<compile_context>
chip_gen: v6e
topology: v6e:2x2x1
jax: 0.10.0
libtpu: 0.0.40
codegen_flags: <defaults>
</compile_context>

<pallas_src>
import functools
import math

import jax
import jax.numpy as jnp
from jax.experimental import pallas as pl
from jax.experimental.pallas import tpu as pltpu

_MXU_DTYPE = jnp.bfloat16            # matmul operand dtype (accumulation stays f32)
_VMEM_LIMIT_BYTES = 48 * 1024 * 1024
_LN_EPS = 1e-5


def _layer_norm(x, g, b, eps):
    mu = jnp.mean(x, axis=-1, keepdims=True)
    xc = x - mu
    var = jnp.mean(xc * xc, axis=-1, keepdims=True)
    return xc * jax.lax.rsqrt(var + eps) * g + b


# ---------------------------------------------------------------------------
# Fused multi-head attention kernel:
#   QKV projections + per-(batch,head) softmax(QK^T/sqrt(dh)) V + output
#   projection + residual add + LayerNorm, all in VMEM in a single grid step.
#   Optionally emits the head-averaged attention map [B, Sq, Sk].
# ---------------------------------------------------------------------------
def _fused_mha_kernel(q_ref, k_ref, v_ref, res_ref, mask_ref,
                      wq_ref, bq_ref, wk_ref, bk_ref, wv_ref, bv_ref,
                      wo_ref, bo_ref, g_ref, beta_ref,
                      out_ref, maps_ref=None, *, nhead, batch, sq, sk, eps):
    f32 = jnp.float32
    d_model = wq_ref.shape[0]
    dh = d_model // nhead
    scale = 1.0 / math.sqrt(dh)

    def proj(x_ref_, w_ref_, b_ref_):
        return jnp.dot(x_ref_[...].astype(_MXU_DTYPE),
                       w_ref_[...].astype(_MXU_DTYPE),
                       preferred_element_type=f32) + b_ref_[...]

    # Projections on the [B*S, D] slabs; q is pre-scaled so the (larger)
    # [Sq, Sk] score tensor does not need its own scale multiply.
    q = proj(q_ref, wq_ref, bq_ref) * scale          # [B*Sq, D] f32
    k = proj(k_ref, wk_ref, bk_ref)                  # [B*Sk, D] f32
    v = proj(v_ref, wv_ref, bv_ref)                  # [B*Sk, D] f32

    mask = mask_ref[...]                             # [B, Sk] additive (0 / -1e9)
    inv_h = 1.0 / nhead

    # TODO(synk): at real RelTR sizes (large B*nhead, HW ~1-2k) move this
    # unrolled (batch, head) loop onto a grid axis / batched einsum.
    out_rows = []
    for b in range(batch):
        qb = q[b * sq:(b + 1) * sq, :]               # [Sq, D]
        kb = k[b * sk:(b + 1) * sk, :]               # [Sk, D]
        vb = v[b * sk:(b + 1) * sk, :]
        mb = mask[b:b + 1, :]                        # [1, Sk]
        head_outs = []
        maps_acc = None
        for h in range(nhead):
            qh = qb[:, h * dh:(h + 1) * dh].astype(_MXU_DTYPE)   # [Sq, dh]
            kh = kb[:, h * dh:(h + 1) * dh].astype(_MXU_DTYPE)   # [Sk, dh]
            vh = vb[:, h * dh:(h + 1) * dh].astype(_MXU_DTYPE)   # [Sk, dh]
            s = jax.lax.dot_general(                  # [Sq, Sk] = qh @ kh^T
                qh, kh, dimension_numbers=(((1,), (1,)), ((), ())),
                preferred_element_type=f32)
            s = s + mb                               # key-padding mask broadcast
            mx = jnp.max(s, axis=-1, keepdims=True)
            p = jnp.exp(s - mx)
            denom = jnp.sum(p, axis=-1, keepdims=True)
            attn = p * pl.reciprocal(denom, approx=True)
            o = jnp.dot(attn.astype(_MXU_DTYPE), vh,
                        preferred_element_type=f32)  # [Sq, dh]
            head_outs.append(o)
            if maps_ref is not None:
                maps_acc = attn if maps_acc is None else maps_acc + attn
        out_rows.append(jnp.concatenate(head_outs, axis=-1))     # [Sq, D]
        if maps_ref is not None:
            maps_ref[b] = (maps_acc * inv_h).astype(maps_ref.dtype)

    o_all = jnp.concatenate(out_rows, axis=0)                    # [B*Sq, D]
    o_all = jnp.dot(o_all.astype(_MXU_DTYPE), wo_ref[...].astype(_MXU_DTYPE),
                    preferred_element_type=f32) + bo_ref[...]
    x = res_ref[...] + o_all                                     # residual
    out_ref[...] = _layer_norm(x, g_ref[...], beta_ref[...], eps).astype(out_ref.dtype)


def mha_fused(q, k, v, residual, mask_add, p, ln, *, nhead, emit_maps=False):
    """q/residual: [B, Sq, D]; k, v: [B, Sk, D]; mask_add: [B, Sk] additive."""
    B, Sq, D = q.shape
    Sk = k.shape[1]
    kernel = functools.partial(_fused_mha_kernel, nhead=nhead, batch=B,
                               sq=Sq, sk=Sk, eps=_LN_EPS)
    out_shape = [jax.ShapeDtypeStruct((B * Sq, D), jnp.float32)]
    if emit_maps:
        out_shape.append(jax.ShapeDtypeStruct((B, Sq, Sk), jnp.float32))
    res = pl.pallas_call(
        kernel,
        out_shape=out_shape,
        compiler_params=pltpu.CompilerParams(vmem_limit_bytes=_VMEM_LIMIT_BYTES),
    )(q.reshape(B * Sq, D), k.reshape(B * Sk, D), v.reshape(B * Sk, D),
      residual.reshape(B * Sq, D), mask_add,
      p["wq"], p["bq"], p["wk"], p["bk"], p["wv"], p["bv"],
      p["wo"], p["bo"], ln["g"], ln["b"])
    out = res[0].reshape(B, Sq, D)
    if emit_maps:
        return out, res[1]
    return out


# ---------------------------------------------------------------------------
# Fused FFN kernel: linear -> ReLU -> linear -> residual add -> LayerNorm.
# Row-tiled over M = B*S with "parallel" semantics.
# ---------------------------------------------------------------------------
def _ffn_ln_kernel(x_ref, w1_ref, b1_ref, w2_ref, b2_ref, g_ref, beta_ref,
                   out_ref, *, eps):
    f32 = jnp.float32
    x = x_ref[...]
    h = jnp.dot(x.astype(_MXU_DTYPE), w1_ref[...].astype(_MXU_DTYPE),
                preferred_element_type=f32) + b1_ref[...]
    h = jnp.maximum(h, 0.0)                                   # ReLU in f32
    y = jnp.dot(h.astype(_MXU_DTYPE), w2_ref[...].astype(_MXU_DTYPE),
                preferred_element_type=f32) + b2_ref[...]
    out_ref[...] = _layer_norm(x + y, g_ref[...], beta_ref[...], eps).astype(out_ref.dtype)


def _pick_row_tile(m):
    if m <= 512:
        return m
    for t in (512, 256, 128, 64, 32, 16, 8):
        if m % t == 0:
            return t
    return m


def ffn_fused(x, p, ln):
    """x: [B, S, D] -> [B, S, D]."""
    B, S, D = x.shape
    M = B * S
    F = p["w1"].shape[1]
    tm = _pick_row_tile(M)
    out = pl.pallas_call(
        functools.partial(_ffn_ln_kernel, eps=_LN_EPS),
        grid=(M // tm,),
        in_specs=[
            pl.BlockSpec((tm, D), lambda i: (i, 0)),
            pl.BlockSpec((D, F), lambda i: (0, 0)),
            pl.BlockSpec((1, F), lambda i: (0, 0)),
            pl.BlockSpec((F, D), lambda i: (0, 0)),
            pl.BlockSpec((1, D), lambda i: (0, 0)),
            pl.BlockSpec((1, D), lambda i: (0, 0)),
            pl.BlockSpec((1, D), lambda i: (0, 0)),
        ],
        out_specs=pl.BlockSpec((tm, D), lambda i: (i, 0)),
        out_shape=jax.ShapeDtypeStruct((M, D), jnp.float32),
        compiler_params=pltpu.CompilerParams(
            dimension_semantics=("parallel",),
            vmem_limit_bytes=_VMEM_LIMIT_BYTES),
    )(x.reshape(M, D), p["w1"], p["b1"], p["w2"], p["b2"], ln["g"], ln["b"])
    return out.reshape(B, S, D)


# ---------------------------------------------------------------------------
# Model glue (plain JAX only for pos-adds / concats / stacking; all heavy math
# runs inside the two fused Pallas kernels above).
# ---------------------------------------------------------------------------
def encoder_layer(p, src, mask_add, pos, nhead):
    # forward_post: q = k = src + pos
    q = src + pos
    src = mha_fused(q, q, src, src, mask_add, p["self_attn"], p["norm1"], nhead=nhead)
    src = ffn_fused(src, p["ffn"], p["norm2"])
    return src


def decoder_layer(p, tgt_entity, tgt_triplet, entity_pos, triplet_pos, so_pos,
                  memory, mem_mask_add, pos, nhead):
    B, Ne, D = tgt_entity.shape
    Nt = triplet_pos.shape[1]

    zeros_e = jnp.zeros((B, Ne), jnp.float32)     # no key-padding mask
    mem_k = memory + pos

    # ----- entity branch -----
    q_e = tgt_entity + entity_pos
    tgt_entity = mha_fused(q_e, q_e, tgt_entity, tgt_entity, zeros_e,
                           p["self_attn_entity"], p["norm2_entity"], nhead=nhead)
    tgt_entity = mha_fused(tgt_entity + entity_pos, mem_k, memory, tgt_entity,
                           mem_mask_add, p["cross_attn_entity"], p["norm1_entity"],
                           nhead=nhead)
    tgt_entity = ffn_fused(tgt_entity, p["ffn_entity"], p["norm3_entity"])

    # ----- coupled subject/object self attention -----
    tgt_sub = tgt_triplet[:, :, :D]
    tgt_obj = tgt_triplet[:, :, D:]
    q_sub = tgt_sub + triplet_pos + so_pos[0]
    q_obj = tgt_obj + triplet_pos + so_pos[1]
    q_so = jnp.concatenate([q_sub, q_obj], axis=1)            # [B, 2*Nt, D]
    tgt_so = jnp.concatenate([tgt_sub, tgt_obj], axis=1)
    zeros_so = jnp.zeros((B, 2 * Nt), jnp.float32)
    tgt_so = mha_fused(q_so, q_so, tgt_so, tgt_so, zeros_so,
                       p["self_attn_so"], p["norm2_so"], nhead=nhead)
    tgt_sub = tgt_so[:, :Nt, :]
    tgt_obj = tgt_so[:, Nt:, :]

    # ----- subject branch -----
    tgt_sub, sub_maps = mha_fused(tgt_sub + triplet_pos, mem_k, memory, tgt_sub,
                                  mem_mask_add, p["cross_attn_sub"], p["norm1_sub"],
                                  nhead=nhead, emit_maps=True)
    tgt_sub = mha_fused(tgt_sub + triplet_pos, tgt_entity, tgt_entity, tgt_sub,
                        zeros_e, p["cross_sub_entity"], p["norm2_sub"], nhead=nhead)
    tgt_sub = ffn_fused(tgt_sub, p["ffn_sub"], p["norm3_sub"])

    # ----- object branch -----
    tgt_obj, obj_maps = mha_fused(tgt_obj + triplet_pos, mem_k, memory, tgt_obj,
                                  mem_mask_add, p["cross_attn_obj"], p["norm1_obj"],
                                  nhead=nhead, emit_maps=True)
    tgt_obj = mha_fused(tgt_obj + triplet_pos, tgt_entity, tgt_entity, tgt_obj,
                        zeros_e, p["cross_obj_entity"], p["norm2_obj"], nhead=nhead)
    tgt_obj = ffn_fused(tgt_obj, p["ffn_obj"], p["norm3_obj"])

    tgt_triplet = jnp.concatenate([tgt_sub, tgt_obj], axis=-1)
    return tgt_entity, tgt_triplet, sub_maps, obj_maps


def transformer_forward(params, src, mask, entity_embed, triplet_embed,
                        pos_embed, so_embed, *, nhead):
    bs, c, h, w = src.shape
    hw = h * w
    # [B, C, H, W] -> [B, HW, C]  (batch-first internal layout)
    src_f = src.reshape(bs, c, hw).transpose(0, 2, 1)
    pos_f = pos_embed.reshape(bs, c, hw).transpose(0, 2, 1)
    mask_f = mask.reshape(bs, hw)
    mask_add = jnp.where(mask_f, -1e9, 0.0).astype(jnp.float32)

    entity_pos_w, entity_w = entity_embed[:, :c], entity_embed[:, c:]
    triplet_pos_w, triplet_w = triplet_embed[:, :c], triplet_embed[:, c:]
    entity_pos = jnp.broadcast_to(entity_pos_w[None], (bs,) + entity_pos_w.shape)
    entity = jnp.broadcast_to(entity_w[None], (bs,) + entity_w.shape)
    triplet_pos = jnp.broadcast_to(triplet_pos_w[None], (bs,) + triplet_pos_w.shape)
    triplet = jnp.broadcast_to(triplet_w[None], (bs,) + triplet_w.shape)

    # ---------------- encoder ----------------
    memory = src_f
    for lp in params["encoder_layers"]:
        memory = encoder_layer(lp, memory, mask_add, pos_f, nhead)

    # ---------------- decoder ----------------
    out_e, out_t = entity, triplet
    ent_inter, tri_inter, sub_inter, obj_inter = [], [], [], []
    for lp in params["decoder_layers"]:
        out_e, out_t, sub_maps, obj_maps = decoder_layer(
            lp, out_e, out_t, entity_pos, triplet_pos, so_embed,
            memory, mask_add, pos_f, nhead)
        ent_inter.append(out_e)
        tri_inter.append(out_t)
        sub_inter.append(sub_maps)
        obj_inter.append(obj_maps)

    hs = jnp.stack(ent_inter)        # [L, B, Ne, C]   (== hs.transpose(1,2) in ref)
    hs_t = jnp.stack(tri_inter)      # [L, B, Nt, 2C]
    sub_all = jnp.stack(sub_inter)   # [L, B, Nt, HW]
    obj_all = jnp.stack(obj_inter)
    L = hs.shape[0]
    nt = sub_all.shape[2]
    so_masks = jnp.concatenate(
        [sub_all.reshape(L, bs, nt, 1, h, w),
         obj_all.reshape(L, bs, nt, 1, h, w)], axis=3)   # [L, B, Nt, 2, h, w]
    return hs, hs_t, so_masks


# ---------------------------------------------------------------------------
# Deterministic parameter init (xavier-uniform weights, zero biases, unit LN).
# ---------------------------------------------------------------------------
def _xavier(key, shape):
    a = math.sqrt(6.0 / (shape[0] + shape[1]))
    return jax.random.uniform(key, shape, jnp.float32, -a, a)


def _init_mha(key, d):
    ks = jax.random.split(key, 4)
    z = lambda n: jnp.zeros((1, n), jnp.float32)
    return dict(wq=_xavier(ks[0], (d, d)), bq=z(d),
                wk=_xavier(ks[1], (d, d)), bk=z(d),
                wv=_xavier(ks[2], (d, d)), bv=z(d),
                wo=_xavier(ks[3], (d, d)), bo=z(d))


def _init_ffn(key, d, dff):
    k1, k2 = jax.random.split(key)
    return dict(w1=_xavier(k1, (d, dff)), b1=jnp.zeros((1, dff), jnp.float32),
                w2=_xavier(k2, (dff, d)), b2=jnp.zeros((1, d), jnp.float32))


def _ln_params(d):
    return dict(g=jnp.ones((1, d), jnp.float32), b=jnp.zeros((1, d), jnp.float32))


def init_encoder_layer(key, d, dff):
    k1, k2 = jax.random.split(key)
    return dict(self_attn=_init_mha(k1, d), ffn=_init_ffn(k2, d, dff),
                norm1=_ln_params(d), norm2=_ln_params(d))


def init_decoder_layer(key, d, dff):
    ks = jax.random.split(key, 10)
    p = dict(
        self_attn_entity=_init_mha(ks[0], d),
        cross_attn_entity=_init_mha(ks[1], d),
        self_attn_so=_init_mha(ks[2], d),
        cross_attn_sub=_init_mha(ks[3], d),
        cross_sub_entity=_init_mha(ks[4], d),
        cross_attn_obj=_init_mha(ks[5], d),
        cross_obj_entity=_init_mha(ks[6], d),
        ffn_entity=_init_ffn(ks[7], d, dff),
        ffn_sub=_init_ffn(ks[8], d, dff),
        ffn_obj=_init_ffn(ks[9], d, dff),
    )
    for name in ["norm1_entity", "norm2_entity", "norm3_entity", "norm2_so",
                 "norm1_sub", "norm2_sub", "norm3_sub",
                 "norm1_obj", "norm2_obj", "norm3_obj"]:
        p[name] = _ln_params(d)
    return p


# ---------------------------------------------------------------------------
if __name__ == "__main__":
    D_MODEL = 32
    NHEAD = 4
    DFF = 64
    NUM_ENC = 2
    NUM_DEC = 2
    N_ENT = 8
    N_TRI = 8
    H, W = 4, 4
    B = 2

    key = jax.random.PRNGKey(0)
    k_enc, k_dec, k_src, k_ent, k_tri, k_pos, k_so = jax.random.split(key, 7)

    # _get_clones deepcopy semantics: all layers start from identical params.
    enc_layer_params = init_encoder_layer(k_enc, D_MODEL, DFF)
    dec_layer_params = init_decoder_layer(k_dec, D_MODEL, DFF)
    params = dict(encoder_layers=[enc_layer_params] * NUM_ENC,
                  decoder_layers=[dec_layer_params] * NUM_DEC)

    src = jax.random.normal(k_src, (B, D_MODEL, H, W), jnp.float32)
    pos_embed = jax.random.normal(k_pos, (B, D_MODEL, H, W), jnp.float32)
    entity_embed = jax.random.normal(k_ent, (N_ENT, 2 * D_MODEL), jnp.float32)
    triplet_embed = jax.random.normal(k_tri, (N_TRI, 3 * D_MODEL), jnp.float32)
    so_embed = jax.random.normal(k_so, (2, D_MODEL), jnp.float32)
    # key-padding mask: True = padded; pad the last spatial row of batch 1.
    mask = jnp.zeros((B, H, W), jnp.bool_).at[1, -1, :].set(True)

    fwd = jax.jit(functools.partial(transformer_forward, nhead=NHEAD))
    hs, hs_t, so_masks = fwd(params, src, mask, entity_embed, triplet_embed,
                             pos_embed, so_embed)
    jax.block_until_ready((hs, hs_t, so_masks))

    assert hs.shape == (NUM_DEC, B, N_ENT, D_MODEL)
    assert hs_t.shape == (NUM_DEC, B, N_TRI, 2 * D_MODEL)
    assert so_masks.shape == (NUM_DEC, B, N_TRI, 2, H, W)
    assert bool(jnp.all(jnp.isfinite(hs)))
    assert bool(jnp.all(jnp.isfinite(hs_t)))
    assert bool(jnp.all(jnp.isfinite(so_masks)))

    print("KERNEL_OK")
</pallas_src>

<mosaic_0001>
module attributes {stable_mosaic.version = 11 : i64} {
  func.func @_fused_mha_kernel(%arg0: memref<16x32xf32, #tpu.memory_space<vmem>>, %arg1: memref<16x32xf32, #tpu.memory_space<vmem>>, %arg2: memref<16x32xf32, #tpu.memory_space<vmem>>, %arg3: memref<16x32xf32, #tpu.memory_space<vmem>>, %arg4: memref<2x8xf32, #tpu.memory_space<vmem>>, %arg5: memref<32x32xf32, #tpu.memory_space<vmem>>, %arg6: memref<1x32xf32, #tpu.memory_space<vmem>>, %arg7: memref<32x32xf32, #tpu.memory_space<vmem>>, %arg8: memref<1x32xf32, #tpu.memory_space<vmem>>, %arg9: memref<32x32xf32, #tpu.memory_space<vmem>>, %arg10: memref<1x32xf32, #tpu.memory_space<vmem>>, %arg11: memref<32x32xf32, #tpu.memory_space<vmem>>, %arg12: memref<1x32xf32, #tpu.memory_space<vmem>>, %arg13: memref<1x32xf32, #tpu.memory_space<vmem>>, %arg14: memref<1x32xf32, #tpu.memory_space<vmem>>, %arg15: memref<16x32xf32, #tpu.memory_space<vmem>>) attributes {dimension_semantics = [], scalar_prefetch = 0 : i64, scratch_operands = 0 : i64, tpu.core_type = #tpu.core_type<tc>} {
    %c0 = arith.constant 0 : index
    %c0_0 = arith.constant 0 : index
    %0 = vector.load %arg0[%c0, %c0_0] : memref<16x32xf32, #tpu.memory_space<vmem>>, vector<16x32xf32>
    %1 = arith.truncf %0 : vector<16x32xf32> to vector<16x32xbf16>
    %c0_1 = arith.constant 0 : index
    %c0_2 = arith.constant 0 : index
    %2 = vector.load %arg5[%c0_1, %c0_2] : memref<32x32xf32, #tpu.memory_space<vmem>>, vector<32x32xf32>
    %3 = arith.truncf %2 : vector<32x32xf32> to vector<32x32xbf16>
    %cst = arith.constant dense<0.000000e+00> : vector<16x32xf32>
    %4 = tpu.matmul %1, %3, %cst {dimension_numbers = #tpu.dot_dimension_numbers<[1], [0], [0], [1], [0, 0, 1, 1], [], []>} : vector<16x32xbf16>, vector<32x32xbf16>, vector<16x32xf32> -> vector<16x32xf32>
    %c0_3 = arith.constant 0 : index
    %c0_4 = arith.constant 0 : index
    %5 = vector.load %arg6[%c0_3, %c0_4] : memref<1x32xf32, #tpu.memory_space<vmem>>, vector<1x32xf32>
    %6 = vector.broadcast %5 : vector<1x32xf32> to vector<16x32xf32>
    %7 = arith.addf %4, %6 : vector<16x32xf32>
    %cst_5 = arith.constant 0.353553385 : f32
    %8 = vector.broadcast %cst_5 : f32 to vector<16x32xf32>
    %9 = arith.mulf %7, %8 : vector<16x32xf32>
    %c0_6 = arith.constant 0 : index
    %c0_7 = arith.constant 0 : index
    %10 = vector.load %arg1[%c0_6, %c0_7] : memref<16x32xf32, #tpu.memory_space<vmem>>, vector<16x32xf32>
    %11 = arith.truncf %10 : vector<16x32xf32> to vector<16x32xbf16>
    %c0_8 = arith.constant 0 : index
    %c0_9 = arith.constant 0 : index
    %12 = vector.load %arg7[%c0_8, %c0_9] : memref<32x32xf32, #tpu.memory_space<vmem>>, vector<32x32xf32>
    %13 = arith.truncf %12 : vector<32x32xf32> to vector<32x32xbf16>
    %cst_10 = arith.constant dense<0.000000e+00> : vector<16x32xf32>
    %14 = tpu.matmul %11, %13, %cst_10 {dimension_numbers = #tpu.dot_dimension_numbers<[1], [0], [0], [1], [0, 0, 1, 1], [], []>} : vector<16x32xbf16>, vector<32x32xbf16>, vector<16x32xf32> -> vector<16x32xf32>
    %c0_11 = arith.constant 0 : index
    %c0_12 = arith.constant 0 : index
    %15 = vector.load %arg8[%c0_11, %c0_12] : memref<1x32xf32, #tpu.memory_space<vmem>>, vector<1x32xf32>
    %16 = vector.broadcast %15 : vector<1x32xf32> to vector<16x32xf32>
    %17 = arith.addf %14, %16 : vector<16x32xf32>
    %c0_13 = arith.constant 0 : index
    %c0_14 = arith.constant 0 : index
    %18 = vector.load %arg2[%c0_13, %c0_14] : memref<16x32xf32, #tpu.memory_space<vmem>>, vector<16x32xf32>
    %19 = arith.truncf %18 : vector<16x32xf32> to vector<16x32xbf16>
    %c0_15 = arith.constant 0 : index
    %c0_16 = arith.constant 0 : index
    %20 = vector.load %arg9[%c0_15, %c0_16] : memref<32x32xf32, #tpu.memory_space<vmem>>, vector<32x32xf32>
    %21 = arith.truncf %20 : vector<32x32xf32> to vector<32x32xbf16>
    %cst_17 = arith.constant dense<0.000000e+00> : vector<16x32xf32>
    %22 = tpu.matmul %19, %21, %cst_17 {dimension_numbers = #tpu.dot_dimension_numbers<[1], [0], [0], [1], [0, 0, 1, 1], [], []>} : vector<16x32xbf16>, vector<32x32xbf16>, vector<16x32xf32> -> vector<16x32xf32>
    %c0_18 = arith.constant 0 : index
    %c0_19 = arith.constant 0 : index
    %23 = vector.load %arg10[%c0_18, %c0_19] : memref<1x32xf32, #tpu.memory_space<vmem>>, vector<1x32xf32>
    %24 = vector.broadcast %23 : vector<1x32xf32> to vector<16x32xf32>
    %25 = arith.addf %22, %24 : vector<16x32xf32>
    %c0_20 = arith.constant 0 : index
    %c0_21 = arith.constant 0 : index
    %26 = vector.load %arg4[%c0_20, %c0_21] : memref<2x8xf32, #tpu.memory_space<vmem>>, vector<2x8xf32>
    %27 = vector.extract_strided_slice %9 {offsets = [0, 0], sizes = [8, 32], strides = [1, 1]} : vector<16x32xf32> to vector<8x32xf32>
    %28 = vector.extract_strided_slice %17 {offsets = [0, 0], sizes = [8, 32], strides = [1, 1]} : vector<16x32xf32> to vector<8x32xf32>
    %29 = vector.extract_strided_slice %25 {offsets = [0, 0], sizes = [8, 32], strides = [1, 1]} : vector<16x32xf32> to vector<8x32xf32>
    %30 = vector.extract_strided_slice %26 {offsets = [0, 0], sizes = [1, 8], strides = [1, 1]} : vector<2x8xf32> to vector<1x8xf32>
    %31 = vector.extract_strided_slice %27 {offsets = [0, 0], sizes = [8, 8], strides = [1, 1]} : vector<8x32xf32> to vector<8x8xf32>
    %32 = arith.truncf %31 : vector<8x8xf32> to vector<8x8xbf16>
    %33 = vector.extract_strided_slice %28 {offsets = [0, 0], sizes = [8, 8], strides = [1, 1]} : vector<8x32xf32> to vector<8x8xf32>
    %34 = arith.truncf %33 : vector<8x8xf32> to vector<8x8xbf16>
    %35 = vector.extract_strided_slice %29 {offsets = [0, 0], sizes = [8, 8], strides = [1, 1]} : vector<8x32xf32> to vector<8x8xf32>
    %36 = arith.truncf %35 : vector<8x8xf32> to vector<8x8xbf16>
    %cst_22 = arith.constant dense<0.000000e+00> : vector<8x8xf32>
    %37 = tpu.matmul %32, %34, %cst_22 {dimension_numbers = #tpu.dot_dimension_numbers<[1], [1], [0], [0], [0, 0, 1, 0], [], []>} : vector<8x8xbf16>, vector<8x8xbf16>, vector<8x8xf32> -> vector<8x8xf32>
    %38 = vector.broadcast %30 : vector<1x8xf32> to vector<8x8xf32>
    %39 = arith.addf %37, %38 : vector<8x8xf32>
    %cst_23 = arith.constant dense<0xFF800000> : vector<8xf32>
    %40 = vector.multi_reduction <maximumf>, %39, %cst_23 [1] : vector<8x8xf32> to vector<8xf32>
    %41 = vector.shape_cast %40 : vector<8xf32> to vector<8x1xf32>
    %42 = vector.broadcast %41 : vector<8x1xf32> to vector<8x8xf32>
    %43 = arith.subf %39, %42 : vector<8x8xf32>
    %44 = math.exp %43 : vector<8x8xf32>
    %cst_24 = arith.constant dense<0.000000e+00> : vector<8xf32>
    %45 = vector.multi_reduction <add>, %44, %cst_24 [1] : vector<8x8xf32> to vector<8xf32>
    %46 = vector.shape_cast %45 : vector<8xf32> to vector<8x1xf32>
    %47 = tpu.reciprocal %46 {approx = true} : vector<8x1xf32> -> vector<8x1xf32>
    %48 = vector.broadcast %47 : vector<8x1xf32> to vector<8x8xf32>
    %49 = arith.mulf %44, %48 : vector<8x8xf32>
    %50 = arith.truncf %49 : vector<8x8xf32> to vector<8x8xbf16>
    %cst_25 = arith.constant dense<0.000000e+00> : vector<8x8xf32>
    %51 = tpu.matmul %50, %36, %cst_25 {dimension_numbers = #tpu.dot_dimension_numbers<[1], [0], [0], [1], [0, 0, 1, 1], [], []>} : vector<8x8xbf16>, vector<8x8xbf16>, vector<8x8xf32> -> vector<8x8xf32>
    %52 = vector.extract_strided_slice %27 {offsets = [0, 8], sizes = [8, 8], strides = [1, 1]} : vector<8x32xf32> to vector<8x8xf32>
    %53 = arith.truncf %52 : vector<8x8xf32> to vector<8x8xbf16>
    %54 = vector.extract_strided_slice %28 {offsets = [0, 8], sizes = [8, 8], strides = [1, 1]} : vector<8x32xf32> to vector<8x8xf32>
    %55 = arith.truncf %54 : vector<8x8xf32> to vector<8x8xbf16>
    %56 = vector.extract_strided_slice %29 {offsets = [0, 8], sizes = [8, 8], strides = [1, 1]} : vector<8x32xf32> to vector<8x8xf32>
    %57 = arith.truncf %56 : vector<8x8xf32> to vector<8x8xbf16>
    %cst_26 = arith.constant dense<0.000000e+00> : vector<8x8xf32>
    %58 = tpu.matmul %53, %55, %cst_26 {dimension_numbers = #tpu.dot_dimension_numbers<[1], [1], [0], [0], [0, 0, 1, 0], [], []>} : vector<8x8xbf16>, vector<8x8xbf16>, vector<8x8xf32> -> vector<8x8xf32>
    %59 = vector.broadcast %30 : vector<1x8xf32> to vector<8x8xf32>
    %60 = arith.addf %58, %59 : vector<8x8xf32>
    %cst_27 = arith.constant dense<0xFF800000> : vector<8xf32>
    %61 = vector.multi_reduction <maximumf>, %60, %cst_27 [1] : vector<8x8xf32> to vector<8xf32>
    %62 = vector.shape_cast %61 : vector<8xf32> to vector<8x1xf32>
    %63 = vector.broadcast %62 : vector<8x1xf32> to vector<8x8xf32>
    %64 = arith.subf %60, %63 : vector<8x8xf32>
    %65 = math.exp %64 : vector<8x8xf32>
    %cst_28 = arith.constant dense<0.000000e+00> : vector<8xf32>
    %66 = vector.multi_reduction <add>, %65, %cst_28 [1] : vector<8x8xf32> to vector<8xf32>
    %67 = vector.shape_cast %66 : vector<8xf32> to vector<8x1xf32>
    %68 = tpu.reciprocal %67 {approx = true} : vector<8x1xf32> -> vector<8x1xf32>
    %69 = vector.broadcast %68 : vector<8x1xf32> to vector<8x8xf32>
    %70 = arith.mulf %65, %69 : vector<8x8xf32>
    %71 = arith.truncf %70 : vector<8x8xf32> to vector<8x8xbf16>
    %cst_29 = arith.constant dense<0.000000e+00> : vector<8x8xf32>
    %72 = tpu.matmul %71, %57, %cst_29 {dimension_numbers = #tpu.dot_dimension_numbers<[1], [0], [0], [1], [0, 0, 1, 1], [], []>} : vector<8x8xbf16>, vector<8x8xbf16>, vector<8x8xf32> -> vector<8x8xf32>
    %73 = vector.extract_strided_slice %27 {offsets = [0, 16], sizes = [8, 8], strides = [1, 1]} : vector<8x32xf32> to vector<8x8xf32>
    %74 = arith.truncf %73 : vector<8x8xf32> to vector<8x8xbf16>
    %75 = vector.extract_strided_slice %28 {offsets = [0, 16], sizes = [8, 8], strides = [1, 1]} : vector<8x32xf32> to vector<8x8xf32>
    %76 = arith.truncf %75 : vector<8x8xf32> to vector<8x8xbf16>
    %77 = vector.extract_strided_slice %29 {offsets = [0, 16], sizes = [8, 8], strides = [1, 1]} : vector<8x32xf32> to vector<8x8xf32>
    %78 = arith.truncf %77 : vector<8x8xf32> to vector<8x8xbf16>
    %cst_30 = arith.constant dense<0.000000e+00> : vector<8x8xf32>
    %79 = tpu.matmul %74, %76, %cst_30 {dimension_numbers = #tpu.dot_dimension_numbers<[1], [1], [0], [0], [0, 0, 1, 0], [], []>} : vector<8x8xbf16>, vector<8x8xbf16>, vector<8x8xf32> -> vector<8x8xf32>
    %80 = vector.broadcast %30 : vector<1x8xf32> to vector<8x8xf32>
    %81 = arith.addf %79, %80 : vector<8x8xf32>
    %cst_31 = arith.constant dense<0xFF800000> : vector<8xf32>
    %82 = vector.multi_reduction <maximumf>, %81, %cst_31 [1] : vector<8x8xf32> to vector<8xf32>
    %83 = vector.shape_cast %82 : vector<8xf32> to vector<8x1xf32>
    %84 = vector.broadcast %83 : vector<8x1xf32> to vector<8x8xf32>
    %85 = arith.subf %81, %84 : vector<8x8xf32>
    %86 = math.exp %85 : vector<8x8xf32>
    %cst_32 = arith.constant dense<0.000000e+00> : vector<8xf32>
    %87 = vector.multi_reduction <add>, %86, %cst_32 [1] : vector<8x8xf32> to vector<8xf32>
    %88 = vector.shape_cast %87 : vector<8xf32> to vector<8x1xf32>
    %89 = tpu.reciprocal %88 {approx = true} : vector<8x1xf32> -> vector<8x1xf32>
    %90 = vector.broadcast %89 : vector<8x1xf32> to vector<8x8xf32>
    %91 = arith.mulf %86, %90 : vector<8x8xf32>
    %92 = arith.truncf %91 : vector<8x8xf32> to vector<8x8xbf16>
    %cst_33 = arith.constant dense<0.000000e+00> : vector<8x8xf32>
    %93 = tpu.matmul %92, %78, %cst_33 {dimension_numbers = #tpu.dot_dimension_numbers<[1], [0], [0], [1], [0, 0, 1, 1], [], []>} : vector<8x8xbf16>, vector<8x8xbf16>, vector<8x8xf32> -> vector<8x8xf32>
    %94 = vector.extract_strided_slice %27 {offsets = [0, 24], sizes = [8, 8], strides = [1, 1]} : vector<8x32xf32> to vector<8x8xf32>
    %95 = arith.truncf %94 : vector<8x8xf32> to vector<8x8xbf16>
    %96 = vector.extract_strided_slice %28 {offsets = [0, 24], sizes = [8, 8], strides = [1, 1]} : vector<8x32xf32> to vector<8x8xf32>
    %97 = arith.truncf %96 : vector<8x8xf32> to vector<8x8xbf16>
    %98 = vector.extract_strided_slice %29 {offsets = [0, 24], sizes = [8, 8], strides = [1, 1]} : vector<8x32xf32> to vector<8x8xf32>
    %99 = arith.truncf %98 : vector<8x8xf32> to vector<8x8xbf16>
    %cst_34 = arith.constant dense<0.000000e+00> : vector<8x8xf32>
    %100 = tpu.matmul %95, %97, %cst_34 {dimension_numbers = #tpu.dot_dimension_numbers<[1], [1], [0], [0], [0, 0, 1, 0], [], []>} : vector<8x8xbf16>, vector<8x8xbf16>, vector<8x8xf32> -> vector<8x8xf32>
    %101 = vector.broadcast %30 : vector<1x8xf32> to vector<8x8xf32>
    %102 = arith.addf %100, %101 : vector<8x8xf32>
    %cst_35 = arith.constant dense<0xFF800000> : vector<8xf32>
    %103 = vector.multi_reduction <maximumf>, %102, %cst_35 [1] : vector<8x8xf32> to vector<8xf32>
    %104 = vector.shape_cast %103 : vector<8xf32> to vector<8x1xf32>
    %105 = vector.broadcast %104 : vector<8x1xf32> to vector<8x8xf32>
    %106 = arith.subf %102, %105 : vector<8x8xf32>
    %107 = math.exp %106 : vector<8x8xf32>
    %cst_36 = arith.constant dense<0.000000e+00> : vector<8xf32>
    %108 = vector.multi_reduction <add>, %107, %cst_36 [1] : vector<8x8xf32> to vector<8xf32>
    %109 = vector.shape_cast %108 : vector<8xf32> to vector<8x1xf32>
    %110 = tpu.reciprocal %109 {approx = true} : vector<8x1xf32> -> vector<8x1xf32>
    %111 = vector.broadcast %110 : vector<8x1xf32> to vector<8x8xf32>
    %112 = arith.mulf %107, %111 : vector<8x8xf32>
    %113 = arith.truncf %112 : vector<8x8xf32> to vector<8x8xbf16>
    %cst_37 = arith.constant dense<0.000000e+00> : vector<8x8xf32>
    %114 = tpu.matmul %113, %99, %cst_37 {dimension_numbers = #tpu.dot_dimension_numbers<[1], [0], [0], [1], [0, 0, 1, 1], [], []>} : vector<8x8xbf16>, vector<8x8xbf16>, vector<8x8xf32> -> vector<8x8xf32>
    %115 = tpu.concatenate %51, %72, %93, %114 in 1 : vector<8x8xf32>, vector<8x8xf32>, vector<8x8xf32>, vector<8x8xf32> -> vector<8x32xf32>
    %116 = vector.extract_strided_slice %9 {offsets = [8, 0], sizes = [8, 32], strides = [1, 1]} : vector<16x32xf32> to vector<8x32xf32>
    %117 = vector.extract_strided_slice %17 {offsets = [8, 0], sizes = [8, 32], strides = [1, 1]} : vector<16x32xf32> to vector<8x32xf32>
    %118 = vector.extract_strided_slice %25 {offsets = [8, 0], sizes = [8, 32], strides = [1, 1]} : vector<16x32xf32> to vector<8x32xf32>
    %119 = vector.extract_strided_slice %26 {offsets = [1, 0], sizes = [1, 8], strides = [1, 1]} : vector<2x8xf32> to vector<1x8xf32>
    %120 = vector.extract_strided_slice %116 {offsets = [0, 0], sizes = [8, 8], strides = [1, 1]} : vector<8x32xf32> to vector<8x8xf32>
    %121 = arith.truncf %120 : vector<8x8xf32> to vector<8x8xbf16>
    %122 = vector.extract_strided_slice %117 {offsets = [0, 0], sizes = [8, 8], strides = [1, 1]} : vector<8x32xf32> to vector<8x8xf32>
    %123 = arith.truncf %122 : vector<8x8xf32> to vector<8x8xbf16>
    %124 = vector.extract_strided_slice %118 {offsets = [0, 0], sizes = [8, 8], strides = [1, 1]} : vector<8x32xf32> to vector<8x8xf32>
    %125 = arith.truncf %124 : vector<8x8xf32> to vector<8x8xbf16>
    %cst_38 = arith.constant dense<0.000000e+00> : vector<8x8xf32>
    %126 = tpu.matmul %121, %123, %cst_38 {dimension_numbers = #tpu.dot_dimension_numbers<[1], [1], [0], [0], [0, 0, 1, 0], [], []>} : vector<8x8xbf16>, vector<8x8xbf16>, vector<8x8xf32> -> vector<8x8xf32>
    %127 = vector.broadcast %119 : vector<1x8xf32> to vector<8x8xf32>
    %128 = arith.addf %126, %127 : vector<8x8xf32>
    %cst_39 = arith.constant dense<0xFF800000> : vector<8xf32>
    %129 = vector.multi_reduction <maximumf>, %128, %cst_39 [1] : vector<8x8xf32> to vector<8xf32>
    %130 = vector.shape_cast %129 : vector<8xf32> to vector<8x1xf32>
    %131 = vector.broadcast %130 : vector<8x1xf32> to vector<8x8xf32>
    %132 = arith.subf %128, %131 : vector<8x8xf32>
    %133 = math.exp %132 : vector<8x8xf32>
    %cst_40 = arith.constant dense<0.000000e+00> : vector<8xf32>
    %134 = vector.multi_reduction <add>, %133, %cst_40 [1] : vector<8x8xf32> to vector<8xf32>
    %135 = vector.shape_cast %134 : vector<8xf32> to vector<8x1xf32>
    %136 = tpu.reciprocal %135 {approx = true} : vector<8x1xf32> -> vector<8x1xf32>
    %137 = vector.broadcast %136 : vector<8x1xf32> to vector<8x8xf32>
    %138 = arith.mulf %133, %137 : vector<8x8xf32>
    %139 = arith.truncf %138 : vector<8x8xf32> to vector<8x8xbf16>
    %cst_41 = arith.constant dense<0.000000e+00> : vector<8x8xf32>
    %140 = tpu.matmul %139, %125, %cst_41 {dimension_numbers = #tpu.dot_dimension_numbers<[1], [0], [0], [1], [0, 0, 1, 1], [], []>} : vector<8x8xbf16>, vector<8x8xbf16>, vector<8x8xf32> -> vector<8x8xf32>
    %141 = vector.extract_strided_slice %116 {offsets = [0, 8], sizes = [8, 8], strides = [1, 1]} : vector<8x32xf32> to vector<8x8xf32>
    %142 = arith.truncf %141 : vector<8x8xf32> to vector<8x8xbf16>
    %143 = vector.extract_strided_slice %117 {offsets = [0, 8], sizes = [8, 8], strides = [1, 1]} : vector<8x32xf32> to vector<8x8xf32>
    %144 = arith.truncf %143 : vector<8x8xf32> to vector<8x8xbf16>
    %145 = vector.extract_strided_slice %118 {offsets = [0, 8], sizes = [8, 8], strides = [1, 1]} : vector<8x32xf32> to vector<8x8xf32>
    %146 = arith.truncf %145 : vector<8x8xf32> to vector<8x8xbf16>
    %cst_42 = arith.constant dense<0.000000e+00> : vector<8x8xf32>
    %147 = tpu.matmul %142, %144, %cst_42 {dimension_numbers = #tpu.dot_dimension_numbers<[1], [1], [0], [0], [0, 0, 1, 0], [], []>} : vector<8x8xbf16>, vector<8x8xbf16>, vector<8x8xf32> -> vector<8x8xf32>
    %148 = vector.broadcast %119 : vector<1x8xf32> to vector<8x8xf32>
    %149 = arith.addf %147, %148 : vector<8x8xf32>
    %cst_43 = arith.constant dense<0xFF800000> : vector<8xf32>
    %150 = vector.multi_reduction <maximumf>, %149, %cst_43 [1] : vector<8x8xf32> to vector<8xf32>
    %151 = vector.shape_cast %150 : vector<8xf32> to vector<8x1xf32>
    %152 = vector.broadcast %151 : vector<8x1xf32> to vector<8x8xf32>
    %153 = arith.subf %149, %152 : vector<8x8xf32>
    %154 = math.exp %153 : vector<8x8xf32>
    %cst_44 = arith.constant dense<0.000000e+00> : vector<8xf32>
    %155 = vector.multi_reduction <add>, %154, %cst_44 [1] : vector<8x8xf32> to vector<8xf32>
    %156 = vector.shape_cast %155 : vector<8xf32> to vector<8x1xf32>
    %157 = tpu.reciprocal %156 {approx = true} : vector<8x1xf32> -> vector<8x1xf32>
    %158 = vector.broadcast %157 : vector<8x1xf32> to vector<8x8xf32>
    %159 = arith.mulf %154, %158 : vector<8x8xf32>
    %160 = arith.truncf %159 : vector<8x8xf32> to vector<8x8xbf16>
    %cst_45 = arith.constant dense<0.000000e+00> : vector<8x8xf32>
    %161 = tpu.matmul %160, %146, %cst_45 {dimension_numbers = #tpu.dot_dimension_numbers<[1], [0], [0], [1], [0, 0, 1, 1], [], []>} : vector<8x8xbf16>, vector<8x8xbf16>, vector<8x8xf32> -> vector<8x8xf32>
    %162 = vector.extract_strided_slice %116 {offsets = [0, 16], sizes = [8, 8], strides = [1, 1]} : vector<8x32xf32> to vector<8x8xf32>
    %163 = arith.truncf %162 : vector<8x8xf32> to vector<8x8xbf16>
    %164 = vector.extract_strided_slice %117 {offsets = [0, 16], sizes = [8, 8], strides = [1, 1]} : vector<8x32xf32> to vector<8x8xf32>
    %165 = arith.truncf %164 : vector<8x8xf32> to vector<8x8xbf16>
    %166 = vector.extract_strided_slice %118 {offsets = [0, 16], sizes = [8, 8], strides = [1, 1]} : vector<8x32xf32> to vector<8x8xf32>
    %167 = arith.truncf %166 : vector<8x8xf32> to vector<8x8xbf16>
    %cst_46 = arith.constant dense<0.000000e+00> : vector<8x8xf32>
    %168 = tpu.matmul %163, %165, %cst_46 {dimension_numbers = #tpu.dot_dimension_numbers<[1], [1], [0], [0], [0, 0, 1, 0], [], []>} : vector<8x8xbf16>, vector<8x8xbf16>, vector<8x8xf32> -> vector<8x8xf32>
    %169 = vector.broadcast %119 : vector<1x8xf32> to vector<8x8xf32>
    %170 = arith.addf %168, %169 : vector<8x8xf32>
    %cst_47 = arith.constant dense<0xFF800000> : vector<8xf32>
    %171 = vector.multi_reduction <maximumf>, %170, %cst_47 [1] : vector<8x8xf32> to vector<8xf32>
    %172 = vector.shape_cast %171 : vector<8xf32> to vector<8x1xf32>
    %173 = vector.broadcast %172 : vector<8x1xf32> to vector<8x8xf32>
    %174 = arith.subf %170, %173 : vector<8x8xf32>
    %175 = math.exp %174 : vector<8x8xf32>
    %cst_48 = arith.constant dense<0.000000e+00> : vector<8xf32>
    %176 = vector.multi_reduction <add>, %175, %cst_48 [1] : vector<8x8xf32> to vector<8xf32>
    %177 = vector.shape_cast %176 : vector<8xf32> to vector<8x1xf32>
    %178 = tpu.reciprocal %177 {approx = true} : vector<8x1xf32> -> vector<8x1xf32>
    %179 = vector.broadcast %178 : vector<8x1xf32> to vector<8x8xf32>
    %180 = arith.mulf %175, %179 : vector<8x8xf32>
    %181 = arith.truncf %180 : vector<8x8xf32> to vector<8x8xbf16>
    %cst_49 = arith.constant dense<0.000000e+00> : vector<8x8xf32>
    %182 = tpu.matmul %181, %167, %cst_49 {dimension_numbers = #tpu.dot_dimension_numbers<[1], [0], [0], [1], [0, 0, 1, 1], [], []>} : vector<8x8xbf16>, vector<8x8xbf16>, vector<8x8xf32> -> vector<8x8xf32>
    %183 = vector.extract_strided_slice %116 {offsets = [0, 24], sizes = [8, 8], strides = [1, 1]} : vector<8x32xf32> to vector<8x8xf32>
    %184 = arith.truncf %183 : vector<8x8xf32> to vector<8x8xbf16>
    %185 = vector.extract_strided_slice %117 {offsets = [0, 24], sizes = [8, 8], strides = [1, 1]} : vector<8x32xf32> to vector<8x8xf32>
    %186 = arith.truncf %185 : vector<8x8xf32> to vector<8x8xbf16>
    %187 = vector.extract_strided_slice %118 {offsets = [0, 24], sizes = [8, 8], strides = [1, 1]} : vector<8x32xf32> to vector<8x8xf32>
    %188 = arith.truncf %187 : vector<8x8xf32> to vector<8x8xbf16>
    %cst_50 = arith.constant dense<0.000000e+00> : vector<8x8xf32>
    %189 = tpu.matmul %184, %186, %cst_50 {dimension_numbers = #tpu.dot_dimension_numbers<[1], [1], [0], [0], [0, 0, 1, 0], [], []>} : vector<8x8xbf16>, vector<8x8xbf16>, vector<8x8xf32> -> vector<8x8xf32>
    %190 = vector.broadcast %119 : vector<1x8xf32> to vector<8x8xf32>
    %191 = arith.addf %189, %190 : vector<8x8xf32>
    %cst_51 = arith.constant dense<0xFF800000> : vector<8xf32>
    %192 = vector.multi_reduction <maximumf>, %191, %cst_51 [1] : vector<8x8xf32> to vector<8xf32>
    %193 = vector.shape_cast %192 : vector<8xf32> to vector<8x1xf32>
    %194 = vector.broadcast %193 : vector<8x1xf32> to vector<8x8xf32>
    %195 = arith.subf %191, %194 : vector<8x8xf32>
    %196 = math.exp %195 : vector<8x8xf32>
    %cst_52 = arith.constant dense<0.000000e+00> : vector<8xf32>
    %197 = vector.multi_reduction <add>, %196, %cst_52 [1] : vector<8x8xf32> to vector<8xf32>
    %198 = vector.shape_cast %197 : vector<8xf32> to vector<8x1xf32>
    %199 = tpu.reciprocal %198 {approx = true} : vector<8x1xf32> -> vector<8x1xf32>
    %200 = vector.broadcast %199 : vector<8x1xf32> to vector<8x8xf32>
    %201 = arith.mulf %196, %200 : vector<8x8xf32>
    %202 = arith.truncf %201 : vector<8x8xf32> to vector<8x8xbf16>
    %cst_53 = arith.constant dense<0.000000e+00> : vector<8x8xf32>
    %203 = tpu.matmul %202, %188, %cst_53 {dimension_numbers = #tpu.dot_dimension_numbers<[1], [0], [0], [1], [0, 0, 1, 1], [], []>} : vector<8x8xbf16>, vector<8x8xbf16>, vector<8x8xf32> -> vector<8x8xf32>
    %204 = tpu.concatenate %140, %161, %182, %203 in 1 : vector<8x8xf32>, vector<8x8xf32>, vector<8x8xf32>, vector<8x8xf32> -> vector<8x32xf32>
    %205 = tpu.concatenate %115, %204 in 0 : vector<8x32xf32>, vector<8x32xf32> -> vector<16x32xf32>
    %206 = arith.truncf %205 : vector<16x32xf32> to vector<16x32xbf16>
    %c0_54 = arith.constant 0 : index
    %c0_55 = arith.constant 0 : index
    %207 = vector.load %arg11[%c0_54, %c0_55] : memref<32x32xf32, #tpu.memory_space<vmem>>, vector<32x32xf32>
    %208 = arith.truncf %207 : vector<32x32xf32> to vector<32x32xbf16>
    %cst_56 = arith.constant dense<0.000000e+00> : vector<16x32xf32>
    %209 = tpu.matmul %206, %208, %cst_56 {dimension_numbers = #tpu.dot_dimension_numbers<[1], [0], [0], [1], [0, 0, 1, 1], [], []>} : vector<16x32xbf16>, vector<32x32xbf16>, vector<16x32xf32> -> vector<16x32xf32>
    %c0_57 = arith.constant 0 : index
    %c0_58 = arith.constant 0 : index
    %210 = vector.load %arg12[%c0_57, %c0_58] : memref<1x32xf32, #tpu.memory_space<vmem>>, vector<1x32xf32>
    %211 = vector.broadcast %210 : vector<1x32xf32> to vector<16x32xf32>
    %212 = arith.addf %209, %211 : vector<16x32xf32>
    %c0_59 = arith.constant 0 : index
    %c0_60 = arith.constant 0 : index
    %213 = vector.load %arg3[%c0_59, %c0_60] : memref<16x32xf32, #tpu.memory_space<vmem>>, vector<16x32xf32>
    %214 = arith.addf %213, %212 : vector<16x32xf32>
    %c0_61 = arith.constant 0 : index
    %c0_62 = arith.constant 0 : index
    %215 = vector.load %arg13[%c0_61, %c0_62] : memref<1x32xf32, #tpu.memory_space<vmem>>, vector<1x32xf32>
    %c0_63 = arith.constant 0 : index
    %c0_64 = arith.constant 0 : index
    %216 = vector.load %arg14[%c0_63, %c0_64] : memref<1x32xf32, #tpu.memory_space<vmem>>, vector<1x32xf32>
    %cst_65 = arith.constant dense<0.000000e+00> : vector<16xf32>
    %217 = vector.multi_reduction <add>, %214, %cst_65 [1] : vector<16x32xf32> to vector<16xf32>
    %218 = vector.shape_cast %217 : vector<16xf32> to vector<16x1xf32>
    %cst_66 = arith.constant 3.200000e+01 : f32
    %219 = vector.broadcast %cst_66 : f32 to vector<16x1xf32>
    %220 = arith.divf %218, %219 : vector<16x1xf32>
    %221 = vector.broadcast %220 : vector<16x1xf32> to vector<16x32xf32>
    %222 = arith.subf %214, %221 : vector<16x32xf32>
    %223 = arith.mulf %222, %222 : vector<16x32xf32>
    %cst_67 = arith.constant dense<0.000000e+00> : vector<16xf32>
    %224 = vector.multi_reduction <add>, %223, %cst_67 [1] : vector<16x32xf32> to vector<16xf32>
    %225 = vector.shape_cast %224 : vector<16xf32> to vector<16x1xf32>
    %cst_68 = arith.constant 3.200000e+01 : f32
    %226 = vector.broadcast %cst_68 : f32 to vector<16x1xf32>
    %227 = arith.divf %225, %226 : vector<16x1xf32>
    %cst_69 = arith.constant 9.99999974E-6 : f32
    %228 = vector.broadcast %cst_69 : f32 to vector<16x1xf32>
    %229 = arith.addf %227, %228 : vector<16x1xf32>
    %230 = math.rsqrt %229 : vector<16x1xf32>
    %231 = vector.broadcast %230 : vector<16x1xf32> to vector<16x32xf32>
    %232 = arith.mulf %222, %231 : vector<16x32xf32>
    %233 = vector.broadcast %215 : vector<1x32xf32> to vector<16x32xf32>
    %234 = arith.mulf %232, %233 : vector<16x32xf32>
    %235 = vector.broadcast %216 : vector<1x32xf32> to vector<16x32xf32>
    %236 = arith.addf %234, %235 : vector<16x32xf32>
    %c0_70 = arith.constant 0 : index
    %c0_71 = arith.constant 0 : index
    %237 = vector.load %arg15[%c0_70, %c0_71] : memref<16x32xf32, #tpu.memory_space<vmem>>, vector<16x32xf32>
    tpu.vector_store %arg15[%c0_70, %c0_71], %236 {strides = array<i32>} : memref<16x32xf32, #tpu.memory_space<vmem>>, vector<16x32xf32>,
    return
  }
}

module attributes {stable_mosaic.version = 11 : i64} {
  func.func @_fused_mha_kernel(%arg0: memref<32x32xf32, #tpu.memory_space<vmem>>, %arg1: memref<32x32xf32, #tpu.memory_space<vmem>>, %arg2: memref<32x32xf32, #tpu.memory_space<vmem>>, %arg3: memref<32x32xf32, #tpu.memory_space<vmem>>, %arg4: memref<2x16xf32, #tpu.memory_space<vmem>>, %arg5: memref<32x32xf32, #tpu.memory_space<vmem>>, %arg6: memref<1x32xf32, #tpu.memory_space<vmem>>, %arg7: memref<32x32xf32, #tpu.memory_space<vmem>>, %arg8: memref<1x32xf32, #tpu.memory_space<vmem>>, %arg9: memref<32x32xf32, #tpu.memory_space<vmem>>, %arg10: memref<1x32xf32, #tpu.memory_space<vmem>>, %arg11: memref<32x32xf32, #tpu.memory_space<vmem>>, %arg12: memref<1x32xf32, #tpu.memory_space<vmem>>, %arg13: memref<1x32xf32, #tpu.memory_space<vmem>>, %arg14: memref<1x32xf32, #tpu.memory_space<vmem>>, %arg15: memref<32x32xf32, #tpu.memory_space<vmem>>) attributes {dimension_semantics = [], scalar_prefetch = 0 : i64, scratch_operands = 0 : i64, tpu.core_type = #tpu.core_type<tc>} {
    %c0 = arith.constant 0 : index
    %c0_0 = arith.constant 0 : index
    %0 = vector.load %arg0[%c0, %c0_0] : memref<32x32xf32, #tpu.memory_space<vmem>>, vector<32x32xf32>
    %1 = arith.truncf %0 : vector<32x32xf32> to vector<32x32xbf16>
    %c0_1 = arith.constant 0 : index
    %c0_2 = arith.constant 0 : index
    %2 = vector.load %arg5[%c0_1, %c0_2] : memref<32x32xf32, #tpu.memory_space<vmem>>, vector<32x32xf32>
    %3 = arith.truncf %2 : vector<32x32xf32> to vector<32x32xbf16>
    %cst = arith.constant dense<0.000000e+00> : vector<32x32xf32>
    %4 = tpu.matmul %1, %3, %cst {dimension_numbers = #tpu.dot_dimension_numbers<[1], [0], [0], [1], [0, 0, 1, 1], [], []>} : vector<32x32xbf16>, vector<32x32xbf16>, vector<32x32xf32> -> vector<32x32xf32>
    %c0_3 = arith.constant 0 : index
    %c0_4 = arith.constant 0 : index
    %5 = vector.load %arg6[%c0_3, %c0_4] : memref<1x32xf32, #tpu.memory_space<vmem>>, vector<1x32xf32>
    %6 = vector.broadcast %5 : vector<1x32xf32> to vector<32x32xf32>
    %7 = arith.addf %4, %6 : vector<32x32xf32>
    %cst_5 = arith.constant 0.353553385 : f32
    %8 = vector.broadcast %cst_5 : f32 to vector<32x32xf32>
    %9 = arith.mulf %7, %8 : vector<32x32xf32>
    %c0_6 = arith.constant 0 : index
    %c0_7 = arith.constant 0 : index
    %10 = vector.load %arg1[%c0_6, %c0_7] : memref<32x32xf32, #tpu.memory_space<vmem>>, vector<32x32xf32>
    %11 = arith.truncf %10 : vector<32x32xf32> to vector<32x32xbf16>
    %c0_8 = arith.constant 0 : index
    %c0_9 = arith.constant 0 : index
    %12 = vector.load %arg7[%c0_8, %c0_9] : memref<32x32xf32, #tpu.memory_space<vmem>>, vector<32x32xf32>
    %13 = arith.truncf %12 : vector<32x32xf32> to vector<32x32xbf16>
    %cst_10 = arith.constant dense<0.000000e+00> : vector<32x32xf32>
    %14 = tpu.matmul %11, %13, %cst_10 {dimension_numbers = #tpu.dot_dimension_numbers<[1], [0], [0], [1], [0, 0, 1, 1], [], []>} : vector<32x32xbf16>, vector<32x32xbf16>, vector<32x32xf32> -> vector<32x32xf32>
    %c0_11 = arith.constant 0 : index
    %c0_12 = arith.constant 0 : index
    %15 = vector.load %arg8[%c0_11, %c0_12] : memref<1x32xf32, #tpu.memory_space<vmem>>, vector<1x32xf32>
    %16 = vector.broadcast %15 : vector<1x32xf32> to vector<32x32xf32>
    %17 = arith.addf %14, %16 : vector<32x32xf32>
    %c0_13 = arith.constant 0 : index
    %c0_14 = arith.constant 0 : index
    %18 = vector.load %arg2[%c0_13, %c0_14] : memref<32x32xf32, #tpu.memory_space<vmem>>, vector<32x32xf32>
    %19 = arith.truncf %18 : vector<32x32xf32> to vector<32x32xbf16>
    %c0_15 = arith.constant 0 : index
    %c0_16 = arith.constant 0 : index
    %20 = vector.load %arg9[%c0_15, %c0_16] : memref<32x32xf32, #tpu.memory_space<vmem>>, vector<32x32xf32>
    %21 = arith.truncf %20 : vector<32x32xf32> to vector<32x32xbf16>
    %cst_17 = arith.constant dense<0.000000e+00> : vector<32x32xf32>
    %22 = tpu.matmul %19, %21, %cst_17 {dimension_numbers = #tpu.dot_dimension_numbers<[1], [0], [0], [1], [0, 0, 1, 1], [], []>} : vector<32x32xbf16>, vector<32x32xbf16>, vector<32x32xf32> -> vector<32x32xf32>
    %c0_18 = arith.constant 0 : index
    %c0_19 = arith.constant 0 : index
    %23 = vector.load %arg10[%c0_18, %c0_19] : memref<1x32xf32, #tpu.memory_space<vmem>>, vector<1x32xf32>
    %24 = vector.broadcast %23 : vector<1x32xf32> to vector<32x32xf32>
    %25 = arith.addf %22, %24 : vector<32x32xf32>
    %c0_20 = arith.constant 0 : index
    %c0_21 = arith.constant 0 : index
    %26 = vector.load %arg4[%c0_20, %c0_21] : memref<2x16xf32, #tpu.memory_space<vmem>>, vector<2x16xf32>
    %27 = vector.extract_strided_slice %9 {offsets = [0, 0], sizes = [16, 32], strides = [1, 1]} : vector<32x32xf32> to vector<16x32xf32>
    %28 = vector.extract_strided_slice %17 {offsets = [0, 0], sizes = [16, 32], strides = [1, 1]} : vector<32x32xf32> to vector<16x32xf32>
    %29 = vector.extract_strided_slice %25 {offsets = [0, 0], sizes = [16, 32], strides = [1, 1]} : vector<32x32xf32> to vector<16x32xf32>
    %30 = vector.extract_strided_slice %26 {offsets = [0, 0], sizes = [1, 16], strides = [1, 1]} : vector<2x16xf32> to vector<1x16xf32>
    %31 = vector.extract_strided_slice %27 {offsets = [0, 0], sizes = [16, 8], strides = [1, 1]} : vector<16x32xf32> to vector<16x8xf32>
    %32 = arith.truncf %31 : vector<16x8xf32> to vector<16x8xbf16>
    %33 = vector.extract_strided_slice %28 {offsets = [0, 0], sizes = [16, 8], strides = [1, 1]} : vector<16x32xf32> to vector<16x8xf32>
    %34 = arith.truncf %33 : vector<16x8xf32> to vector<16x8xbf16>
    %35 = vector.extract_strided_slice %29 {offsets = [0, 0], sizes = [16, 8], strides = [1, 1]} : vector<16x32xf32> to vector<16x8xf32>
    %36 = arith.truncf %35 : vector<16x8xf32> to vector<16x8xbf16>
    %cst_22 = arith.constant dense<0.000000e+00> : vector<16x16xf32>
    %37 = tpu.matmul %32, %34, %cst_22 {dimension_numbers = #tpu.dot_dimension_numbers<[1], [1], [0], [0], [0, 0, 1, 0], [], []>} : vector<16x8xbf16>, vector<16x8xbf16>, vector<16x16xf32> -> vector<16x16xf32>
    %38 = vector.broadcast %30 : vector<1x16xf32> to vector<16x16xf32>
    %39 = arith.addf %37, %38 : vector<16x16xf32>
    %cst_23 = arith.constant dense<0xFF800000> : vector<16xf32>
    %40 = vector.multi_reduction <maximumf>, %39, %cst_23 [1] : vector<16x16xf32> to vector<16xf32>
    %41 = vector.shape_cast %40 : vector<16xf32> to vector<16x1xf32>
    %42 = vector.broadcast %41 : vector<16x1xf32> to vector<16x16xf32>
    %43 = arith.subf %39, %42 : vector<16x16xf32>
    %44 = math.exp %43 : vector<16x16xf32>
    %cst_24 = arith.constant dense<0.000000e+00> : vector<16xf32>
    %45 = vector.multi_reduction <add>, %44, %cst_24 [1] : vector<16x16xf32> to vector<16xf32>
    %46 = vector.shape_cast %45 : vector<16xf32> to vector<16x1xf32>
    %47 = tpu.reciprocal %46 {approx = true} : vector<16x1xf32> -> vector<16x1xf32>
    %48 = vector.broadcast %47 : vector<16x1xf32> to vector<16x16xf32>
    %49 = arith.mulf %44, %48 : vector<16x16xf32>
    %50 = arith.truncf %49 : vector<16x16xf32> to vector<16x16xbf16>
    %cst_25 = arith.constant dense<0.000000e+00> : vector<16x8xf32>
    %51 = tpu.matmul %50, %36, %cst_25 {dimension_numbers = #tpu.dot_dimension_numbers<[1], [0], [0], [1], [0, 0, 1, 1], [], []>} : vector<16x16xbf16>, vector<16x8xbf16>, vector<16x8xf32> -> vector<16x8xf32>
    %52 = vector.extract_strided_slice %27 {offsets = [0, 8], sizes = [16, 8], strides = [1, 1]} : vector<16x32xf32> to vector<16x8xf32>
    %53 = arith.truncf %52 : vector<16x8xf32> to vector<16x8xbf16>
    %54 = vector.extract_strided_slice %28 {offsets = [0, 8], sizes = [16, 8], strides = [1, 1]} : vector<16x32xf32> to vector<16x8xf32>
    %55 = arith.truncf %54 : vector<16x8xf32> to vector<16x8xbf16>
    %56 = vector.extract_strided_slice %29 {offsets = [0, 8], sizes = [16, 8], strides = [1, 1]} : vector<16x32xf32> to vector<16x8xf32>
    %57 = arith.truncf %56 : vector<16x8xf32> to vector<16x8xbf16>
    %cst_26 = arith.constant dense<0.000000e+00> : vector<16x16xf32>
    %58 = tpu.matmul %53, %55, %cst_26 {dimension_numbers = #tpu.dot_dimension_numbers<[1], [1], [0], [0], [0, 0, 1, 0], [], []>} : vector<16x8xbf16>, vector<16x8xbf16>, vector<16x16xf32> -> vector<16x16xf32>
    %59 = vector.broadcast %30 : vector<1x16xf32> to vector<16x16xf32>
    %60 = arith.addf %58, %59 : vector<16x16xf32>
    %cst_27 = arith.constant dense<0xFF800000> : vector<16xf32>
    %61 = vector.multi_reduction <maximumf>, %60, %cst_27 [1] : vector<16x16xf32> to vector<16xf32>
    %62 = vector.shape_cast %61 : vector<16xf32> to vector<16x1xf32>
    %63 = vector.broadcast %62 : vector<16x1xf32> to vector<16x16xf32>
    %64 = arith.subf %60, %63 : vector<16x16xf32>
    %65 = math.exp %64 : vector<16x16xf32>
    %cst_28 = arith.constant dense<0.000000e+00> : vector<16xf32>
    %66 = vector.multi_reduction <add>, %65, %cst_28 [1] : vector<16x16xf32> to vector<16xf32>
    %67 = vector.shape_cast %66 : vector<16xf32> to vector<16x1xf32>
    %68 = tpu.reciprocal %67 {approx = true} : vector<16x1xf32> -> vector<16x1xf32>
    %69 = vector.broadcast %68 : vector<16x1xf32> to vector<16x16xf32>
    %70 = arith.mulf %65, %69 : vector<16x16xf32>
    %71 = arith.truncf %70 : vector<16x16xf32> to vector<16x16xbf16>
    %cst_29 = arith.constant dense<0.000000e+00> : vector<16x8xf32>
    %72 = tpu.matmul %71, %57, %cst_29 {dimension_numbers = #tpu.dot_dimension_numbers<[1], [0], [0], [1], [0, 0, 1, 1], [], []>} : vector<16x16xbf16>, vector<16x8xbf16>, vector<16x8xf32> -> vector<16x8xf32>
    %73 = vector.extract_strided_slice %27 {offsets = [0, 16], sizes = [16, 8], strides = [1, 1]} : vector<16x32xf32> to vector<16x8xf32>
    %74 = arith.truncf %73 : vector<16x8xf32> to vector<16x8xbf16>
    %75 = vector.extract_strided_slice %28 {offsets = [0, 16], sizes = [16, 8], strides = [1, 1]} : vector<16x32xf32> to vector<16x8xf32>
    %76 = arith.truncf %75 : vector<16x8xf32> to vector<16x8xbf16>
    %77 = vector.extract_strided_slice %29 {offsets = [0, 16], sizes = [16, 8], strides = [1, 1]} : vector<16x32xf32> to vector<16x8xf32>
    %78 = arith.truncf %77 : vector<16x8xf32> to vector<16x8xbf16>
    %cst_30 = arith.constant dense<0.000000e+00> : vector<16x16xf32>
    %79 = tpu.matmul %74, %76, %cst_30 {dimension_numbers = #tpu.dot_dimension_numbers<[1], [1], [0], [0], [0, 0, 1, 0], [], []>} : vector<16x8xbf16>, vector<16x8xbf16>, vector<16x16xf32> -> vector<16x16xf32>
    %80 = vector.broadcast %30 : vector<1x16xf32> to vector<16x16xf32>
    %81 = arith.addf %79, %80 : vector<16x16xf32>
    %cst_31 = arith.constant dense<0xFF800000> : vector<16xf32>
    %82 = vector.multi_reduction <maximumf>, %81, %cst_31 [1] : vector<16x16xf32> to vector<16xf32>
    %83 = vector.shape_cast %82 : vector<16xf32> to vector<16x1xf32>
    %84 = vector.broadcast %83 : vector<16x1xf32> to vector<16x16xf32>
    %85 = arith.subf %81, %84 : vector<16x16xf32>
    %86 = math.exp %85 : vector<16x16xf32>
    %cst_32 = arith.constant dense<0.000000e+00> : vector<16xf32>
    %87 = vector.multi_reduction <add>, %86, %cst_32 [1] : vector<16x16xf32> to vector<16xf32>
    %88 = vector.shape_cast %87 : vector<16xf32> to vector<16x1xf32>
    %89 = tpu.reciprocal %88 {approx = true} : vector<16x1xf32> -> vector<16x1xf32>
    %90 = vector.broadcast %89 : vector<16x1xf32> to vector<16x16xf32>
    %91 = arith.mulf %86, %90 : vector<16x16xf32>
    %92 = arith.truncf %91 : vector<16x16xf32> to vector<16x16xbf16>
    %cst_33 = arith.constant dense<0.000000e+00> : vector<16x8xf32>
    %93 = tpu.matmul %92, %78, %cst_33 {dimension_numbers = #tpu.dot_dimension_numbers<[1], [0], [0], [1], [0, 0, 1, 1], [], []>} : vector<16x16xbf16>, vector<16x8xbf16>, vector<16x8xf32> -> vector<16x8xf32>
    %94 = vector.extract_strided_slice %27 {offsets = [0, 24], sizes = [16, 8], strides = [1, 1]} : vector<16x32xf32> to vector<16x8xf32>
    %95 = arith.truncf %94 : vector<16x8xf32> to vector<16x8xbf16>
    %96 = vector.extract_strided_slice %28 {offsets = [0, 24], sizes = [16, 8], strides = [1, 1]} : vector<16x32xf32> to vector<16x8xf32>
    %97 = arith.truncf %96 : vector<16x8xf32> to vector<16x8xbf16>
    %98 = vector.extract_strided_slice %29 {offsets = [0, 24], sizes = [16, 8], strides = [1, 1]} : vector<16x32xf32> to vector<16x8xf32>
    %99 = arith.truncf %98 : vector<16x8xf32> to vector<16x8xbf16>
    %cst_34 = arith.constant dense<0.000000e+00> : vector<16x16xf32>
    %100 = tpu.matmul %95, %97, %cst_34 {dimension_numbers = #tpu.dot_dimension_numbers<[1], [1], [0], [0], [0, 0, 1, 0], [], []>} : vector<16x8xbf16>, vector<16x8xbf16>, vector<16x16xf32> -> vector<16x16xf32>
    %101 = vector.broadcast %30 : vector<1x16xf32> to vector<16x16xf32>
    %102 = arith.addf %100, %101 : vector<16x16xf32>
    %cst_35 = arith.constant dense<0xFF800000> : vector<16xf32>
    %103 = vector.multi_reduction <maximumf>, %102, %cst_35 [1] : vector<16x16xf32> to vector<16xf32>
    %104 = vector.shape_cast %103 : vector<16xf32> to vector<16x1xf32>
    %105 = vector.broadcast %104 : vector<16x1xf32> to vector<16x16xf32>
    %106 = arith.subf %102, %105 : vector<16x16xf32>
    %107 = math.exp %106 : vector<16x16xf32>
    %cst_36 = arith.constant dense<0.000000e+00> : vector<16xf32>
    %108 = vector.multi_reduction <add>, %107, %cst_36 [1] : vector<16x16xf32> to vector<16xf32>
    %109 = vector.shape_cast %108 : vector<16xf32> to vector<16x1xf32>
    %110 = tpu.reciprocal %109 {approx = true} : vector<16x1xf32> -> vector<16x1xf32>
    %111 = vector.broadcast %110 : vector<16x1xf32> to vector<16x16xf32>
    %112 = arith.mulf %107, %111 : vector<16x16xf32>
    %113 = arith.truncf %112 : vector<16x16xf32> to vector<16x16xbf16>
    %cst_37 = arith.constant dense<0.000000e+00> : vector<16x8xf32>
    %114 = tpu.matmul %113, %99, %cst_37 {dimension_numbers = #tpu.dot_dimension_numbers<[1], [0], [0], [1], [0, 0, 1, 1], [], []>} : vector<16x16xbf16>, vector<16x8xbf16>, vector<16x8xf32> -> vector<16x8xf32>
    %115 = tpu.concatenate %51, %72, %93, %114 in 1 : vector<16x8xf32>, vector<16x8xf32>, vector<16x8xf32>, vector<16x8xf32> -> vector<16x32xf32>
    %116 = vector.extract_strided_slice %9 {offsets = [16, 0], sizes = [16, 32], strides = [1, 1]} : vector<32x32xf32> to vector<16x32xf32>
    %117 = vector.extract_strided_slice %17 {offsets = [16, 0], sizes = [16, 32], strides = [1, 1]} : vector<32x32xf32> to vector<16x32xf32>
    %118 = vector.extract_strided_slice %25 {offsets = [16, 0], sizes = [16, 32], strides = [1, 1]} : vector<32x32xf32> to vector<16x32xf32>
    %119 = vector.extract_strided_slice %26 {offsets = [1, 0], sizes = [1, 16], strides = [1, 1]} : vector<2x16xf32> to vector<1x16xf32>
    %120 = vector.extract_strided_slice %116 {offsets = [0, 0], sizes = [16, 8], strides = [1, 1]} : vector<16x32xf32> to vector<16x8xf32>
    %121 = arith.truncf %120 : vector<16x8xf32> to vector<16x8xbf16>
    %122 = vector.extract_strided_slice %117 {offsets = [0, 0], sizes = [16, 8], strides = [1, 1]} : vector<16x32xf32> to vector<16x8xf32>
    %123 = arith.truncf %122 : vector<16x8xf32> to vector<16x8xbf16>
    %124 = vector.extract_strided_slice %118 {offsets = [0, 0], sizes = [16, 8], strides = [1, 1]} : vector<16x32xf32> to vector<16x8xf32>
    %125 = arith.truncf %124 : vector<16x8xf32> to vector<16x8xbf16>
    %cst_38 = arith.constant dense<0.000000e+00> : vector<16x16xf32>
    %126 = tpu.matmul %121, %123, %cst_38 {dimension_numbers = #tpu.dot_dimension_numbers<[1], [1], [0], [0], [0, 0, 1, 0], [], []>} : vector<16x8xbf16>, vector<16x8xbf16>, vector<16x16xf32> -> vector<16x16xf32>
    %127 = vector.broadcast %119 : vector<1x16xf32> to vector<16x16xf32>
    %128 = arith.addf %126, %127 : vector<16x16xf32>
    %cst_39 = arith.constant dense<0xFF800000> : vector<16xf32>
    %129 = vector.multi_reduction <maximumf>, %128, %cst_39 [1] : vector<16x16xf32> to vector<16xf32>
    %130 = vector.shape_cast %129 : vector<16xf32> to vector<16x1xf32>
    %131 = vector.broadcast %130 : vector<16x1xf32> to vector<16x16xf32>
    %132 = arith.subf %128, %131 : vector<16x16xf32>
    %133 = math.exp %132 : vector<16x16xf32>
    %cst_40 = arith.constant dense<0.000000e+00> : vector<16xf32>
    %134 = vector.multi_reduction <add>, %133, %cst_40 [1] : vector<16x16xf32> to vector<16xf32>
    %135 = vector.shape_cast %134 : vector<16xf32> to vector<16x1xf32>
    %136 = tpu.reciprocal %135 {approx = true} : vector<16x1xf32> -> vector<16x1xf32>
    %137 = vector.broadcast %136 : vector<16x1xf32> to vector<16x16xf32>
    %138 = arith.mulf %133, %137 : vector<16x16xf32>
    %139 = arith.truncf %138 : vector<16x16xf32> to vector<16x16xbf16>
    %cst_41 = arith.constant dense<0.000000e+00> : vector<16x8xf32>
    %140 = tpu.matmul %139, %125, %cst_41 {dimension_numbers = #tpu.dot_dimension_numbers<[1], [0], [0], [1], [0, 0, 1, 1], [], []>} : vector<16x16xbf16>, vector<16x8xbf16>, vector<16x8xf32> -> vector<16x8xf32>
    %141 = vector.extract_strided_slice %116 {offsets = [0, 8], sizes = [16, 8], strides = [1, 1]} : vector<16x32xf32> to vector<16x8xf32>
    %142 = arith.truncf %141 : vector<16x8xf32> to vector<16x8xbf16>
    %143 = vector.extract_strided_slice %117 {offsets = [0, 8], sizes = [16, 8], strides = [1, 1]} : vector<16x32xf32> to vector<16x8xf32>
    %144 = arith.truncf %143 : vector<16x8xf32> to vector<16x8xbf16>
    %145 = vector.extract_strided_slice %118 {offsets = [0, 8], sizes = [16, 8], strides = [1, 1]} : vector<16x32xf32> to vector<16x8xf32>
    %146 = arith.truncf %145 : vector<16x8xf32> to vector<16x8xbf16>
    %cst_42 = arith.constant dense<0.000000e+00> : vector<16x16xf32>
    %147 = tpu.matmul %142, %144, %cst_42 {dimension_numbers = #tpu.dot_dimension_numbers<[1], [1], [0], [0], [0, 0, 1, 0], [], []>} : vector<16x8xbf16>, vector<16x8xbf16>, vector<16x16xf32> -> vector<16x16xf32>
    %148 = vector.broadcast %119 : vector<1x16xf32> to vector<16x16xf32>
    %149 = arith.addf %147, %148 : vector<16x16xf32>
    %cst_43 = arith.constant dense<0xFF800000> : vector<16xf32>
    %150 = vector.multi_reduction <maximumf>, %149, %cst_43 [1] : vector<16x16xf32> to vector<16xf32>
    %151 = vector.shape_cast %150 : vector<16xf32> to vector<16x1xf32>
    %152 = vector.broadcast %151 : vector<16x1xf32> to vector<16x16xf32>
    %153 = arith.subf %149, %152 : vector<16x16xf32>
    %154 = math.exp %153 : vector<16x16xf32>
    %cst_44 = arith.constant dense<0.000000e+00> : vector<16xf32>
    %155 = vector.multi_reduction <add>, %154, %cst_44 [1] : vector<16x16xf32> to vector<16xf32>
    %156 = vector.shape_cast %155 : vector<16xf32> to vector<16x1xf32>
    %157 = tpu.reciprocal %156 {approx = true} : vector<16x1xf32> -> vector<16x1xf32>
    %158 = vector.broadcast %157 : vector<16x1xf32> to vector<16x16xf32>
    %159 = arith.mulf %154, %158 : vector<16x16xf32>
    %160 = arith.truncf %159 : vector<16x16xf32> to vector<16x16xbf16>
    %cst_45 = arith.constant dense<0.000000e+00> : vector<16x8xf32>
    %161 = tpu.matmul %160, %146, %cst_45 {dimension_numbers = #tpu.dot_dimension_numbers<[1], [0], [0], [1], [0, 0, 1, 1], [], []>} : vector<16x16xbf16>, vector<16x8xbf16>, vector<16x8xf32> -> vector<16x8xf32>
    %162 = vector.extract_strided_slice %116 {offsets = [0, 16], sizes = [16, 8], strides = [1, 1]} : vector<16x32xf32> to vector<16x8xf32>
    %163 = arith.truncf %162 : vector<16x8xf32> to vector<16x8xbf16>
    %164 = vector.extract_strided_slice %117 {offsets = [0, 16], sizes = [16, 8], strides = [1, 1]} : vector<16x32xf32> to vector<16x8xf32>
    %165 = arith.truncf %164 : vector<16x8xf32> to vector<16x8xbf16>
    %166 = vector.extract_strided_slice %118 {offsets = [0, 16], sizes = [16, 8], strides = [1, 1]} : vector<16x32xf32> to vector<16x8xf32>
    %167 = arith.truncf %166 : vector<16x8xf32> to vector<16x8xbf16>
    %cst_46 = arith.constant dense<0.000000e+00> : vector<16x16xf32>
    %168 = tpu.matmul %163, %165, %cst_46 {dimension_numbers = #tpu.dot_dimension_numbers<[1], [1], [0], [0], [0, 0, 1, 0], [], []>} : vector<16x8xbf16>, vector<16x8xbf16>, vector<16x16xf32> -> vector<16x16xf32>
    %169 = vector.broadcast %119 : vector<1x16xf32> to vector<16x16xf32>
    %170 = arith.addf %168, %169 : vector<16x16xf32>
    %cst_47 = arith.constant dense<0xFF800000> : vector<16xf32>
    %171 = vector.multi_reduction <maximumf>, %170, %cst_47 [1] : vector<16x16xf32> to vector<16xf32>
    %172 = vector.shape_cast %171 : vector<16xf32> to vector<16x1xf32>
    %173 = vector.broadcast %172 : vector<16x1xf32> to vector<16x16xf32>
    %174 = arith.subf %170, %173 : vector<16x16xf32>
    %175 = math.exp %174 : vector<16x16xf32>
    %cst_48 = arith.constant dense<0.000000e+00> : vector<16xf32>
    %176 = vector.multi_reduction <add>, %175, %cst_48 [1] : vector<16x16xf32> to vector<16xf32>
    %177 = vector.shape_cast %176 : vector<16xf32> to vector<16x1xf32>
    %178 = tpu.reciprocal %177 {approx = true} : vector<16x1xf32> -> vector<16x1xf32>
    %179 = vector.broadcast %178 : vector<16x1xf32> to vector<16x16xf32>
    %180 = arith.mulf %175, %179 : vector<16x16xf32>
    %181 = arith.truncf %180 : vector<16x16xf32> to vector<16x16xbf16>
    %cst_49 = arith.constant dense<0.000000e+00> : vector<16x8xf32>
    %182 = tpu.matmul %181, %167, %cst_49 {dimension_numbers = #tpu.dot_dimension_numbers<[1], [0], [0], [1], [0, 0, 1, 1], [], []>} : vector<16x16xbf16>, vector<16x8xbf16>, vector<16x8xf32> -> vector<16x8xf32>
    %183 = vector.extract_strided_slice %116 {offsets = [0, 24], sizes = [16, 8], strides = [1, 1]} : vector<16x32xf32> to vector<16x8xf32>
    %184 = arith.truncf %183 : vector<16x8xf32> to vector<16x8xbf16>
    %185 = vector.extract_strided_slice %117 {offsets = [0, 24], sizes = [16, 8], strides = [1, 1]} : vector<16x32xf32> to vector<16x8xf32>
    %186 = arith.truncf %185 : vector<16x8xf32> to vector<16x8xbf16>
    %187 = vector.extract_strided_slice %118 {offsets = [0, 24], sizes = [16, 8], strides = [1, 1]} : vector<16x32xf32> to vector<16x8xf32>
    %188 = arith.truncf %187 : vector<16x8xf32> to vector<16x8xbf16>
    %cst_50 = arith.constant dense<0.000000e+00> : vector<16x16xf32>
    %189 = tpu.matmul %184, %186, %cst_50 {dimension_numbers = #tpu.dot_dimension_numbers<[1], [1], [0], [0], [0, 0, 1, 0], [], []>} : vector<16x8xbf16>, vector<16x8xbf16>, vector<16x16xf32> -> vector<16x16xf32>
    %190 = vector.broadcast %119 : vector<1x16xf32> to vector<16x16xf32>
    %191 = arith.addf %189, %190 : vector<16x16xf32>
    %cst_51 = arith.constant dense<0xFF800000> : vector<16xf32>
    %192 = vector.multi_reduction <maximumf>, %191, %cst_51 [1] : vector<16x16xf32> to vector<16xf32>
    %193 = vector.shape_cast %192 : vector<16xf32> to vector<16x1xf32>
    %194 = vector.broadcast %193 : vector<16x1xf32> to vector<16x16xf32>
    %195 = arith.subf %191, %194 : vector<16x16xf32>
    %196 = math.exp %195 : vector<16x16xf32>
    %cst_52 = arith.constant dense<0.000000e+00> : vector<16xf32>
    %197 = vector.multi_reduction <add>, %196, %cst_52 [1] : vector<16x16xf32> to vector<16xf32>
    %198 = vector.shape_cast %197 : vector<16xf32> to vector<16x1xf32>
    %199 = tpu.reciprocal %198 {approx = true} : vector<16x1xf32> -> vector<16x1xf32>
    %200 = vector.broadcast %199 : vector<16x1xf32> to vector<16x16xf32>
    %201 = arith.mulf %196, %200 : vector<16x16xf32>
    %202 = arith.truncf %201 : vector<16x16xf32> to vector<16x16xbf16>
    %cst_53 = arith.constant dense<0.000000e+00> : vector<16x8xf32>
    %203 = tpu.matmul %202, %188, %cst_53 {dimension_numbers = #tpu.dot_dimension_numbers<[1], [0], [0], [1], [0, 0, 1, 1], [], []>} : vector<16x16xbf16>, vector<16x8xbf16>, vector<16x8xf32> -> vector<16x8xf32>
    %204 = tpu.concatenate %140, %161, %182, %203 in 1 : vector<16x8xf32>, vector<16x8xf32>, vector<16x8xf32>, vector<16x8xf32> -> vector<16x32xf32>
    %205 = tpu.concatenate %115, %204 in 0 : vector<16x32xf32>, vector<16x32xf32> -> vector<32x32xf32>
    %206 = arith.truncf %205 : vector<32x32xf32> to vector<32x32xbf16>
    %c0_54 = arith.constant 0 : index
    %c0_55 = arith.constant 0 : index
    %207 = vector.load %arg11[%c0_54, %c0_55] : memref<32x32xf32, #tpu.memory_space<vmem>>, vector<32x32xf32>
    %208 = arith.truncf %207 : vector<32x32xf32> to vector<32x32xbf16>
    %cst_56 = arith.constant dense<0.000000e+00> : vector<32x32xf32>
    %209 = tpu.matmul %206, %208, %cst_56 {dimension_numbers = #tpu.dot_dimension_numbers<[1], [0], [0], [1], [0, 0, 1, 1], [], []>} : vector<32x32xbf16>, vector<32x32xbf16>, vector<32x32xf32> -> vector<32x32xf32>
    %c0_57 = arith.constant 0 : index
    %c0_58 = arith.constant 0 : index
    %210 = vector.load %arg12[%c0_57, %c0_58] : memref<1x32xf32, #tpu.memory_space<vmem>>, vector<1x32xf32>
    %211 = vector.broadcast %210 : vector<1x32xf32> to vector<32x32xf32>
    %212 = arith.addf %209, %211 : vector<32x32xf32>
    %c0_59 = arith.constant 0 : index
    %c0_60 = arith.constant 0 : index
    %213 = vector.load %arg3[%c0_59, %c0_60] : memref<32x32xf32, #tpu.memory_space<vmem>>, vector<32x32xf32>
    %214 = arith.addf %213, %212 : vector<32x32xf32>
    %c0_61 = arith.constant 0 : index
    %c0_62 = arith.constant 0 : index
    %215 = vector.load %arg13[%c0_61, %c0_62] : memref<1x32xf32, #tpu.memory_space<vmem>>, vector<1x32xf32>
    %c0_63 = arith.constant 0 : index
    %c0_64 = arith.constant 0 : index
    %216 = vector.load %arg14[%c0_63, %c0_64] : memref<1x32xf32, #tpu.memory_space<vmem>>, vector<1x32xf32>
    %cst_65 = arith.constant dense<0.000000e+00> : vector<32xf32>
    %217 = vector.multi_reduction <add>, %214, %cst_65 [1] : vector<32x32xf32> to vector<32xf32>
    %218 = vector.shape_cast %217 : vector<32xf32> to vector<32x1xf32>
    %cst_66 = arith.constant 3.200000e+01 : f32
    %219 = vector.broadcast %cst_66 : f32 to vector<32x1xf32>
    %220 = arith.divf %218, %219 : vector<32x1xf32>
    %221 = vector.broadcast %220 : vector<32x1xf32> to vector<32x32xf32>
    %222 = arith.subf %214, %221 : vector<32x32xf32>
    %223 = arith.mulf %222, %222 : vector<32x32xf32>
    %cst_67 = arith.constant dense<0.000000e+00> : vector<32xf32>
    %224 = vector.multi_reduction <add>, %223, %cst_67 [1] : vector<32x32xf32> to vector<32xf32>
    %225 = vector.shape_cast %224 : vector<32xf32> to vector<32x1xf32>
    %cst_68 = arith.constant 3.200000e+01 : f32
    %226 = vector.broadcast %cst_68 : f32 to vector<32x1xf32>
    %227 = arith.divf %225, %226 : vector<32x1xf32>
    %cst_69 = arith.constant 9.99999974E-6 : f32
    %228 = vector.broadcast %cst_69 : f32 to vector<32x1xf32>
    %229 = arith.addf %227, %228 : vector<32x1xf32>
    %230 = math.rsqrt %229 : vector<32x1xf32>
    %231 = vector.broadcast %230 : vector<32x1xf32> to vector<32x32xf32>
    %232 = arith.mulf %222, %231 : vector<32x32xf32>
    %233 = vector.broadcast %215 : vector<1x32xf32> to vector<32x32xf32>
    %234 = arith.mulf %232, %233 : vector<32x32xf32>
    %235 = vector.broadcast %216 : vector<1x32xf32> to vector<32x32xf32>
    %236 = arith.addf %234, %235 : vector<32x32xf32>
    %c0_70 = arith.constant 0 : index
    %c0_71 = arith.constant 0 : index
    %237 = vector.load %arg15[%c0_70, %c0_71] : memref<32x32xf32, #tpu.memory_space<vmem>>, vector<32x32xf32>
    tpu.vector_store %arg15[%c0_70, %c0_71], %236 {strides = array<i32>} : memref<32x32xf32, #tpu.memory_space<vmem>>, vector<32x32xf32>,
    return
  }
}

module attributes {stable_mosaic.version = 11 : i64} {
  func.func @_fused_mha_kernel(%arg0: memref<16x32xf32, #tpu.memory_space<vmem>>, %arg1: memref<32x32xf32, #tpu.memory_space<vmem>>, %arg2: memref<32x32xf32, #tpu.memory_space<vmem>>, %arg3: memref<16x32xf32, #tpu.memory_space<vmem>>, %arg4: memref<2x16xf32, #tpu.memory_space<vmem>>, %arg5: memref<32x32xf32, #tpu.memory_space<vmem>>, %arg6: memref<1x32xf32, #tpu.memory_space<vmem>>, %arg7: memref<32x32xf32, #tpu.memory_space<vmem>>, %arg8: memref<1x32xf32, #tpu.memory_space<vmem>>, %arg9: memref<32x32xf32, #tpu.memory_space<vmem>>, %arg10: memref<1x32xf32, #tpu.memory_space<vmem>>, %arg11: memref<32x32xf32, #tpu.memory_space<vmem>>, %arg12: memref<1x32xf32, #tpu.memory_space<vmem>>, %arg13: memref<1x32xf32, #tpu.memory_space<vmem>>, %arg14: memref<1x32xf32, #tpu.memory_space<vmem>>, %arg15: memref<16x32xf32, #tpu.memory_space<vmem>>) attributes {dimension_semantics = [], scalar_prefetch = 0 : i64, scratch_operands = 0 : i64, tpu.core_type = #tpu.core_type<tc>} {
    %c0 = arith.constant 0 : index
    %c0_0 = arith.constant 0 : index
    %0 = vector.load %arg0[%c0, %c0_0] : memref<16x32xf32, #tpu.memory_space<vmem>>, vector<16x32xf32>
    %1 = arith.truncf %0 : vector<16x32xf32> to vector<16x32xbf16>
    %c0_1 = arith.constant 0 : index
    %c0_2 = arith.constant 0 : index
    %2 = vector.load %arg5[%c0_1, %c0_2] : memref<32x32xf32, #tpu.memory_space<vmem>>, vector<32x32xf32>
    %3 = arith.truncf %2 : vector<32x32xf32> to vector<32x32xbf16>
    %cst = arith.constant dense<0.000000e+00> : vector<16x32xf32>
    %4 = tpu.matmul %1, %3, %cst {dimension_numbers = #tpu.dot_dimension_numbers<[1], [0], [0], [1], [0, 0, 1, 1], [], []>} : vector<16x32xbf16>, vector<32x32xbf16>, vector<16x32xf32> -> vector<16x32xf32>
    %c0_3 = arith.constant 0 : index
    %c0_4 = arith.constant 0 : index
    %5 = vector.load %arg6[%c0_3, %c0_4] : memref<1x32xf32, #tpu.memory_space<vmem>>, vector<1x32xf32>
    %6 = vector.broadcast %5 : vector<1x32xf32> to vector<16x32xf32>
    %7 = arith.addf %4, %6 : vector<16x32xf32>
    %cst_5 = arith.constant 0.353553385 : f32
    %8 = vector.broadcast %cst_5 : f32 to vector<16x32xf32>
    %9 = arith.mulf %7, %8 : vector<16x32xf32>
    %c0_6 = arith.constant 0 : index
    %c0_7 = arith.constant 0 : index
    %10 = vector.load %arg1[%c0_6, %c0_7] : memref<32x32xf32, #tpu.memory_space<vmem>>, vector<32x32xf32>
    %11 = arith.truncf %10 : vector<32x32xf32> to vector<32x32xbf16>
    %c0_8 = arith.constant 0 : index
    %c0_9 = arith.constant 0 : index
    %12 = vector.load %arg7[%c0_8, %c0_9] : memref<32x32xf32, #tpu.memory_space<vmem>>, vector<32x32xf32>
    %13 = arith.truncf %12 : vector<32x32xf32> to vector<32x32xbf16>
    %cst_10 = arith.constant dense<0.000000e+00> : vector<32x32xf32>
    %14 = tpu.matmul %11, %13, %cst_10 {dimension_numbers = #tpu.dot_dimension_numbers<[1], [0], [0], [1], [0, 0, 1, 1], [], []>} : vector<32x32xbf16>, vector<32x32xbf16>, vector<32x32xf32> -> vector<32x32xf32>
    %c0_11 = arith.constant 0 : index
    %c0_12 = arith.constant 0 : index
    %15 = vector.load %arg8[%c0_11, %c0_12] : memref<1x32xf32, #tpu.memory_space<vmem>>, vector<1x32xf32>
    %16 = vector.broadcast %15 : vector<1x32xf32> to vector<32x32xf32>
    %17 = arith.addf %14, %16 : vector<32x32xf32>
    %c0_13 = arith.constant 0 : index
    %c0_14 = arith.constant 0 : index
    %18 = vector.load %arg2[%c0_13, %c0_14] : memref<32x32xf32, #tpu.memory_space<vmem>>, vector<32x32xf32>
    %19 = arith.truncf %18 : vector<32x32xf32> to vector<32x32xbf16>
    %c0_15 = arith.constant 0 : index
    %c0_16 = arith.constant 0 : index
    %20 = vector.load %arg9[%c0_15, %c0_16] : memref<32x32xf32, #tpu.memory_space<vmem>>, vector<32x32xf32>
    %21 = arith.truncf %20 : vector<32x32xf32> to vector<32x32xbf16>
    %cst_17 = arith.constant dense<0.000000e+00> : vector<32x32xf32>
    %22 = tpu.matmul %19, %21, %cst_17 {dimension_numbers = #tpu.dot_dimension_numbers<[1], [0], [0], [1], [0, 0, 1, 1], [], []>} : vector<32x32xbf16>, vector<32x32xbf16>, vector<32x32xf32> -> vector<32x32xf32>
    %c0_18 = arith.constant 0 : index
    %c0_19 = arith.constant 0 : index
    %23 = vector.load %arg10[%c0_18, %c0_19] : memref<1x32xf32, #tpu.memory_space<vmem>>, vector<1x32xf32>
    %24 = vector.broadcast %23 : vector<1x32xf32> to vector<32x32xf32>
    %25 = arith.addf %22, %24 : vector<32x32xf32>
    %c0_20 = arith.constant 0 : index
    %c0_21 = arith.constant 0 : index
    %26 = vector.load %arg4[%c0_20, %c0_21] : memref<2x16xf32, #tpu.memory_space<vmem>>, vector<2x16xf32>
    %27 = vector.extract_strided_slice %9 {offsets = [0, 0], sizes = [8, 32], strides = [1, 1]} : vector<16x32xf32> to vector<8x32xf32>
    %28 = vector.extract_strided_slice %17 {offsets = [0, 0], sizes = [16, 32], strides = [1, 1]} : vector<32x32xf32> to vector<16x32xf32>
    %29 = vector.extract_strided_slice %25 {offsets = [0, 0], sizes = [16, 32], strides = [1, 1]} : vector<32x32xf32> to vector<16x32xf32>
    %30 = vector.extract_strided_slice %26 {offsets = [0, 0], sizes = [1, 16], strides = [1, 1]} : vector<2x16xf32> to vector<1x16xf32>
    %31 = vector.extract_strided_slice %27 {offsets = [0, 0], sizes = [8, 8], strides = [1, 1]} : vector<8x32xf32> to vector<8x8xf32>
    %32 = arith.truncf %31 : vector<8x8xf32> to vector<8x8xbf16>
    %33 = vector.extract_strided_slice %28 {offsets = [0, 0], sizes = [16, 8], strides = [1, 1]} : vector<16x32xf32> to vector<16x8xf32>
    %34 = arith.truncf %33 : vector<16x8xf32> to vector<16x8xbf16>
    %35 = vector.extract_strided_slice %29 {offsets = [0, 0], sizes = [16, 8], strides = [1, 1]} : vector<16x32xf32> to vector<16x8xf32>
    %36 = arith.truncf %35 : vector<16x8xf32> to vector<16x8xbf16>
    %cst_22 = arith.constant dense<0.000000e+00> : vector<8x16xf32>
    %37 = tpu.matmul %32, %34, %cst_22 {dimension_numbers = #tpu.dot_dimension_numbers<[1], [1], [0], [0], [0, 0, 1, 0], [], []>} : vector<8x8xbf16>, vector<16x8xbf16>, vector<8x16xf32> -> vector<8x16xf32>
    %38 = vector.broadcast %30 : vector<1x16xf32> to vector<8x16xf32>
    %39 = arith.addf %37, %38 : vector<8x16xf32>
    %cst_23 = arith.constant dense<0xFF800000> : vector<8xf32>
    %40 = vector.multi_reduction <maximumf>, %39, %cst_23 [1] : vector<8x16xf32> to vector<8xf32>
    %41 = vector.shape_cast %40 : vector<8xf32> to vector<8x1xf32>
    %42 = vector.broadcast %41 : vector<8x1xf32> to vector<8x16xf32>
    %43 = arith.subf %39, %42 : vector<8x16xf32>
    %44 = math.exp %43 : vector<8x16xf32>
    %cst_24 = arith.constant dense<0.000000e+00> : vector<8xf32>
    %45 = vector.multi_reduction <add>, %44, %cst_24 [1] : vector<8x16xf32> to vector<8xf32>
    %46 = vector.shape_cast %45 : vector<8xf32> to vector<8x1xf32>
    %47 = tpu.reciprocal %46 {approx = true} : vector<8x1xf32> -> vector<8x1xf32>
    %48 = vector.broadcast %47 : vector<8x1xf32> to vector<8x16xf32>
    %49 = arith.mulf %44, %48 : vector<8x16xf32>
    %50 = arith.truncf %49 : vector<8x16xf32> to vector<8x16xbf16>
    %cst_25 = arith.constant dense<0.000000e+00> : vector<8x8xf32>
    %51 = tpu.matmul %50, %36, %cst_25 {dimension_numbers = #tpu.dot_dimension_numbers<[1], [0], [0], [1], [0, 0, 1, 1], [], []>} : vector<8x16xbf16>, vector<16x8xbf16>, vector<8x8xf32> -> vector<8x8xf32>
    %52 = vector.extract_strided_slice %27 {offsets = [0, 8], sizes = [8, 8], strides = [1, 1]} : vector<8x32xf32> to vector<8x8xf32>
    %53 = arith.truncf %52 : vector<8x8xf32> to vector<8x8xbf16>
    %54 = vector.extract_strided_slice %28 {offsets = [0, 8], sizes = [16, 8], strides = [1, 1]} : vector<16x32xf32> to vector<16x8xf32>
    %55 = arith.truncf %54 : vector<16x8xf32> to vector<16x8xbf16>
    %56 = vector.extract_strided_slice %29 {offsets = [0, 8], sizes = [16, 8], strides = [1, 1]} : vector<16x32xf32> to vector<16x8xf32>
    %57 = arith.truncf %56 : vector<16x8xf32> to vector<16x8xbf16>
    %cst_26 = arith.constant dense<0.000000e+00> : vector<8x16xf32>
    %58 = tpu.matmul %53, %55, %cst_26 {dimension_numbers = #tpu.dot_dimension_numbers<[1], [1], [0], [0], [0, 0, 1, 0], [], []>} : vector<8x8xbf16>, vector<16x8xbf16>, vector<8x16xf32> -> vector<8x16xf32>
    %59 = vector.broadcast %30 : vector<1x16xf32> to vector<8x16xf32>
    %60 = arith.addf %58, %59 : vector<8x16xf32>
    %cst_27 = arith.constant dense<0xFF800000> : vector<8xf32>
    %61 = vector.multi_reduction <maximumf>, %60, %cst_27 [1] : vector<8x16xf32> to vector<8xf32>
    %62 = vector.shape_cast %61 : vector<8xf32> to vector<8x1xf32>
    %63 = vector.broadcast %62 : vector<8x1xf32> to vector<8x16xf32>
    %64 = arith.subf %60, %63 : vector<8x16xf32>
    %65 = math.exp %64 : vector<8x16xf32>
    %cst_28 = arith.constant dense<0.000000e+00> : vector<8xf32>
    %66 = vector.multi_reduction <add>, %65, %cst_28 [1] : vector<8x16xf32> to vector<8xf32>
    %67 = vector.shape_cast %66 : vector<8xf32> to vector<8x1xf32>
    %68 = tpu.reciprocal %67 {approx = true} : vector<8x1xf32> -> vector<8x1xf32>
    %69 = vector.broadcast %68 : vector<8x1xf32> to vector<8x16xf32>
    %70 = arith.mulf %65, %69 : vector<8x16xf32>
    %71 = arith.truncf %70 : vector<8x16xf32> to vector<8x16xbf16>
    %cst_29 = arith.constant dense<0.000000e+00> : vector<8x8xf32>
    %72 = tpu.matmul %71, %57, %cst_29 {dimension_numbers = #tpu.dot_dimension_numbers<[1], [0], [0], [1], [0, 0, 1, 1], [], []>} : vector<8x16xbf16>, vector<16x8xbf16>, vector<8x8xf32> -> vector<8x8xf32>
    %73 = vector.extract_strided_slice %27 {offsets = [0, 16], sizes = [8, 8], strides = [1, 1]} : vector<8x32xf32> to vector<8x8xf32>
    %74 = arith.truncf %73 : vector<8x8xf32> to vector<8x8xbf16>
    %75 = vector.extract_strided_slice %28 {offsets = [0, 16], sizes = [16, 8], strides = [1, 1]} : vector<16x32xf32> to vector<16x8xf32>
    %76 = arith.truncf %75 : vector<16x8xf32> to vector<16x8xbf16>
    %77 = vector.extract_strided_slice %29 {offsets = [0, 16], sizes = [16, 8], strides = [1, 1]} : vector<16x32xf32> to vector<16x8xf32>
    %78 = arith.truncf %77 : vector<16x8xf32> to vector<16x8xbf16>
    %cst_30 = arith.constant dense<0.000000e+00> : vector<8x16xf32>
    %79 = tpu.matmul %74, %76, %cst_30 {dimension_numbers = #tpu.dot_dimension_numbers<[1], [1], [0], [0], [0, 0, 1, 0], [], []>} : vector<8x8xbf16>, vector<16x8xbf16>, vector<8x16xf32> -> vector<8x16xf32>
    %80 = vector.broadcast %30 : vector<1x16xf32> to vector<8x16xf32>
    %81 = arith.addf %79, %80 : vector<8x16xf32>
    %cst_31 = arith.constant dense<0xFF800000> : vector<8xf32>
    %82 = vector.multi_reduction <maximumf>, %81, %cst_31 [1] : vector<8x16xf32> to vector<8xf32>
    %83 = vector.shape_cast %82 : vector<8xf32> to vector<8x1xf32>
    %84 = vector.broadcast %83 : vector<8x1xf32> to vector<8x16xf32>
    %85 = arith.subf %81, %84 : vector<8x16xf32>
    %86 = math.exp %85 : vector<8x16xf32>
    %cst_32 = arith.constant dense<0.000000e+00> : vector<8xf32>
    %87 = vector.multi_reduction <add>, %86, %cst_32 [1] : vector<8x16xf32> to vector<8xf32>
    %88 = vector.shape_cast %87 : vector<8xf32> to vector<8x1xf32>
    %89 = tpu.reciprocal %88 {approx = true} : vector<8x1xf32> -> vector<8x1xf32>
    %90 = vector.broadcast %89 : vector<8x1xf32> to vector<8x16xf32>
    %91 = arith.mulf %86, %90 : vector<8x16xf32>
    %92 = arith.truncf %91 : vector<8x16xf32> to vector<8x16xbf16>
    %cst_33 = arith.constant dense<0.000000e+00> : vector<8x8xf32>
    %93 = tpu.matmul %92, %78, %cst_33 {dimension_numbers = #tpu.dot_dimension_numbers<[1], [0], [0], [1], [0, 0, 1, 1], [], []>} : vector<8x16xbf16>, vector<16x8xbf16>, vector<8x8xf32> -> vector<8x8xf32>
    %94 = vector.extract_strided_slice %27 {offsets = [0, 24], sizes = [8, 8], strides = [1, 1]} : vector<8x32xf32> to vector<8x8xf32>
    %95 = arith.truncf %94 : vector<8x8xf32> to vector<8x8xbf16>
    %96 = vector.extract_strided_slice %28 {offsets = [0, 24], sizes = [16, 8], strides = [1, 1]} : vector<16x32xf32> to vector<16x8xf32>
    %97 = arith.truncf %96 : vector<16x8xf32> to vector<16x8xbf16>
    %98 = vector.extract_strided_slice %29 {offsets = [0, 24], sizes = [16, 8], strides = [1, 1]} : vector<16x32xf32> to vector<16x8xf32>
    %99 = arith.truncf %98 : vector<16x8xf32> to vector<16x8xbf16>
    %cst_34 = arith.constant dense<0.000000e+00> : vector<8x16xf32>
    %100 = tpu.matmul %95, %97, %cst_34 {dimension_numbers = #tpu.dot_dimension_numbers<[1], [1], [0], [0], [0, 0, 1, 0], [], []>} : vector<8x8xbf16>, vector<16x8xbf16>, vector<8x16xf32> -> vector<8x16xf32>
    %101 = vector.broadcast %30 : vector<1x16xf32> to vector<8x16xf32>
    %102 = arith.addf %100, %101 : vector<8x16xf32>
    %cst_35 = arith.constant dense<0xFF800000> : vector<8xf32>
    %103 = vector.multi_reduction <maximumf>, %102, %cst_35 [1] : vector<8x16xf32> to vector<8xf32>
    %104 = vector.shape_cast %103 : vector<8xf32> to vector<8x1xf32>
    %105 = vector.broadcast %104 : vector<8x1xf32> to vector<8x16xf32>
    %106 = arith.subf %102, %105 : vector<8x16xf32>
    %107 = math.exp %106 : vector<8x16xf32>
    %cst_36 = arith.constant dense<0.000000e+00> : vector<8xf32>
    %108 = vector.multi_reduction <add>, %107, %cst_36 [1] : vector<8x16xf32> to vector<8xf32>
    %109 = vector.shape_cast %108 : vector<8xf32> to vector<8x1xf32>
    %110 = tpu.reciprocal %109 {approx = true} : vector<8x1xf32> -> vector<8x1xf32>
    %111 = vector.broadcast %110 : vector<8x1xf32> to vector<8x16xf32>
    %112 = arith.mulf %107, %111 : vector<8x16xf32>
    %113 = arith.truncf %112 : vector<8x16xf32> to vector<8x16xbf16>
    %cst_37 = arith.constant dense<0.000000e+00> : vector<8x8xf32>
    %114 = tpu.matmul %113, %99, %cst_37 {dimension_numbers = #tpu.dot_dimension_numbers<[1], [0], [0], [1], [0, 0, 1, 1], [], []>} : vector<8x16xbf16>, vector<16x8xbf16>, vector<8x8xf32> -> vector<8x8xf32>
    %115 = tpu.concatenate %51, %72, %93, %114 in 1 : vector<8x8xf32>, vector<8x8xf32>, vector<8x8xf32>, vector<8x8xf32> -> vector<8x32xf32>
    %116 = vector.extract_strided_slice %9 {offsets = [8, 0], sizes = [8, 32], strides = [1, 1]} : vector<16x32xf32> to vector<8x32xf32>
    %117 = vector.extract_strided_slice %17 {offsets = [16, 0], sizes = [16, 32], strides = [1, 1]} : vector<32x32xf32> to vector<16x32xf32>
    %118 = vector.extract_strided_slice %25 {offsets = [16, 0], sizes = [16, 32], strides = [1, 1]} : vector<32x32xf32> to vector<16x32xf32>
    %119 = vector.extract_strided_slice %26 {offsets = [1, 0], sizes = [1, 16], strides = [1, 1]} : vector<2x16xf32> to vector<1x16xf32>
    %120 = vector.extract_strided_slice %116 {offsets = [0, 0], sizes = [8, 8], strides = [1, 1]} : vector<8x32xf32> to vector<8x8xf32>
    %121 = arith.truncf %120 : vector<8x8xf32> to vector<8x8xbf16>
    %122 = vector.extract_strided_slice %117 {offsets = [0, 0], sizes = [16, 8], strides = [1, 1]} : vector<16x32xf32> to vector<16x8xf32>
    %123 = arith.truncf %122 : vector<16x8xf32> to vector<16x8xbf16>
    %124 = vector.extract_strided_slice %118 {offsets = [0, 0], sizes = [16, 8], strides = [1, 1]} : vector<16x32xf32> to vector<16x8xf32>
    %125 = arith.truncf %124 : vector<16x8xf32> to vector<16x8xbf16>
    %cst_38 = arith.constant dense<0.000000e+00> : vector<8x16xf32>
    %126 = tpu.matmul %121, %123, %cst_38 {dimension_numbers = #tpu.dot_dimension_numbers<[1], [1], [0], [0], [0, 0, 1, 0], [], []>} : vector<8x8xbf16>, vector<16x8xbf16>, vector<8x16xf32> -> vector<8x16xf32>
    %127 = vector.broadcast %119 : vector<1x16xf32> to vector<8x16xf32>
    %128 = arith.addf %126, %127 : vector<8x16xf32>
    %cst_39 = arith.constant dense<0xFF800000> : vector<8xf32>
    %129 = vector.multi_reduction <maximumf>, %128, %cst_39 [1] : vector<8x16xf32> to vector<8xf32>
    %130 = vector.shape_cast %129 : vector<8xf32> to vector<8x1xf32>
    %131 = vector.broadcast %130 : vector<8x1xf32> to vector<8x16xf32>
    %132 = arith.subf %128, %131 : vector<8x16xf32>
    %133 = math.exp %132 : vector<8x16xf32>
    %cst_40 = arith.constant dense<0.000000e+00> : vector<8xf32>
    %134 = vector.multi_reduction <add>, %133, %cst_40 [1] : vector<8x16xf32> to vector<8xf32>
    %135 = vector.shape_cast %134 : vector<8xf32> to vector<8x1xf32>
    %136 = tpu.reciprocal %135 {approx = true} : vector<8x1xf32> -> vector<8x1xf32>
    %137 = vector.broadcast %136 : vector<8x1xf32> to vector<8x16xf32>
    %138 = arith.mulf %133, %137 : vector<8x16xf32>
    %139 = arith.truncf %138 : vector<8x16xf32> to vector<8x16xbf16>
    %cst_41 = arith.constant dense<0.000000e+00> : vector<8x8xf32>
    %140 = tpu.matmul %139, %125, %cst_41 {dimension_numbers = #tpu.dot_dimension_numbers<[1], [0], [0], [1], [0, 0, 1, 1], [], []>} : vector<8x16xbf16>, vector<16x8xbf16>, vector<8x8xf32> -> vector<8x8xf32>
    %141 = vector.extract_strided_slice %116 {offsets = [0, 8], sizes = [8, 8], strides = [1, 1]} : vector<8x32xf32> to vector<8x8xf32>
    %142 = arith.truncf %141 : vector<8x8xf32> to vector<8x8xbf16>
    %143 = vector.extract_strided_slice %117 {offsets = [0, 8], sizes = [16, 8], strides = [1, 1]} : vector<16x32xf32> to vector<16x8xf32>
    %144 = arith.truncf %143 : vector<16x8xf32> to vector<16x8xbf16>
    %145 = vector.extract_strided_slice %118 {offsets = [0, 8], sizes = [16, 8], strides = [1, 1]} : vector<16x32xf32> to vector<16x8xf32>
    %146 = arith.truncf %145 : vector<16x8xf32> to vector<16x8xbf16>
    %cst_42 = arith.constant dense<0.000000e+00> : vector<8x16xf32>
    %147 = tpu.matmul %142, %144, %cst_42 {dimension_numbers = #tpu.dot_dimension_numbers<[1], [1], [0], [0], [0, 0, 1, 0], [], []>} : vector<8x8xbf16>, vector<16x8xbf16>, vector<8x16xf32> -> vector<8x16xf32>
    %148 = vector.broadcast %119 : vector<1x16xf32> to vector<8x16xf32>
    %149 = arith.addf %147, %148 : vector<8x16xf32>
    %cst_43 = arith.constant dense<0xFF800000> : vector<8xf32>
    %150 = vector.multi_reduction <maximumf>, %149, %cst_43 [1] : vector<8x16xf32> to vector<8xf32>
    %151 = vector.shape_cast %150 : vector<8xf32> to vector<8x1xf32>
    %152 = vector.broadcast %151 : vector<8x1xf32> to vector<8x16xf32>
    %153 = arith.subf %149, %152 : vector<8x16xf32>
    %154 = math.exp %153 : vector<8x16xf32>
    %cst_44 = arith.constant dense<0.000000e+00> : vector<8xf32>
    %155 = vector.multi_reduction <add>, %154, %cst_44 [1] : vector<8x16xf32> to vector<8xf32>
    %156 = vector.shape_cast %155 : vector<8xf32> to vector<8x1xf32>
    %157 = tpu.reciprocal %156 {approx = true} : vector<8x1xf32> -> vector<8x1xf32>
    %158 = vector.broadcast %157 : vector<8x1xf32> to vector<8x16xf32>
    %159 = arith.mulf %154, %158 : vector<8x16xf32>
    %160 = arith.truncf %159 : vector<8x16xf32> to vector<8x16xbf16>
    %cst_45 = arith.constant dense<0.000000e+00> : vector<8x8xf32>
    %161 = tpu.matmul %160, %146, %cst_45 {dimension_numbers = #tpu.dot_dimension_numbers<[1], [0], [0], [1], [0, 0, 1, 1], [], []>} : vector<8x16xbf16>, vector<16x8xbf16>, vector<8x8xf32> -> vector<8x8xf32>
    %162 = vector.extract_strided_slice %116 {offsets = [0, 16], sizes = [8, 8], strides = [1, 1]} : vector<8x32xf32> to vector<8x8xf32>
    %163 = arith.truncf %162 : vector<8x8xf32> to vector<8x8xbf16>
    %164 = vector.extract_strided_slice %117 {offsets = [0, 16], sizes = [16, 8], strides = [1, 1]} : vector<16x32xf32> to vector<16x8xf32>
    %165 = arith.truncf %164 : vector<16x8xf32> to vector<16x8xbf16>
    %166 = vector.extract_strided_slice %118 {offsets = [0, 16], sizes = [16, 8], strides = [1, 1]} : vector<16x32xf32> to vector<16x8xf32>
    %167 = arith.truncf %166 : vector<16x8xf32> to vector<16x8xbf16>
    %cst_46 = arith.constant dense<0.000000e+00> : vector<8x16xf32>
    %168 = tpu.matmul %163, %165, %cst_46 {dimension_numbers = #tpu.dot_dimension_numbers<[1], [1], [0], [0], [0, 0, 1, 0], [], []>} : vector<8x8xbf16>, vector<16x8xbf16>, vector<8x16xf32> -> vector<8x16xf32>
    %169 = vector.broadcast %119 : vector<1x16xf32> to vector<8x16xf32>
    %170 = arith.addf %168, %169 : vector<8x16xf32>
    %cst_47 = arith.constant dense<0xFF800000> : vector<8xf32>
    %171 = vector.multi_reduction <maximumf>, %170, %cst_47 [1] : vector<8x16xf32> to vector<8xf32>
    %172 = vector.shape_cast %171 : vector<8xf32> to vector<8x1xf32>
    %173 = vector.broadcast %172 : vector<8x1xf32> to vector<8x16xf32>
    %174 = arith.subf %170, %173 : vector<8x16xf32>
    %175 = math.exp %174 : vector<8x16xf32>
    %cst_48 = arith.constant dense<0.000000e+00> : vector<8xf32>
    %176 = vector.multi_reduction <add>, %175, %cst_48 [1] : vector<8x16xf32> to vector<8xf32>
    %177 = vector.shape_cast %176 : vector<8xf32> to vector<8x1xf32>
    %178 = tpu.reciprocal %177 {approx = true} : vector<8x1xf32> -> vector<8x1xf32>
    %179 = vector.broadcast %178 : vector<8x1xf32> to vector<8x16xf32>
    %180 = arith.mulf %175, %179 : vector<8x16xf32>
    %181 = arith.truncf %180 : vector<8x16xf32> to vector<8x16xbf16>
    %cst_49 = arith.constant dense<0.000000e+00> : vector<8x8xf32>
    %182 = tpu.matmul %181, %167, %cst_49 {dimension_numbers = #tpu.dot_dimension_numbers<[1], [0], [0], [1], [0, 0, 1, 1], [], []>} : vector<8x16xbf16>, vector<16x8xbf16>, vector<8x8xf32> -> vector<8x8xf32>
    %183 = vector.extract_strided_slice %116 {offsets = [0, 24], sizes = [8, 8], strides = [1, 1]} : vector<8x32xf32> to vector<8x8xf32>
    %184 = arith.truncf %183 : vector<8x8xf32> to vector<8x8xbf16>
    %185 = vector.extract_strided_slice %117 {offsets = [0, 24], sizes = [16, 8], strides = [1, 1]} : vector<16x32xf32> to vector<16x8xf32>
    %186 = arith.truncf %185 : vector<16x8xf32> to vector<16x8xbf16>
    %187 = vector.extract_strided_slice %118 {offsets = [0, 24], sizes = [16, 8], strides = [1, 1]} : vector<16x32xf32> to vector<16x8xf32>
    %188 = arith.truncf %187 : vector<16x8xf32> to vector<16x8xbf16>
    %cst_50 = arith.constant dense<0.000000e+00> : vector<8x16xf32>
    %189 = tpu.matmul %184, %186, %cst_50 {dimension_numbers = #tpu.dot_dimension_numbers<[1], [1], [0], [0], [0, 0, 1, 0], [], []>} : vector<8x8xbf16>, vector<16x8xbf16>, vector<8x16xf32> -> vector<8x16xf32>
    %190 = vector.broadcast %119 : vector<1x16xf32> to vector<8x16xf32>
    %191 = arith.addf %189, %190 : vector<8x16xf32>
    %cst_51 = arith.constant dense<0xFF800000> : vector<8xf32>
    %192 = vector.multi_reduction <maximumf>, %191, %cst_51 [1] : vector<8x16xf32> to vector<8xf32>
    %193 = vector.shape_cast %192 : vector<8xf32> to vector<8x1xf32>
    %194 = vector.broadcast %193 : vector<8x1xf32> to vector<8x16xf32>
    %195 = arith.subf %191, %194 : vector<8x16xf32>
    %196 = math.exp %195 : vector<8x16xf32>
    %cst_52 = arith.constant dense<0.000000e+00> : vector<8xf32>
    %197 = vector.multi_reduction <add>, %196, %cst_52 [1] : vector<8x16xf32> to vector<8xf32>
    %198 = vector.shape_cast %197 : vector<8xf32> to vector<8x1xf32>
    %199 = tpu.reciprocal %198 {approx = true} : vector<8x1xf32> -> vector<8x1xf32>
    %200 = vector.broadcast %199 : vector<8x1xf32> to vector<8x16xf32>
    %201 = arith.mulf %196, %200 : vector<8x16xf32>
    %202 = arith.truncf %201 : vector<8x16xf32> to vector<8x16xbf16>
    %cst_53 = arith.constant dense<0.000000e+00> : vector<8x8xf32>
    %203 = tpu.matmul %202, %188, %cst_53 {dimension_numbers = #tpu.dot_dimension_numbers<[1], [0], [0], [1], [0, 0, 1, 1], [], []>} : vector<8x16xbf16>, vector<16x8xbf16>, vector<8x8xf32> -> vector<8x8xf32>
    %204 = tpu.concatenate %140, %161, %182, %203 in 1 : vector<8x8xf32>, vector<8x8xf32>, vector<8x8xf32>, vector<8x8xf32> -> vector<8x32xf32>
    %205 = tpu.concatenate %115, %204 in 0 : vector<8x32xf32>, vector<8x32xf32> -> vector<16x32xf32>
    %206 = arith.truncf %205 : vector<16x32xf32> to vector<16x32xbf16>
    %c0_54 = arith.constant 0 : index
    %c0_55 = arith.constant 0 : index
    %207 = vector.load %arg11[%c0_54, %c0_55] : memref<32x32xf32, #tpu.memory_space<vmem>>, vector<32x32xf32>
    %208 = arith.truncf %207 : vector<32x32xf32> to vector<32x32xbf16>
    %cst_56 = arith.constant dense<0.000000e+00> : vector<16x32xf32>
    %209 = tpu.matmul %206, %208, %cst_56 {dimension_numbers = #tpu.dot_dimension_numbers<[1], [0], [0], [1], [0, 0, 1, 1], [], []>} : vector<16x32xbf16>, vector<32x32xbf16>, vector<16x32xf32> -> vector<16x32xf32>
    %c0_57 = arith.constant 0 : index
    %c0_58 = arith.constant 0 : index
    %210 = vector.load %arg12[%c0_57, %c0_58] : memref<1x32xf32, #tpu.memory_space<vmem>>, vector<1x32xf32>
    %211 = vector.broadcast %210 : vector<1x32xf32> to vector<16x32xf32>
    %212 = arith.addf %209, %211 : vector<16x32xf32>
    %c0_59 = arith.constant 0 : index
    %c0_60 = arith.constant 0 : index
    %213 = vector.load %arg3[%c0_59, %c0_60] : memref<16x32xf32, #tpu.memory_space<vmem>>, vector<16x32xf32>
    %214 = arith.addf %213, %212 : vector<16x32xf32>
    %c0_61 = arith.constant 0 : index
    %c0_62 = arith.constant 0 : index
    %215 = vector.load %arg13[%c0_61, %c0_62] : memref<1x32xf32, #tpu.memory_space<vmem>>, vector<1x32xf32>
    %c0_63 = arith.constant 0 : index
    %c0_64 = arith.constant 0 : index
    %216 = vector.load %arg14[%c0_63, %c0_64] : memref<1x32xf32, #tpu.memory_space<vmem>>, vector<1x32xf32>
    %cst_65 = arith.constant dense<0.000000e+00> : vector<16xf32>
    %217 = vector.multi_reduction <add>, %214, %cst_65 [1] : vector<16x32xf32> to vector<16xf32>
    %218 = vector.shape_cast %217 : vector<16xf32> to vector<16x1xf32>
    %cst_66 = arith.constant 3.200000e+01 : f32
    %219 = vector.broadcast %cst_66 : f32 to vector<16x1xf32>
    %220 = arith.divf %218, %219 : vector<16x1xf32>
    %221 = vector.broadcast %220 : vector<16x1xf32> to vector<16x32xf32>
    %222 = arith.subf %214, %221 : vector<16x32xf32>
    %223 = arith.mulf %222, %222 : vector<16x32xf32>
    %cst_67 = arith.constant dense<0.000000e+00> : vector<16xf32>
    %224 = vector.multi_reduction <add>, %223, %cst_67 [1] : vector<16x32xf32> to vector<16xf32>
    %225 = vector.shape_cast %224 : vector<16xf32> to vector<16x1xf32>
    %cst_68 = arith.constant 3.200000e+01 : f32
    %226 = vector.broadcast %cst_68 : f32 to vector<16x1xf32>
    %227 = arith.divf %225, %226 : vector<16x1xf32>
    %cst_69 = arith.constant 9.99999974E-6 : f32
    %228 = vector.broadcast %cst_69 : f32 to vector<16x1xf32>
    %229 = arith.addf %227, %228 : vector<16x1xf32>
    %230 = math.rsqrt %229 : vector<16x1xf32>
    %231 = vector.broadcast %230 : vector<16x1xf32> to vector<16x32xf32>
    %232 = arith.mulf %222, %231 : vector<16x32xf32>
    %233 = vector.broadcast %215 : vector<1x32xf32> to vector<16x32xf32>
    %234 = arith.mulf %232, %233 : vector<16x32xf32>
    %235 = vector.broadcast %216 : vector<1x32xf32> to vector<16x32xf32>
    %236 = arith.addf %234, %235 : vector<16x32xf32>
    %c0_70 = arith.constant 0 : index
    %c0_71 = arith.constant 0 : index
    %237 = vector.load %arg15[%c0_70, %c0_71] : memref<16x32xf32, #tpu.memory_space<vmem>>, vector<16x32xf32>
    tpu.vector_store %arg15[%c0_70, %c0_71], %236 {strides = array<i32>} : memref<16x32xf32, #tpu.memory_space<vmem>>, vector<16x32xf32>,
    return
  }
}

module attributes {stable_mosaic.version = 11 : i64} {
  func.func @_ffn_ln_kernel(%arg0: i32, %arg1: memref<32x32xf32, #tpu.memory_space<vmem>>, %arg2: memref<32x64xf32, #tpu.memory_space<vmem>>, %arg3: memref<1x64xf32, #tpu.memory_space<vmem>>, %arg4: memref<64x32xf32, #tpu.memory_space<vmem>>, %arg5: memref<1x32xf32, #tpu.memory_space<vmem>>, %arg6: memref<1x32xf32, #tpu.memory_space<vmem>>, %arg7: memref<1x32xf32, #tpu.memory_space<vmem>>, %arg8: memref<32x32xf32, #tpu.memory_space<vmem>>) attributes {dimension_semantics = [#tpu.dimension_semantics<parallel>], iteration_bounds = array<i64: 1>, scalar_prefetch = 0 : i64, scratch_operands = 0 : i64, tpu.core_type = #tpu.core_type<tc>, window_params = [{transform_indices = @transform_0, window_bounds = array<i64: 32, 32>}, {pipeline_mode = #tpu.pipeline_mode<synchronous>, transform_indices = @transform_1, window_bounds = array<i64: 32, 64>}, {pipeline_mode = #tpu.pipeline_mode<synchronous>, transform_indices = @transform_2, window_bounds = array<i64: 1, 64>}, {pipeline_mode = #tpu.pipeline_mode<synchronous>, transform_indices = @transform_3, window_bounds = array<i64: 64, 32>}, {pipeline_mode = #tpu.pipeline_mode<synchronous>, transform_indices = @transform_4, window_bounds = array<i64: 1, 32>}, {pipeline_mode = #tpu.pipeline_mode<synchronous>, transform_indices = @transform_5, window_bounds = array<i64: 1, 32>}, {pipeline_mode = #tpu.pipeline_mode<synchronous>, transform_indices = @transform_6, window_bounds = array<i64: 1, 32>}, {transform_indices = @transform_7, window_bounds = array<i64: 32, 32>}]} {
    %c0 = arith.constant 0 : index
    %c0_0 = arith.constant 0 : index
    %0 = vector.load %arg1[%c0, %c0_0] : memref<32x32xf32, #tpu.memory_space<vmem>>, vector<32x32xf32>
    %1 = arith.truncf %0 : vector<32x32xf32> to vector<32x32xbf16>
    %c0_1 = arith.constant 0 : index
    %c0_2 = arith.constant 0 : index
    %2 = vector.load %arg2[%c0_1, %c0_2] : memref<32x64xf32, #tpu.memory_space<vmem>>, vector<32x64xf32>
    %3 = arith.truncf %2 : vector<32x64xf32> to vector<32x64xbf16>
    %cst = arith.constant dense<0.000000e+00> : vector<32x64xf32>
    %4 = tpu.matmul %1, %3, %cst {dimension_numbers = #tpu.dot_dimension_numbers<[1], [0], [0], [1], [0, 0, 1, 1], [], []>} : vector<32x32xbf16>, vector<32x64xbf16>, vector<32x64xf32> -> vector<32x64xf32>
    %c0_3 = arith.constant 0 : index
    %c0_4 = arith.constant 0 : index
    %5 = vector.load %arg3[%c0_3, %c0_4] : memref<1x64xf32, #tpu.memory_space<vmem>>, vector<1x64xf32>
    %6 = vector.broadcast %5 : vector<1x64xf32> to vector<32x64xf32>
    %7 = arith.addf %4, %6 : vector<32x64xf32>
    %cst_5 = arith.constant 0.000000e+00 : f32
    %8 = vector.broadcast %cst_5 : f32 to vector<32x64xf32>
    %9 = arith.maximumf %7, %8 : vector<32x64xf32>
    %10 = arith.truncf %9 : vector<32x64xf32> to vector<32x64xbf16>
    %c0_6 = arith.constant 0 : index
    %c0_7 = arith.constant 0 : index
    %11 = vector.load %arg4[%c0_6, %c0_7] : memref<64x32xf32, #tpu.memory_space<vmem>>, vector<64x32xf32>
    %12 = arith.truncf %11 : vector<64x32xf32> to vector<64x32xbf16>
    %cst_8 = arith.constant dense<0.000000e+00> : vector<32x32xf32>
    %13 = tpu.matmul %10, %12, %cst_8 {dimension_numbers = #tpu.dot_dimension_numbers<[1], [0], [0], [1], [0, 0, 1, 1], [], []>} : vector<32x64xbf16>, vector<64x32xbf16>, vector<32x32xf32> -> vector<32x32xf32>
    %c0_9 = arith.constant 0 : index
    %c0_10 = arith.constant 0 : index
    %14 = vector.load %arg5[%c0_9, %c0_10] : memref<1x32xf32, #tpu.memory_space<vmem>>, vector<1x32xf32>
    %15 = vector.broadcast %14 : vector<1x32xf32> to vector<32x32xf32>
    %16 = arith.addf %13, %15 : vector<32x32xf32>
    %17 = arith.addf %0, %16 : vector<32x32xf32>
    %c0_11 = arith.constant 0 : index
    %c0_12 = arith.constant 0 : index
    %18 = vector.load %arg6[%c0_11, %c0_12] : memref<1x32xf32, #tpu.memory_space<vmem>>, vector<1x32xf32>
    %c0_13 = arith.constant 0 : index
    %c0_14 = arith.constant 0 : index
    %19 = vector.load %arg7[%c0_13, %c0_14] : memref<1x32xf32, #tpu.memory_space<vmem>>, vector<1x32xf32>
    %cst_15 = arith.constant dense<0.000000e+00> : vector<32xf32>
    %20 = vector.multi_reduction <add>, %17, %cst_15 [1] : vector<32x32xf32> to vector<32xf32>
    %21 = vector.shape_cast %20 : vector<32xf32> to vector<32x1xf32>
    %cst_16 = arith.constant 3.200000e+01 : f32
    %22 = vector.broadcast %cst_16 : f32 to vector<32x1xf32>
    %23 = arith.divf %21, %22 : vector<32x1xf32>
    %24 = vector.broadcast %23 : vector<32x1xf32> to vector<32x32xf32>
    %25 = arith.subf %17, %24 : vector<32x32xf32>
    %26 = arith.mulf %25, %25 : vector<32x32xf32>
    %cst_17 = arith.constant dense<0.000000e+00> : vector<32xf32>
    %27 = vector.multi_reduction <add>, %26, %cst_17 [1] : vector<32x32xf32> to vector<32xf32>
    %28 = vector.shape_cast %27 : vector<32xf32> to vector<32x1xf32>
    %cst_18 = arith.constant 3.200000e+01 : f32
    %29 = vector.broadcast %cst_18 : f32 to vector<32x1xf32>
    %30 = arith.divf %28, %29 : vector<32x1xf32>
    %cst_19 = arith.constant 9.99999974E-6 : f32
    %31 = vector.broadcast %cst_19 : f32 to vector<32x1xf32>
    %32 = arith.addf %30, %31 : vector<32x1xf32>
    %33 = math.rsqrt %32 : vector<32x1xf32>
    %34 = vector.broadcast %33 : vector<32x1xf32> to vector<32x32xf32>
    %35 = arith.mulf %25, %34 : vector<32x32xf32>
    %36 = vector.broadcast %18 : vector<1x32xf32> to vector<32x32xf32>
    %37 = arith.mulf %35, %36 : vector<32x32xf32>
    %38 = vector.broadcast %19 : vector<1x32xf32> to vector<32x32xf32>
    %39 = arith.addf %37, %38 : vector<32x32xf32>
    %c0_20 = arith.constant 0 : index
    %c0_21 = arith.constant 0 : index
    %40 = vector.load %arg8[%c0_20, %c0_21] : memref<32x32xf32, #tpu.memory_space<vmem>>, vector<32x32xf32>
    tpu.vector_store %arg8[%c0_20, %c0_21], %39 {strides = array<i32>} : memref<32x32xf32, #tpu.memory_space<vmem>>, vector<32x32xf32>,
    return
  }
  func.func @transform_0(%arg0: i32) -> (i32, i32) {
    %c0_i32 = arith.constant 0 : i32
    %c0_i32_0 = arith.constant 0 : i32
    return %arg0, %c0_i32 : i32, i32
  }
  func.func @transform_1(%arg0: i32) -> (i32, i32) {
    %c0_i32 = arith.constant 0 : i32
    %c0_i32_0 = arith.constant 0 : i32
    %c0_i32_1 = arith.constant 0 : i32
    return %c0_i32, %c0_i32_0 : i32, i32
  }
  func.func @transform_2(%arg0: i32) -> (i32, i32) {
    %c0_i32 = arith.constant 0 : i32
    %c0_i32_0 = arith.constant 0 : i32
    %c0_i32_1 = arith.constant 0 : i32
    return %c0_i32, %c0_i32_0 : i32, i32
  }
  func.func @transform_3(%arg0: i32) -> (i32, i32) {
    %c0_i32 = arith.constant 0 : i32
    %c0_i32_0 = arith.constant 0 : i32
    %c0_i32_1 = arith.constant 0 : i32
    return %c0_i32, %c0_i32_0 : i32, i32
  }
  func.func @transform_4(%arg0: i32) -> (i32, i32) {
    %c0_i32 = arith.constant 0 : i32
    %c0_i32_0 = arith.constant 0 : i32
    %c0_i32_1 = arith.constant 0 : i32
    return %c0_i32, %c0_i32_0 : i32, i32
  }
  func.func @transform_5(%arg0: i32) -> (i32, i32) {
    %c0_i32 = arith.constant 0 : i32
    %c0_i32_0 = arith.constant 0 : i32
    %c0_i32_1 = arith.constant 0 : i32
    return %c0_i32, %c0_i32_0 : i32, i32
  }
  func.func @transform_6(%arg0: i32) -> (i32, i32) {
    %c0_i32 = arith.constant 0 : i32
    %c0_i32_0 = arith.constant 0 : i32
    %c0_i32_1 = arith.constant 0 : i32
    return %c0_i32, %c0_i32_0 : i32, i32
  }
  func.func @transform_7(%arg0: i32) -> (i32, i32) {
    %c0_i32 = arith.constant 0 : i32
    %c0_i32_0 = arith.constant 0 : i32
    return %arg0, %c0_i32 : i32, i32
  }
}

module attributes {stable_mosaic.version = 11 : i64} {
  func.func @_ffn_ln_kernel(%arg0: i32, %arg1: memref<16x32xf32, #tpu.memory_space<vmem>>, %arg2: memref<32x64xf32, #tpu.memory_space<vmem>>, %arg3: memref<1x64xf32, #tpu.memory_space<vmem>>, %arg4: memref<64x32xf32, #tpu.memory_space<vmem>>, %arg5: memref<1x32xf32, #tpu.memory_space<vmem>>, %arg6: memref<1x32xf32, #tpu.memory_space<vmem>>, %arg7: memref<1x32xf32, #tpu.memory_space<vmem>>, %arg8: memref<16x32xf32, #tpu.memory_space<vmem>>) attributes {dimension_semantics = [#tpu.dimension_semantics<parallel>], iteration_bounds = array<i64: 1>, scalar_prefetch = 0 : i64, scratch_operands = 0 : i64, tpu.core_type = #tpu.core_type<tc>, window_params = [{transform_indices = @transform_0, window_bounds = array<i64: 16, 32>}, {pipeline_mode = #tpu.pipeline_mode<synchronous>, transform_indices = @transform_1, window_bounds = array<i64: 32, 64>}, {pipeline_mode = #tpu.pipeline_mode<synchronous>, transform_indices = @transform_2, window_bounds = array<i64: 1, 64>}, {pipeline_mode = #tpu.pipeline_mode<synchronous>, transform_indices = @transform_3, window_bounds = array<i64: 64, 32>}, {pipeline_mode = #tpu.pipeline_mode<synchronous>, transform_indices = @transform_4, window_bounds = array<i64: 1, 32>}, {pipeline_mode = #tpu.pipeline_mode<synchronous>, transform_indices = @transform_5, window_bounds = array<i64: 1, 32>}, {pipeline_mode = #tpu.pipeline_mode<synchronous>, transform_indices = @transform_6, window_bounds = array<i64: 1, 32>}, {transform_indices = @transform_7, window_bounds = array<i64: 16, 32>}]} {
    %c0 = arith.constant 0 : index
    %c0_0 = arith.constant 0 : index
    %0 = vector.load %arg1[%c0, %c0_0] : memref<16x32xf32, #tpu.memory_space<vmem>>, vector<16x32xf32>
    %1 = arith.truncf %0 : vector<16x32xf32> to vector<16x32xbf16>
    %c0_1 = arith.constant 0 : index
    %c0_2 = arith.constant 0 : index
    %2 = vector.load %arg2[%c0_1, %c0_2] : memref<32x64xf32, #tpu.memory_space<vmem>>, vector<32x64xf32>
    %3 = arith.truncf %2 : vector<32x64xf32> to vector<32x64xbf16>
    %cst = arith.constant dense<0.000000e+00> : vector<16x64xf32>
    %4 = tpu.matmul %1, %3, %cst {dimension_numbers = #tpu.dot_dimension_numbers<[1], [0], [0], [1], [0, 0, 1, 1], [], []>} : vector<16x32xbf16>, vector<32x64xbf16>, vector<16x64xf32> -> vector<16x64xf32>
    %c0_3 = arith.constant 0 : index
    %c0_4 = arith.constant 0 : index
    %5 = vector.load %arg3[%c0_3, %c0_4] : memref<1x64xf32, #tpu.memory_space<vmem>>, vector<1x64xf32>
    %6 = vector.broadcast %5 : vector<1x64xf32> to vector<16x64xf32>
    %7 = arith.addf %4, %6 : vector<16x64xf32>
    %cst_5 = arith.constant 0.000000e+00 : f32
    %8 = vector.broadcast %cst_5 : f32 to vector<16x64xf32>
    %9 = arith.maximumf %7, %8 : vector<16x64xf32>
    %10 = arith.truncf %9 : vector<16x64xf32> to vector<16x64xbf16>
    %c0_6 = arith.constant 0 : index
    %c0_7 = arith.constant 0 : index
    %11 = vector.load %arg4[%c0_6, %c0_7] : memref<64x32xf32, #tpu.memory_space<vmem>>, vector<64x32xf32>
    %12 = arith.truncf %11 : vector<64x32xf32> to vector<64x32xbf16>
    %cst_8 = arith.constant dense<0.000000e+00> : vector<16x32xf32>
    %13 = tpu.matmul %10, %12, %cst_8 {dimension_numbers = #tpu.dot_dimension_numbers<[1], [0], [0], [1], [0, 0, 1, 1], [], []>} : vector<16x64xbf16>, vector<64x32xbf16>, vector<16x32xf32> -> vector<16x32xf32>
    %c0_9 = arith.constant 0 : index
    %c0_10 = arith.constant 0 : index
    %14 = vector.load %arg5[%c0_9, %c0_10] : memref<1x32xf32, #tpu.memory_space<vmem>>, vector<1x32xf32>
    %15 = vector.broadcast %14 : vector<1x32xf32> to vector<16x32xf32>
    %16 = arith.addf %13, %15 : vector<16x32xf32>
    %17 = arith.addf %0, %16 : vector<16x32xf32>
    %c0_11 = arith.constant 0 : index
    %c0_12 = arith.constant 0 : index
    %18 = vector.load %arg6[%c0_11, %c0_12] : memref<1x32xf32, #tpu.memory_space<vmem>>, vector<1x32xf32>
    %c0_13 = arith.constant 0 : index
    %c0_14 = arith.constant 0 : index
    %19 = vector.load %arg7[%c0_13, %c0_14] : memref<1x32xf32, #tpu.memory_space<vmem>>, vector<1x32xf32>
    %cst_15 = arith.constant dense<0.000000e+00> : vector<16xf32>
    %20 = vector.multi_reduction <add>, %17, %cst_15 [1] : vector<16x32xf32> to vector<16xf32>
    %21 = vector.shape_cast %20 : vector<16xf32> to vector<16x1xf32>
    %cst_16 = arith.constant 3.200000e+01 : f32
    %22 = vector.broadcast %cst_16 : f32 to vector<16x1xf32>
    %23 = arith.divf %21, %22 : vector<16x1xf32>
    %24 = vector.broadcast %23 : vector<16x1xf32> to vector<16x32xf32>
    %25 = arith.subf %17, %24 : vector<16x32xf32>
    %26 = arith.mulf %25, %25 : vector<16x32xf32>
    %cst_17 = arith.constant dense<0.000000e+00> : vector<16xf32>
    %27 = vector.multi_reduction <add>, %26, %cst_17 [1] : vector<16x32xf32> to vector<16xf32>
    %28 = vector.shape_cast %27 : vector<16xf32> to vector<16x1xf32>
    %cst_18 = arith.constant 3.200000e+01 : f32
    %29 = vector.broadcast %cst_18 : f32 to vector<16x1xf32>
    %30 = arith.divf %28, %29 : vector<16x1xf32>
    %cst_19 = arith.constant 9.99999974E-6 : f32
    %31 = vector.broadcast %cst_19 : f32 to vector<16x1xf32>
    %32 = arith.addf %30, %31 : vector<16x1xf32>
    %33 = math.rsqrt %32 : vector<16x1xf32>
    %34 = vector.broadcast %33 : vector<16x1xf32> to vector<16x32xf32>
    %35 = arith.mulf %25, %34 : vector<16x32xf32>
    %36 = vector.broadcast %18 : vector<1x32xf32> to vector<16x32xf32>
    %37 = arith.mulf %35, %36 : vector<16x32xf32>
    %38 = vector.broadcast %19 : vector<1x32xf32> to vector<16x32xf32>
    %39 = arith.addf %37, %38 : vector<16x32xf32>
    %c0_20 = arith.constant 0 : index
    %c0_21 = arith.constant 0 : index
    %40 = vector.load %arg8[%c0_20, %c0_21] : memref<16x32xf32, #tpu.memory_space<vmem>>, vector<16x32xf32>
    tpu.vector_store %arg8[%c0_20, %c0_21], %39 {strides = array<i32>} : memref<16x32xf32, #tpu.memory_space<vmem>>, vector<16x32xf32>,
    return
  }
  func.func @transform_0(%arg0: i32) -> (i32, i32) {
    %c0_i32 = arith.constant 0 : i32
    %c0_i32_0 = arith.constant 0 : i32
    return %arg0, %c0_i32 : i32, i32
  }
  func.func @transform_1(%arg0: i32) -> (i32, i32) {
    %c0_i32 = arith.constant 0 : i32
    %c0_i32_0 = arith.constant 0 : i32
    %c0_i32_1 = arith.constant 0 : i32
    return %c0_i32, %c0_i32_0 : i32, i32
  }
  func.func @transform_2(%arg0: i32) -> (i32, i32) {
    %c0_i32 = arith.constant 0 : i32
    %c0_i32_0 = arith.constant 0 : i32
    %c0_i32_1 = arith.constant 0 : i32
    return %c0_i32, %c0_i32_0 : i32, i32
  }
  func.func @transform_3(%arg0: i32) -> (i32, i32) {
    %c0_i32 = arith.constant 0 : i32
    %c0_i32_0 = arith.constant 0 : i32
    %c0_i32_1 = arith.constant 0 : i32
    return %c0_i32, %c0_i32_0 : i32, i32
  }
  func.func @transform_4(%arg0: i32) -> (i32, i32) {
    %c0_i32 = arith.constant 0 : i32
    %c0_i32_0 = arith.constant 0 : i32
    %c0_i32_1 = arith.constant 0 : i32
    return %c0_i32, %c0_i32_0 : i32, i32
  }
  func.func @transform_5(%arg0: i32) -> (i32, i32) {
    %c0_i32 = arith.constant 0 : i32
    %c0_i32_0 = arith.constant 0 : i32
    %c0_i32_1 = arith.constant 0 : i32
    return %c0_i32, %c0_i32_0 : i32, i32
  }
  func.func @transform_6(%arg0: i32) -> (i32, i32) {
    %c0_i32 = arith.constant 0 : i32
    %c0_i32_0 = arith.constant 0 : i32
    %c0_i32_1 = arith.constant 0 : i32
    return %c0_i32, %c0_i32_0 : i32, i32
  }
  func.func @transform_7(%arg0: i32) -> (i32, i32) {
    %c0_i32 = arith.constant 0 : i32
    %c0_i32_0 = arith.constant 0 : i32
    return %arg0, %c0_i32 : i32, i32
  }
}

module attributes {stable_mosaic.version = 11 : i64} {
  func.func @_fused_mha_kernel(%arg0: memref<16x32xf32, #tpu.memory_space<vmem>>, %arg1: memref<32x32xf32, #tpu.memory_space<vmem>>, %arg2: memref<32x32xf32, #tpu.memory_space<vmem>>, %arg3: memref<16x32xf32, #tpu.memory_space<vmem>>, %arg4: memref<2x16xf32, #tpu.memory_space<vmem>>, %arg5: memref<32x32xf32, #tpu.memory_space<vmem>>, %arg6: memref<1x32xf32, #tpu.memory_space<vmem>>, %arg7: memref<32x32xf32, #tpu.memory_space<vmem>>, %arg8: memref<1x32xf32, #tpu.memory_space<vmem>>, %arg9: memref<32x32xf32, #tpu.memory_space<vmem>>, %arg10: memref<1x32xf32, #tpu.memory_space<vmem>>, %arg11: memref<32x32xf32, #tpu.memory_space<vmem>>, %arg12: memref<1x32xf32, #tpu.memory_space<vmem>>, %arg13: memref<1x32xf32, #tpu.memory_space<vmem>>, %arg14: memref<1x32xf32, #tpu.memory_space<vmem>>, %arg15: memref<16x32xf32, #tpu.memory_space<vmem>>, %arg16: memref<2x8x16xf32, #tpu.memory_space<vmem>>) attributes {dimension_semantics = [], scalar_prefetch = 0 : i64, scratch_operands = 0 : i64, tpu.core_type = #tpu.core_type<tc>} {
    %c0 = arith.constant 0 : index
    %c0_0 = arith.constant 0 : index
    %0 = vector.load %arg0[%c0, %c0_0] : memref<16x32xf32, #tpu.memory_space<vmem>>, vector<16x32xf32>
    %1 = arith.truncf %0 : vector<16x32xf32> to vector<16x32xbf16>
    %c0_1 = arith.constant 0 : index
    %c0_2 = arith.constant 0 : index
    %2 = vector.load %arg5[%c0_1, %c0_2] : memref<32x32xf32, #tpu.memory_space<vmem>>, vector<32x32xf32>
    %3 = arith.truncf %2 : vector<32x32xf32> to vector<32x32xbf16>
    %cst = arith.constant dense<0.000000e+00> : vector<16x32xf32>
    %4 = tpu.matmul %1, %3, %cst {dimension_numbers = #tpu.dot_dimension_numbers<[1], [0], [0], [1], [0, 0, 1, 1], [], []>} : vector<16x32xbf16>, vector<32x32xbf16>, vector<16x32xf32> -> vector<16x32xf32>
    %c0_3 = arith.constant 0 : index
    %c0_4 = arith.constant 0 : index
    %5 = vector.load %arg6[%c0_3, %c0_4] : memref<1x32xf32, #tpu.memory_space<vmem>>, vector<1x32xf32>
    %6 = vector.broadcast %5 : vector<1x32xf32> to vector<16x32xf32>
    %7 = arith.addf %4, %6 : vector<16x32xf32>
    %cst_5 = arith.constant 0.353553385 : f32
    %8 = vector.broadcast %cst_5 : f32 to vector<16x32xf32>
    %9 = arith.mulf %7, %8 : vector<16x32xf32>
    %c0_6 = arith.constant 0 : index
    %c0_7 = arith.constant 0 : index
    %10 = vector.load %arg1[%c0_6, %c0_7] : memref<32x32xf32, #tpu.memory_space<vmem>>, vector<32x32xf32>
    %11 = arith.truncf %10 : vector<32x32xf32> to vector<32x32xbf16>
    %c0_8 = arith.constant 0 : index
    %c0_9 = arith.constant 0 : index
    %12 = vector.load %arg7[%c0_8, %c0_9] : memref<32x32xf32, #tpu.memory_space<vmem>>, vector<32x32xf32>
    %13 = arith.truncf %12 : vector<32x32xf32> to vector<32x32xbf16>
    %cst_10 = arith.constant dense<0.000000e+00> : vector<32x32xf32>
    %14 = tpu.matmul %11, %13, %cst_10 {dimension_numbers = #tpu.dot_dimension_numbers<[1], [0], [0], [1], [0, 0, 1, 1], [], []>} : vector<32x32xbf16>, vector<32x32xbf16>, vector<32x32xf32> -> vector<32x32xf32>
    %c0_11 = arith.constant 0 : index
    %c0_12 = arith.constant 0 : index
    %15 = vector.load %arg8[%c0_11, %c0_12] : memref<1x32xf32, #tpu.memory_space<vmem>>, vector<1x32xf32>
    %16 = vector.broadcast %15 : vector<1x32xf32> to vector<32x32xf32>
    %17 = arith.addf %14, %16 : vector<32x32xf32>
    %c0_13 = arith.constant 0 : index
    %c0_14 = arith.constant 0 : index
    %18 = vector.load %arg2[%c0_13, %c0_14] : memref<32x32xf32, #tpu.memory_space<vmem>>, vector<32x32xf32>
    %19 = arith.truncf %18 : vector<32x32xf32> to vector<32x32xbf16>
    %c0_15 = arith.constant 0 : index
    %c0_16 = arith.constant 0 : index
    %20 = vector.load %arg9[%c0_15, %c0_16] : memref<32x32xf32, #tpu.memory_space<vmem>>, vector<32x32xf32>
    %21 = arith.truncf %20 : vector<32x32xf32> to vector<32x32xbf16>
    %cst_17 = arith.constant dense<0.000000e+00> : vector<32x32xf32>
    %22 = tpu.matmul %19, %21, %cst_17 {dimension_numbers = #tpu.dot_dimension_numbers<[1], [0], [0], [1], [0, 0, 1, 1], [], []>} : vector<32x32xbf16>, vector<32x32xbf16>, vector<32x32xf32> -> vector<32x32xf32>
    %c0_18 = arith.constant 0 : index
    %c0_19 = arith.constant 0 : index
    %23 = vector.load %arg10[%c0_18, %c0_19] : memref<1x32xf32, #tpu.memory_space<vmem>>, vector<1x32xf32>
    %24 = vector.broadcast %23 : vector<1x32xf32> to vector<32x32xf32>
    %25 = arith.addf %22, %24 : vector<32x32xf32>
    %c0_20 = arith.constant 0 : index
    %c0_21 = arith.constant 0 : index
    %26 = vector.load %arg4[%c0_20, %c0_21] : memref<2x16xf32, #tpu.memory_space<vmem>>, vector<2x16xf32>
    %27 = vector.extract_strided_slice %9 {offsets = [0, 0], sizes = [8, 32], strides = [1, 1]} : vector<16x32xf32> to vector<8x32xf32>
    %28 = vector.extract_strided_slice %17 {offsets = [0, 0], sizes = [16, 32], strides = [1, 1]} : vector<32x32xf32> to vector<16x32xf32>
    %29 = vector.extract_strided_slice %25 {offsets = [0, 0], sizes = [16, 32], strides = [1, 1]} : vector<32x32xf32> to vector<16x32xf32>
    %30 = vector.extract_strided_slice %26 {offsets = [0, 0], sizes = [1, 16], strides = [1, 1]} : vector<2x16xf32> to vector<1x16xf32>
    %31 = vector.extract_strided_slice %27 {offsets = [0, 0], sizes = [8, 8], strides = [1, 1]} : vector<8x32xf32> to vector<8x8xf32>
    %32 = arith.truncf %31 : vector<8x8xf32> to vector<8x8xbf16>
    %33 = vector.extract_strided_slice %28 {offsets = [0, 0], sizes = [16, 8], strides = [1, 1]} : vector<16x32xf32> to vector<16x8xf32>
    %34 = arith.truncf %33 : vector<16x8xf32> to vector<16x8xbf16>
    %35 = vector.extract_strided_slice %29 {offsets = [0, 0], sizes = [16, 8], strides = [1, 1]} : vector<16x32xf32> to vector<16x8xf32>
    %36 = arith.truncf %35 : vector<16x8xf32> to vector<16x8xbf16>
    %cst_22 = arith.constant dense<0.000000e+00> : vector<8x16xf32>
    %37 = tpu.matmul %32, %34, %cst_22 {dimension_numbers = #tpu.dot_dimension_numbers<[1], [1], [0], [0], [0, 0, 1, 0], [], []>} : vector<8x8xbf16>, vector<16x8xbf16>, vector<8x16xf32> -> vector<8x16xf32>
    %38 = vector.broadcast %30 : vector<1x16xf32> to vector<8x16xf32>
    %39 = arith.addf %37, %38 : vector<8x16xf32>
    %cst_23 = arith.constant dense<0xFF800000> : vector<8xf32>
    %40 = vector.multi_reduction <maximumf>, %39, %cst_23 [1] : vector<8x16xf32> to vector<8xf32>
    %41 = vector.shape_cast %40 : vector<8xf32> to vector<8x1xf32>
    %42 = vector.broadcast %41 : vector<8x1xf32> to vector<8x16xf32>
    %43 = arith.subf %39, %42 : vector<8x16xf32>
    %44 = math.exp %43 : vector<8x16xf32>
    %cst_24 = arith.constant dense<0.000000e+00> : vector<8xf32>
    %45 = vector.multi_reduction <add>, %44, %cst_24 [1] : vector<8x16xf32> to vector<8xf32>
    %46 = vector.shape_cast %45 : vector<8xf32> to vector<8x1xf32>
    %47 = tpu.reciprocal %46 {approx = true} : vector<8x1xf32> -> vector<8x1xf32>
    %48 = vector.broadcast %47 : vector<8x1xf32> to vector<8x16xf32>
    %49 = arith.mulf %44, %48 : vector<8x16xf32>
    %50 = arith.truncf %49 : vector<8x16xf32> to vector<8x16xbf16>
    %cst_25 = arith.constant dense<0.000000e+00> : vector<8x8xf32>
    %51 = tpu.matmul %50, %36, %cst_25 {dimension_numbers = #tpu.dot_dimension_numbers<[1], [0], [0], [1], [0, 0, 1, 1], [], []>} : vector<8x16xbf16>, vector<16x8xbf16>, vector<8x8xf32> -> vector<8x8xf32>
    %52 = vector.extract_strided_slice %27 {offsets = [0, 8], sizes = [8, 8], strides = [1, 1]} : vector<8x32xf32> to vector<8x8xf32>
    %53 = arith.truncf %52 : vector<8x8xf32> to vector<8x8xbf16>
    %54 = vector.extract_strided_slice %28 {offsets = [0, 8], sizes = [16, 8], strides = [1, 1]} : vector<16x32xf32> to vector<16x8xf32>
    %55 = arith.truncf %54 : vector<16x8xf32> to vector<16x8xbf16>
    %56 = vector.extract_strided_slice %29 {offsets = [0, 8], sizes = [16, 8], strides = [1, 1]} : vector<16x32xf32> to vector<16x8xf32>
    %57 = arith.truncf %56 : vector<16x8xf32> to vector<16x8xbf16>
    %cst_26 = arith.constant dense<0.000000e+00> : vector<8x16xf32>
    %58 = tpu.matmul %53, %55, %cst_26 {dimension_numbers = #tpu.dot_dimension_numbers<[1], [1], [0], [0], [0, 0, 1, 0], [], []>} : vector<8x8xbf16>, vector<16x8xbf16>, vector<8x16xf32> -> vector<8x16xf32>
    %59 = vector.broadcast %30 : vector<1x16xf32> to vector<8x16xf32>
    %60 = arith.addf %58, %59 : vector<8x16xf32>
    %cst_27 = arith.constant dense<0xFF800000> : vector<8xf32>
    %61 = vector.multi_reduction <maximumf>, %60, %cst_27 [1] : vector<8x16xf32> to vector<8xf32>
    %62 = vector.shape_cast %61 : vector<8xf32> to vector<8x1xf32>
    %63 = vector.broadcast %62 : vector<8x1xf32> to vector<8x16xf32>
    %64 = arith.subf %60, %63 : vector<8x16xf32>
    %65 = math.exp %64 : vector<8x16xf32>
    %cst_28 = arith.constant dense<0.000000e+00> : vector<8xf32>
    %66 = vector.multi_reduction <add>, %65, %cst_28 [1] : vector<8x16xf32> to vector<8xf32>
    %67 = vector.shape_cast %66 : vector<8xf32> to vector<8x1xf32>
    %68 = tpu.reciprocal %67 {approx = true} : vector<8x1xf32> -> vector<8x1xf32>
    %69 = vector.broadcast %68 : vector<8x1xf32> to vector<8x16xf32>
    %70 = arith.mulf %65, %69 : vector<8x16xf32>
    %71 = arith.truncf %70 : vector<8x16xf32> to vector<8x16xbf16>
    %cst_29 = arith.constant dense<0.000000e+00> : vector<8x8xf32>
    %72 = tpu.matmul %71, %57, %cst_29 {dimension_numbers = #tpu.dot_dimension_numbers<[1], [0], [0], [1], [0, 0, 1, 1], [], []>} : vector<8x16xbf16>, vector<16x8xbf16>, vector<8x8xf32> -> vector<8x8xf32>
    %73 = arith.addf %49, %70 : vector<8x16xf32>
    %74 = vector.extract_strided_slice %27 {offsets = [0, 16], sizes = [8, 8], strides = [1, 1]} : vector<8x32xf32> to vector<8x8xf32>
    %75 = arith.truncf %74 : vector<8x8xf32> to vector<8x8xbf16>
    %76 = vector.extract_strided_slice %28 {offsets = [0, 16], sizes = [16, 8], strides = [1, 1]} : vector<16x32xf32> to vector<16x8xf32>
    %77 = arith.truncf %76 : vector<16x8xf32> to vector<16x8xbf16>
    %78 = vector.extract_strided_slice %29 {offsets = [0, 16], sizes = [16, 8], strides = [1, 1]} : vector<16x32xf32> to vector<16x8xf32>
    %79 = arith.truncf %78 : vector<16x8xf32> to vector<16x8xbf16>
    %cst_30 = arith.constant dense<0.000000e+00> : vector<8x16xf32>
    %80 = tpu.matmul %75, %77, %cst_30 {dimension_numbers = #tpu.dot_dimension_numbers<[1], [1], [0], [0], [0, 0, 1, 0], [], []>} : vector<8x8xbf16>, vector<16x8xbf16>, vector<8x16xf32> -> vector<8x16xf32>
    %81 = vector.broadcast %30 : vector<1x16xf32> to vector<8x16xf32>
    %82 = arith.addf %80, %81 : vector<8x16xf32>
    %cst_31 = arith.constant dense<0xFF800000> : vector<8xf32>
    %83 = vector.multi_reduction <maximumf>, %82, %cst_31 [1] : vector<8x16xf32> to vector<8xf32>
    %84 = vector.shape_cast %83 : vector<8xf32> to vector<8x1xf32>
    %85 = vector.broadcast %84 : vector<8x1xf32> to vector<8x16xf32>
    %86 = arith.subf %82, %85 : vector<8x16xf32>
    %87 = math.exp %86 : vector<8x16xf32>
    %cst_32 = arith.constant dense<0.000000e+00> : vector<8xf32>
    %88 = vector.multi_reduction <add>, %87, %cst_32 [1] : vector<8x16xf32> to vector<8xf32>
    %89 = vector.shape_cast %88 : vector<8xf32> to vector<8x1xf32>
    %90 = tpu.reciprocal %89 {approx = true} : vector<8x1xf32> -> vector<8x1xf32>
    %91 = vector.broadcast %90 : vector<8x1xf32> to vector<8x16xf32>
    %92 = arith.mulf %87, %91 : vector<8x16xf32>
    %93 = arith.truncf %92 : vector<8x16xf32> to vector<8x16xbf16>
    %cst_33 = arith.constant dense<0.000000e+00> : vector<8x8xf32>
    %94 = tpu.matmul %93, %79, %cst_33 {dimension_numbers = #tpu.dot_dimension_numbers<[1], [0], [0], [1], [0, 0, 1, 1], [], []>} : vector<8x16xbf16>, vector<16x8xbf16>, vector<8x8xf32> -> vector<8x8xf32>
    %95 = arith.addf %73, %92 : vector<8x16xf32>
    %96 = vector.extract_strided_slice %27 {offsets = [0, 24], sizes = [8, 8], strides = [1, 1]} : vector<8x32xf32> to vector<8x8xf32>
    %97 = arith.truncf %96 : vector<8x8xf32> to vector<8x8xbf16>
    %98 = vector.extract_strided_slice %28 {offsets = [0, 24], sizes = [16, 8], strides = [1, 1]} : vector<16x32xf32> to vector<16x8xf32>
    %99 = arith.truncf %98 : vector<16x8xf32> to vector<16x8xbf16>
    %100 = vector.extract_strided_slice %29 {offsets = [0, 24], sizes = [16, 8], strides = [1, 1]} : vector<16x32xf32> to vector<16x8xf32>
    %101 = arith.truncf %100 : vector<16x8xf32> to vector<16x8xbf16>
    %cst_34 = arith.constant dense<0.000000e+00> : vector<8x16xf32>
    %102 = tpu.matmul %97, %99, %cst_34 {dimension_numbers = #tpu.dot_dimension_numbers<[1], [1], [0], [0], [0, 0, 1, 0], [], []>} : vector<8x8xbf16>, vector<16x8xbf16>, vector<8x16xf32> -> vector<8x16xf32>
    %103 = vector.broadcast %30 : vector<1x16xf32> to vector<8x16xf32>
    %104 = arith.addf %102, %103 : vector<8x16xf32>
    %cst_35 = arith.constant dense<0xFF800000> : vector<8xf32>
    %105 = vector.multi_reduction <maximumf>, %104, %cst_35 [1] : vector<8x16xf32> to vector<8xf32>
    %106 = vector.shape_cast %105 : vector<8xf32> to vector<8x1xf32>
    %107 = vector.broadcast %106 : vector<8x1xf32> to vector<8x16xf32>
    %108 = arith.subf %104, %107 : vector<8x16xf32>
    %109 = math.exp %108 : vector<8x16xf32>
    %cst_36 = arith.constant dense<0.000000e+00> : vector<8xf32>
    %110 = vector.multi_reduction <add>, %109, %cst_36 [1] : vector<8x16xf32> to vector<8xf32>
    %111 = vector.shape_cast %110 : vector<8xf32> to vector<8x1xf32>
    %112 = tpu.reciprocal %111 {approx = true} : vector<8x1xf32> -> vector<8x1xf32>
    %113 = vector.broadcast %112 : vector<8x1xf32> to vector<8x16xf32>
    %114 = arith.mulf %109, %113 : vector<8x16xf32>
    %115 = arith.truncf %114 : vector<8x16xf32> to vector<8x16xbf16>
    %cst_37 = arith.constant dense<0.000000e+00> : vector<8x8xf32>
    %116 = tpu.matmul %115, %101, %cst_37 {dimension_numbers = #tpu.dot_dimension_numbers<[1], [0], [0], [1], [0, 0, 1, 1], [], []>} : vector<8x16xbf16>, vector<16x8xbf16>, vector<8x8xf32> -> vector<8x8xf32>
    %117 = arith.addf %95, %114 : vector<8x16xf32>
    %118 = tpu.concatenate %51, %72, %94, %116 in 1 : vector<8x8xf32>, vector<8x8xf32>, vector<8x8xf32>, vector<8x8xf32> -> vector<8x32xf32>
    %cst_38 = arith.constant 2.500000e-01 : f32
    %119 = vector.broadcast %cst_38 : f32 to vector<8x16xf32>
    %120 = arith.mulf %117, %119 : vector<8x16xf32>
    %c0_39 = arith.constant 0 : index
    %c0_40 = arith.constant 0 : index
    %c0_41 = arith.constant 0 : index
    %121 = vector.load %arg16[%c0_39, %c0_40, %c0_41] : memref<2x8x16xf32, #tpu.memory_space<vmem>>, vector<1x8x16xf32>
    %122 = vector.shape_cast %121 : vector<1x8x16xf32> to vector<8x16xf32>
    %123 = vector.shape_cast %120 : vector<8x16xf32> to vector<1x8x16xf32>
    tpu.vector_store %arg16[%c0_39, %c0_40, %c0_41], %123 {strides = array<i32>} : memref<2x8x16xf32, #tpu.memory_space<vmem>>, vector<1x8x16xf32>,
    %124 = vector.extract_strided_slice %9 {offsets = [8, 0], sizes = [8, 32], strides = [1, 1]} : vector<16x32xf32> to vector<8x32xf32>
    %125 = vector.extract_strided_slice %17 {offsets = [16, 0], sizes = [16, 32], strides = [1, 1]} : vector<32x32xf32> to vector<16x32xf32>
    %126 = vector.extract_strided_slice %25 {offsets = [16, 0], sizes = [16, 32], strides = [1, 1]} : vector<32x32xf32> to vector<16x32xf32>
    %127 = vector.extract_strided_slice %26 {offsets = [1, 0], sizes = [1, 16], strides = [1, 1]} : vector<2x16xf32> to vector<1x16xf32>
    %128 = vector.extract_strided_slice %124 {offsets = [0, 0], sizes = [8, 8], strides = [1, 1]} : vector<8x32xf32> to vector<8x8xf32>
    %129 = arith.truncf %128 : vector<8x8xf32> to vector<8x8xbf16>
    %130 = vector.extract_strided_slice %125 {offsets = [0, 0], sizes = [16, 8], strides = [1, 1]} : vector<16x32xf32> to vector<16x8xf32>
    %131 = arith.truncf %130 : vector<16x8xf32> to vector<16x8xbf16>
    %132 = vector.extract_strided_slice %126 {offsets = [0, 0], sizes = [16, 8], strides = [1, 1]} : vector<16x32xf32> to vector<16x8xf32>
    %133 = arith.truncf %132 : vector<16x8xf32> to vector<16x8xbf16>
    %cst_42 = arith.constant dense<0.000000e+00> : vector<8x16xf32>
    %134 = tpu.matmul %129, %131, %cst_42 {dimension_numbers = #tpu.dot_dimension_numbers<[1], [1], [0], [0], [0, 0, 1, 0], [], []>} : vector<8x8xbf16>, vector<16x8xbf16>, vector<8x16xf32> -> vector<8x16xf32>
    %135 = vector.broadcast %127 : vector<1x16xf32> to vector<8x16xf32>
    %136 = arith.addf %134, %135 : vector<8x16xf32>
    %cst_43 = arith.constant dense<0xFF800000> : vector<8xf32>
    %137 = vector.multi_reduction <maximumf>, %136, %cst_43 [1] : vector<8x16xf32> to vector<8xf32>
    %138 = vector.shape_cast %137 : vector<8xf32> to vector<8x1xf32>
    %139 = vector.broadcast %138 : vector<8x1xf32> to vector<8x16xf32>
    %140 = arith.subf %136, %139 : vector<8x16xf32>
    %141 = math.exp %140 : vector<8x16xf32>
    %cst_44 = arith.constant dense<0.000000e+00> : vector<8xf32>
    %142 = vector.multi_reduction <add>, %141, %cst_44 [1] : vector<8x16xf32> to vector<8xf32>
    %143 = vector.shape_cast %142 : vector<8xf32> to vector<8x1xf32>
    %144 = tpu.reciprocal %143 {approx = true} : vector<8x1xf32> -> vector<8x1xf32>
    %145 = vector.broadcast %144 : vector<8x1xf32> to vector<8x16xf32>
    %146 = arith.mulf %141, %145 : vector<8x16xf32>
    %147 = arith.truncf %146 : vector<8x16xf32> to vector<8x16xbf16>
    %cst_45 = arith.constant dense<0.000000e+00> : vector<8x8xf32>
    %148 = tpu.matmul %147, %133, %cst_45 {dimension_numbers = #tpu.dot_dimension_numbers<[1], [0], [0], [1], [0, 0, 1, 1], [], []>} : vector<8x16xbf16>, vector<16x8xbf16>, vector<8x8xf32> -> vector<8x8xf32>
    %149 = vector.extract_strided_slice %124 {offsets = [0, 8], sizes = [8, 8], strides = [1, 1]} : vector<8x32xf32> to vector<8x8xf32>
    %150 = arith.truncf %149 : vector<8x8xf32> to vector<8x8xbf16>
    %151 = vector.extract_strided_slice %125 {offsets = [0, 8], sizes = [16, 8], strides = [1, 1]} : vector<16x32xf32> to vector<16x8xf32>
    %152 = arith.truncf %151 : vector<16x8xf32> to vector<16x8xbf16>
    %153 = vector.extract_strided_slice %126 {offsets = [0, 8], sizes = [16, 8], strides = [1, 1]} : vector<16x32xf32> to vector<16x8xf32>
    %154 = arith.truncf %153 : vector<16x8xf32> to vector<16x8xbf16>
    %cst_46 = arith.constant dense<0.000000e+00> : vector<8x16xf32>
    %155 = tpu.matmul %150, %152, %cst_46 {dimension_numbers = #tpu.dot_dimension_numbers<[1], [1], [0], [0], [0, 0, 1, 0], [], []>} : vector<8x8xbf16>, vector<16x8xbf16>, vector<8x16xf32> -> vector<8x16xf32>
    %156 = vector.broadcast %127 : vector<1x16xf32> to vector<8x16xf32>
    %157 = arith.addf %155, %156 : vector<8x16xf32>
    %cst_47 = arith.constant dense<0xFF800000> : vector<8xf32>
    %158 = vector.multi_reduction <maximumf>, %157, %cst_47 [1] : vector<8x16xf32> to vector<8xf32>
    %159 = vector.shape_cast %158 : vector<8xf32> to vector<8x1xf32>
    %160 = vector.broadcast %159 : vector<8x1xf32> to vector<8x16xf32>
    %161 = arith.subf %157, %160 : vector<8x16xf32>
    %162 = math.exp %161 : vector<8x16xf32>
    %cst_48 = arith.constant dense<0.000000e+00> : vector<8xf32>
    %163 = vector.multi_reduction <add>, %162, %cst_48 [1] : vector<8x16xf32> to vector<8xf32>
    %164 = vector.shape_cast %163 : vector<8xf32> to vector<8x1xf32>
    %165 = tpu.reciprocal %164 {approx = true} : vector<8x1xf32> -> vector<8x1xf32>
    %166 = vector.broadcast %165 : vector<8x1xf32> to vector<8x16xf32>
    %167 = arith.mulf %162, %166 : vector<8x16xf32>
    %168 = arith.truncf %167 : vector<8x16xf32> to vector<8x16xbf16>
    %cst_49 = arith.constant dense<0.000000e+00> : vector<8x8xf32>
    %169 = tpu.matmul %168, %154, %cst_49 {dimension_numbers = #tpu.dot_dimension_numbers<[1], [0], [0], [1], [0, 0, 1, 1], [], []>} : vector<8x16xbf16>, vector<16x8xbf16>, vector<8x8xf32> -> vector<8x8xf32>
    %170 = arith.addf %146, %167 : vector<8x16xf32>
    %171 = vector.extract_strided_slice %124 {offsets = [0, 16], sizes = [8, 8], strides = [1, 1]} : vector<8x32xf32> to vector<8x8xf32>
    %172 = arith.truncf %171 : vector<8x8xf32> to vector<8x8xbf16>
    %173 = vector.extract_strided_slice %125 {offsets = [0, 16], sizes = [16, 8], strides = [1, 1]} : vector<16x32xf32> to vector<16x8xf32>
    %174 = arith.truncf %173 : vector<16x8xf32> to vector<16x8xbf16>
    %175 = vector.extract_strided_slice %126 {offsets = [0, 16], sizes = [16, 8], strides = [1, 1]} : vector<16x32xf32> to vector<16x8xf32>
    %176 = arith.truncf %175 : vector<16x8xf32> to vector<16x8xbf16>
    %cst_50 = arith.constant dense<0.000000e+00> : vector<8x16xf32>
    %177 = tpu.matmul %172, %174, %cst_50 {dimension_numbers = #tpu.dot_dimension_numbers<[1], [1], [0], [0], [0, 0, 1, 0], [], []>} : vector<8x8xbf16>, vector<16x8xbf16>, vector<8x16xf32> -> vector<8x16xf32>
    %178 = vector.broadcast %127 : vector<1x16xf32> to vector<8x16xf32>
    %179 = arith.addf %177, %178 : vector<8x16xf32>
    %cst_51 = arith.constant dense<0xFF800000> : vector<8xf32>
    %180 = vector.multi_reduction <maximumf>, %179, %cst_51 [1] : vector<8x16xf32> to vector<8xf32>
    %181 = vector.shape_cast %180 : vector<8xf32> to vector<8x1xf32>
    %182 = vector.broadcast %181 : vector<8x1xf32> to vector<8x16xf32>
    %183 = arith.subf %179, %182 : vector<8x16xf32>
    %184 = math.exp %183 : vector<8x16xf32>
    %cst_52 = arith.constant dense<0.000000e+00> : vector<8xf32>
    %185 = vector.multi_reduction <add>, %184, %cst_52 [1] : vector<8x16xf32> to vector<8xf32>
    %186 = vector.shape_cast %185 : vector<8xf32> to vector<8x1xf32>
    %187 = tpu.reciprocal %186 {approx = true} : vector<8x1xf32> -> vector<8x1xf32>
    %188 = vector.broadcast %187 : vector<8x1xf32> to vector<8x16xf32>
    %189 = arith.mulf %184, %188 : vector<8x16xf32>
    %190 = arith.truncf %189 : vector<8x16xf32> to vector<8x16xbf16>
    %cst_53 = arith.constant dense<0.000000e+00> : vector<8x8xf32>
    %191 = tpu.matmul %190, %176, %cst_53 {dimension_numbers = #tpu.dot_dimension_numbers<[1], [0], [0], [1], [0, 0, 1, 1], [], []>} : vector<8x16xbf16>, vector<16x8xbf16>, vector<8x8xf32> -> vector<8x8xf32>
    %192 = arith.addf %170, %189 : vector<8x16xf32>
    %193 = vector.extract_strided_slice %124 {offsets = [0, 24], sizes = [8, 8], strides = [1, 1]} : vector<8x32xf32> to vector<8x8xf32>
    %194 = arith.truncf %193 : vector<8x8xf32> to vector<8x8xbf16>
    %195 = vector.extract_strided_slice %125 {offsets = [0, 24], sizes = [16, 8], strides = [1, 1]} : vector<16x32xf32> to vector<16x8xf32>
    %196 = arith.truncf %195 : vector<16x8xf32> to vector<16x8xbf16>
    %197 = vector.extract_strided_slice %126 {offsets = [0, 24], sizes = [16, 8], strides = [1, 1]} : vector<16x32xf32> to vector<16x8xf32>
    %198 = arith.truncf %197 : vector<16x8xf32> to vector<16x8xbf16>
    %cst_54 = arith.constant dense<0.000000e+00> : vector<8x16xf32>
    %199 = tpu.matmul %194, %196, %cst_54 {dimension_numbers = #tpu.dot_dimension_numbers<[1], [1], [0], [0], [0, 0, 1, 0], [], []>} : vector<8x8xbf16>, vector<16x8xbf16>, vector<8x16xf32> -> vector<8x16xf32>
    %200 = vector.broadcast %127 : vector<1x16xf32> to vector<8x16xf32>
    %201 = arith.addf %199, %200 : vector<8x16xf32>
    %cst_55 = arith.constant dense<0xFF800000> : vector<8xf32>
    %202 = vector.multi_reduction <maximumf>, %201, %cst_55 [1] : vector<8x16xf32> to vector<8xf32>
    %203 = vector.shape_cast %202 : vector<8xf32> to vector<8x1xf32>
    %204 = vector.broadcast %203 : vector<8x1xf32> to vector<8x16xf32>
    %205 = arith.subf %201, %204 : vector<8x16xf32>
    %206 = math.exp %205 : vector<8x16xf32>
    %cst_56 = arith.constant dense<0.000000e+00> : vector<8xf32>
    %207 = vector.multi_reduction <add>, %206, %cst_56 [1] : vector<8x16xf32> to vector<8xf32>
    %208 = vector.shape_cast %207 : vector<8xf32> to vector<8x1xf32>
    %209 = tpu.reciprocal %208 {approx = true} : vector<8x1xf32> -> vector<8x1xf32>
    %210 = vector.broadcast %209 : vector<8x1xf32> to vector<8x16xf32>
    %211 = arith.mulf %206, %210 : vector<8x16xf32>
    %212 = arith.truncf %211 : vector<8x16xf32> to vector<8x16xbf16>
    %cst_57 = arith.constant dense<0.000000e+00> : vector<8x8xf32>
    %213 = tpu.matmul %212, %198, %cst_57 {dimension_numbers = #tpu.dot_dimension_numbers<[1], [0], [0], [1], [0, 0, 1, 1], [], []>} : vector<8x16xbf16>, vector<16x8xbf16>, vector<8x8xf32> -> vector<8x8xf32>
    %214 = arith.addf %192, %211 : vector<8x16xf32>
    %215 = tpu.concatenate %148, %169, %191, %213 in 1 : vector<8x8xf32>, vector<8x8xf32>, vector<8x8xf32>, vector<8x8xf32> -> vector<8x32xf32>
    %cst_58 = arith.constant 2.500000e-01 : f32
    %216 = vector.broadcast %cst_58 : f32 to vector<8x16xf32>
    %217 = arith.mulf %214, %216 : vector<8x16xf32>
    %c1 = arith.constant 1 : index
    %c0_59 = arith.constant 0 : index
    %c0_60 = arith.constant 0 : index
    %218 = vector.load %arg16[%c1, %c0_59, %c0_60] : memref<2x8x16xf32, #tpu.memory_space<vmem>>, vector<1x8x16xf32>
    %219 = vector.shape_cast %218 : vector<1x8x16xf32> to vector<8x16xf32>
    %220 = vector.shape_cast %217 : vector<8x16xf32> to vector<1x8x16xf32>
    tpu.vector_store %arg16[%c1, %c0_59, %c0_60], %220 {strides = array<i32>} : memref<2x8x16xf32, #tpu.memory_space<vmem>>, vector<1x8x16xf32>,
    %221 = tpu.concatenate %118, %215 in 0 : vector<8x32xf32>, vector<8x32xf32> -> vector<16x32xf32>
    %222 = arith.truncf %221 : vector<16x32xf32> to vector<16x32xbf16>
    %c0_61 = arith.constant 0 : index
    %c0_62 = arith.constant 0 : index
    %223 = vector.load %arg11[%c0_61, %c0_62] : memref<32x32xf32, #tpu.memory_space<vmem>>, vector<32x32xf32>
    %224 = arith.truncf %223 : vector<32x32xf32> to vector<32x32xbf16>
    %cst_63 = arith.constant dense<0.000000e+00> : vector<16x32xf32>
    %225 = tpu.matmul %222, %224, %cst_63 {dimension_numbers = #tpu.dot_dimension_numbers<[1], [0], [0], [1], [0, 0, 1, 1], [], []>} : vector<16x32xbf16>, vector<32x32xbf16>, vector<16x32xf32> -> vector<16x32xf32>
    %c0_64 = arith.constant 0 : index
    %c0_65 = arith.constant 0 : index
    %226 = vector.load %arg12[%c0_64, %c0_65] : memref<1x32xf32, #tpu.memory_space<vmem>>, vector<1x32xf32>
    %227 = vector.broadcast %226 : vector<1x32xf32> to vector<16x32xf32>
    %228 = arith.addf %225, %227 : vector<16x32xf32>
    %c0_66 = arith.constant 0 : index
    %c0_67 = arith.constant 0 : index
    %229 = vector.load %arg3[%c0_66, %c0_67] : memref<16x32xf32, #tpu.memory_space<vmem>>, vector<16x32xf32>
    %230 = arith.addf %229, %228 : vector<16x32xf32>
    %c0_68 = arith.constant 0 : index
    %c0_69 = arith.constant 0 : index
    %231 = vector.load %arg13[%c0_68, %c0_69] : memref<1x32xf32, #tpu.memory_space<vmem>>, vector<1x32xf32>
    %c0_70 = arith.constant 0 : index
    %c0_71 = arith.constant 0 : index
    %232 = vector.load %arg14[%c0_70, %c0_71] : memref<1x32xf32, #tpu.memory_space<vmem>>, vector<1x32xf32>
    %cst_72 = arith.constant dense<0.000000e+00> : vector<16xf32>
    %233 = vector.multi_reduction <add>, %230, %cst_72 [1] : vector<16x32xf32> to vector<16xf32>
    %234 = vector.shape_cast %233 : vector<16xf32> to vector<16x1xf32>
    %cst_73 = arith.constant 3.200000e+01 : f32
    %235 = vector.broadcast %cst_73 : f32 to vector<16x1xf32>
    %236 = arith.divf %234, %235 : vector<16x1xf32>
    %237 = vector.broadcast %236 : vector<16x1xf32> to vector<16x32xf32>
    %238 = arith.subf %230, %237 : vector<16x32xf32>
    %239 = arith.mulf %238, %238 : vector<16x32xf32>
    %cst_74 = arith.constant dense<0.000000e+00> : vector<16xf32>
    %240 = vector.multi_reduction <add>, %239, %cst_74 [1] : vector<16x32xf32> to vector<16xf32>
    %241 = vector.shape_cast %240 : vector<16xf32> to vector<16x1xf32>
    %cst_75 = arith.constant 3.200000e+01 : f32
    %242 = vector.broadcast %cst_75 : f32 to vector<16x1xf32>
    %243 = arith.divf %241, %242 : vector<16x1xf32>
    %cst_76 = arith.constant 9.99999974E-6 : f32
    %244 = vector.broadcast %cst_76 : f32 to vector<16x1xf32>
    %245 = arith.addf %243, %244 : vector<16x1xf32>
    %246 = math.rsqrt %245 : vector<16x1xf32>
    %247 = vector.broadcast %246 : vector<16x1xf32> to vector<16x32xf32>
    %248 = arith.mulf %238, %247 : vector<16x32xf32>
    %249 = vector.broadcast %231 : vector<1x32xf32> to vector<16x32xf32>
    %250 = arith.mulf %248, %249 : vector<16x32xf32>
    %251 = vector.broadcast %232 : vector<1x32xf32> to vector<16x32xf32>
    %252 = arith.addf %250, %251 : vector<16x32xf32>
    %c0_77 = arith.constant 0 : index
    %c0_78 = arith.constant 0 : index
    %253 = vector.load %arg15[%c0_77, %c0_78] : memref<16x32xf32, #tpu.memory_space<vmem>>, vector<16x32xf32>
    tpu.vector_store %arg15[%c0_77, %c0_78], %252 {strides = array<i32>} : memref<16x32xf32, #tpu.memory_space<vmem>>, vector<16x32xf32>,
    return
  }
}

</mosaic_0001>

<llo_original>
// kernel: transformer_forward.25
$region0: #{transformer_forward.25}
  #allocation0 [shape = 'u32[]', space=smem, size = 0x4, offset = 0x4, fixed_abs, tag = 'smem constant byte address 0x4 - core index']
  #allocation1 [shape = 'u32[144,128]{1,0:T(1,128)}', space=vmem, size = 0x12000, scoped, tag = 'internal scratch']
  %s0 = inlined_call_operand.vmem [shape: f32[32,32], index: 0, kind: input, shape index: {}]
  %s1 = inlined_call_operand.vmem [shape: f32[32,64], index: 1, kind: input, shape index: {}]
  %s2 = inlined_call_operand.vmem [shape: f32[1,64], index: 2, kind: input, shape index: {}]
  %s3 = inlined_call_operand.vmem [shape: f32[64,32], index: 3, kind: input, shape index: {}]
  %s4 = inlined_call_operand.vmem [shape: f32[1,32], index: 4, kind: input, shape index: {}]
  %s5 = inlined_call_operand.vmem [shape: f32[1,32], index: 5, kind: input, shape index: {}]
  %s6 = inlined_call_operand.vmem [shape: f32[1,32], index: 6, kind: input, shape index: {}]
  %s7 = inlined_call_operand.vmem [shape: f32[32,32], index: 7, kind: output, shape index: {}]
  %s8 = sld [smem:[#allocation0]]
  $region38: #{transformer_forward.25} parent=0
    _
  %s10 = ssub.s32 1, %s8
  %s11 = scalar_select 0, %s10, %s8
  // Predicated region
  $region2: #{transformer_forward.25} parent=0 // pred_check
    _
  $region3: #{transformer_forward.25} parent=0 // pred_check_branch
    %13 = sbr.rel (0) target = $region5
  $region4: #{transformer_forward.25} parent=0 // pred_region
    _
  $region5: #{transformer_forward.25} parent=0 // pred_fallthru
    _
  // Predicated region
  $region6: #{transformer_forward.25} parent=0 // pred_check
    _
  $region7: #{transformer_forward.25} parent=0 // pred_check_branch
    %15 = sbr.rel (0) target = $region9
  $region8: #{transformer_forward.25} parent=0 // pred_region
    _
  $region9: #{transformer_forward.25} parent=0 // pred_fallthru
    _
  // Predicated region
  $region10: #{transformer_forward.25} parent=0 // pred_check
    _
  $region11: #{transformer_forward.25} parent=0 // pred_check_branch
    %17 = sbr.rel (0) target = $region13
  $region12: #{transformer_forward.25} parent=0 // pred_region
    _
  $region13: #{transformer_forward.25} parent=0 // pred_fallthru
    _
  // Predicated region
  $region14: #{transformer_forward.25} parent=0 // pred_check
    _
  $region15: #{transformer_forward.25} parent=0 // pred_check_branch
    %19 = sbr.rel (0) target = $region17
  $region16: #{transformer_forward.25} parent=0 // pred_region
    _
  $region17: #{transformer_forward.25} parent=0 // pred_fallthru
    _
  // Predicated region
  $region18: #{transformer_forward.25} parent=0 // pred_check
    _
  $region19: #{transformer_forward.25} parent=0 // pred_check_branch
    %21 = sbr.rel (0) target = $region21
  $region20: #{transformer_forward.25} parent=0 // pred_region
    _
  $region21: #{transformer_forward.25} parent=0 // pred_fallthru
    _
  // Predicated region
  $region22: #{transformer_forward.25} parent=0 // pred_check
    _
  $region23: #{transformer_forward.25} parent=0 // pred_check_branch
    %23 = sbr.rel (0) target = $region25
  $region24: #{transformer_forward.25} parent=0 // pred_region
    _
  $region25: #{transformer_forward.25} parent=0 // pred_fallthru
    _
  // Predicated region
  $region26: #{transformer_forward.25} parent=0 // pred_check
    _
  $region27: #{transformer_forward.25} parent=0 // pred_check_branch
    %25 = sbr.rel (0) target = $region29
  $region28: #{transformer_forward.25} parent=0 // pred_region
    _
  $region29: #{transformer_forward.25} parent=0 // pred_fallthru
    _
  %v27 = vld [vmem:[%s0] sm:$0xff]
  %v28 = vld [vmem:[%s0 + $0x8] sm:$0xff]
  %v29 = vld [vmem:[%s0 + $0x10] sm:$0xff]
  %v30 = vld [vmem:[%s0 + $0x18] sm:$0xff]
  %v31 = vpack.c.bf16 %v28, %v27
  %v32 = vpack.c.bf16 %v30, %v29
  %v33 = vld [vmem:[%s1] sm:$0xff]
  %v34 = vld [vmem:[%s1 + $0x8] sm:$0xff]
  %v35 = vld [vmem:[%s1 + $0x10] sm:$0xff]
  %v36 = vld [vmem:[%s1 + $0x18] sm:$0xff]
  %v37 = vpack.c.bf16 %v34, %v33
  %v38 = vpack.c.bf16 %v36, %v35
  %v39 = vld [vmem:[%s2] sm:$0x1]
  %v41 = vlaneseq
  %v42 = vshrl.u32 %v41, 7
  %v43 = vsub.s32 0, %v42
  %v44 = vrot.slane %v39, %v43
  %vm46 = vcmask 261120
  %v48 = vsel %vm46, %v31, 0
  %v51 = vsel %vm46, %v32, 0
  %53 = vmatprep.subr.bf16.mxu0 0
  %54 = vmatpush1.bf16.msra.mxu0 0
  %55 = vmatprep.subr.bf16.mxu0 0
  %56 = vmatpush1.bf16.msra.mxu0 0
  %57 = vmatprep.subr.bf16.mxu0 0
  %58 = vmatpush1.bf16.msra.mxu0 0
  %59 = vmatprep.subr.bf16.mxu0 0
  %60 = vmatpush1.bf16.msra.mxu0 0
  %61 = vmatprep.subr.bf16.mxu0 0
  %62 = vmatpush1.bf16.msra.mxu0 0
  %63 = vmatprep.subr.bf16.mxu0 0
  %64 = vmatpush1.bf16.msra.mxu0 0
  %65 = vmatprep.subr.bf16.mxu0 0
  %66 = vmatpush1.bf16.msra.mxu0 %v38
  %67 = vmatprep.subr.bf16.mxu0 0
  %68 = vmatpush1.bf16.msra.mxu0 %v37
  %69 = vmatprep.subr.bf16.mxu0 0
  %70 = vmatpush2.bf16.msra.mxu0 0
  %71 = vmatprep.subr.bf16.mxu0 0
  %72 = vmatpush2.bf16.msra.mxu0 0
  %73 = vmatprep.subr.bf16.mxu0 0
  %74 = vmatpush2.bf16.msra.mxu0 0
  %75 = vmatprep.subr.bf16.mxu0 0
  %76 = vmatpush2.bf16.msra.mxu0 0
  %77 = vmatprep.subr.bf16.mxu0 0
  %78 = vmatpush2.bf16.msra.mxu0 0
  %79 = vmatprep.subr.bf16.mxu0 0
  %80 = vmatpush2.bf16.msra.mxu0 0
  %81 = vmatprep.subr.bf16.mxu0 0
  %82 = vmatpush2.bf16.msra.mxu0 0
  %83 = vmatprep.subr.bf16.mxu0 0
  %84 = vmatpush2.bf16.msra.mxu0 0
  %85 = vmatprep.mubr.bf16.mxu0 0
  %86 = vmatmul.mubr.bf16.gmra.mxu0 %v48
  %v87 = vpop.f32.mrf.mxu0
  %v88 = vadd.f32 %v44, %v87
  %v89 = vpop.f32.mrf.mxu0
  %v90 = vpop.f32.mrf.mxu0
  %v91 = vadd.f32 %v44, %v90
  %v92 = vpop.f32.mrf.mxu0
  %93 = vmatprep.mubr.bf16.mxu0 0
  %94 = vmatmul.mubr.bf16.gmra.mxu0 %v51
  %v95 = vpop.f32.mrf.mxu0
  %v96 = vadd.f32 %v44, %v95
  %v97 = vpop.f32.mrf.mxu0
  %v98 = vpop.f32.mrf.mxu0
  %v99 = vadd.f32 %v44, %v98
  %v100 = vpop.f32.mrf.mxu0
  %101 = vdwg.mxu0
  %v102 = vmax.f32 %v88, 0.0
  %v103 = vmax.f32 %v91, 0.0
  %v104 = vmax.f32 %v96, 0.0
  %v105 = vmax.f32 %v99, 0.0
  %v106 = vpack.c.bf16 %v103, %v102
  %v107 = vpack.c.bf16 %v105, %v104
  %v108 = vld [vmem:[%s3] sm:$0xff]
  %v109 = vld [vmem:[%s3 + $0x8] sm:$0xff]
  %v110 = vld [vmem:[%s3 + $0x10] sm:$0xff]
  %v111 = vld [vmem:[%s3 + $0x18] sm:$0xff]
  %v112 = vld [vmem:[%s3 + $0x20] sm:$0xff]
  %v113 = vld [vmem:[%s3 + $0x28] sm:$0xff]
  %v114 = vld [vmem:[%s3 + $0x30] sm:$0xff]
  %v115 = vld [vmem:[%s3 + $0x38] sm:$0xff]
  %v116 = vpack.c.bf16 %v109, %v108
  %v117 = vpack.c.bf16 %v111, %v110
  %v118 = vpack.c.bf16 %v113, %v112
  %v119 = vpack.c.bf16 %v115, %v114
  %v120 = vld [vmem:[%s4] sm:$0x1]
  %v122 = vlaneseq
  %v123 = vshrl.u32 %v122, 7
  %v124 = vsub.s32 0, %v123
  %v125 = vrot.slane %v120, %v124
  %vm127 = vcmask 523264
  %v129 = vsel %vm127, %v106, 0
  %v132 = vsel %vm127, %v107, 0
  %134 = vmatprep.subr.bf16.mxu0 0
  %135 = vmatpush1.bf16.msra.mxu0 0
  %136 = vmatprep.subr.bf16.mxu0 0
  %137 = vmatpush1.bf16.msra.mxu0 0
  %138 = vmatprep.subr.bf16.mxu0 0
  %139 = vmatpush1.bf16.msra.mxu0 0
  %140 = vmatprep.subr.bf16.mxu0 0
  %141 = vmatpush1.bf16.msra.mxu0 0
  %142 = vmatprep.subr.bf16.mxu0 0
  %143 = vmatpush1.bf16.msra.mxu0 %v119
  %144 = vmatprep.subr.bf16.mxu0 0
  %145 = vmatpush1.bf16.msra.mxu0 %v118
  %146 = vmatprep.subr.bf16.mxu0 0
  %147 = vmatpush1.bf16.msra.mxu0 %v117
  %148 = vmatprep.subr.bf16.mxu0 0
  %149 = vmatpush1.bf16.msra.mxu0 %v116
  %150 = vmatprep.subr.bf16.mxu0 0
  %151 = vmatpush2.bf16.msra.mxu0 0
  %152 = vmatprep.subr.bf16.mxu0 0
  %153 = vmatpush2.bf16.msra.mxu0 0
  %154 = vmatprep.subr.bf16.mxu0 0
  %155 = vmatpush2.bf16.msra.mxu0 0
  %156 = vmatprep.subr.bf16.mxu0 0
  %157 = vmatpush2.bf16.msra.mxu0 0
  %158 = vmatprep.subr.bf16.mxu0 0
  %159 = vmatpush2.bf16.msra.mxu0 0
  %160 = vmatprep.subr.bf16.mxu0 0
  %161 = vmatpush2.bf16.msra.mxu0 0
  %162 = vmatprep.subr.bf16.mxu0 0
  %163 = vmatpush2.bf16.msra.mxu0 0
  %164 = vmatprep.subr.bf16.mxu0 0
  %165 = vmatpush2.bf16.msra.mxu0 0
  %166 = vmatprep.mubr.bf16.mxu0 0
  %167 = vmatmul.mubr.bf16.gmra.mxu0 %v129
  %v168 = vpop.f32.mrf.mxu0
  %v169 = vadd.f32 %v125, %v168
  %v170 = vpop.f32.mrf.mxu0
  %v171 = vpop.f32.mrf.mxu0
  %v172 = vadd.f32 %v125, %v171
  %v173 = vpop.f32.mrf.mxu0
  %174 = vmatprep.mubr.bf16.mxu0 0
  %175 = vmatmul.mubr.bf16.gmra.mxu0 %v132
  %v176 = vpop.f32.mrf.mxu0
  %v177 = vadd.f32 %v125, %v176
  %v178 = vpop.f32.mrf.mxu0
  %v179 = vpop.f32.mrf.mxu0
  %v180 = vadd.f32 %v125, %v179
  %v181 = vpop.f32.mrf.mxu0
  %182 = vdwg.mxu0
  %v183 = vadd.f32 %v27, %v169
  %v184 = vadd.f32 %v28, %v172
  %v185 = vadd.f32 %v29, %v177
  %v186 = vadd.f32 %v30, %v180
  %v187 = vld [vmem:[%s5] sm:$0x1]
  %v188 = vld [vmem:[%s6] sm:$0x1]
  %v189 = vsel %vm46, %v183, 0.0
  %190 = vadd.xlane.f32.xlu0 %v189
  %v191 = vpop.xlane.xlu0 %190
  %v192 = vsel %vm46, %v184, 0.0
  %193 = vadd.xlane.f32.xlu0 %v192
  %v194 = vpop.xlane.xlu0 %193
  %v195 = vsel %vm46, %v185, 0.0
  %196 = vadd.xlane.f32.xlu0 %v195
  %v197 = vpop.xlane.xlu0 %196
  %v198 = vsel %vm46, %v186, 0.0
  %199 = vadd.xlane.f32.xlu0 %v198
  %v200 = vpop.xlane.xlu0 %199
  %v201 = vrcp.pop 32.0
  %v202 = vmul.f32 %v191, %v201
  %v203 = vmul.f32 %v194, %v201
  %v204 = vmul.f32 %v197, %v201
  %v205 = vmul.f32 %v200, %v201
  %v206 = vsub.f32 %v183, %v202
  %v207 = vsub.f32 %v184, %v203
  %v208 = vsub.f32 %v185, %v204
  %v209 = vsub.f32 %v186, %v205
  %v210 = vmul.f32 %v206, %v206
  %v211 = vmul.f32 %v207, %v207
  %v212 = vmul.f32 %v208, %v208
  %v213 = vmul.f32 %v209, %v209
  %v214 = vsel %vm46, %v210, 0.0
  %215 = vadd.xlane.f32.xlu0 %v214
  %v216 = vpop.xlane.xlu0 %215
  %v217 = vsel %vm46, %v211, 0.0
  %218 = vadd.xlane.f32.xlu0 %v217
  %v219 = vpop.xlane.xlu0 %218
  %v220 = vsel %vm46, %v212, 0.0
  %221 = vadd.xlane.f32.xlu0 %v220
  %v222 = vpop.xlane.xlu0 %221
  %v223 = vsel %vm46, %v213, 0.0
  %224 = vadd.xlane.f32.xlu0 %v223
  %v225 = vpop.xlane.xlu0 %224
  %v226 = vmul.f32 %v216, %v201
  %v227 = vmul.f32 %v219, %v201
  %v228 = vmul.f32 %v222, %v201
  %v229 = vmul.f32 %v225, %v201
  %v230 = vadd.f32 %v226, 1e-05
  %v231 = vadd.f32 %v227, 1e-05
  %v232 = vadd.f32 %v228, 1e-05
  %v233 = vadd.f32 %v229, 1e-05
  %v234 = vrsqrt.pop %v230
  %v235 = vrsqrt.pop %v231
  %v236 = vrsqrt.pop %v232
  %v237 = vrsqrt.pop %v233
  %v238 = vmul.f32 %v206, %v234
  %v239 = vmul.f32 %v207, %v235
  %v240 = vmul.f32 %v208, %v236
  %v241 = vmul.f32 %v209, %v237
  %v243 = vlaneseq
  %v244 = vshrl.u32 %v243, 7
  %v245 = vsub.s32 0, %v244
  %v246 = vrot.slane %v187, %v245
  %v248 = vmul.f32 %v238, %v246
  %v249 = vmul.f32 %v239, %v246
  %v250 = vmul.f32 %v240, %v246
  %v251 = vmul.f32 %v241, %v246
  %v253 = vlaneseq
  %v254 = vshrl.u32 %v253, 7
  %v255 = vsub.s32 0, %v254
  %v256 = vrot.slane %v188, %v255
  %v258 = vadd.f32 %v248, %v256
  %v259 = vadd.f32 %v249, %v256
  %v260 = vadd.f32 %v250, %v256
  %v261 = vadd.f32 %v251, %v256
  %262 = vst.msk [vmem:[%s7] sm:$0xff] %vm46, %v258
  %263 = vst.msk [vmem:[%s7 + $0x8] sm:$0xff] %vm46, %v259
  %264 = vst.msk [vmem:[%s7 + $0x10] sm:$0xff] %vm46, %v260
  %265 = vst.msk [vmem:[%s7 + $0x18] sm:$0xff] %vm46, %v261
  // Predicated region
  $region30: #{transformer_forward.25} parent=0 // pred_check
    _
  $region31: #{transformer_forward.25} parent=0 // pred_check_branch
    %267 = sbr.rel (0) target = $region33
  $region32: #{transformer_forward.25} parent=0 // pred_region
    _
  $region33: #{transformer_forward.25} parent=0 // pred_fallthru
    _
  // Predicated region
  $region34: #{transformer_forward.25} parent=0 // pred_check
    _
  $region35: #{transformer_forward.25} parent=0 // pred_check_branch
    %269 = sbr.rel (0) target = $region37
  $region36: #{transformer_forward.25} parent=0 // pred_region
    _
  $region37: #{transformer_forward.25} parent=0 // pred_fallthru
    _

// kernel: transformer_forward.28
$region0: #{transformer_forward.28}
  #allocation0 [shape = 'u32[]', space=smem, size = 0x4, offset = 0x4, fixed_abs, tag = 'smem constant byte address 0x4 - core index']
  #allocation1 [shape = 'u32[144,128]{1,0:T(1,128)}', space=vmem, size = 0x12000, scoped, tag = 'internal scratch']
  %s0 = inlined_call_operand.vmem [shape: f32[16,32], index: 0, kind: input, shape index: {}, may-alias: {0,1,2,3}]
  %s1 = inlined_call_operand.vmem [shape: f32[16,32], index: 1, kind: input, shape index: {}, may-alias: {0,1,2,3}]
  %s2 = inlined_call_operand.vmem [shape: f32[16,32], index: 2, kind: input, shape index: {}, may-alias: {0,1,2,3}]
  %s3 = inlined_call_operand.vmem [shape: f32[16,32], index: 3, kind: input, shape index: {}, may-alias: {0,1,2,3}]
  %s4 = inlined_call_operand.vmem [shape: f32[2,8], index: 4, kind: input, shape index: {}]
  %s5 = inlined_call_operand.vmem [shape: f32[32,32], index: 5, kind: input, shape index: {}]
  %s6 = inlined_call_operand.vmem [shape: f32[1,32], index: 6, kind: input, shape index: {}]
  %s7 = inlined_call_operand.vmem [shape: f32[32,32], index: 7, kind: input, shape index: {}]
  %s8 = inlined_call_operand.vmem [shape: f32[1,32], index: 8, kind: input, shape index: {}]
  %s9 = inlined_call_operand.vmem [shape: f32[32,32], index: 9, kind: input, shape index: {}]
  %s10 = inlined_call_operand.vmem [shape: f32[1,32], index: 10, kind: input, shape index: {}]
  %s11 = inlined_call_operand.vmem [shape: f32[32,32], index: 11, kind: input, shape index: {}]
  %s12 = inlined_call_operand.vmem [shape: f32[1,32], index: 12, kind: input, shape index: {}]
  %s13 = inlined_call_operand.vmem [shape: f32[1,32], index: 13, kind: input, shape index: {}]
  %s14 = inlined_call_operand.vmem [shape: f32[1,32], index: 14, kind: input, shape index: {}]
  %s15 = inlined_call_operand.vmem [shape: f32[16,32], index: 15, kind: output, shape index: {}]
  %s16 = sld [smem:[#allocation0]]
  $region70: #{transformer_forward.28} parent=0
    _
  %s18 = ssub.s32 1, %s16
  %s19 = scalar_select 0, %s18, %s16
  // Predicated region
  $region2: #{transformer_forward.28} parent=0 // pred_check
    _
  $region3: #{transformer_forward.28} parent=0 // pred_check_branch
    %21 = sbr.rel (0) target = $region5
  $region4: #{transformer_forward.28} parent=0 // pred_region
    _
  $region5: #{transformer_forward.28} parent=0 // pred_fallthru
    _
  // Predicated region
  $region6: #{transformer_forward.28} parent=0 // pred_check
    _
  $region7: #{transformer_forward.28} parent=0 // pred_check_branch
    %23 = sbr.rel (0) target = $region9
  $region8: #{transformer_forward.28} parent=0 // pred_region
    _
  $region9: #{transformer_forward.28} parent=0 // pred_fallthru
    _
  // Predicated region
  $region10: #{transformer_forward.28} parent=0 // pred_check
    _
  $region11: #{transformer_forward.28} parent=0 // pred_check_branch
    %25 = sbr.rel (0) target = $region13
  $region12: #{transformer_forward.28} parent=0 // pred_region
    _
  $region13: #{transformer_forward.28} parent=0 // pred_fallthru
    _
  // Predicated region
  $region14: #{transformer_forward.28} parent=0 // pred_check
    _
  $region15: #{transformer_forward.28} parent=0 // pred_check_branch
    %27 = sbr.rel (0) target = $region17
  $region16: #{transformer_forward.28} parent=0 // pred_region
    _
  $region17: #{transformer_forward.28} parent=0 // pred_fallthru
    _
  // Predicated region
  $region18: #{transformer_forward.28} parent=0 // pred_check
    _
  $region19: #{transformer_forward.28} parent=0 // pred_check_branch
    %29 = sbr.rel (0) target = $region21
  $region20: #{transformer_forward.28} parent=0 // pred_region
    _
  $region21: #{transformer_forward.28} parent=0 // pred_fallthru
    _
  // Predicated region
  $region22: #{transformer_forward.28} parent=0 // pred_check
    _
  $region23: #{transformer_forward.28} parent=0 // pred_check_branch
    %31 = sbr.rel (0) target = $region25
  $region24: #{transformer_forward.28} parent=0 // pred_region
    _
  $region25: #{transformer_forward.28} parent=0 // pred_fallthru
    _
  // Predicated region
  $region26: #{transformer_forward.28} parent=0 // pred_check
    _
  $region27: #{transformer_forward.28} parent=0 // pred_check_branch
    %33 = sbr.rel (0) target = $region29
  $region28: #{transformer_forward.28} parent=0 // pred_region
    _
  $region29: #{transformer_forward.28} parent=0 // pred_fallthru
    _
  // Predicated region
  $region30: #{transformer_forward.28} parent=0 // pred_check
    _
  $region31: #{transformer_forward.28} parent=0 // pred_check_branch
    %35 = sbr.rel (0) target = $region33
  $region32: #{transformer_forward.28} parent=0 // pred_region
    _
  $region33: #{transformer_forward.28} parent=0 // pred_fallthru
    _
  // Predicated region
  $region34: #{transformer_forward.28} parent=0 // pred_check
    _
  $region35: #{transformer_forward.28} parent=0 // pred_check_branch
    %37 = sbr.rel (0) target = $region37
  $region36: #{transformer_forward.28} parent=0 // pred_region
    _
  $region37: #{transformer_forward.28} parent=0 // pred_fallthru
    _
  // Predicated region
  $region38: #{transformer_forward.28} parent=0 // pred_check
    _
  $region39: #{transformer_forward.28} parent=0 // pred_check_branch
    %39 = sbr.rel (0) target = $region41
  $region40: #{transformer_forward.28} parent=0 // pred_region
    _
  $region41: #{transformer_forward.28} parent=0 // pred_fallthru
    _
  // Predicated region
  $region42: #{transformer_forward.28} parent=0 // pred_check
    _
  $region43: #{transformer_forward.28} parent=0 // pred_check_branch
    %41 = sbr.rel (0) target = $region45
  $region44: #{transformer_forward.28} parent=0 // pred_region
    _
  $region45: #{transformer_forward.28} parent=0 // pred_fallthru
    _
  // Predicated region
  $region46: #{transformer_forward.28} parent=0 // pred_check
    _
  $region47: #{transformer_forward.28} parent=0 // pred_check_branch
    %43 = sbr.rel (0) target = $region49
  $region48: #{transformer_forward.28} parent=0 // pred_region
    _
  $region49: #{transformer_forward.28} parent=0 // pred_fallthru
    _
  // Predicated region
  $region50: #{transformer_forward.28} parent=0 // pred_check
    _
  $region51: #{transformer_forward.28} parent=0 // pred_check_branch
    %45 = sbr.rel (0) target = $region53
  $region52: #{transformer_forward.28} parent=0 // pred_region
    _
  $region53: #{transformer_forward.28} parent=0 // pred_fallthru
    _
  // Predicated region
  $region54: #{transformer_forward.28} parent=0 // pred_check
    _
  $region55: #{transformer_forward.28} parent=0 // pred_check_branch
    %47 = sbr.rel (0) target = $region57
  $region56: #{transformer_forward.28} parent=0 // pred_region
    _
  $region57: #{transformer_forward.28} parent=0 // pred_fallthru
    _
  // Predicated region
  $region58: #{transformer_forward.28} parent=0 // pred_check
    _
  $region59: #{transformer_forward.28} parent=0 // pred_check_branch
    %49 = sbr.rel (0) target = $region61
  $region60: #{transformer_forward.28} parent=0 // pred_region
    _
  $region61: #{transformer_forward.28} parent=0 // pred_fallthru
    _
  %v51 = vld [vmem:[%s0] sm:$0xff]
  %v52 = vld [vmem:[%s0 + $0x8] sm:$0xff]
  %v53 = vpack.c.bf16 %v52, %v51
  %v54 = vld [vmem:[%s5] sm:$0xff]
  %v55 = vld [vmem:[%s5 + $0x8] sm:$0xff]
  %v56 = vld [vmem:[%s5 + $0x10] sm:$0xff]
  %v57 = vld [vmem:[%s5 + $0x18] sm:$0xff]
  %v58 = vpack.c.bf16 %v55, %v54
  %v59 = vpack.c.bf16 %v57, %v56
  %v60 = vld [vmem:[%s6] sm:$0x1]
  %v62 = vlaneseq
  %v63 = vshrl.u32 %v62, 7
  %v64 = vsub.s32 0, %v63
  %v65 = vrot.slane %v60, %v64
  %vm67 = vcmask 261120
  %v69 = vsel %vm67, %v53, 0
  %71 = vmatprep.subr.bf16.mxu0 0
  %72 = vmatpush1.bf16.msra.mxu0 0
  %73 = vmatprep.subr.bf16.mxu0 0
  %74 = vmatpush1.bf16.msra.mxu0 0
  %75 = vmatprep.subr.bf16.mxu0 0
  %76 = vmatpush1.bf16.msra.mxu0 0
  %77 = vmatprep.subr.bf16.mxu0 0
  %78 = vmatpush1.bf16.msra.mxu0 0
  %79 = vmatprep.subr.bf16.mxu0 0
  %80 = vmatpush1.bf16.msra.mxu0 0
  %81 = vmatprep.subr.bf16.mxu0 0
  %82 = vmatpush1.bf16.msra.mxu0 0
  %83 = vmatprep.subr.bf16.mxu0 0
  %84 = vmatpush1.bf16.msra.mxu0 %v59
  %85 = vmatprep.subr.bf16.mxu0 0
  %86 = vmatpush1.bf16.msra.mxu0 %v58
  %87 = vmatprep.subr.bf16.mxu0 0
  %88 = vmatpush2.bf16.msra.mxu0 0
  %89 = vmatprep.subr.bf16.mxu0 0
  %90 = vmatpush2.bf16.msra.mxu0 0
  %91 = vmatprep.subr.bf16.mxu0 0
  %92 = vmatpush2.bf16.msra.mxu0 0
  %93 = vmatprep.subr.bf16.mxu0 0
  %94 = vmatpush2.bf16.msra.mxu0 0
  %95 = vmatprep.subr.bf16.mxu0 0
  %96 = vmatpush2.bf16.msra.mxu0 0
  %97 = vmatprep.subr.bf16.mxu0 0
  %98 = vmatpush2.bf16.msra.mxu0 0
  %99 = vmatprep.subr.bf16.mxu0 0
  %100 = vmatpush2.bf16.msra.mxu0 0
  %101 = vmatprep.subr.bf16.mxu0 0
  %102 = vmatpush2.bf16.msra.mxu0 0
  %103 = vmatprep.mubr.bf16.mxu0 0
  %104 = vmatmul.mubr.bf16.gmra.mxu0 %v69
  %v105 = vpop.f32.mrf.mxu0
  %v106 = vadd.f32 %v65, %v105
  %v107 = vpop.f32.mrf.mxu0
  %v108 = vpop.f32.mrf.mxu0
  %v109 = vadd.f32 %v65, %v108
  %v110 = vpop.f32.mrf.mxu0
  %111 = vdwg.mxu0
  %v112 = vmul.f32 %v106, 0.35355338
  %v113 = vmul.f32 %v109, 0.35355338
  %v114 = vld [vmem:[%s1] sm:$0xff]
  %v115 = vld [vmem:[%s1 + $0x8] sm:$0xff]
  %v116 = vpack.c.bf16 %v115, %v114
  %v117 = vld [vmem:[%s7] sm:$0xff]
  %v118 = vld [vmem:[%s7 + $0x8] sm:$0xff]
  %v119 = vld [vmem:[%s7 + $0x10] sm:$0xff]
  %v120 = vld [vmem:[%s7 + $0x18] sm:$0xff]
  %v121 = vpack.c.bf16 %v118, %v117
  %v122 = vpack.c.bf16 %v120, %v119
  %v123 = vld [vmem:[%s8] sm:$0x1]
  %v125 = vlaneseq
  %v126 = vshrl.u32 %v125, 7
  %v127 = vsub.s32 0, %v126
  %v128 = vrot.slane %v123, %v127
  %v131 = vsel %vm67, %v116, 0
  %133 = vmatprep.subr.bf16.mxu0 0
  %134 = vmatpush1.bf16.msra.mxu0 0
  %135 = vmatprep.subr.bf16.mxu0 0
  %136 = vmatpush1.bf16.msra.mxu0 0
  %137 = vmatprep.subr.bf16.mxu0 0
  %138 = vmatpush1.bf16.msra.mxu0 0
  %139 = vmatprep.subr.bf16.mxu0 0
  %140 = vmatpush1.bf16.msra.mxu0 0
  %141 = vmatprep.subr.bf16.mxu0 0
  %142 = vmatpush1.bf16.msra.mxu0 0
  %143 = vmatprep.subr.bf16.mxu0 0
  %144 = vmatpush1.bf16.msra.mxu0 0
  %145 = vmatprep.subr.bf16.mxu0 0
  %146 = vmatpush1.bf16.msra.mxu0 %v122
  %147 = vmatprep.subr.bf16.mxu0 0
  %148 = vmatpush1.bf16.msra.mxu0 %v121
  %149 = vmatprep.subr.bf16.mxu0 0
  %150 = vmatpush2.bf16.msra.mxu0 0
  %151 = vmatprep.subr.bf16.mxu0 0
  %152 = vmatpush2.bf16.msra.mxu0 0
  %153 = vmatprep.subr.bf16.mxu0 0
  %154 = vmatpush2.bf16.msra.mxu0 0
  %155 = vmatprep.subr.bf16.mxu0 0
  %156 = vmatpush2.bf16.msra.mxu0 0
  %157 = vmatprep.subr.bf16.mxu0 0
  %158 = vmatpush2.bf16.msra.mxu0 0
  %159 = vmatprep.subr.bf16.mxu0 0
  %160 = vmatpush2.bf16.msra.mxu0 0
  %161 = vmatprep.subr.bf16.mxu0 0
  %162 = vmatpush2.bf16.msra.mxu0 0
  %163 = vmatprep.subr.bf16.mxu0 0
  %164 = vmatpush2.bf16.msra.mxu0 0
  %165 = vmatprep.mubr.bf16.mxu0 0
  %166 = vmatmul.mubr.bf16.gmra.mxu0 %v131
  %v167 = vpop.f32.mrf.mxu0
  %v168 = vadd.f32 %v128, %v167
  %v169 = vpop.f32.mrf.mxu0
  %v170 = vpop.f32.mrf.mxu0
  %v171 = vadd.f32 %v128, %v170
  %v172 = vpop.f32.mrf.mxu0
  %173 = vdwg.mxu0
  %v174 = vld [vmem:[%s2] sm:$0xff]
  %v175 = vld [vmem:[%s2 + $0x8] sm:$0xff]
  %v176 = vpack.c.bf16 %v175, %v174
  %v177 = vld [vmem:[%s9] sm:$0xff]
  %v178 = vld [vmem:[%s9 + $0x8] sm:$0xff]
  %v179 = vld [vmem:[%s9 + $0x10] sm:$0xff]
  %v180 = vld [vmem:[%s9 + $0x18] sm:$0xff]
  %v181 = vpack.c.bf16 %v178, %v177
  %v182 = vpack.c.bf16 %v180, %v179
  %v183 = vld [vmem:[%s10] sm:$0x1]
  %v185 = vlaneseq
  %v186 = vshrl.u32 %v185, 7
  %v187 = vsub.s32 0, %v186
  %v188 = vrot.slane %v183, %v187
  %v191 = vsel %vm67, %v176, 0
  %193 = vmatprep.subr.bf16.mxu0 0
  %194 = vmatpush1.bf16.msra.mxu0 0
  %195 = vmatprep.subr.bf16.mxu0 0
  %196 = vmatpush1.bf16.msra.mxu0 0
  %197 = vmatprep.subr.bf16.mxu0 0
  %198 = vmatpush1.bf16.msra.mxu0 0
  %199 = vmatprep.subr.bf16.mxu0 0
  %200 = vmatpush1.bf16.msra.mxu0 0
  %201 = vmatprep.subr.bf16.mxu0 0
  %202 = vmatpush1.bf16.msra.mxu0 0
  %203 = vmatprep.subr.bf16.mxu0 0
  %204 = vmatpush1.bf16.msra.mxu0 0
  %205 = vmatprep.subr.bf16.mxu0 0
  %206 = vmatpush1.bf16.msra.mxu0 %v182
  %207 = vmatprep.subr.bf16.mxu0 0
  %208 = vmatpush1.bf16.msra.mxu0 %v181
  %209 = vmatprep.subr.bf16.mxu0 0
  %210 = vmatpush2.bf16.msra.mxu0 0
  %211 = vmatprep.subr.bf16.mxu0 0
  %212 = vmatpush2.bf16.msra.mxu0 0
  %213 = vmatprep.subr.bf16.mxu0 0
  %214 = vmatpush2.bf16.msra.mxu0 0
  %215 = vmatprep.subr.bf16.mxu0 0
  %216 = vmatpush2.bf16.msra.mxu0 0
  %217 = vmatprep.subr.bf16.mxu0 0
  %218 = vmatpush2.bf16.msra.mxu0 0
  %219 = vmatprep.subr.bf16.mxu0 0
  %220 = vmatpush2.bf16.msra.mxu0 0
  %221 = vmatprep.subr.bf16.mxu0 0
  %222 = vmatpush2.bf16.msra.mxu0 0
  %223 = vmatprep.subr.bf16.mxu0 0
  %224 = vmatpush2.bf16.msra.mxu0 0
  %225 = vmatprep.mubr.bf16.mxu0 0
  %226 = vmatmul.mubr.bf16.gmra.mxu0 %v191
  %v227 = vpop.f32.mrf.mxu0
  %v228 = vadd.f32 %v188, %v227
  %v229 = vpop.f32.mrf.mxu0
  %v230 = vpop.f32.mrf.mxu0
  %v231 = vadd.f32 %v188, %v230
  %v232 = vpop.f32.mrf.mxu0
  %233 = vdwg.mxu0
  %v234 = vld [vmem:[%s4] sm:$0x3]
  %v235 = vpack.c.bf16 %v112, %v112
  %v236 = vpack.c.bf16 %v168, %v168
  %v237 = vpack.c.bf16 %v228, %v228
  %v238 = vlaneseq
  %v239 = vshrl.u32 %v238, 7
  %v240 = vsub.s32 0, %v239
  %v241 = vrot.slane %v234, %v240
  %vm242 = vcmask 64512
  %v244 = vsel %vm242, %v235, 0
  %v247 = vsel %vm242, %v236, 0
  %249 = vmatprep.subr.bf16.mxu0 0
  %250 = vmatpush1.bf16.xpose.msra.mxu0 0
  %251 = vmatprep.subr.bf16.mxu0 0
  %252 = vmatpush1.bf16.xpose.msra.mxu0 0
  %253 = vmatprep.subr.bf16.mxu0 0
  %254 = vmatpush1.bf16.xpose.msra.mxu0 0
  %255 = vmatprep.subr.bf16.mxu0 0
  %256 = vmatpush1.bf16.xpose.msra.mxu0 0
  %257 = vmatprep.subr.bf16.mxu0 0
  %258 = vmatpush1.bf16.xpose.msra.mxu0 0
  %259 = vmatprep.subr.bf16.mxu0 0
  %260 = vmatpush1.bf16.xpose.msra.mxu0 0
  %261 = vmatprep.subr.bf16.mxu0 0
  %262 = vmatpush1.bf16.xpose.msra.mxu0 0
  %263 = vmatprep.subr.bf16.mxu0 0
  %264 = vmatpush1.bf16.xpose.msra.mxu0 %v247
  %265 = vmatprep.subr.bf16.mxu0 0
  %266 = vmatpush2.bf16.xpose.msra.mxu0 0
  %267 = vmatprep.subr.bf16.mxu0 0
  %268 = vmatpush2.bf16.xpose.msra.mxu0 0
  %269 = vmatprep.subr.bf16.mxu0 0
  %270 = vmatpush2.bf16.xpose.msra.mxu0 0
  %271 = vmatprep.subr.bf16.mxu0 0
  %272 = vmatpush2.bf16.xpose.msra.mxu0 0
  %273 = vmatprep.subr.bf16.mxu0 0
  %274 = vmatpush2.bf16.xpose.msra.mxu0 0
  %275 = vmatprep.subr.bf16.mxu0 0
  %276 = vmatpush2.bf16.xpose.msra.mxu0 0
  %277 = vmatprep.subr.bf16.mxu0 0
  %278 = vmatpush2.bf16.xpose.msra.mxu0 0
  %279 = vmatprep.subr.bf16.mxu0 0
  %280 = vmatpush2.bf16.xpose.msra.mxu0 0
  %281 = vmatprep.mubr.bf16.mxu0 0
  %282 = vmatmul.mubr.bf16.gmra.mxu0 %v244
  %v283 = vpop.f32.mrf.mxu0
  %v284 = vadd.f32 %v241, %v283
  %v285 = vpop.f32.mrf.mxu0
  %v286 = vpop.f32.mrf.mxu0
  %v287 = vpop.f32.mrf.mxu0
  %288 = vdwg.mxu0
  %v289 = vsel %vm242, %v284, -inf
  %290 = vmax.xlane.f32.xlu0 %v289
  %v291 = vpop.xlane.xlu0 %290
  %v292 = vsub.f32 %v284, %v291
  %v293 = vmul.f32 %v292, 1.442695
  %v294 = vpow.pop %v293
  %v295 = vsel %vm242, %v294, 0.0
  %296 = vadd.xlane.f32.xlu0 %v295
  %v297 = vpop.xlane.xlu0 %296
  %v298 = vrcp.pop %v297
  %v299 = vmul.f32 %v294, %v298
  %v300 = vpack.c.bf16 %v299, %v299
  %v302 = vsel %vm242, %v300, 0
  %vm304 = vcmask 1043456
  %v306 = vsel %vm304, %v237, 0
  %308 = vmatprep.subr.bf16.mxu0 0
  %309 = vmatpush1.bf16.msra.mxu0 0
  %310 = vmatprep.subr.bf16.mxu0 0
  %311 = vmatpush1.bf16.msra.mxu0 0
  %312 = vmatprep.subr.bf16.mxu0 0
  %313 = vmatpush1.bf16.msra.mxu0 0
  %314 = vmatprep.subr.bf16.mxu0 0
  %315 = vmatpush1.bf16.msra.mxu0 0
  %316 = vmatprep.subr.bf16.mxu0 0
  %317 = vmatpush1.bf16.msra.mxu0 0
  %318 = vmatprep.subr.bf16.mxu0 0
  %319 = vmatpush1.bf16.msra.mxu0 0
  %320 = vmatprep.subr.bf16.mxu0 0
  %321 = vmatpush1.bf16.msra.mxu0 0
  %322 = vmatprep.subr.bf16.mxu0 0
  %323 = vmatpush1.bf16.msra.mxu0 %v306
  %324 = vmatprep.subr.bf16.mxu0 0
  %325 = vmatpush2.bf16.msra.mxu0 0
  %326 = vmatprep.subr.bf16.mxu0 0
  %327 = vmatpush2.bf16.msra.mxu0 0
  %328 = vmatprep.subr.bf16.mxu0 0
  %329 = vmatpush2.bf16.msra.mxu0 0
  %330 = vmatprep.subr.bf16.mxu0 0
  %331 = vmatpush2.bf16.msra.mxu0 0
  %332 = vmatprep.subr.bf16.mxu0 0
  %333 = vmatpush2.bf16.msra.mxu0 0
  %334 = vmatprep.subr.bf16.mxu0 0
  %335 = vmatpush2.bf16.msra.mxu0 0
  %336 = vmatprep.subr.bf16.mxu0 0
  %337 = vmatpush2.bf16.msra.mxu0 0
  %338 = vmatprep.subr.bf16.mxu0 0
  %339 = vmatpush2.bf16.msra.mxu0 0
  %340 = vmatprep.mubr.bf16.mxu0 0
  %341 = vmatmul.mubr.bf16.gmra.mxu0 %v302
  %v342 = vpop.f32.mrf.mxu0
  %v343 = vadd.f32 0.0, %v342
  %v344 = vpop.f32.mrf.mxu0
  %v345 = vpop.f32.mrf.mxu0
  %v346 = vpop.f32.mrf.mxu0
  %347 = vdwg.mxu0
  %349 = vrot.lane.b32.xlu0 %v235, 120
  %v350 = vpop.permute.xlu0 %349
  %352 = vrot.lane.b32.xlu0 %v236, 120
  %v353 = vpop.permute.xlu0 %352
  %v355 = vsel %vm242, %v350, 0
  %v358 = vsel %vm242, %v353, 0
  %360 = vmatprep.subr.bf16.mxu0 0
  %361 = vmatpush1.bf16.xpose.msra.mxu0 0
  %362 = vmatprep.subr.bf16.mxu0 0
  %363 = vmatpush1.bf16.xpose.msra.mxu0 0
  %364 = vmatprep.subr.bf16.mxu0 0
  %365 = vmatpush1.bf16.xpose.msra.mxu0 0
  %366 = vmatprep.subr.bf16.mxu0 0
  %367 = vmatpush1.bf16.xpose.msra.mxu0 0
  %368 = vmatprep.subr.bf16.mxu0 0
  %369 = vmatpush1.bf16.xpose.msra.mxu0 0
  %370 = vmatprep.subr.bf16.mxu0 0
  %371 = vmatpush1.bf16.xpose.msra.mxu0 0
  %372 = vmatprep.subr.bf16.mxu0 0
  %373 = vmatpush1.bf16.xpose.msra.mxu0 0
  %374 = vmatprep.subr.bf16.mxu0 0
  %375 = vmatpush1.bf16.xpose.msra.mxu0 %v358
  %376 = vmatprep.subr.bf16.mxu0 0
  %377 = vmatpush2.bf16.xpose.msra.mxu0 0
  %378 = vmatprep.subr.bf16.mxu0 0
  %379 = vmatpush2.bf16.xpose.msra.mxu0 0
  %380 = vmatprep.subr.bf16.mxu0 0
  %381 = vmatpush2.bf16.xpose.msra.mxu0 0
  %382 = vmatprep.subr.bf16.mxu0 0
  %383 = vmatpush2.bf16.xpose.msra.mxu0 0
  %384 = vmatprep.subr.bf16.mxu0 0
  %385 = vmatpush2.bf16.xpose.msra.mxu0 0
  %386 = vmatprep.subr.bf16.mxu0 0
  %387 = vmatpush2.bf16.xpose.msra.mxu0 0
  %388 = vmatprep.subr.bf16.mxu0 0
  %389 = vmatpush2.bf16.xpose.msra.mxu0 0
  %390 = vmatprep.subr.bf16.mxu0 0
  %391 = vmatpush2.bf16.xpose.msra.mxu0 0
  %392 = vmatprep.mubr.bf16.mxu0 0
  %393 = vmatmul.mubr.bf16.gmra.mxu0 %v355
  %v394 = vpop.f32.mrf.mxu0
  %v395 = vadd.f32 %v241, %v394
  %v396 = vpop.f32.mrf.mxu0
  %v397 = vpop.f32.mrf.mxu0
  %v398 = vpop.f32.mrf.mxu0
  %399 = vdwg.mxu0
  %v400 = vsel %vm242, %v395, -inf
  %401 = vmax.xlane.f32.xlu0 %v400
  %v402 = vpop.xlane.xlu0 %401
  %v403 = vsub.f32 %v395, %v402
  %v404 = vmul.f32 %v403, 1.442695
  %v405 = vpow.pop %v404
  %v406 = vsel %vm242, %v405, 0.0
  %407 = vadd.xlane.f32.xlu0 %v406
  %v408 = vpop.xlane.xlu0 %407
  %v409 = vrcp.pop %v408
  %v410 = vmul.f32 %v405, %v409
  %v411 = vpack.c.bf16 %v410, %v410
  %413 = vrot.lane.b32.xlu0 %v237, 120
  %v414 = vpop.permute.xlu0 %413
  %v416 = vsel %vm242, %v411, 0
  %v419 = vsel %vm304, %v414, 0
  %421 = vmatprep.subr.bf16.mxu0 0
  %422 = vmatpush1.bf16.msra.mxu0 0
  %423 = vmatprep.subr.bf16.mxu0 0
  %424 = vmatpush1.bf16.msra.mxu0 0
  %425 = vmatprep.subr.bf16.mxu0 0
  %426 = vmatpush1.bf16.msra.mxu0 0
  %427 = vmatprep.subr.bf16.mxu0 0
  %428 = vmatpush1.bf16.msra.mxu0 0
  %429 = vmatprep.subr.bf16.mxu0 0
  %430 = vmatpush1.bf16.msra.mxu0 0
  %431 = vmatprep.subr.bf16.mxu0 0
  %432 = vmatpush1.bf16.msra.mxu0 0
  %433 = vmatprep.subr.bf16.mxu0 0
  %434 = vmatpush1.bf16.msra.mxu0 0
  %435 = vmatprep.subr.bf16.mxu0 0
  %436 = vmatpush1.bf16.msra.mxu0 %v419
  %437 = vmatprep.subr.bf16.mxu0 0
  %438 = vmatpush2.bf16.msra.mxu0 0
  %439 = vmatprep.subr.bf16.mxu0 0
  %440 = vmatpush2.bf16.msra.mxu0 0
  %441 = vmatprep.subr.bf16.mxu0 0
  %442 = vmatpush2.bf16.msra.mxu0 0
  %443 = vmatprep.subr.bf16.mxu0 0
  %444 = vmatpush2.bf16.msra.mxu0 0
  %445 = vmatprep.subr.bf16.mxu0 0
  %446 = vmatpush2.bf16.msra.mxu0 0
  %447 = vmatprep.subr.bf16.mxu0 0
  %448 = vmatpush2.bf16.msra.mxu0 0
  %449 = vmatprep.subr.bf16.mxu0 0
  %450 = vmatpush2.bf16.msra.mxu0 0
  %451 = vmatprep.subr.bf16.mxu0 0
  %452 = vmatpush2.bf16.msra.mxu0 0
  %453 = vmatprep.mubr.bf16.mxu0 0
  %454 = vmatmul.mubr.bf16.gmra.mxu0 %v416
  %v455 = vpop.f32.mrf.mxu0
  %v456 = vadd.f32 0.0, %v455
  %v457 = vpop.f32.mrf.mxu0
  %v458 = vpop.f32.mrf.mxu0
  %v459 = vpop.f32.mrf.mxu0
  %460 = vdwg.mxu0
  %461 = vrot.lane.b32.xlu0 %v235, 112
  %v462 = vpop.permute.xlu0 %461
  %463 = vrot.lane.b32.xlu0 %v236, 112
  %v464 = vpop.permute.xlu0 %463
  %v466 = vsel %vm242, %v462, 0
  %v469 = vsel %vm242, %v464, 0
  %471 = vmatprep.subr.bf16.mxu0 0
  %472 = vmatpush1.bf16.xpose.msra.mxu0 0
  %473 = vmatprep.subr.bf16.mxu0 0
  %474 = vmatpush1.bf16.xpose.msra.mxu0 0
  %475 = vmatprep.subr.bf16.mxu0 0
  %476 = vmatpush1.bf16.xpose.msra.mxu0 0
  %477 = vmatprep.subr.bf16.mxu0 0
  %478 = vmatpush1.bf16.xpose.msra.mxu0 0
  %479 = vmatprep.subr.bf16.mxu0 0
  %480 = vmatpush1.bf16.xpose.msra.mxu0 0
  %481 = vmatprep.subr.bf16.mxu0 0
  %482 = vmatpush1.bf16.xpose.msra.mxu0 0
  %483 = vmatprep.subr.bf16.mxu0 0
  %484 = vmatpush1.bf16.xpose.msra.mxu0 0
  %485 = vmatprep.subr.bf16.mxu0 0
  %486 = vmatpush1.bf16.xpose.msra.mxu0 %v469
  %487 = vmatprep.subr.bf16.mxu0 0
  %488 = vmatpush2.bf16.xpose.msra.mxu0 0
  %489 = vmatprep.subr.bf16.mxu0 0
  %490 = vmatpush2.bf16.xpose.msra.mxu0 0
  %491 = vmatprep.subr.bf16.mxu0 0
  %492 = vmatpush2.bf16.xpose.msra.mxu0 0
  %493 = vmatprep.subr.bf16.mxu0 0
  %494 = vmatpush2.bf16.xpose.msra.mxu0 0
  %495 = vmatprep.subr.bf16.mxu0 0
  %496 = vmatpush2.bf16.xpose.msra.mxu0 0
  %497 = vmatprep.subr.bf16.mxu0 0
  %498 = vmatpush2.bf16.xpose.msra.mxu0 0
  %499 = vmatprep.subr.bf16.mxu0 0
  %500 = vmatpush2.bf16.xpose.msra.mxu0 0
  %501 = vmatprep.subr.bf16.mxu0 0
  %502 = vmatpush2.bf16.xpose.msra.mxu0 0
  %503 = vmatprep.mubr.bf16.mxu0 0
  %504 = vmatmul.mubr.bf16.gmra.mxu0 %v466
  %v505 = vpop.f32.mrf.mxu0
  %v506 = vadd.f32 %v241, %v505
  %v507 = vpop.f32.mrf.mxu0
  %v508 = vpop.f32.mrf.mxu0
  %v509 = vpop.f32.mrf.mxu0
  %510 = vdwg.mxu0
  %v511 = vsel %vm242, %v506, -inf
  %512 = vmax.xlane.f32.xlu0 %v511
  %v513 = vpop.xlane.xlu0 %512
  %v514 = vsub.f32 %v506, %v513
  %v515 = vmul.f32 %v514, 1.442695
  %v516 = vpow.pop %v515
  %v517 = vsel %vm242, %v516, 0.0
  %518 = vadd.xlane.f32.xlu0 %v517
  %v519 = vpop.xlane.xlu0 %518
  %v520 = vrcp.pop %v519
  %v521 = vmul.f32 %v516, %v520
  %v522 = vpack.c.bf16 %v521, %v521
  %523 = vrot.lane.b32.xlu0 %v237, 112
  %v524 = vpop.permute.xlu0 %523
  %v526 = vsel %vm242, %v522, 0
  %v529 = vsel %vm304, %v524, 0
  %531 = vmatprep.subr.bf16.mxu0 0
  %532 = vmatpush1.bf16.msra.mxu0 0
  %533 = vmatprep.subr.bf16.mxu0 0
  %534 = vmatpush1.bf16.msra.mxu0 0
  %535 = vmatprep.subr.bf16.mxu0 0
  %536 = vmatpush1.bf16.msra.mxu0 0
  %537 = vmatprep.subr.bf16.mxu0 0
  %538 = vmatpush1.bf16.msra.mxu0 0
  %539 = vmatprep.subr.bf16.mxu0 0
  %540 = vmatpush1.bf16.msra.mxu0 0
  %541 = vmatprep.subr.bf16.mxu0 0
  %542 = vmatpush1.bf16.msra.mxu0 0
  %543 = vmatprep.subr.bf16.mxu0 0
  %544 = vmatpush1.bf16.msra.mxu0 0
  %545 = vmatprep.subr.bf16.mxu0 0
  %546 = vmatpush1.bf16.msra.mxu0 %v529
  %547 = vmatprep.subr.bf16.mxu0 0
  %548 = vmatpush2.bf16.msra.mxu0 0
  %549 = vmatprep.subr.bf16.mxu0 0
  %550 = vmatpush2.bf16.msra.mxu0 0
  %551 = vmatprep.subr.bf16.mxu0 0
  %552 = vmatpush2.bf16.msra.mxu0 0
  %553 = vmatprep.subr.bf16.mxu0 0
  %554 = vmatpush2.bf16.msra.mxu0 0
  %555 = vmatprep.subr.bf16.mxu0 0
  %556 = vmatpush2.bf16.msra.mxu0 0
  %557 = vmatprep.subr.bf16.mxu0 0
  %558 = vmatpush2.bf16.msra.mxu0 0
  %559 = vmatprep.subr.bf16.mxu0 0
  %560 = vmatpush2.bf16.msra.mxu0 0
  %561 = vmatprep.subr.bf16.mxu0 0
  %562 = vmatpush2.bf16.msra.mxu0 0
  %563 = vmatprep.mubr.bf16.mxu0 0
  %564 = vmatmul.mubr.bf16.gmra.mxu0 %v526
  %v565 = vpop.f32.mrf.mxu0
  %v566 = vadd.f32 0.0, %v565
  %v567 = vpop.f32.mrf.mxu0
  %v568 = vpop.f32.mrf.mxu0
  %v569 = vpop.f32.mrf.mxu0
  %570 = vdwg.mxu0
  %571 = vrot.lane.b32.xlu0 %v235, 104
  %v572 = vpop.permute.xlu0 %571
  %573 = vrot.lane.b32.xlu0 %v236, 104
  %v574 = vpop.permute.xlu0 %573
  %v576 = vsel %vm242, %v572, 0
  %v579 = vsel %vm242, %v574, 0
  %581 = vmatprep.subr.bf16.mxu0 0
  %582 = vmatpush1.bf16.xpose.msra.mxu0 0
  %583 = vmatprep.subr.bf16.mxu0 0
  %584 = vmatpush1.bf16.xpose.msra.mxu0 0
  %585 = vmatprep.subr.bf16.mxu0 0
  %586 = vmatpush1.bf16.xpose.msra.mxu0 0
  %587 = vmatprep.subr.bf16.mxu0 0
  %588 = vmatpush1.bf16.xpose.msra.mxu0 0
  %589 = vmatprep.subr.bf16.mxu0 0
  %590 = vmatpush1.bf16.xpose.msra.mxu0 0
  %591 = vmatprep.subr.bf16.mxu0 0
  %592 = vmatpush1.bf16.xpose.msra.mxu0 0
  %593 = vmatprep.subr.bf16.mxu0 0
  %594 = vmatpush1.bf16.xpose.msra.mxu0 0
  %595 = vmatprep.subr.bf16.mxu0 0
  %596 = vmatpush1.bf16.xpose.msra.mxu0 %v579
  %597 = vmatprep.subr.bf16.mxu0 0
  %598 = vmatpush2.bf16.xpose.msra.mxu0 0
  %599 = vmatprep.subr.bf16.mxu0 0
  %600 = vmatpush2.bf16.xpose.msra.mxu0 0
  %601 = vmatprep.subr.bf16.mxu0 0
  %602 = vmatpush2.bf16.xpose.msra.mxu0 0
  %603 = vmatprep.subr.bf16.mxu0 0
  %604 = vmatpush2.bf16.xpose.msra.mxu0 0
  %605 = vmatprep.subr.bf16.mxu0 0
  %606 = vmatpush2.bf16.xpose.msra.mxu0 0
  %607 = vmatprep.subr.bf16.mxu0 0
  %608 = vmatpush2.bf16.xpose.msra.mxu0 0
  %609 = vmatprep.subr.bf16.mxu0 0
  %610 = vmatpush2.bf16.xpose.msra.mxu0 0
  %611 = vmatprep.subr.bf16.mxu0 0
  %612 = vmatpush2.bf16.xpose.msra.mxu0 0
  %613 = vmatprep.mubr.bf16.mxu0 0
  %614 = vmatmul.mubr.bf16.gmra.mxu0 %v576
  %v615 = vpop.f32.mrf.mxu0
  %v616 = vadd.f32 %v241, %v615
  %v617 = vpop.f32.mrf.mxu0
  %v618 = vpop.f32.mrf.mxu0
  %v619 = vpop.f32.mrf.mxu0
  %620 = vdwg.mxu0
  %v621 = vsel %vm242, %v616, -inf
  %622 = vmax.xlane.f32.xlu0 %v621
  %v623 = vpop.xlane.xlu0 %622
  %v624 = vsub.f32 %v616, %v623
  %v625 = vmul.f32 %v624, 1.442695
  %v626 = vpow.pop %v625
  %v627 = vsel %vm242, %v626, 0.0
  %628 = vadd.xlane.f32.xlu0 %v627
  %v629 = vpop.xlane.xlu0 %628
  %v630 = vrcp.pop %v629
  %v631 = vmul.f32 %v626, %v630
  %v632 = vpack.c.bf16 %v631, %v631
  %633 = vrot.lane.b32.xlu0 %v237, 104
  %v634 = vpop.permute.xlu0 %633
  %v636 = vsel %vm242, %v632, 0
  %v639 = vsel %vm304, %v634, 0
  %641 = vmatprep.subr.bf16.mxu0 0
  %642 = vmatpush1.bf16.msra.mxu0 0
  %643 = vmatprep.subr.bf16.mxu0 0
  %644 = vmatpush1.bf16.msra.mxu0 0
  %645 = vmatprep.subr.bf16.mxu0 0
  %646 = vmatpush1.bf16.msra.mxu0 0
  %647 = vmatprep.subr.bf16.mxu0 0
  %648 = vmatpush1.bf16.msra.mxu0 0
  %649 = vmatprep.subr.bf16.mxu0 0
  %650 = vmatpush1.bf16.msra.mxu0 0
  %651 = vmatprep.subr.bf16.mxu0 0
  %652 = vmatpush1.bf16.msra.mxu0 0
  %653 = vmatprep.subr.bf16.mxu0 0
  %654 = vmatpush1.bf16.msra.mxu0 0
  %655 = vmatprep.subr.bf16.mxu0 0
  %656 = vmatpush1.bf16.msra.mxu0 %v639
  %657 = vmatprep.subr.bf16.mxu0 0
  %658 = vmatpush2.bf16.msra.mxu0 0
  %659 = vmatprep.subr.bf16.mxu0 0
  %660 = vmatpush2.bf16.msra.mxu0 0
  %661 = vmatprep.subr.bf16.mxu0 0
  %662 = vmatpush2.bf16.msra.mxu0 0
  %663 = vmatprep.subr.bf16.mxu0 0
  %664 = vmatpush2.bf16.msra.mxu0 0
  %665 = vmatprep.subr.bf16.mxu0 0
  %666 = vmatpush2.bf16.msra.mxu0 0
  %667 = vmatprep.subr.bf16.mxu0 0
  %668 = vmatpush2.bf16.msra.mxu0 0
  %669 = vmatprep.subr.bf16.mxu0 0
  %670 = vmatpush2.bf16.msra.mxu0 0
  %671 = vmatprep.subr.bf16.mxu0 0
  %672 = vmatpush2.bf16.msra.mxu0 0
  %673 = vmatprep.mubr.bf16.mxu0 0
  %674 = vmatmul.mubr.bf16.gmra.mxu0 %v636
  %v675 = vpop.f32.mrf.mxu0
  %v676 = vadd.f32 0.0, %v675
  %v677 = vpop.f32.mrf.mxu0
  %v678 = vpop.f32.mrf.mxu0
  %v679 = vpop.f32.mrf.mxu0
  %680 = vdwg.mxu0
  %682 = vrot.lane.b32.xlu0 %v456, 8
  %v683 = vpop.permute.xlu0 %682
  %686 = vrot.lane.b32.xlu0 %v566, 16
  %v687 = vpop.permute.xlu0 %686
  %690 = vrot.lane.b32.xlu0 %v676, 24
  %v691 = vpop.permute.xlu0 %690
  %v693 = vsel %vm242, %v343, %v683
  %vm694 = vcmask 130048
  %v695 = vsel %vm694, %v693, %v687
  %vm696 = vcmask 195584
  %v697 = vsel %vm696, %v695, %v691
  %v698 = vpack.c.bf16 %v113, %v113
  %v699 = vpack.c.bf16 %v171, %v171
  %v700 = vpack.c.bf16 %v231, %v231
  %v701 = vlaneseq
  %v702 = vshrl.u32 %v701, 7
  %v703 = vsub.s32 1, %v702
  %v704 = vrot.slane %v234, %v703
  %v706 = vsel %vm242, %v698, 0
  %v709 = vsel %vm242, %v699, 0
  %711 = vmatprep.subr.bf16.mxu0 0
  %712 = vmatpush1.bf16.xpose.msra.mxu0 0
  %713 = vmatprep.subr.bf16.mxu0 0
  %714 = vmatpush1.bf16.xpose.msra.mxu0 0
  %715 = vmatprep.subr.bf16.mxu0 0
  %716 = vmatpush1.bf16.xpose.msra.mxu0 0
  %717 = vmatprep.subr.bf16.mxu0 0
  %718 = vmatpush1.bf16.xpose.msra.mxu0 0
  %719 = vmatprep.subr.bf16.mxu0 0
  %720 = vmatpush1.bf16.xpose.msra.mxu0 0
  %721 = vmatprep.subr.bf16.mxu0 0
  %722 = vmatpush1.bf16.xpose.msra.mxu0 0
  %723 = vmatprep.subr.bf16.mxu0 0
  %724 = vmatpush1.bf16.xpose.msra.mxu0 0
  %725 = vmatprep.subr.bf16.mxu0 0
  %726 = vmatpush1.bf16.xpose.msra.mxu0 %v709
  %727 = vmatprep.subr.bf16.mxu0 0
  %728 = vmatpush2.bf16.xpose.msra.mxu0 0
  %729 = vmatprep.subr.bf16.mxu0 0
  %730 = vmatpush2.bf16.xpose.msra.mxu0 0
  %731 = vmatprep.subr.bf16.mxu0 0
  %732 = vmatpush2.bf16.xpose.msra.mxu0 0
  %733 = vmatprep.subr.bf16.mxu0 0
  %734 = vmatpush2.bf16.xpose.msra.mxu0 0
  %735 = vmatprep.subr.bf16.mxu0 0
  %736 = vmatpush2.bf16.xpose.msra.mxu0 0
  %737 = vmatprep.subr.bf16.mxu0 0
  %738 = vmatpush2.bf16.xpose.msra.mxu0 0
  %739 = vmatprep.subr.bf16.mxu0 0
  %740 = vmatpush2.bf16.xpose.msra.mxu0 0
  %741 = vmatprep.subr.bf16.mxu0 0
  %742 = vmatpush2.bf16.xpose.msra.mxu0 0
  %743 = vmatprep.mubr.bf16.mxu0 0
  %744 = vmatmul.mubr.bf16.gmra.mxu0 %v706
  %v745 = vpop.f32.mrf.mxu0
  %v746 = vadd.f32 %v704, %v745
  %v747 = vpop.f32.mrf.mxu0
  %v748 = vpop.f32.mrf.mxu0
  %v749 = vpop.f32.mrf.mxu0
  %750 = vdwg.mxu0
  %v751 = vsel %vm242, %v746, -inf
  %752 = vmax.xlane.f32.xlu0 %v751
  %v753 = vpop.xlane.xlu0 %752
  %v754 = vsub.f32 %v746, %v753
  %v755 = vmul.f32 %v754, 1.442695
  %v756 = vpow.pop %v755
  %v757 = vsel %vm242, %v756, 0.0
  %758 = vadd.xlane.f32.xlu0 %v757
  %v759 = vpop.xlane.xlu0 %758
  %v760 = vrcp.pop %v759
  %v761 = vmul.f32 %v756, %v760
  %v762 = vpack.c.bf16 %v761, %v761
  %v764 = vsel %vm242, %v762, 0
  %v767 = vsel %vm304, %v700, 0
  %769 = vmatprep.subr.bf16.mxu0 0
  %770 = vmatpush1.bf16.msra.mxu0 0
  %771 = vmatprep.subr.bf16.mxu0 0
  %772 = vmatpush1.bf16.msra.mxu0 0
  %773 = vmatprep.subr.bf16.mxu0 0
  %774 = vmatpush1.bf16.msra.mxu0 0
  %775 = vmatprep.subr.bf16.mxu0 0
  %776 = vmatpush1.bf16.msra.mxu0 0
  %777 = vmatprep.subr.bf16.mxu0 0
  %778 = vmatpush1.bf16.msra.mxu0 0
  %779 = vmatprep.subr.bf16.mxu0 0
  %780 = vmatpush1.bf16.msra.mxu0 0
  %781 = vmatprep.subr.bf16.mxu0 0
  %782 = vmatpush1.bf16.msra.mxu0 0
  %783 = vmatprep.subr.bf16.mxu0 0
  %784 = vmatpush1.bf16.msra.mxu0 %v767
  %785 = vmatprep.subr.bf16.mxu0 0
  %786 = vmatpush2.bf16.msra.mxu0 0
  %787 = vmatprep.subr.bf16.mxu0 0
  %788 = vmatpush2.bf16.msra.mxu0 0
  %789 = vmatprep.subr.bf16.mxu0 0
  %790 = vmatpush2.bf16.msra.mxu0 0
  %791 = vmatprep.subr.bf16.mxu0 0
  %792 = vmatpush2.bf16.msra.mxu0 0
  %793 = vmatprep.subr.bf16.mxu0 0
  %794 = vmatpush2.bf16.msra.mxu0 0
  %795 = vmatprep.subr.bf16.mxu0 0
  %796 = vmatpush2.bf16.msra.mxu0 0
  %797 = vmatprep.subr.bf16.mxu0 0
  %798 = vmatpush2.bf16.msra.mxu0 0
  %799 = vmatprep.subr.bf16.mxu0 0
  %800 = vmatpush2.bf16.msra.mxu0 0
  %801 = vmatprep.mubr.bf16.mxu0 0
  %802 = vmatmul.mubr.bf16.gmra.mxu0 %v764
  %v803 = vpop.f32.mrf.mxu0
  %v804 = vadd.f32 0.0, %v803
  %v805 = vpop.f32.mrf.mxu0
  %v806 = vpop.f32.mrf.mxu0
  %v807 = vpop.f32.mrf.mxu0
  %808 = vdwg.mxu0
  %810 = vrot.lane.b32.xlu0 %v698, 120
  %v811 = vpop.permute.xlu0 %810
  %813 = vrot.lane.b32.xlu0 %v699, 120
  %v814 = vpop.permute.xlu0 %813
  %v816 = vsel %vm242, %v811, 0
  %v819 = vsel %vm242, %v814, 0
  %821 = vmatprep.subr.bf16.mxu0 0
  %822 = vmatpush1.bf16.xpose.msra.mxu0 0
  %823 = vmatprep.subr.bf16.mxu0 0
  %824 = vmatpush1.bf16.xpose.msra.mxu0 0
  %825 = vmatprep.subr.bf16.mxu0 0
  %826 = vmatpush1.bf16.xpose.msra.mxu0 0
  %827 = vmatprep.subr.bf16.mxu0 0
  %828 = vmatpush1.bf16.xpose.msra.mxu0 0
  %829 = vmatprep.subr.bf16.mxu0 0
  %830 = vmatpush1.bf16.xpose.msra.mxu0 0
  %831 = vmatprep.subr.bf16.mxu0 0
  %832 = vmatpush1.bf16.xpose.msra.mxu0 0
  %833 = vmatprep.subr.bf16.mxu0 0
  %834 = vmatpush1.bf16.xpose.msra.mxu0 0
  %835 = vmatprep.subr.bf16.mxu0 0
  %836 = vmatpush1.bf16.xpose.msra.mxu0 %v819
  %837 = vmatprep.subr.bf16.mxu0 0
  %838 = vmatpush2.bf16.xpose.msra.mxu0 0
  %839 = vmatprep.subr.bf16.mxu0 0
  %840 = vmatpush2.bf16.xpose.msra.mxu0 0
  %841 = vmatprep.subr.bf16.mxu0 0
  %842 = vmatpush2.bf16.xpose.msra.mxu0 0
  %843 = vmatprep.subr.bf16.mxu0 0
  %844 = vmatpush2.bf16.xpose.msra.mxu0 0
  %845 = vmatprep.subr.bf16.mxu0 0
  %846 = vmatpush2.bf16.xpose.msra.mxu0 0
  %847 = vmatprep.subr.bf16.mxu0 0
  %848 = vmatpush2.bf16.xpose.msra.mxu0 0
  %849 = vmatprep.subr.bf16.mxu0 0
  %850 = vmatpush2.bf16.xpose.msra.mxu0 0
  %851 = vmatprep.subr.bf16.mxu0 0
  %852 = vmatpush2.bf16.xpose.msra.mxu0 0
  %853 = vmatprep.mubr.bf16.mxu0 0
  %854 = vmatmul.mubr.bf16.gmra.mxu0 %v816
  %v855 = vpop.f32.mrf.mxu0
  %v856 = vadd.f32 %v704, %v855
  %v857 = vpop.f32.mrf.mxu0
  %v858 = vpop.f32.mrf.mxu0
  %v859 = vpop.f32.mrf.mxu0
  %860 = vdwg.mxu0
  %v861 = vsel %vm242, %v856, -inf
  %862 = vmax.xlane.f32.xlu0 %v861
  %v863 = vpop.xlane.xlu0 %862
  %v864 = vsub.f32 %v856, %v863
  %v865 = vmul.f32 %v864, 1.442695
  %v866 = vpow.pop %v865
  %v867 = vsel %vm242, %v866, 0.0
  %868 = vadd.xlane.f32.xlu0 %v867
  %v869 = vpop.xlane.xlu0 %868
  %v870 = vrcp.pop %v869
  %v871 = vmul.f32 %v866, %v870
  %v872 = vpack.c.bf16 %v871, %v871
  %874 = vrot.lane.b32.xlu0 %v700, 120
  %v875 = vpop.permute.xlu0 %874
  %v877 = vsel %vm242, %v872, 0
  %v880 = vsel %vm304, %v875, 0
  %882 = vmatprep.subr.bf16.mxu0 0
  %883 = vmatpush1.bf16.msra.mxu0 0
  %884 = vmatprep.subr.bf16.mxu0 0
  %885 = vmatpush1.bf16.msra.mxu0 0
  %886 = vmatprep.subr.bf16.mxu0 0
  %887 = vmatpush1.bf16.msra.mxu0 0
  %888 = vmatprep.subr.bf16.mxu0 0
  %889 = vmatpush1.bf16.msra.mxu0 0
  %890 = vmatprep.subr.bf16.mxu0 0
  %891 = vmatpush1.bf16.msra.mxu0 0
  %892 = vmatprep.subr.bf16.mxu0 0
  %893 = vmatpush1.bf16.msra.mxu0 0
  %894 = vmatprep.subr.bf16.mxu0 0
  %895 = vmatpush1.bf16.msra.mxu0 0
  %896 = vmatprep.subr.bf16.mxu0 0
  %897 = vmatpush1.bf16.msra.mxu0 %v880
  %898 = vmatprep.subr.bf16.mxu0 0
  %899 = vmatpush2.bf16.msra.mxu0 0
  %900 = vmatprep.subr.bf16.mxu0 0
  %901 = vmatpush2.bf16.msra.mxu0 0
  %902 = vmatprep.subr.bf16.mxu0 0
  %903 = vmatpush2.bf16.msra.mxu0 0
  %904 = vmatprep.subr.bf16.mxu0 0
  %905 = vmatpush2.bf16.msra.mxu0 0
  %906 = vmatprep.subr.bf16.mxu0 0
  %907 = vmatpush2.bf16.msra.mxu0 0
  %908 = vmatprep.subr.bf16.mxu0 0
  %909 = vmatpush2.bf16.msra.mxu0 0
  %910 = vmatprep.subr.bf16.mxu0 0
  %911 = vmatpush2.bf16.msra.mxu0 0
  %912 = vmatprep.subr.bf16.mxu0 0
  %913 = vmatpush2.bf16.msra.mxu0 0
  %914 = vmatprep.mubr.bf16.mxu0 0
  %915 = vmatmul.mubr.bf16.gmra.mxu0 %v877
  %v916 = vpop.f32.mrf.mxu0
  %v917 = vadd.f32 0.0, %v916
  %v918 = vpop.f32.mrf.mxu0
  %v919 = vpop.f32.mrf.mxu0
  %v920 = vpop.f32.mrf.mxu0
  %921 = vdwg.mxu0
  %922 = vrot.lane.b32.xlu0 %v698, 112
  %v923 = vpop.permute.xlu0 %922
  %924 = vrot.lane.b32.xlu0 %v699, 112
  %v925 = vpop.permute.xlu0 %924
  %v927 = vsel %vm242, %v923, 0
  %v930 = vsel %vm242, %v925, 0
  %932 = vmatprep.subr.bf16.mxu0 0
  %933 = vmatpush1.bf16.xpose.msra.mxu0 0
  %934 = vmatprep.subr.bf16.mxu0 0
  %935 = vmatpush1.bf16.xpose.msra.mxu0 0
  %936 = vmatprep.subr.bf16.mxu0 0
  %937 = vmatpush1.bf16.xpose.msra.mxu0 0
  %938 = vmatprep.subr.bf16.mxu0 0
  %939 = vmatpush1.bf16.xpose.msra.mxu0 0
  %940 = vmatprep.subr.bf16.mxu0 0
  %941 = vmatpush1.bf16.xpose.msra.mxu0 0
  %942 = vmatprep.subr.bf16.mxu0 0
  %943 = vmatpush1.bf16.xpose.msra.mxu0 0
  %944 = vmatprep.subr.bf16.mxu0 0
  %945 = vmatpush1.bf16.xpose.msra.mxu0 0
  %946 = vmatprep.subr.bf16.mxu0 0
  %947 = vmatpush1.bf16.xpose.msra.mxu0 %v930
  %948 = vmatprep.subr.bf16.mxu0 0
  %949 = vmatpush2.bf16.xpose.msra.mxu0 0
  %950 = vmatprep.subr.bf16.mxu0 0
  %951 = vmatpush2.bf16.xpose.msra.mxu0 0
  %952 = vmatprep.subr.bf16.mxu0 0
  %953 = vmatpush2.bf16.xpose.msra.mxu0 0
  %954 = vmatprep.subr.bf16.mxu0 0
  %955 = vmatpush2.bf16.xpose.msra.mxu0 0
  %956 = vmatprep.subr.bf16.mxu0 0
  %957 = vmatpush2.bf16.xpose.msra.mxu0 0
  %958 = vmatprep.subr.bf16.mxu0 0
  %959 = vmatpush2.bf16.xpose.msra.mxu0 0
  %960 = vmatprep.subr.bf16.mxu0 0
  %961 = vmatpush2.bf16.xpose.msra.mxu0 0
  %962 = vmatprep.subr.bf16.mxu0 0
  %963 = vmatpush2.bf16.xpose.msra.mxu0 0
  %964 = vmatprep.mubr.bf16.mxu0 0
  %965 = vmatmul.mubr.bf16.gmra.mxu0 %v927
  %v966 = vpop.f32.mrf.mxu0
  %v967 = vadd.f32 %v704, %v966
  %v968 = vpop.f32.mrf.mxu0
  %v969 = vpop.f32.mrf.mxu0
  %v970 = vpop.f32.mrf.mxu0
  %971 = vdwg.mxu0
  %v972 = vsel %vm242, %v967, -inf
  %973 = vmax.xlane.f32.xlu0 %v972
  %v974 = vpop.xlane.xlu0 %973
  %v975 = vsub.f32 %v967, %v974
  %v976 = vmul.f32 %v975, 1.442695
  %v977 = vpow.pop %v976
  %v978 = vsel %vm242, %v977, 0.0
  %979 = vadd.xlane.f32.xlu0 %v978
  %v980 = vpop.xlane.xlu0 %979
  %v981 = vrcp.pop %v980
  %v982 = vmul.f32 %v977, %v981
  %v983 = vpack.c.bf16 %v982, %v982
  %984 = vrot.lane.b32.xlu0 %v700, 112
  %v985 = vpop.permute.xlu0 %984
  %v987 = vsel %vm242, %v983, 0
  %v990 = vsel %vm304, %v985, 0
  %992 = vmatprep.subr.bf16.mxu0 0
  %993 = vmatpush1.bf16.msra.mxu0 0
  %994 = vmatprep.subr.bf16.mxu0 0
  %995 = vmatpush1.bf16.msra.mxu0 0
  %996 = vmatprep.subr.bf16.mxu0 0
  %997 = vmatpush1.bf16.msra.mxu0 0
  %998 = vmatprep.subr.bf16.mxu0 0
  %999 = vmatpush1.bf16.msra.mxu0 0
  %1000 = vmatprep.subr.bf16.mxu0 0
  %1001 = vmatpush1.bf16.msra.mxu0 0
  %1002 = vmatprep.subr.bf16.mxu0 0
  %1003 = vmatpush1.bf16.msra.mxu0 0
  %1004 = vmatprep.subr.bf16.mxu0 0
  %1005 = vmatpush1.bf16.msra.mxu0 0
  %1006 = vmatprep.subr.bf16.mxu0 0
  %1007 = vmatpush1.bf16.msra.mxu0 %v990
  %1008 = vmatprep.subr.bf16.mxu0 0
  %1009 = vmatpush2.bf16.msra.mxu0 0
  %1010 = vmatprep.subr.bf16.mxu0 0
  %1011 = vmatpush2.bf16.msra.mxu0 0
  %1012 = vmatprep.subr.bf16.mxu0 0
  %1013 = vmatpush2.bf16.msra.mxu0 0
  %1014 = vmatprep.subr.bf16.mxu0 0
  %1015 = vmatpush2.bf16.msra.mxu0 0
  %1016 = vmatprep.subr.bf16.mxu0 0
  %1017 = vmatpush2.bf16.msra.mxu0 0
  %1018 = vmatprep.subr.bf16.mxu0 0
  %1019 = vmatpush2.bf16.msra.mxu0 0
  %1020 = vmatprep.subr.bf16.mxu0 0
  %1021 = vmatpush2.bf16.msra.mxu0 0
  %1022 = vmatprep.subr.bf16.mxu0 0
  %1023 = vmatpush2.bf16.msra.mxu0 0
  %1024 = vmatprep.mubr.bf16.mxu0 0
  %1025 = vmatmul.mubr.bf16.gmra.mxu0 %v987
  %v1026 = vpop.f32.mrf.mxu0
  %v1027 = vadd.f32 0.0, %v1026
  %v1028 = vpop.f32.mrf.mxu0
  %v1029 = vpop.f32.mrf.mxu0
  %v1030 = vpop.f32.mrf.mxu0
  %1031 = vdwg.mxu0
  %1032 = vrot.lane.b32.xlu0 %v698, 104
  %v1033 = vpop.permute.xlu0 %1032
  %1034 = vrot.lane.b32.xlu0 %v699, 104
  %v1035 = vpop.permute.xlu0 %1034
  %v1037 = vsel %vm242, %v1033, 0
  %v1040 = vsel %vm242, %v1035, 0
  %1042 = vmatprep.subr.bf16.mxu0 0
  %1043 = vmatpush1.bf16.xpose.msra.mxu0 0
  %1044 = vmatprep.subr.bf16.mxu0 0
  %1045 = vmatpush1.bf16.xpose.msra.mxu0 0
  %1046 = vmatprep.subr.bf16.mxu0 0
  %1047 = vmatpush1.bf16.xpose.msra.mxu0 0
  %1048 = vmatprep.subr.bf16.mxu0 0
  %1049 = vmatpush1.bf16.xpose.msra.mxu0 0
  %1050 = vmatprep.subr.bf16.mxu0 0
  %1051 = vmatpush1.bf16.xpose.msra.mxu0 0
  %1052 = vmatprep.subr.bf16.mxu0 0
  %1053 = vmatpush1.bf16.xpose.msra.mxu0 0
  %1054 = vmatprep.subr.bf16.mxu0 0
  %1055 = vmatpush1.bf16.xpose.msra.mxu0 0
  %1056 = vmatprep.subr.bf16.mxu0 0
  %1057 = vmatpush1.bf16.xpose.msra.mxu0 %v1040
  %1058 = vmatprep.subr.bf16.mxu0 0
  %1059 = vmatpush2.bf16.xpose.msra.mxu0 0
  %1060 = vmatprep.subr.bf16.mxu0 0
  %1061 = vmatpush2.bf16.xpose.msra.mxu0 0
  %1062 = vmatprep.subr.bf16.mxu0 0
  %1063 = vmatpush2.bf16.xpose.msra.mxu0 0
  %1064 = vmatprep.subr.bf16.mxu0 0
  %1065 = vmatpush2.bf16.xpose.msra.mxu0 0
  %1066 = vmatprep.subr.bf16.mxu0 0
  %1067 = vmatpush2.bf16.xpose.msra.mxu0 0
  %1068 = vmatprep.subr.bf16.mxu0 0
  %1069 = vmatpush2.bf16.xpose.msra.mxu0 0
  %1070 = vmatprep.subr.bf16.mxu0 0
  %1071 = vmatpush2.bf16.xpose.msra.mxu0 0
  %1072 = vmatprep.subr.bf16.mxu0 0
  %1073 = vmatpush2.bf16.xpose.msra.mxu0 0
  %1074 = vmatprep.mubr.bf16.mxu0 0
  %1075 = vmatmul.mubr.bf16.gmra.mxu0 %v1037
  %v1076 = vpop.f32.mrf.mxu0
  %v1077 = vadd.f32 %v704, %v1076
  %v1078 = vpop.f32.mrf.mxu0
  %v1079 = vpop.f32.mrf.mxu0
  %v1080 = vpop.f32.mrf.mxu0
  %1081 = vdwg.mxu0
  %v1082 = vsel %vm242, %v1077, -inf
  %1083 = vmax.xlane.f32.xlu0 %v1082
  %v1084 = vpop.xlane.xlu0 %1083
  %v1085 = vsub.f32 %v1077, %v1084
  %v1086 = vmul.f32 %v1085, 1.442695
  %v1087 = vpow.pop %v1086
  %v1088 = vsel %vm242, %v1087, 0.0
  %1089 = vadd.xlane.f32.xlu0 %v1088
  %v1090 = vpop.xlane.xlu0 %1089
  %v1091 = vrcp.pop %v1090
  %v1092 = vmul.f32 %v1087, %v1091
  %v1093 = vpack.c.bf16 %v1092, %v1092
  %1094 = vrot.lane.b32.xlu0 %v700, 104
  %v1095 = vpop.permute.xlu0 %1094
  %v1097 = vsel %vm242, %v1093, 0
  %v1100 = vsel %vm304, %v1095, 0
  %1102 = vmatprep.subr.bf16.mxu0 0
  %1103 = vmatpush1.bf16.msra.mxu0 0
  %1104 = vmatprep.subr.bf16.mxu0 0
  %1105 = vmatpush1.bf16.msra.mxu0 0
  %1106 = vmatprep.subr.bf16.mxu0 0
  %1107 = vmatpush1.bf16.msra.mxu0 0
  %1108 = vmatprep.subr.bf16.mxu0 0
  %1109 = vmatpush1.bf16.msra.mxu0 0
  %1110 = vmatprep.subr.bf16.mxu0 0
  %1111 = vmatpush1.bf16.msra.mxu0 0
  %1112 = vmatprep.subr.bf16.mxu0 0
  %1113 = vmatpush1.bf16.msra.mxu0 0
  %1114 = vmatprep.subr.bf16.mxu0 0
  %1115 = vmatpush1.bf16.msra.mxu0 0
  %1116 = vmatprep.subr.bf16.mxu0 0
  %1117 = vmatpush1.bf16.msra.mxu0 %v1100
  %1118 = vmatprep.subr.bf16.mxu0 0
  %1119 = vmatpush2.bf16.msra.mxu0 0
  %1120 = vmatprep.subr.bf16.mxu0 0
  %1121 = vmatpush2.bf16.msra.mxu0 0
  %1122 = vmatprep.subr.bf16.mxu0 0
  %1123 = vmatpush2.bf16.msra.mxu0 0
  %1124 = vmatprep.subr.bf16.mxu0 0
  %1125 = vmatpush2.bf16.msra.mxu0 0
  %1126 = vmatprep.subr.bf16.mxu0 0
  %1127 = vmatpush2.bf16.msra.mxu0 0
  %1128 = vmatprep.subr.bf16.mxu0 0
  %1129 = vmatpush2.bf16.msra.mxu0 0
  %1130 = vmatprep.subr.bf16.mxu0 0
  %1131 = vmatpush2.bf16.msra.mxu0 0
  %1132 = vmatprep.subr.bf16.mxu0 0
  %1133 = vmatpush2.bf16.msra.mxu0 0
  %1134 = vmatprep.mubr.bf16.mxu0 0
  %1135 = vmatmul.mubr.bf16.gmra.mxu0 %v1097
  %v1136 = vpop.f32.mrf.mxu0
  %v1137 = vadd.f32 0.0, %v1136
  %v1138 = vpop.f32.mrf.mxu0
  %v1139 = vpop.f32.mrf.mxu0
  %v1140 = vpop.f32.mrf.mxu0
  %1141 = vdwg.mxu0
  %1143 = vrot.lane.b32.xlu0 %v917, 8
  %v1144 = vpop.permute.xlu0 %1143
  %1147 = vrot.lane.b32.xlu0 %v1027, 16
  %v1148 = vpop.permute.xlu0 %1147
  %1151 = vrot.lane.b32.xlu0 %v1137, 24
  %v1152 = vpop.permute.xlu0 %1151
  %v1154 = vsel %vm242, %v804, %v1144
  %v1155 = vsel %vm694, %v1154, %v1148
  %v1156 = vsel %vm696, %v1155, %v1152
  %v1157 = vpack.c.bf16 %v1156, %v697
  %v1158 = vld [vmem:[%s11] sm:$0xff]
  %v1159 = vld [vmem:[%s11 + $0x8] sm:$0xff]
  %v1160 = vld [vmem:[%s11 + $0x10] sm:$0xff]
  %v1161 = vld [vmem:[%s11 + $0x18] sm:$0xff]
  %v1162 = vpack.c.bf16 %v1159, %v1158
  %v1163 = vpack.c.bf16 %v1161, %v1160
  %v1164 = vld [vmem:[%s12] sm:$0x1]
  %v1166 = vlaneseq
  %v1167 = vshrl.u32 %v1166, 7
  %v1168 = vsub.s32 0, %v1167
  %v1169 = vrot.slane %v1164, %v1168
  %v1172 = vsel %vm67, %v1157, 0
  %1174 = vmatprep.subr.bf16.mxu0 0
  %1175 = vmatpush1.bf16.msra.mxu0 0
  %1176 = vmatprep.subr.bf16.mxu0 0
  %1177 = vmatpush1.bf16.msra.mxu0 0
  %1178 = vmatprep.subr.bf16.mxu0 0
  %1179 = vmatpush1.bf16.msra.mxu0 0
  %1180 = vmatprep.subr.bf16.mxu0 0
  %1181 = vmatpush1.bf16.msra.mxu0 0
  %1182 = vmatprep.subr.bf16.mxu0 0
  %1183 = vmatpush1.bf16.msra.mxu0 0
  %1184 = vmatprep.subr.bf16.mxu0 0
  %1185 = vmatpush1.bf16.msra.mxu0 0
  %1186 = vmatprep.subr.bf16.mxu0 0
  %1187 = vmatpush1.bf16.msra.mxu0 %v1163
  %1188 = vmatprep.subr.bf16.mxu0 0
  %1189 = vmatpush1.bf16.msra.mxu0 %v1162
  %1190 = vmatprep.subr.bf16.mxu0 0
  %1191 = vmatpush2.bf16.msra.mxu0 0
  %1192 = vmatprep.subr.bf16.mxu0 0
  %1193 = vmatpush2.bf16.msra.mxu0 0
  %1194 = vmatprep.subr.bf16.mxu0 0
  %1195 = vmatpush2.bf16.msra.mxu0 0
  %1196 = vmatprep.subr.bf16.mxu0 0
  %1197 = vmatpush2.bf16.msra.mxu0 0
  %1198 = vmatprep.subr.bf16.mxu0 0
  %1199 = vmatpush2.bf16.msra.mxu0 0
  %1200 = vmatprep.subr.bf16.mxu0 0
  %1201 = vmatpush2.bf16.msra.mxu0 0
  %1202 = vmatprep.subr.bf16.mxu0 0
  %1203 = vmatpush2.bf16.msra.mxu0 0
  %1204 = vmatprep.subr.bf16.mxu0 0
  %1205 = vmatpush2.bf16.msra.mxu0 0
  %1206 = vmatprep.mubr.bf16.mxu0 0
  %1207 = vmatmul.mubr.bf16.gmra.mxu0 %v1172
  %v1208 = vpop.f32.mrf.mxu0
  %v1209 = vadd.f32 %v1169, %v1208
  %v1210 = vpop.f32.mrf.mxu0
  %v1211 = vpop.f32.mrf.mxu0
  %v1212 = vadd.f32 %v1169, %v1211
  %v1213 = vpop.f32.mrf.mxu0
  %1214 = vdwg.mxu0
  %v1215 = vld [vmem:[%s3] sm:$0xff]
  %v1216 = vld [vmem:[%s3 + $0x8] sm:$0xff]
  %v1217 = vadd.f32 %v1215, %v1209
  %v1218 = vadd.f32 %v1216, %v1212
  %v1219 = vld [vmem:[%s13] sm:$0x1]
  %v1220 = vld [vmem:[%s14] sm:$0x1]
  %v1221 = vsel %vm67, %v1217, 0.0
  %1222 = vadd.xlane.f32.xlu0 %v1221
  %v1223 = vpop.xlane.xlu0 %1222
  %v1224 = vsel %vm67, %v1218, 0.0
  %1225 = vadd.xlane.f32.xlu0 %v1224
  %v1226 = vpop.xlane.xlu0 %1225
  %v1227 = vrcp.pop 32.0
  %v1228 = vmul.f32 %v1223, %v1227
  %v1229 = vmul.f32 %v1226, %v1227
  %v1230 = vsub.f32 %v1217, %v1228
  %v1231 = vsub.f32 %v1218, %v1229
  %v1232 = vmul.f32 %v1230, %v1230
  %v1233 = vmul.f32 %v1231, %v1231
  %v1234 = vsel %vm67, %v1232, 0.0
  %1235 = vadd.xlane.f32.xlu0 %v1234
  %v1236 = vpop.xlane.xlu0 %1235
  %v1237 = vsel %vm67, %v1233, 0.0
  %1238 = vadd.xlane.f32.xlu0 %v1237
  %v1239 = vpop.xlane.xlu0 %1238
  %v1240 = vmul.f32 %v1236, %v1227
  %v1241 = vmul.f32 %v1239, %v1227
  %v1242 = vadd.f32 %v1240, 1e-05
  %v1243 = vadd.f32 %v1241, 1e-05
  %v1244 = vrsqrt.pop %v1242
  %v1245 = vrsqrt.pop %v1243
  %v1246 = vmul.f32 %v1230, %v1244
  %v1247 = vmul.f32 %v1231, %v1245
  %v1249 = vlaneseq
  %v1250 = vshrl.u32 %v1249, 7
  %v1251 = vsub.s32 0, %v1250
  %v1252 = vrot.slane %v1219, %v1251
  %v1254 = vmul.f32 %v1246, %v1252
  %v1255 = vmul.f32 %v1247, %v1252
  %v1257 = vlaneseq
  %v1258 = vshrl.u32 %v1257, 7
  %v1259 = vsub.s32 0, %v1258
  %v1260 = vrot.slane %v1220, %v1259
  %v1262 = vadd.f32 %v1254, %v1260
  %v1263 = vadd.f32 %v1255, %v1260
  %1264 = vst.msk [vmem:[%s15] sm:$0xff] %vm67, %v1262
  %1265 = vst.msk [vmem:[%s15 + $0x8] sm:$0xff] %vm67, %v1263
  // Predicated region
  $region62: #{transformer_forward.28} parent=0 // pred_check
    _
  $region63: #{transformer_forward.28} parent=0 // pred_check_branch
    %1267 = sbr.rel (0) target = $region65
  $region64: #{transformer_forward.28} parent=0 // pred_region
    _
  $region65: #{transformer_forward.28} parent=0 // pred_fallthru
    _
  // Predicated region
  $region66: #{transformer_forward.28} parent=0 // pred_check
    _
  $region67: #{transformer_forward.28} parent=0 // pred_check_branch
    %1269 = sbr.rel (0) target = $region69
  $region68: #{transformer_forward.28} parent=0 // pred_region
    _
  $region69: #{transformer_forward.28} parent=0 // pred_fallthru
    _

// kernel: transformer_forward.24
$region0: #{transformer_forward.24}
  #allocation0 [shape = 'u32[]', space=smem, size = 0x4, offset = 0x4, fixed_abs, tag = 'smem constant byte address 0x4 - core index']
  #allocation1 [shape = 'u32[144,128]{1,0:T(1,128)}', space=vmem, size = 0x12000, scoped, tag = 'internal scratch']
  %s0 = inlined_call_operand.vmem [shape: f32[32,32], index: 0, kind: input, shape index: {}, may-alias: {0,1}]
  %s1 = inlined_call_operand.vmem [shape: f32[32,32], index: 1, kind: input, shape index: {}, may-alias: {0,1}]
  %s2 = inlined_call_operand.vmem [shape: f32[32,32], index: 2, kind: input, shape index: {}, may-alias: {2,3}]
  %s3 = inlined_call_operand.vmem [shape: f32[32,32], index: 3, kind: input, shape index: {}, may-alias: {2,3}]
  %s4 = inlined_call_operand.vmem [shape: f32[2,16], index: 4, kind: input, shape index: {}]
  %s5 = inlined_call_operand.vmem [shape: f32[32,32], index: 5, kind: input, shape index: {}]
  %s6 = inlined_call_operand.vmem [shape: f32[1,32], index: 6, kind: input, shape index: {}]
  %s7 = inlined_call_operand.vmem [shape: f32[32,32], index: 7, kind: input, shape index: {}]
  %s8 = inlined_call_operand.vmem [shape: f32[1,32], index: 8, kind: input, shape index: {}]
  %s9 = inlined_call_operand.vmem [shape: f32[32,32], index: 9, kind: input, shape index: {}]
  %s10 = inlined_call_operand.vmem [shape: f32[1,32], index: 10, kind: input, shape index: {}]
  %s11 = inlined_call_operand.vmem [shape: f32[32,32], index: 11, kind: input, shape index: {}]
  %s12 = inlined_call_operand.vmem [shape: f32[1,32], index: 12, kind: input, shape index: {}]
  %s13 = inlined_call_operand.vmem [shape: f32[1,32], index: 13, kind: input, shape index: {}]
  %s14 = inlined_call_operand.vmem [shape: f32[1,32], index: 14, kind: input, shape index: {}]
  %s15 = inlined_call_operand.vmem [shape: f32[32,32], index: 15, kind: output, shape index: {}]
  %s16 = sld [smem:[#allocation0]]
  $region70: #{transformer_forward.24} parent=0
    _
  %s18 = ssub.s32 1, %s16
  %s19 = scalar_select 0, %s18, %s16
  // Predicated region
  $region2: #{transformer_forward.24} parent=0 // pred_check
    _
  $region3: #{transformer_forward.24} parent=0 // pred_check_branch
    %21 = sbr.rel (0) target = $region5
  $region4: #{transformer_forward.24} parent=0 // pred_region
    _
  $region5: #{transformer_forward.24} parent=0 // pred_fallthru
    _
  // Predicated region
  $region6: #{transformer_forward.24} parent=0 // pred_check
    _
  $region7: #{transformer_forward.24} parent=0 // pred_check_branch
    %23 = sbr.rel (0) target = $region9
  $region8: #{transformer_forward.24} parent=0 // pred_region
    _
  $region9: #{transformer_forward.24} parent=0 // pred_fallthru
    _
  // Predicated region
  $region10: #{transformer_forward.24} parent=0 // pred_check
    _
  $region11: #{transformer_forward.24} parent=0 // pred_check_branch
    %25 = sbr.rel (0) target = $region13
  $region12: #{transformer_forward.24} parent=0 // pred_region
    _
  $region13: #{transformer_forward.24} parent=0 // pred_fallthru
    _
  // Predicated region
  $region14: #{transformer_forward.24} parent=0 // pred_check
    _
  $region15: #{transformer_forward.24} parent=0 // pred_check_branch
    %27 = sbr.rel (0) target = $region17
  $region16: #{transformer_forward.24} parent=0 // pred_region
    _
  $region17: #{transformer_forward.24} parent=0 // pred_fallthru
    _
  // Predicated region
  $region18: #{transformer_forward.24} parent=0 // pred_check
    _
  $region19: #{transformer_forward.24} parent=0 // pred_check_branch
    %29 = sbr.rel (0) target = $region21
  $region20: #{transformer_forward.24} parent=0 // pred_region
    _
  $region21: #{transformer_forward.24} parent=0 // pred_fallthru
    _
  // Predicated region
  $region22: #{transformer_forward.24} parent=0 // pred_check
    _
  $region23: #{transformer_forward.24} parent=0 // pred_check_branch
    %31 = sbr.rel (0) target = $region25
  $region24: #{transformer_forward.24} parent=0 // pred_region
    _
  $region25: #{transformer_forward.24} parent=0 // pred_fallthru
    _
  // Predicated region
  $region26: #{transformer_forward.24} parent=0 // pred_check
    _
  $region27: #{transformer_forward.24} parent=0 // pred_check_branch
    %33 = sbr.rel (0) target = $region29
  $region28: #{transformer_forward.24} parent=0 // pred_region
    _
  $region29: #{transformer_forward.24} parent=0 // pred_fallthru
    _
  // Predicated region
  $region30: #{transformer_forward.24} parent=0 // pred_check
    _
  $region31: #{transformer_forward.24} parent=0 // pred_check_branch
    %35 = sbr.rel (0) target = $region33
  $region32: #{transformer_forward.24} parent=0 // pred_region
    _
  $region33: #{transformer_forward.24} parent=0 // pred_fallthru
    _
  // Predicated region
  $region34: #{transformer_forward.24} parent=0 // pred_check
    _
  $region35: #{transformer_forward.24} parent=0 // pred_check_branch
    %37 = sbr.rel (0) target = $region37
  $region36: #{transformer_forward.24} parent=0 // pred_region
    _
  $region37: #{transformer_forward.24} parent=0 // pred_fallthru
    _
  // Predicated region
  $region38: #{transformer_forward.24} parent=0 // pred_check
    _
  $region39: #{transformer_forward.24} parent=0 // pred_check_branch
    %39 = sbr.rel (0) target = $region41
  $region40: #{transformer_forward.24} parent=0 // pred_region
    _
  $region41: #{transformer_forward.24} parent=0 // pred_fallthru
    _
  // Predicated region
  $region42: #{transformer_forward.24} parent=0 // pred_check
    _
  $region43: #{transformer_forward.24} parent=0 // pred_check_branch
    %41 = sbr.rel (0) target = $region45
  $region44: #{transformer_forward.24} parent=0 // pred_region
    _
  $region45: #{transformer_forward.24} parent=0 // pred_fallthru
    _
  // Predicated region
  $region46: #{transformer_forward.24} parent=0 // pred_check
    _
  $region47: #{transformer_forward.24} parent=0 // pred_check_branch
    %43 = sbr.rel (0) target = $region49
  $region48: #{transformer_forward.24} parent=0 // pred_region
    _
  $region49: #{transformer_forward.24} parent=0 // pred_fallthru
    _
  // Predicated region
  $region50: #{transformer_forward.24} parent=0 // pred_check
    _
  $region51: #{transformer_forward.24} parent=0 // pred_check_branch
    %45 = sbr.rel (0) target = $region53
  $region52: #{transformer_forward.24} parent=0 // pred_region
    _
  $region53: #{transformer_forward.24} parent=0 // pred_fallthru
    _
  // Predicated region
  $region54: #{transformer_forward.24} parent=0 // pred_check
    _
  $region55: #{transformer_forward.24} parent=0 // pred_check_branch
    %47 = sbr.rel (0) target = $region57
  $region56: #{transformer_forward.24} parent=0 // pred_region
    _
  $region57: #{transformer_forward.24} parent=0 // pred_fallthru
    _
  // Predicated region
  $region58: #{transformer_forward.24} parent=0 // pred_check
    _
  $region59: #{transformer_forward.24} parent=0 // pred_check_branch
    %49 = sbr.rel (0) target = $region61
  $region60: #{transformer_forward.24} parent=0 // pred_region
    _
  $region61: #{transformer_forward.24} parent=0 // pred_fallthru
    _
  %v51 = vld [vmem:[%s0] sm:$0xff]
  %v52 = vld [vmem:[%s0 + $0x8] sm:$0xff]
  %v53 = vld [vmem:[%s0 + $0x10] sm:$0xff]
  %v54 = vld [vmem:[%s0 + $0x18] sm:$0xff]
  %v55 = vpack.c.bf16 %v52, %v51
  %v56 = vpack.c.bf16 %v54, %v53
  %v57 = vld [vmem:[%s5] sm:$0xff]
  %v58 = vld [vmem:[%s5 + $0x8] sm:$0xff]
  %v59 = vld [vmem:[%s5 + $0x10] sm:$0xff]
  %v60 = vld [vmem:[%s5 + $0x18] sm:$0xff]
  %v61 = vpack.c.bf16 %v58, %v57
  %v62 = vpack.c.bf16 %v60, %v59
  %v63 = vld [vmem:[%s6] sm:$0x1]
  %v65 = vlaneseq
  %v66 = vshrl.u32 %v65, 7
  %v67 = vsub.s32 0, %v66
  %v68 = vrot.slane %v63, %v67
  %vm70 = vcmask 261120
  %v72 = vsel %vm70, %v55, 0
  %v75 = vsel %vm70, %v56, 0
  %77 = vmatprep.subr.bf16.mxu0 0
  %78 = vmatpush1.bf16.msra.mxu0 0
  %79 = vmatprep.subr.bf16.mxu0 0
  %80 = vmatpush1.bf16.msra.mxu0 0
  %81 = vmatprep.subr.bf16.mxu0 0
  %82 = vmatpush1.bf16.msra.mxu0 0
  %83 = vmatprep.subr.bf16.mxu0 0
  %84 = vmatpush1.bf16.msra.mxu0 0
  %85 = vmatprep.subr.bf16.mxu0 0
  %86 = vmatpush1.bf16.msra.mxu0 0
  %87 = vmatprep.subr.bf16.mxu0 0
  %88 = vmatpush1.bf16.msra.mxu0 0
  %89 = vmatprep.subr.bf16.mxu0 0
  %90 = vmatpush1.bf16.msra.mxu0 %v62
  %91 = vmatprep.subr.bf16.mxu0 0
  %92 = vmatpush1.bf16.msra.mxu0 %v61
  %93 = vmatprep.subr.bf16.mxu0 0
  %94 = vmatpush2.bf16.msra.mxu0 0
  %95 = vmatprep.subr.bf16.mxu0 0
  %96 = vmatpush2.bf16.msra.mxu0 0
  %97 = vmatprep.subr.bf16.mxu0 0
  %98 = vmatpush2.bf16.msra.mxu0 0
  %99 = vmatprep.subr.bf16.mxu0 0
  %100 = vmatpush2.bf16.msra.mxu0 0
  %101 = vmatprep.subr.bf16.mxu0 0
  %102 = vmatpush2.bf16.msra.mxu0 0
  %103 = vmatprep.subr.bf16.mxu0 0
  %104 = vmatpush2.bf16.msra.mxu0 0
  %105 = vmatprep.subr.bf16.mxu0 0
  %106 = vmatpush2.bf16.msra.mxu0 0
  %107 = vmatprep.subr.bf16.mxu0 0
  %108 = vmatpush2.bf16.msra.mxu0 0
  %109 = vmatprep.mubr.bf16.mxu0 0
  %110 = vmatmul.mubr.bf16.gmra.mxu0 %v72
  %v111 = vpop.f32.mrf.mxu0
  %v112 = vadd.f32 %v68, %v111
  %v113 = vpop.f32.mrf.mxu0
  %v114 = vpop.f32.mrf.mxu0
  %v115 = vadd.f32 %v68, %v114
  %v116 = vpop.f32.mrf.mxu0
  %117 = vmatprep.mubr.bf16.mxu0 0
  %118 = vmatmul.mubr.bf16.gmra.mxu0 %v75
  %v119 = vpop.f32.mrf.mxu0
  %v120 = vadd.f32 %v68, %v119
  %v121 = vpop.f32.mrf.mxu0
  %v122 = vpop.f32.mrf.mxu0
  %v123 = vadd.f32 %v68, %v122
  %v124 = vpop.f32.mrf.mxu0
  %125 = vdwg.mxu0
  %v126 = vmul.f32 %v112, 0.35355338
  %v127 = vmul.f32 %v115, 0.35355338
  %v128 = vmul.f32 %v120, 0.35355338
  %v129 = vmul.f32 %v123, 0.35355338
  %v130 = vld [vmem:[%s1] sm:$0xff]
  %v131 = vld [vmem:[%s1 + $0x8] sm:$0xff]
  %v132 = vld [vmem:[%s1 + $0x10] sm:$0xff]
  %v133 = vld [vmem:[%s1 + $0x18] sm:$0xff]
  %v134 = vpack.c.bf16 %v131, %v130
  %v135 = vpack.c.bf16 %v133, %v132
  %v136 = vld [vmem:[%s7] sm:$0xff]
  %v137 = vld [vmem:[%s7 + $0x8] sm:$0xff]
  %v138 = vld [vmem:[%s7 + $0x10] sm:$0xff]
  %v139 = vld [vmem:[%s7 + $0x18] sm:$0xff]
  %v140 = vpack.c.bf16 %v137, %v136
  %v141 = vpack.c.bf16 %v139, %v138
  %v142 = vld [vmem:[%s8] sm:$0x1]
  %v144 = vlaneseq
  %v145 = vshrl.u32 %v144, 7
  %v146 = vsub.s32 0, %v145
  %v147 = vrot.slane %v142, %v146
  %v150 = vsel %vm70, %v134, 0
  %v153 = vsel %vm70, %v135, 0
  %155 = vmatprep.subr.bf16.mxu0 0
  %156 = vmatpush1.bf16.msra.mxu0 0
  %157 = vmatprep.subr.bf16.mxu0 0
  %158 = vmatpush1.bf16.msra.mxu0 0
  %159 = vmatprep.subr.bf16.mxu0 0
  %160 = vmatpush1.bf16.msra.mxu0 0
  %161 = vmatprep.subr.bf16.mxu0 0
  %162 = vmatpush1.bf16.msra.mxu0 0
  %163 = vmatprep.subr.bf16.mxu0 0
  %164 = vmatpush1.bf16.msra.mxu0 0
  %165 = vmatprep.subr.bf16.mxu0 0
  %166 = vmatpush1.bf16.msra.mxu0 0
  %167 = vmatprep.subr.bf16.mxu0 0
  %168 = vmatpush1.bf16.msra.mxu0 %v141
  %169 = vmatprep.subr.bf16.mxu0 0
  %170 = vmatpush1.bf16.msra.mxu0 %v140
  %171 = vmatprep.subr.bf16.mxu0 0
  %172 = vmatpush2.bf16.msra.mxu0 0
  %173 = vmatprep.subr.bf16.mxu0 0
  %174 = vmatpush2.bf16.msra.mxu0 0
  %175 = vmatprep.subr.bf16.mxu0 0
  %176 = vmatpush2.bf16.msra.mxu0 0
  %177 = vmatprep.subr.bf16.mxu0 0
  %178 = vmatpush2.bf16.msra.mxu0 0
  %179 = vmatprep.subr.bf16.mxu0 0
  %180 = vmatpush2.bf16.msra.mxu0 0
  %181 = vmatprep.subr.bf16.mxu0 0
  %182 = vmatpush2.bf16.msra.mxu0 0
  %183 = vmatprep.subr.bf16.mxu0 0
  %184 = vmatpush2.bf16.msra.mxu0 0
  %185 = vmatprep.subr.bf16.mxu0 0
  %186 = vmatpush2.bf16.msra.mxu0 0
  %187 = vmatprep.mubr.bf16.mxu0 0
  %188 = vmatmul.mubr.bf16.gmra.mxu0 %v150
  %v189 = vpop.f32.mrf.mxu0
  %v190 = vadd.f32 %v147, %v189
  %v191 = vpop.f32.mrf.mxu0
  %v192 = vpop.f32.mrf.mxu0
  %v193 = vadd.f32 %v147, %v192
  %v194 = vpop.f32.mrf.mxu0
  %195 = vmatprep.mubr.bf16.mxu0 0
  %196 = vmatmul.mubr.bf16.gmra.mxu0 %v153
  %v197 = vpop.f32.mrf.mxu0
  %v198 = vadd.f32 %v147, %v197
  %v199 = vpop.f32.mrf.mxu0
  %v200 = vpop.f32.mrf.mxu0
  %v201 = vadd.f32 %v147, %v200
  %v202 = vpop.f32.mrf.mxu0
  %203 = vdwg.mxu0
  %v204 = vld [vmem:[%s2] sm:$0xff]
  %v205 = vld [vmem:[%s2 + $0x8] sm:$0xff]
  %v206 = vld [vmem:[%s2 + $0x10] sm:$0xff]
  %v207 = vld [vmem:[%s2 + $0x18] sm:$0xff]
  %v208 = vpack.c.bf16 %v205, %v204
  %v209 = vpack.c.bf16 %v207, %v206
  %v210 = vld [vmem:[%s9] sm:$0xff]
  %v211 = vld [vmem:[%s9 + $0x8] sm:$0xff]
  %v212 = vld [vmem:[%s9 + $0x10] sm:$0xff]
  %v213 = vld [vmem:[%s9 + $0x18] sm:$0xff]
  %v214 = vpack.c.bf16 %v211, %v210
  %v215 = vpack.c.bf16 %v213, %v212
  %v216 = vld [vmem:[%s10] sm:$0x1]
  %v218 = vlaneseq
  %v219 = vshrl.u32 %v218, 7
  %v220 = vsub.s32 0, %v219
  %v221 = vrot.slane %v216, %v220
  %v224 = vsel %vm70, %v208, 0
  %v227 = vsel %vm70, %v209, 0
  %229 = vmatprep.subr.bf16.mxu0 0
  %230 = vmatpush1.bf16.msra.mxu0 0
  %231 = vmatprep.subr.bf16.mxu0 0
  %232 = vmatpush1.bf16.msra.mxu0 0
  %233 = vmatprep.subr.bf16.mxu0 0
  %234 = vmatpush1.bf16.msra.mxu0 0
  %235 = vmatprep.subr.bf16.mxu0 0
  %236 = vmatpush1.bf16.msra.mxu0 0
  %237 = vmatprep.subr.bf16.mxu0 0
  %238 = vmatpush1.bf16.msra.mxu0 0
  %239 = vmatprep.subr.bf16.mxu0 0
  %240 = vmatpush1.bf16.msra.mxu0 0
  %241 = vmatprep.subr.bf16.mxu0 0
  %242 = vmatpush1.bf16.msra.mxu0 %v215
  %243 = vmatprep.subr.bf16.mxu0 0
  %244 = vmatpush1.bf16.msra.mxu0 %v214
  %245 = vmatprep.subr.bf16.mxu0 0
  %246 = vmatpush2.bf16.msra.mxu0 0
  %247 = vmatprep.subr.bf16.mxu0 0
  %248 = vmatpush2.bf16.msra.mxu0 0
  %249 = vmatprep.subr.bf16.mxu0 0
  %250 = vmatpush2.bf16.msra.mxu0 0
  %251 = vmatprep.subr.bf16.mxu0 0
  %252 = vmatpush2.bf16.msra.mxu0 0
  %253 = vmatprep.subr.bf16.mxu0 0
  %254 = vmatpush2.bf16.msra.mxu0 0
  %255 = vmatprep.subr.bf16.mxu0 0
  %256 = vmatpush2.bf16.msra.mxu0 0
  %257 = vmatprep.subr.bf16.mxu0 0
  %258 = vmatpush2.bf16.msra.mxu0 0
  %259 = vmatprep.subr.bf16.mxu0 0
  %260 = vmatpush2.bf16.msra.mxu0 0
  %261 = vmatprep.mubr.bf16.mxu0 0
  %262 = vmatmul.mubr.bf16.gmra.mxu0 %v224
  %v263 = vpop.f32.mrf.mxu0
  %v264 = vadd.f32 %v221, %v263
  %v265 = vpop.f32.mrf.mxu0
  %v266 = vpop.f32.mrf.mxu0
  %v267 = vadd.f32 %v221, %v266
  %v268 = vpop.f32.mrf.mxu0
  %269 = vmatprep.mubr.bf16.mxu0 0
  %270 = vmatmul.mubr.bf16.gmra.mxu0 %v227
  %v271 = vpop.f32.mrf.mxu0
  %v272 = vadd.f32 %v221, %v271
  %v273 = vpop.f32.mrf.mxu0
  %v274 = vpop.f32.mrf.mxu0
  %v275 = vadd.f32 %v221, %v274
  %v276 = vpop.f32.mrf.mxu0
  %277 = vdwg.mxu0
  %v278 = vld [vmem:[%s4] sm:$0x3]
  %v279 = vpack.c.bf16 %v127, %v126
  %v280 = vpack.c.bf16 %v193, %v190
  %v281 = vpack.c.bf16 %v267, %v264
  %v282 = vlaneseq
  %v283 = vshrl.u32 %v282, 7
  %v284 = vsub.s32 0, %v283
  %v285 = vrot.slane %v278, %v284
  %vm286 = vcmask 64512
  %v288 = vsel %vm286, %v279, 0
  %v291 = vsel %vm286, %v280, 0
  %293 = vmatprep.subr.bf16.mxu0 0
  %294 = vmatpush1.bf16.xpose.msra.mxu0 0
  %295 = vmatprep.subr.bf16.mxu0 0
  %296 = vmatpush1.bf16.xpose.msra.mxu0 0
  %297 = vmatprep.subr.bf16.mxu0 0
  %298 = vmatpush1.bf16.xpose.msra.mxu0 0
  %299 = vmatprep.subr.bf16.mxu0 0
  %300 = vmatpush1.bf16.xpose.msra.mxu0 0
  %301 = vmatprep.subr.bf16.mxu0 0
  %302 = vmatpush1.bf16.xpose.msra.mxu0 0
  %303 = vmatprep.subr.bf16.mxu0 0
  %304 = vmatpush1.bf16.xpose.msra.mxu0 0
  %305 = vmatprep.subr.bf16.mxu0 0
  %306 = vmatpush1.bf16.xpose.msra.mxu0 0
  %307 = vmatprep.subr.bf16.mxu0 0
  %308 = vmatpush1.bf16.xpose.msra.mxu0 %v291
  %309 = vmatprep.subr.bf16.mxu0 0
  %310 = vmatpush2.bf16.xpose.msra.mxu0 0
  %311 = vmatprep.subr.bf16.mxu0 0
  %312 = vmatpush2.bf16.xpose.msra.mxu0 0
  %313 = vmatprep.subr.bf16.mxu0 0
  %314 = vmatpush2.bf16.xpose.msra.mxu0 0
  %315 = vmatprep.subr.bf16.mxu0 0
  %316 = vmatpush2.bf16.xpose.msra.mxu0 0
  %317 = vmatprep.subr.bf16.mxu0 0
  %318 = vmatpush2.bf16.xpose.msra.mxu0 0
  %319 = vmatprep.subr.bf16.mxu0 0
  %320 = vmatpush2.bf16.xpose.msra.mxu0 0
  %321 = vmatprep.subr.bf16.mxu0 0
  %322 = vmatpush2.bf16.xpose.msra.mxu0 0
  %323 = vmatprep.subr.bf16.mxu0 0
  %324 = vmatpush2.bf16.xpose.msra.mxu0 0
  %325 = vmatprep.mubr.bf16.mxu0 0
  %326 = vmatmul.mubr.bf16.gmra.mxu0 %v288
  %v327 = vpop.f32.mrf.mxu0
  %v328 = vadd.f32 %v285, %v327
  %v329 = vpop.f32.mrf.mxu0
  %v330 = vpop.f32.mrf.mxu0
  %v331 = vadd.f32 %v285, %v330
  %v332 = vpop.f32.mrf.mxu0
  %333 = vdwg.mxu0
  %vm334 = vcmask 130048
  %v335 = vsel %vm334, %v328, -inf
  %336 = vmax.xlane.f32.xlu0 %v335
  %v337 = vpop.xlane.xlu0 %336
  %v338 = vsel %vm334, %v331, -inf
  %339 = vmax.xlane.f32.xlu0 %v338
  %v340 = vpop.xlane.xlu0 %339
  %v341 = vsub.f32 %v328, %v337
  %v342 = vsub.f32 %v331, %v340
  %v343 = vmul.f32 %v341, 1.442695
  %v344 = vpow.pop %v343
  %v345 = vmul.f32 %v342, 1.442695
  %v346 = vpow.pop %v345
  %v347 = vsel %vm334, %v344, 0.0
  %348 = vadd.xlane.f32.xlu0 %v347
  %v349 = vpop.xlane.xlu0 %348
  %v350 = vsel %vm334, %v346, 0.0
  %351 = vadd.xlane.f32.xlu0 %v350
  %v352 = vpop.xlane.xlu0 %351
  %v353 = vrcp.pop %v349
  %v354 = vrcp.pop %v352
  %v355 = vmul.f32 %v344, %v353
  %v356 = vmul.f32 %v346, %v354
  %v357 = vpack.c.bf16 %v356, %v355
  %v359 = vsel %vm334, %v357, 0
  %361 = vmatprep.subr.bf16.mxu0 0
  %362 = vmatpush1.bf16.msra.mxu0 0
  %363 = vmatprep.subr.bf16.mxu0 0
  %364 = vmatpush1.bf16.msra.mxu0 0
  %365 = vmatprep.subr.bf16.mxu0 0
  %366 = vmatpush1.bf16.msra.mxu0 0
  %367 = vmatprep.subr.bf16.mxu0 0
  %368 = vmatpush1.bf16.msra.mxu0 0
  %369 = vmatprep.subr.bf16.mxu0 0
  %370 = vmatpush1.bf16.msra.mxu0 0
  %371 = vmatprep.subr.bf16.mxu0 0
  %372 = vmatpush1.bf16.msra.mxu0 0
  %373 = vmatprep.subr.bf16.mxu0 0
  %374 = vmatpush1.bf16.msra.mxu0 0
  %375 = vmatprep.subr.bf16.mxu0 0
  %376 = vmatpush1.bf16.msra.mxu0 %v281
  %377 = vmatprep.subr.bf16.mxu0 0
  %378 = vmatpush2.bf16.msra.mxu0 0
  %379 = vmatprep.subr.bf16.mxu0 0
  %380 = vmatpush2.bf16.msra.mxu0 0
  %381 = vmatprep.subr.bf16.mxu0 0
  %382 = vmatpush2.bf16.msra.mxu0 0
  %383 = vmatprep.subr.bf16.mxu0 0
  %384 = vmatpush2.bf16.msra.mxu0 0
  %385 = vmatprep.subr.bf16.mxu0 0
  %386 = vmatpush2.bf16.msra.mxu0 0
  %387 = vmatprep.subr.bf16.mxu0 0
  %388 = vmatpush2.bf16.msra.mxu0 0
  %389 = vmatprep.subr.bf16.mxu0 0
  %390 = vmatpush2.bf16.msra.mxu0 0
  %391 = vmatprep.subr.bf16.mxu0 0
  %392 = vmatpush2.bf16.msra.mxu0 0
  %393 = vmatprep.mubr.bf16.mxu0 0
  %394 = vmatmul.mubr.bf16.gmra.mxu0 %v359
  %v395 = vpop.f32.mrf.mxu0
  %v396 = vadd.f32 0.0, %v395
  %v397 = vpop.f32.mrf.mxu0
  %v398 = vpop.f32.mrf.mxu0
  %v399 = vadd.f32 0.0, %v398
  %v400 = vpop.f32.mrf.mxu0
  %401 = vdwg.mxu0
  %403 = vrot.lane.b32.xlu0 %v279, 120
  %v404 = vpop.permute.xlu0 %403
  %406 = vrot.lane.b32.xlu0 %v280, 120
  %v407 = vpop.permute.xlu0 %406
  %v409 = vsel %vm286, %v404, 0
  %v412 = vsel %vm286, %v407, 0
  %414 = vmatprep.subr.bf16.mxu0 0
  %415 = vmatpush1.bf16.xpose.msra.mxu0 0
  %416 = vmatprep.subr.bf16.mxu0 0
  %417 = vmatpush1.bf16.xpose.msra.mxu0 0
  %418 = vmatprep.subr.bf16.mxu0 0
  %419 = vmatpush1.bf16.xpose.msra.mxu0 0
  %420 = vmatprep.subr.bf16.mxu0 0
  %421 = vmatpush1.bf16.xpose.msra.mxu0 0
  %422 = vmatprep.subr.bf16.mxu0 0
  %423 = vmatpush1.bf16.xpose.msra.mxu0 0
  %424 = vmatprep.subr.bf16.mxu0 0
  %425 = vmatpush1.bf16.xpose.msra.mxu0 0
  %426 = vmatprep.subr.bf16.mxu0 0
  %427 = vmatpush1.bf16.xpose.msra.mxu0 0
  %428 = vmatprep.subr.bf16.mxu0 0
  %429 = vmatpush1.bf16.xpose.msra.mxu0 %v412
  %430 = vmatprep.subr.bf16.mxu0 0
  %431 = vmatpush2.bf16.xpose.msra.mxu0 0
  %432 = vmatprep.subr.bf16.mxu0 0
  %433 = vmatpush2.bf16.xpose.msra.mxu0 0
  %434 = vmatprep.subr.bf16.mxu0 0
  %435 = vmatpush2.bf16.xpose.msra.mxu0 0
  %436 = vmatprep.subr.bf16.mxu0 0
  %437 = vmatpush2.bf16.xpose.msra.mxu0 0
  %438 = vmatprep.subr.bf16.mxu0 0
  %439 = vmatpush2.bf16.xpose.msra.mxu0 0
  %440 = vmatprep.subr.bf16.mxu0 0
  %441 = vmatpush2.bf16.xpose.msra.mxu0 0
  %442 = vmatprep.subr.bf16.mxu0 0
  %443 = vmatpush2.bf16.xpose.msra.mxu0 0
  %444 = vmatprep.subr.bf16.mxu0 0
  %445 = vmatpush2.bf16.xpose.msra.mxu0 0
  %446 = vmatprep.mubr.bf16.mxu0 0
  %447 = vmatmul.mubr.bf16.gmra.mxu0 %v409
  %v448 = vpop.f32.mrf.mxu0
  %v449 = vadd.f32 %v285, %v448
  %v450 = vpop.f32.mrf.mxu0
  %v451 = vpop.f32.mrf.mxu0
  %v452 = vadd.f32 %v285, %v451
  %v453 = vpop.f32.mrf.mxu0
  %454 = vdwg.mxu0
  %v455 = vsel %vm334, %v449, -inf
  %456 = vmax.xlane.f32.xlu0 %v455
  %v457 = vpop.xlane.xlu0 %456
  %v458 = vsel %vm334, %v452, -inf
  %459 = vmax.xlane.f32.xlu0 %v458
  %v460 = vpop.xlane.xlu0 %459
  %v461 = vsub.f32 %v449, %v457
  %v462 = vsub.f32 %v452, %v460
  %v463 = vmul.f32 %v461, 1.442695
  %v464 = vpow.pop %v463
  %v465 = vmul.f32 %v462, 1.442695
  %v466 = vpow.pop %v465
  %v467 = vsel %vm334, %v464, 0.0
  %468 = vadd.xlane.f32.xlu0 %v467
  %v469 = vpop.xlane.xlu0 %468
  %v470 = vsel %vm334, %v466, 0.0
  %471 = vadd.xlane.f32.xlu0 %v470
  %v472 = vpop.xlane.xlu0 %471
  %v473 = vrcp.pop %v469
  %v474 = vrcp.pop %v472
  %v475 = vmul.f32 %v464, %v473
  %v476 = vmul.f32 %v466, %v474
  %v477 = vpack.c.bf16 %v476, %v475
  %479 = vrot.lane.b32.xlu0 %v281, 120
  %v480 = vpop.permute.xlu0 %479
  %v483 = vsel %vm334, %v477, 0
  %485 = vmatprep.subr.bf16.mxu0 0
  %486 = vmatpush1.bf16.msra.mxu0 0
  %487 = vmatprep.subr.bf16.mxu0 0
  %488 = vmatpush1.bf16.msra.mxu0 0
  %489 = vmatprep.subr.bf16.mxu0 0
  %490 = vmatpush1.bf16.msra.mxu0 0
  %491 = vmatprep.subr.bf16.mxu0 0
  %492 = vmatpush1.bf16.msra.mxu0 0
  %493 = vmatprep.subr.bf16.mxu0 0
  %494 = vmatpush1.bf16.msra.mxu0 0
  %495 = vmatprep.subr.bf16.mxu0 0
  %496 = vmatpush1.bf16.msra.mxu0 0
  %497 = vmatprep.subr.bf16.mxu0 0
  %498 = vmatpush1.bf16.msra.mxu0 0
  %499 = vmatprep.subr.bf16.mxu0 0
  %500 = vmatpush1.bf16.msra.mxu0 %v480
  %501 = vmatprep.subr.bf16.mxu0 0
  %502 = vmatpush2.bf16.msra.mxu0 0
  %503 = vmatprep.subr.bf16.mxu0 0
  %504 = vmatpush2.bf16.msra.mxu0 0
  %505 = vmatprep.subr.bf16.mxu0 0
  %506 = vmatpush2.bf16.msra.mxu0 0
  %507 = vmatprep.subr.bf16.mxu0 0
  %508 = vmatpush2.bf16.msra.mxu0 0
  %509 = vmatprep.subr.bf16.mxu0 0
  %510 = vmatpush2.bf16.msra.mxu0 0
  %511 = vmatprep.subr.bf16.mxu0 0
  %512 = vmatpush2.bf16.msra.mxu0 0
  %513 = vmatprep.subr.bf16.mxu0 0
  %514 = vmatpush2.bf16.msra.mxu0 0
  %515 = vmatprep.subr.bf16.mxu0 0
  %516 = vmatpush2.bf16.msra.mxu0 0
  %517 = vmatprep.mubr.bf16.mxu0 0
  %518 = vmatmul.mubr.bf16.gmra.mxu0 %v483
  %v519 = vpop.f32.mrf.mxu0
  %v520 = vadd.f32 0.0, %v519
  %v521 = vpop.f32.mrf.mxu0
  %v522 = vpop.f32.mrf.mxu0
  %v523 = vadd.f32 0.0, %v522
  %v524 = vpop.f32.mrf.mxu0
  %525 = vdwg.mxu0
  %526 = vrot.lane.b32.xlu0 %v279, 112
  %v527 = vpop.permute.xlu0 %526
  %528 = vrot.lane.b32.xlu0 %v280, 112
  %v529 = vpop.permute.xlu0 %528
  %v531 = vsel %vm286, %v527, 0
  %v534 = vsel %vm286, %v529, 0
  %536 = vmatprep.subr.bf16.mxu0 0
  %537 = vmatpush1.bf16.xpose.msra.mxu0 0
  %538 = vmatprep.subr.bf16.mxu0 0
  %539 = vmatpush1.bf16.xpose.msra.mxu0 0
  %540 = vmatprep.subr.bf16.mxu0 0
  %541 = vmatpush1.bf16.xpose.msra.mxu0 0
  %542 = vmatprep.subr.bf16.mxu0 0
  %543 = vmatpush1.bf16.xpose.msra.mxu0 0
  %544 = vmatprep.subr.bf16.mxu0 0
  %545 = vmatpush1.bf16.xpose.msra.mxu0 0
  %546 = vmatprep.subr.bf16.mxu0 0
  %547 = vmatpush1.bf16.xpose.msra.mxu0 0
  %548 = vmatprep.subr.bf16.mxu0 0
  %549 = vmatpush1.bf16.xpose.msra.mxu0 0
  %550 = vmatprep.subr.bf16.mxu0 0
  %551 = vmatpush1.bf16.xpose.msra.mxu0 %v534
  %552 = vmatprep.subr.bf16.mxu0 0
  %553 = vmatpush2.bf16.xpose.msra.mxu0 0
  %554 = vmatprep.subr.bf16.mxu0 0
  %555 = vmatpush2.bf16.xpose.msra.mxu0 0
  %556 = vmatprep.subr.bf16.mxu0 0
  %557 = vmatpush2.bf16.xpose.msra.mxu0 0
  %558 = vmatprep.subr.bf16.mxu0 0
  %559 = vmatpush2.bf16.xpose.msra.mxu0 0
  %560 = vmatprep.subr.bf16.mxu0 0
  %561 = vmatpush2.bf16.xpose.msra.mxu0 0
  %562 = vmatprep.subr.bf16.mxu0 0
  %563 = vmatpush2.bf16.xpose.msra.mxu0 0
  %564 = vmatprep.subr.bf16.mxu0 0
  %565 = vmatpush2.bf16.xpose.msra.mxu0 0
  %566 = vmatprep.subr.bf16.mxu0 0
  %567 = vmatpush2.bf16.xpose.msra.mxu0 0
  %568 = vmatprep.mubr.bf16.mxu0 0
  %569 = vmatmul.mubr.bf16.gmra.mxu0 %v531
  %v570 = vpop.f32.mrf.mxu0
  %v571 = vadd.f32 %v285, %v570
  %v572 = vpop.f32.mrf.mxu0
  %v573 = vpop.f32.mrf.mxu0
  %v574 = vadd.f32 %v285, %v573
  %v575 = vpop.f32.mrf.mxu0
  %576 = vdwg.mxu0
  %v577 = vsel %vm334, %v571, -inf
  %578 = vmax.xlane.f32.xlu0 %v577
  %v579 = vpop.xlane.xlu0 %578
  %v580 = vsel %vm334, %v574, -inf
  %581 = vmax.xlane.f32.xlu0 %v580
  %v582 = vpop.xlane.xlu0 %581
  %v583 = vsub.f32 %v571, %v579
  %v584 = vsub.f32 %v574, %v582
  %v585 = vmul.f32 %v583, 1.442695
  %v586 = vpow.pop %v585
  %v587 = vmul.f32 %v584, 1.442695
  %v588 = vpow.pop %v587
  %v589 = vsel %vm334, %v586, 0.0
  %590 = vadd.xlane.f32.xlu0 %v589
  %v591 = vpop.xlane.xlu0 %590
  %v592 = vsel %vm334, %v588, 0.0
  %593 = vadd.xlane.f32.xlu0 %v592
  %v594 = vpop.xlane.xlu0 %593
  %v595 = vrcp.pop %v591
  %v596 = vrcp.pop %v594
  %v597 = vmul.f32 %v586, %v595
  %v598 = vmul.f32 %v588, %v596
  %v599 = vpack.c.bf16 %v598, %v597
  %600 = vrot.lane.b32.xlu0 %v281, 112
  %v601 = vpop.permute.xlu0 %600
  %v604 = vsel %vm334, %v599, 0
  %606 = vmatprep.subr.bf16.mxu0 0
  %607 = vmatpush1.bf16.msra.mxu0 0
  %608 = vmatprep.subr.bf16.mxu0 0
  %609 = vmatpush1.bf16.msra.mxu0 0
  %610 = vmatprep.subr.bf16.mxu0 0
  %611 = vmatpush1.bf16.msra.mxu0 0
  %612 = vmatprep.subr.bf16.mxu0 0
  %613 = vmatpush1.bf16.msra.mxu0 0
  %614 = vmatprep.subr.bf16.mxu0 0
  %615 = vmatpush1.bf16.msra.mxu0 0
  %616 = vmatprep.subr.bf16.mxu0 0
  %617 = vmatpush1.bf16.msra.mxu0 0
  %618 = vmatprep.subr.bf16.mxu0 0
  %619 = vmatpush1.bf16.msra.mxu0 0
  %620 = vmatprep.subr.bf16.mxu0 0
  %621 = vmatpush1.bf16.msra.mxu0 %v601
  %622 = vmatprep.subr.bf16.mxu0 0
  %623 = vmatpush2.bf16.msra.mxu0 0
  %624 = vmatprep.subr.bf16.mxu0 0
  %625 = vmatpush2.bf16.msra.mxu0 0
  %626 = vmatprep.subr.bf16.mxu0 0
  %627 = vmatpush2.bf16.msra.mxu0 0
  %628 = vmatprep.subr.bf16.mxu0 0
  %629 = vmatpush2.bf16.msra.mxu0 0
  %630 = vmatprep.subr.bf16.mxu0 0
  %631 = vmatpush2.bf16.msra.mxu0 0
  %632 = vmatprep.subr.bf16.mxu0 0
  %633 = vmatpush2.bf16.msra.mxu0 0
  %634 = vmatprep.subr.bf16.mxu0 0
  %635 = vmatpush2.bf16.msra.mxu0 0
  %636 = vmatprep.subr.bf16.mxu0 0
  %637 = vmatpush2.bf16.msra.mxu0 0
  %638 = vmatprep.mubr.bf16.mxu0 0
  %639 = vmatmul.mubr.bf16.gmra.mxu0 %v604
  %v640 = vpop.f32.mrf.mxu0
  %v641 = vadd.f32 0.0, %v640
  %v642 = vpop.f32.mrf.mxu0
  %v643 = vpop.f32.mrf.mxu0
  %v644 = vadd.f32 0.0, %v643
  %v645 = vpop.f32.mrf.mxu0
  %646 = vdwg.mxu0
  %647 = vrot.lane.b32.xlu0 %v279, 104
  %v648 = vpop.permute.xlu0 %647
  %649 = vrot.lane.b32.xlu0 %v280, 104
  %v650 = vpop.permute.xlu0 %649
  %v652 = vsel %vm286, %v648, 0
  %v655 = vsel %vm286, %v650, 0
  %657 = vmatprep.subr.bf16.mxu0 0
  %658 = vmatpush1.bf16.xpose.msra.mxu0 0
  %659 = vmatprep.subr.bf16.mxu0 0
  %660 = vmatpush1.bf16.xpose.msra.mxu0 0
  %661 = vmatprep.subr.bf16.mxu0 0
  %662 = vmatpush1.bf16.xpose.msra.mxu0 0
  %663 = vmatprep.subr.bf16.mxu0 0
  %664 = vmatpush1.bf16.xpose.msra.mxu0 0
  %665 = vmatprep.subr.bf16.mxu0 0
  %666 = vmatpush1.bf16.xpose.msra.mxu0 0
  %667 = vmatprep.subr.bf16.mxu0 0
  %668 = vmatpush1.bf16.xpose.msra.mxu0 0
  %669 = vmatprep.subr.bf16.mxu0 0
  %670 = vmatpush1.bf16.xpose.msra.mxu0 0
  %671 = vmatprep.subr.bf16.mxu0 0
  %672 = vmatpush1.bf16.xpose.msra.mxu0 %v655
  %673 = vmatprep.subr.bf16.mxu0 0
  %674 = vmatpush2.bf16.xpose.msra.mxu0 0
  %675 = vmatprep.subr.bf16.mxu0 0
  %676 = vmatpush2.bf16.xpose.msra.mxu0 0
  %677 = vmatprep.subr.bf16.mxu0 0
  %678 = vmatpush2.bf16.xpose.msra.mxu0 0
  %679 = vmatprep.subr.bf16.mxu0 0
  %680 = vmatpush2.bf16.xpose.msra.mxu0 0
  %681 = vmatprep.subr.bf16.mxu0 0
  %682 = vmatpush2.bf16.xpose.msra.mxu0 0
  %683 = vmatprep.subr.bf16.mxu0 0
  %684 = vmatpush2.bf16.xpose.msra.mxu0 0
  %685 = vmatprep.subr.bf16.mxu0 0
  %686 = vmatpush2.bf16.xpose.msra.mxu0 0
  %687 = vmatprep.subr.bf16.mxu0 0
  %688 = vmatpush2.bf16.xpose.msra.mxu0 0
  %689 = vmatprep.mubr.bf16.mxu0 0
  %690 = vmatmul.mubr.bf16.gmra.mxu0 %v652
  %v691 = vpop.f32.mrf.mxu0
  %v692 = vadd.f32 %v285, %v691
  %v693 = vpop.f32.mrf.mxu0
  %v694 = vpop.f32.mrf.mxu0
  %v695 = vadd.f32 %v285, %v694
  %v696 = vpop.f32.mrf.mxu0
  %697 = vdwg.mxu0
  %v698 = vsel %vm334, %v692, -inf
  %699 = vmax.xlane.f32.xlu0 %v698
  %v700 = vpop.xlane.xlu0 %699
  %v701 = vsel %vm334, %v695, -inf
  %702 = vmax.xlane.f32.xlu0 %v701
  %v703 = vpop.xlane.xlu0 %702
  %v704 = vsub.f32 %v692, %v700
  %v705 = vsub.f32 %v695, %v703
  %v706 = vmul.f32 %v704, 1.442695
  %v707 = vpow.pop %v706
  %v708 = vmul.f32 %v705, 1.442695
  %v709 = vpow.pop %v708
  %v710 = vsel %vm334, %v707, 0.0
  %711 = vadd.xlane.f32.xlu0 %v710
  %v712 = vpop.xlane.xlu0 %711
  %v713 = vsel %vm334, %v709, 0.0
  %714 = vadd.xlane.f32.xlu0 %v713
  %v715 = vpop.xlane.xlu0 %714
  %v716 = vrcp.pop %v712
  %v717 = vrcp.pop %v715
  %v718 = vmul.f32 %v707, %v716
  %v719 = vmul.f32 %v709, %v717
  %v720 = vpack.c.bf16 %v719, %v718
  %721 = vrot.lane.b32.xlu0 %v281, 104
  %v722 = vpop.permute.xlu0 %721
  %v725 = vsel %vm334, %v720, 0
  %727 = vmatprep.subr.bf16.mxu0 0
  %728 = vmatpush1.bf16.msra.mxu0 0
  %729 = vmatprep.subr.bf16.mxu0 0
  %730 = vmatpush1.bf16.msra.mxu0 0
  %731 = vmatprep.subr.bf16.mxu0 0
  %732 = vmatpush1.bf16.msra.mxu0 0
  %733 = vmatprep.subr.bf16.mxu0 0
  %734 = vmatpush1.bf16.msra.mxu0 0
  %735 = vmatprep.subr.bf16.mxu0 0
  %736 = vmatpush1.bf16.msra.mxu0 0
  %737 = vmatprep.subr.bf16.mxu0 0
  %738 = vmatpush1.bf16.msra.mxu0 0
  %739 = vmatprep.subr.bf16.mxu0 0
  %740 = vmatpush1.bf16.msra.mxu0 0
  %741 = vmatprep.subr.bf16.mxu0 0
  %742 = vmatpush1.bf16.msra.mxu0 %v722
  %743 = vmatprep.subr.bf16.mxu0 0
  %744 = vmatpush2.bf16.msra.mxu0 0
  %745 = vmatprep.subr.bf16.mxu0 0
  %746 = vmatpush2.bf16.msra.mxu0 0
  %747 = vmatprep.subr.bf16.mxu0 0
  %748 = vmatpush2.bf16.msra.mxu0 0
  %749 = vmatprep.subr.bf16.mxu0 0
  %750 = vmatpush2.bf16.msra.mxu0 0
  %751 = vmatprep.subr.bf16.mxu0 0
  %752 = vmatpush2.bf16.msra.mxu0 0
  %753 = vmatprep.subr.bf16.mxu0 0
  %754 = vmatpush2.bf16.msra.mxu0 0
  %755 = vmatprep.subr.bf16.mxu0 0
  %756 = vmatpush2.bf16.msra.mxu0 0
  %757 = vmatprep.subr.bf16.mxu0 0
  %758 = vmatpush2.bf16.msra.mxu0 0
  %759 = vmatprep.mubr.bf16.mxu0 0
  %760 = vmatmul.mubr.bf16.gmra.mxu0 %v725
  %v761 = vpop.f32.mrf.mxu0
  %v762 = vadd.f32 0.0, %v761
  %v763 = vpop.f32.mrf.mxu0
  %v764 = vpop.f32.mrf.mxu0
  %v765 = vadd.f32 0.0, %v764
  %v766 = vpop.f32.mrf.mxu0
  %767 = vdwg.mxu0
  %770 = vrot.lane.b32.xlu0 %v520, 8
  %v771 = vpop.permute.xlu0 %770
  %772 = vrot.lane.b32.xlu0 %v523, 8
  %v773 = vpop.permute.xlu0 %772
  %778 = vrot.lane.b32.xlu0 %v641, 16
  %v779 = vpop.permute.xlu0 %778
  %780 = vrot.lane.b32.xlu0 %v644, 16
  %v781 = vpop.permute.xlu0 %780
  %786 = vrot.lane.b32.xlu0 %v762, 24
  %v787 = vpop.permute.xlu0 %786
  %788 = vrot.lane.b32.xlu0 %v765, 24
  %v789 = vpop.permute.xlu0 %788
  %v792 = vsel %vm286, %v396, %v771
  %v793 = vsel %vm286, %v399, %v773
  %v794 = vsel %vm334, %v792, %v779
  %v795 = vsel %vm334, %v793, %v781
  %vm796 = vcmask 195584
  %v797 = vsel %vm796, %v794, %v787
  %v798 = vsel %vm796, %v795, %v789
  %v799 = vpack.c.bf16 %v129, %v128
  %v800 = vpack.c.bf16 %v201, %v198
  %v801 = vpack.c.bf16 %v275, %v272
  %v802 = vlaneseq
  %v803 = vshrl.u32 %v802, 7
  %v804 = vsub.s32 1, %v803
  %v805 = vrot.slane %v278, %v804
  %v807 = vsel %vm286, %v799, 0
  %v810 = vsel %vm286, %v800, 0
  %812 = vmatprep.subr.bf16.mxu0 0
  %813 = vmatpush1.bf16.xpose.msra.mxu0 0
  %814 = vmatprep.subr.bf16.mxu0 0
  %815 = vmatpush1.bf16.xpose.msra.mxu0 0
  %816 = vmatprep.subr.bf16.mxu0 0
  %817 = vmatpush1.bf16.xpose.msra.mxu0 0
  %818 = vmatprep.subr.bf16.mxu0 0
  %819 = vmatpush1.bf16.xpose.msra.mxu0 0
  %820 = vmatprep.subr.bf16.mxu0 0
  %821 = vmatpush1.bf16.xpose.msra.mxu0 0
  %822 = vmatprep.subr.bf16.mxu0 0
  %823 = vmatpush1.bf16.xpose.msra.mxu0 0
  %824 = vmatprep.subr.bf16.mxu0 0
  %825 = vmatpush1.bf16.xpose.msra.mxu0 0
  %826 = vmatprep.subr.bf16.mxu0 0
  %827 = vmatpush1.bf16.xpose.msra.mxu0 %v810
  %828 = vmatprep.subr.bf16.mxu0 0
  %829 = vmatpush2.bf16.xpose.msra.mxu0 0
  %830 = vmatprep.subr.bf16.mxu0 0
  %831 = vmatpush2.bf16.xpose.msra.mxu0 0
  %832 = vmatprep.subr.bf16.mxu0 0
  %833 = vmatpush2.bf16.xpose.msra.mxu0 0
  %834 = vmatprep.subr.bf16.mxu0 0
  %835 = vmatpush2.bf16.xpose.msra.mxu0 0
  %836 = vmatprep.subr.bf16.mxu0 0
  %837 = vmatpush2.bf16.xpose.msra.mxu0 0
  %838 = vmatprep.subr.bf16.mxu0 0
  %839 = vmatpush2.bf16.xpose.msra.mxu0 0
  %840 = vmatprep.subr.bf16.mxu0 0
  %841 = vmatpush2.bf16.xpose.msra.mxu0 0
  %842 = vmatprep.subr.bf16.mxu0 0
  %843 = vmatpush2.bf16.xpose.msra.mxu0 0
  %844 = vmatprep.mubr.bf16.mxu0 0
  %845 = vmatmul.mubr.bf16.gmra.mxu0 %v807
  %v846 = vpop.f32.mrf.mxu0
  %v847 = vadd.f32 %v805, %v846
  %v848 = vpop.f32.mrf.mxu0
  %v849 = vpop.f32.mrf.mxu0
  %v850 = vadd.f32 %v805, %v849
  %v851 = vpop.f32.mrf.mxu0
  %852 = vdwg.mxu0
  %v853 = vsel %vm334, %v847, -inf
  %854 = vmax.xlane.f32.xlu0 %v853
  %v855 = vpop.xlane.xlu0 %854
  %v856 = vsel %vm334, %v850, -inf
  %857 = vmax.xlane.f32.xlu0 %v856
  %v858 = vpop.xlane.xlu0 %857
  %v859 = vsub.f32 %v847, %v855
  %v860 = vsub.f32 %v850, %v858
  %v861 = vmul.f32 %v859, 1.442695
  %v862 = vpow.pop %v861
  %v863 = vmul.f32 %v860, 1.442695
  %v864 = vpow.pop %v863
  %v865 = vsel %vm334, %v862, 0.0
  %866 = vadd.xlane.f32.xlu0 %v865
  %v867 = vpop.xlane.xlu0 %866
  %v868 = vsel %vm334, %v864, 0.0
  %869 = vadd.xlane.f32.xlu0 %v868
  %v870 = vpop.xlane.xlu0 %869
  %v871 = vrcp.pop %v867
  %v872 = vrcp.pop %v870
  %v873 = vmul.f32 %v862, %v871
  %v874 = vmul.f32 %v864, %v872
  %v875 = vpack.c.bf16 %v874, %v873
  %v877 = vsel %vm334, %v875, 0
  %879 = vmatprep.subr.bf16.mxu0 0
  %880 = vmatpush1.bf16.msra.mxu0 0
  %881 = vmatprep.subr.bf16.mxu0 0
  %882 = vmatpush1.bf16.msra.mxu0 0
  %883 = vmatprep.subr.bf16.mxu0 0
  %884 = vmatpush1.bf16.msra.mxu0 0
  %885 = vmatprep.subr.bf16.mxu0 0
  %886 = vmatpush1.bf16.msra.mxu0 0
  %887 = vmatprep.subr.bf16.mxu0 0
  %888 = vmatpush1.bf16.msra.mxu0 0
  %889 = vmatprep.subr.bf16.mxu0 0
  %890 = vmatpush1.bf16.msra.mxu0 0
  %891 = vmatprep.subr.bf16.mxu0 0
  %892 = vmatpush1.bf16.msra.mxu0 0
  %893 = vmatprep.subr.bf16.mxu0 0
  %894 = vmatpush1.bf16.msra.mxu0 %v801
  %895 = vmatprep.subr.bf16.mxu0 0
  %896 = vmatpush2.bf16.msra.mxu0 0
  %897 = vmatprep.subr.bf16.mxu0 0
  %898 = vmatpush2.bf16.msra.mxu0 0
  %899 = vmatprep.subr.bf16.mxu0 0
  %900 = vmatpush2.bf16.msra.mxu0 0
  %901 = vmatprep.subr.bf16.mxu0 0
  %902 = vmatpush2.bf16.msra.mxu0 0
  %903 = vmatprep.subr.bf16.mxu0 0
  %904 = vmatpush2.bf16.msra.mxu0 0
  %905 = vmatprep.subr.bf16.mxu0 0
  %906 = vmatpush2.bf16.msra.mxu0 0
  %907 = vmatprep.subr.bf16.mxu0 0
  %908 = vmatpush2.bf16.msra.mxu0 0
  %909 = vmatprep.subr.bf16.mxu0 0
  %910 = vmatpush2.bf16.msra.mxu0 0
  %911 = vmatprep.mubr.bf16.mxu0 0
  %912 = vmatmul.mubr.bf16.gmra.mxu0 %v877
  %v913 = vpop.f32.mrf.mxu0
  %v914 = vadd.f32 0.0, %v913
  %v915 = vpop.f32.mrf.mxu0
  %v916 = vpop.f32.mrf.mxu0
  %v917 = vadd.f32 0.0, %v916
  %v918 = vpop.f32.mrf.mxu0
  %919 = vdwg.mxu0
  %921 = vrot.lane.b32.xlu0 %v799, 120
  %v922 = vpop.permute.xlu0 %921
  %924 = vrot.lane.b32.xlu0 %v800, 120
  %v925 = vpop.permute.xlu0 %924
  %v927 = vsel %vm286, %v922, 0
  %v930 = vsel %vm286, %v925, 0
  %932 = vmatprep.subr.bf16.mxu0 0
  %933 = vmatpush1.bf16.xpose.msra.mxu0 0
  %934 = vmatprep.subr.bf16.mxu0 0
  %935 = vmatpush1.bf16.xpose.msra.mxu0 0
  %936 = vmatprep.subr.bf16.mxu0 0
  %937 = vmatpush1.bf16.xpose.msra.mxu0 0
  %938 = vmatprep.subr.bf16.mxu0 0
  %939 = vmatpush1.bf16.xpose.msra.mxu0 0
  %940 = vmatprep.subr.bf16.mxu0 0
  %941 = vmatpush1.bf16.xpose.msra.mxu0 0
  %942 = vmatprep.subr.bf16.mxu0 0
  %943 = vmatpush1.bf16.xpose.msra.mxu0 0
  %944 = vmatprep.subr.bf16.mxu0 0
  %945 = vmatpush1.bf16.xpose.msra.mxu0 0
  %946 = vmatprep.subr.bf16.mxu0 0
  %947 = vmatpush1.bf16.xpose.msra.mxu0 %v930
  %948 = vmatprep.subr.bf16.mxu0 0
  %949 = vmatpush2.bf16.xpose.msra.mxu0 0
  %950 = vmatprep.subr.bf16.mxu0 0
  %951 = vmatpush2.bf16.xpose.msra.mxu0 0
  %952 = vmatprep.subr.bf16.mxu0 0
  %953 = vmatpush2.bf16.xpose.msra.mxu0 0
  %954 = vmatprep.subr.bf16.mxu0 0
  %955 = vmatpush2.bf16.xpose.msra.mxu0 0
  %956 = vmatprep.subr.bf16.mxu0 0
  %957 = vmatpush2.bf16.xpose.msra.mxu0 0
  %958 = vmatprep.subr.bf16.mxu0 0
  %959 = vmatpush2.bf16.xpose.msra.mxu0 0
  %960 = vmatprep.subr.bf16.mxu0 0
  %961 = vmatpush2.bf16.xpose.msra.mxu0 0
  %962 = vmatprep.subr.bf16.mxu0 0
  %963 = vmatpush2.bf16.xpose.msra.mxu0 0
  %964 = vmatprep.mubr.bf16.mxu0 0
  %965 = vmatmul.mubr.bf16.gmra.mxu0 %v927
  %v966 = vpop.f32.mrf.mxu0
  %v967 = vadd.f32 %v805, %v966
  %v968 = vpop.f32.mrf.mxu0
  %v969 = vpop.f32.mrf.mxu0
  %v970 = vadd.f32 %v805, %v969
  %v971 = vpop.f32.mrf.mxu0
  %972 = vdwg.mxu0
  %v973 = vsel %vm334, %v967, -inf
  %974 = vmax.xlane.f32.xlu0 %v973
  %v975 = vpop.xlane.xlu0 %974
  %v976 = vsel %vm334, %v970, -inf
  %977 = vmax.xlane.f32.xlu0 %v976
  %v978 = vpop.xlane.xlu0 %977
  %v979 = vsub.f32 %v967, %v975
  %v980 = vsub.f32 %v970, %v978
  %v981 = vmul.f32 %v979, 1.442695
  %v982 = vpow.pop %v981
  %v983 = vmul.f32 %v980, 1.442695
  %v984 = vpow.pop %v983
  %v985 = vsel %vm334, %v982, 0.0
  %986 = vadd.xlane.f32.xlu0 %v985
  %v987 = vpop.xlane.xlu0 %986
  %v988 = vsel %vm334, %v984, 0.0
  %989 = vadd.xlane.f32.xlu0 %v988
  %v990 = vpop.xlane.xlu0 %989
  %v991 = vrcp.pop %v987
  %v992 = vrcp.pop %v990
  %v993 = vmul.f32 %v982, %v991
  %v994 = vmul.f32 %v984, %v992
  %v995 = vpack.c.bf16 %v994, %v993
  %997 = vrot.lane.b32.xlu0 %v801, 120
  %v998 = vpop.permute.xlu0 %997
  %v1001 = vsel %vm334, %v995, 0
  %1003 = vmatprep.subr.bf16.mxu0 0
  %1004 = vmatpush1.bf16.msra.mxu0 0
  %1005 = vmatprep.subr.bf16.mxu0 0
  %1006 = vmatpush1.bf16.msra.mxu0 0
  %1007 = vmatprep.subr.bf16.mxu0 0
  %1008 = vmatpush1.bf16.msra.mxu0 0
  %1009 = vmatprep.subr.bf16.mxu0 0
  %1010 = vmatpush1.bf16.msra.mxu0 0
  %1011 = vmatprep.subr.bf16.mxu0 0
  %1012 = vmatpush1.bf16.msra.mxu0 0
  %1013 = vmatprep.subr.bf16.mxu0 0
  %1014 = vmatpush1.bf16.msra.mxu0 0
  %1015 = vmatprep.subr.bf16.mxu0 0
  %1016 = vmatpush1.bf16.msra.mxu0 0
  %1017 = vmatprep.subr.bf16.mxu0 0
  %1018 = vmatpush1.bf16.msra.mxu0 %v998
  %1019 = vmatprep.subr.bf16.mxu0 0
  %1020 = vmatpush2.bf16.msra.mxu0 0
  %1021 = vmatprep.subr.bf16.mxu0 0
  %1022 = vmatpush2.bf16.msra.mxu0 0
  %1023 = vmatprep.subr.bf16.mxu0 0
  %1024 = vmatpush2.bf16.msra.mxu0 0
  %1025 = vmatprep.subr.bf16.mxu0 0
  %1026 = vmatpush2.bf16.msra.mxu0 0
  %1027 = vmatprep.subr.bf16.mxu0 0
  %1028 = vmatpush2.bf16.msra.mxu0 0
  %1029 = vmatprep.subr.bf16.mxu0 0
  %1030 = vmatpush2.bf16.msra.mxu0 0
  %1031 = vmatprep.subr.bf16.mxu0 0
  %1032 = vmatpush2.bf16.msra.mxu0 0
  %1033 = vmatprep.subr.bf16.mxu0 0
  %1034 = vmatpush2.bf16.msra.mxu0 0
  %1035 = vmatprep.mubr.bf16.mxu0 0
  %1036 = vmatmul.mubr.bf16.gmra.mxu0 %v1001
  %v1037 = vpop.f32.mrf.mxu0
  %v1038 = vadd.f32 0.0, %v1037
  %v1039 = vpop.f32.mrf.mxu0
  %v1040 = vpop.f32.mrf.mxu0
  %v1041 = vadd.f32 0.0, %v1040
  %v1042 = vpop.f32.mrf.mxu0
  %1043 = vdwg.mxu0
  %1044 = vrot.lane.b32.xlu0 %v799, 112
  %v1045 = vpop.permute.xlu0 %1044
  %1046 = vrot.lane.b32.xlu0 %v800, 112
  %v1047 = vpop.permute.xlu0 %1046
  %v1049 = vsel %vm286, %v1045, 0
  %v1052 = vsel %vm286, %v1047, 0
  %1054 = vmatprep.subr.bf16.mxu0 0
  %1055 = vmatpush1.bf16.xpose.msra.mxu0 0
  %1056 = vmatprep.subr.bf16.mxu0 0
  %1057 = vmatpush1.bf16.xpose.msra.mxu0 0
  %1058 = vmatprep.subr.bf16.mxu0 0
  %1059 = vmatpush1.bf16.xpose.msra.mxu0 0
  %1060 = vmatprep.subr.bf16.mxu0 0
  %1061 = vmatpush1.bf16.xpose.msra.mxu0 0
  %1062 = vmatprep.subr.bf16.mxu0 0
  %1063 = vmatpush1.bf16.xpose.msra.mxu0 0
  %1064 = vmatprep.subr.bf16.mxu0 0
  %1065 = vmatpush1.bf16.xpose.msra.mxu0 0
  %1066 = vmatprep.subr.bf16.mxu0 0
  %1067 = vmatpush1.bf16.xpose.msra.mxu0 0
  %1068 = vmatprep.subr.bf16.mxu0 0
  %1069 = vmatpush1.bf16.xpose.msra.mxu0 %v1052
  %1070 = vmatprep.subr.bf16.mxu0 0
  %1071 = vmatpush2.bf16.xpose.msra.mxu0 0
  %1072 = vmatprep.subr.bf16.mxu0 0
  %1073 = vmatpush2.bf16.xpose.msra.mxu0 0
  %1074 = vmatprep.subr.bf16.mxu0 0
  %1075 = vmatpush2.bf16.xpose.msra.mxu0 0
  %1076 = vmatprep.subr.bf16.mxu0 0
  %1077 = vmatpush2.bf16.xpose.msra.mxu0 0
  %1078 = vmatprep.subr.bf16.mxu0 0
  %1079 = vmatpush2.bf16.xpose.msra.mxu0 0
  %1080 = vmatprep.subr.bf16.mxu0 0
  %1081 = vmatpush2.bf16.xpose.msra.mxu0 0
  %1082 = vmatprep.subr.bf16.mxu0 0
  %1083 = vmatpush2.bf16.xpose.msra.mxu0 0
  %1084 = vmatprep.subr.bf16.mxu0 0
  %1085 = vmatpush2.bf16.xpose.msra.mxu0 0
  %1086 = vmatprep.mubr.bf16.mxu0 0
  %1087 = vmatmul.mubr.bf16.gmra.mxu0 %v1049
  %v1088 = vpop.f32.mrf.mxu0
  %v1089 = vadd.f32 %v805, %v1088
  %v1090 = vpop.f32.mrf.mxu0
  %v1091 = vpop.f32.mrf.mxu0
  %v1092 = vadd.f32 %v805, %v1091
  %v1093 = vpop.f32.mrf.mxu0
  %1094 = vdwg.mxu0
  %v1095 = vsel %vm334, %v1089, -inf
  %1096 = vmax.xlane.f32.xlu0 %v1095
  %v1097 = vpop.xlane.xlu0 %1096
  %v1098 = vsel %vm334, %v1092, -inf
  %1099 = vmax.xlane.f32.xlu0 %v1098
  %v1100 = vpop.xlane.xlu0 %1099
  %v1101 = vsub.f32 %v1089, %v1097
  %v1102 = vsub.f32 %v1092, %v1100
  %v1103 = vmul.f32 %v1101, 1.442695
  %v1104 = vpow.pop %v1103
  %v1105 = vmul.f32 %v1102, 1.442695
  %v1106 = vpow.pop %v1105
  %v1107 = vsel %vm334, %v1104, 0.0
  %1108 = vadd.xlane.f32.xlu0 %v1107
  %v1109 = vpop.xlane.xlu0 %1108
  %v1110 = vsel %vm334, %v1106, 0.0
  %1111 = vadd.xlane.f32.xlu0 %v1110
  %v1112 = vpop.xlane.xlu0 %1111
  %v1113 = vrcp.pop %v1109
  %v1114 = vrcp.pop %v1112
  %v1115 = vmul.f32 %v1104, %v1113
  %v1116 = vmul.f32 %v1106, %v1114
  %v1117 = vpack.c.bf16 %v1116, %v1115
  %1118 = vrot.lane.b32.xlu0 %v801, 112
  %v1119 = vpop.permute.xlu0 %1118
  %v1122 = vsel %vm334, %v1117, 0
  %1124 = vmatprep.subr.bf16.mxu0 0
  %1125 = vmatpush1.bf16.msra.mxu0 0
  %1126 = vmatprep.subr.bf16.mxu0 0
  %1127 = vmatpush1.bf16.msra.mxu0 0
  %1128 = vmatprep.subr.bf16.mxu0 0
  %1129 = vmatpush1.bf16.msra.mxu0 0
  %1130 = vmatprep.subr.bf16.mxu0 0
  %1131 = vmatpush1.bf16.msra.mxu0 0
  %1132 = vmatprep.subr.bf16.mxu0 0
  %1133 = vmatpush1.bf16.msra.mxu0 0
  %1134 = vmatprep.subr.bf16.mxu0 0
  %1135 = vmatpush1.bf16.msra.mxu0 0
  %1136 = vmatprep.subr.bf16.mxu0 0
  %1137 = vmatpush1.bf16.msra.mxu0 0
  %1138 = vmatprep.subr.bf16.mxu0 0
  %1139 = vmatpush1.bf16.msra.mxu0 %v1119
  %1140 = vmatprep.subr.bf16.mxu0 0
  %1141 = vmatpush2.bf16.msra.mxu0 0
  %1142 = vmatprep.subr.bf16.mxu0 0
  %1143 = vmatpush2.bf16.msra.mxu0 0
  %1144 = vmatprep.subr.bf16.mxu0 0
  %1145 = vmatpush2.bf16.msra.mxu0 0
  %1146 = vmatprep.subr.bf16.mxu0 0
  %1147 = vmatpush2.bf16.msra.mxu0 0
  %1148 = vmatprep.subr.bf16.mxu0 0
  %1149 = vmatpush2.bf16.msra.mxu0 0
  %1150 = vmatprep.subr.bf16.mxu0 0
  %1151 = vmatpush2.bf16.msra.mxu0 0
  %1152 = vmatprep.subr.bf16.mxu0 0
  %1153 = vmatpush2.bf16.msra.mxu0 0
  %1154 = vmatprep.subr.bf16.mxu0 0
  %1155 = vmatpush2.bf16.msra.mxu0 0
  %1156 = vmatprep.mubr.bf16.mxu0 0
  %1157 = vmatmul.mubr.bf16.gmra.mxu0 %v1122
  %v1158 = vpop.f32.mrf.mxu0
  %v1159 = vadd.f32 0.0, %v1158
  %v1160 = vpop.f32.mrf.mxu0
  %v1161 = vpop.f32.mrf.mxu0
  %v1162 = vadd.f32 0.0, %v1161
  %v1163 = vpop.f32.mrf.mxu0
  %1164 = vdwg.mxu0
  %1165 = vrot.lane.b32.xlu0 %v799, 104
  %v1166 = vpop.permute.xlu0 %1165
  %1167 = vrot.lane.b32.xlu0 %v800, 104
  %v1168 = vpop.permute.xlu0 %1167
  %v1170 = vsel %vm286, %v1166, 0
  %v1173 = vsel %vm286, %v1168, 0
  %1175 = vmatprep.subr.bf16.mxu0 0
  %1176 = vmatpush1.bf16.xpose.msra.mxu0 0
  %1177 = vmatprep.subr.bf16.mxu0 0
  %1178 = vmatpush1.bf16.xpose.msra.mxu0 0
  %1179 = vmatprep.subr.bf16.mxu0 0
  %1180 = vmatpush1.bf16.xpose.msra.mxu0 0
  %1181 = vmatprep.subr.bf16.mxu0 0
  %1182 = vmatpush1.bf16.xpose.msra.mxu0 0
  %1183 = vmatprep.subr.bf16.mxu0 0
  %1184 = vmatpush1.bf16.xpose.msra.mxu0 0
  %1185 = vmatprep.subr.bf16.mxu0 0
  %1186 = vmatpush1.bf16.xpose.msra.mxu0 0
  %1187 = vmatprep.subr.bf16.mxu0 0
  %1188 = vmatpush1.bf16.xpose.msra.mxu0 0
  %1189 = vmatprep.subr.bf16.mxu0 0
  %1190 = vmatpush1.bf16.xpose.msra.mxu0 %v1173
  %1191 = vmatprep.subr.bf16.mxu0 0
  %1192 = vmatpush2.bf16.xpose.msra.mxu0 0
  %1193 = vmatprep.subr.bf16.mxu0 0
  %1194 = vmatpush2.bf16.xpose.msra.mxu0 0
  %1195 = vmatprep.subr.bf16.mxu0 0
  %1196 = vmatpush2.bf16.xpose.msra.mxu0 0
  %1197 = vmatprep.subr.bf16.mxu0 0
  %1198 = vmatpush2.bf16.xpose.msra.mxu0 0
  %1199 = vmatprep.subr.bf16.mxu0 0
  %1200 = vmatpush2.bf16.xpose.msra.mxu0 0
  %1201 = vmatprep.subr.bf16.mxu0 0
  %1202 = vmatpush2.bf16.xpose.msra.mxu0 0
  %1203 = vmatprep.subr.bf16.mxu0 0
  %1204 = vmatpush2.bf16.xpose.msra.mxu0 0
  %1205 = vmatprep.subr.bf16.mxu0 0
  %1206 = vmatpush2.bf16.xpose.msra.mxu0 0
  %1207 = vmatprep.mubr.bf16.mxu0 0
  %1208 = vmatmul.mubr.bf16.gmra.mxu0 %v1170
  %v1209 = vpop.f32.mrf.mxu0
  %v1210 = vadd.f32 %v805, %v1209
  %v1211 = vpop.f32.mrf.mxu0
  %v1212 = vpop.f32.mrf.mxu0
  %v1213 = vadd.f32 %v805, %v1212
  %v1214 = vpop.f32.mrf.mxu0
  %1215 = vdwg.mxu0
  %v1216 = vsel %vm334, %v1210, -inf
  %1217 = vmax.xlane.f32.xlu0 %v1216
  %v1218 = vpop.xlane.xlu0 %1217
  %v1219 = vsel %vm334, %v1213, -inf
  %1220 = vmax.xlane.f32.xlu0 %v1219
  %v1221 = vpop.xlane.xlu0 %1220
  %v1222 = vsub.f32 %v1210, %v1218
  %v1223 = vsub.f32 %v1213, %v1221
  %v1224 = vmul.f32 %v1222, 1.442695
  %v1225 = vpow.pop %v1224
  %v1226 = vmul.f32 %v1223, 1.442695
  %v1227 = vpow.pop %v1226
  %v1228 = vsel %vm334, %v1225, 0.0
  %1229 = vadd.xlane.f32.xlu0 %v1228
  %v1230 = vpop.xlane.xlu0 %1229
  %v1231 = vsel %vm334, %v1227, 0.0
  %1232 = vadd.xlane.f32.xlu0 %v1231
  %v1233 = vpop.xlane.xlu0 %1232
  %v1234 = vrcp.pop %v1230
  %v1235 = vrcp.pop %v1233
  %v1236 = vmul.f32 %v1225, %v1234
  %v1237 = vmul.f32 %v1227, %v1235
  %v1238 = vpack.c.bf16 %v1237, %v1236
  %1239 = vrot.lane.b32.xlu0 %v801, 104
  %v1240 = vpop.permute.xlu0 %1239
  %v1243 = vsel %vm334, %v1238, 0
  %1245 = vmatprep.subr.bf16.mxu0 0
  %1246 = vmatpush1.bf16.msra.mxu0 0
  %1247 = vmatprep.subr.bf16.mxu0 0
  %1248 = vmatpush1.bf16.msra.mxu0 0
  %1249 = vmatprep.subr.bf16.mxu0 0
  %1250 = vmatpush1.bf16.msra.mxu0 0
  %1251 = vmatprep.subr.bf16.mxu0 0
  %1252 = vmatpush1.bf16.msra.mxu0 0
  %1253 = vmatprep.subr.bf16.mxu0 0
  %1254 = vmatpush1.bf16.msra.mxu0 0
  %1255 = vmatprep.subr.bf16.mxu0 0
  %1256 = vmatpush1.bf16.msra.mxu0 0
  %1257 = vmatprep.subr.bf16.mxu0 0
  %1258 = vmatpush1.bf16.msra.mxu0 0
  %1259 = vmatprep.subr.bf16.mxu0 0
  %1260 = vmatpush1.bf16.msra.mxu0 %v1240
  %1261 = vmatprep.subr.bf16.mxu0 0
  %1262 = vmatpush2.bf16.msra.mxu0 0
  %1263 = vmatprep.subr.bf16.mxu0 0
  %1264 = vmatpush2.bf16.msra.mxu0 0
  %1265 = vmatprep.subr.bf16.mxu0 0
  %1266 = vmatpush2.bf16.msra.mxu0 0
  %1267 = vmatprep.subr.bf16.mxu0 0
  %1268 = vmatpush2.bf16.msra.mxu0 0
  %1269 = vmatprep.subr.bf16.mxu0 0
  %1270 = vmatpush2.bf16.msra.mxu0 0
  %1271 = vmatprep.subr.bf16.mxu0 0
  %1272 = vmatpush2.bf16.msra.mxu0 0
  %1273 = vmatprep.subr.bf16.mxu0 0
  %1274 = vmatpush2.bf16.msra.mxu0 0
  %1275 = vmatprep.subr.bf16.mxu0 0
  %1276 = vmatpush2.bf16.msra.mxu0 0
  %1277 = vmatprep.mubr.bf16.mxu0 0
  %1278 = vmatmul.mubr.bf16.gmra.mxu0 %v1243
  %v1279 = vpop.f32.mrf.mxu0
  %v1280 = vadd.f32 0.0, %v1279
  %v1281 = vpop.f32.mrf.mxu0
  %v1282 = vpop.f32.mrf.mxu0
  %v1283 = vadd.f32 0.0, %v1282
  %v1284 = vpop.f32.mrf.mxu0
  %1285 = vdwg.mxu0
  %1288 = vrot.lane.b32.xlu0 %v1038, 8
  %v1289 = vpop.permute.xlu0 %1288
  %1290 = vrot.lane.b32.xlu0 %v1041, 8
  %v1291 = vpop.permute.xlu0 %1290
  %1296 = vrot.lane.b32.xlu0 %v1159, 16
  %v1297 = vpop.permute.xlu0 %1296
  %1298 = vrot.lane.b32.xlu0 %v1162, 16
  %v1299 = vpop.permute.xlu0 %1298
  %1304 = vrot.lane.b32.xlu0 %v1280, 24
  %v1305 = vpop.permute.xlu0 %1304
  %1306 = vrot.lane.b32.xlu0 %v1283, 24
  %v1307 = vpop.permute.xlu0 %1306
  %v1310 = vsel %vm286, %v914, %v1289
  %v1311 = vsel %vm286, %v917, %v1291
  %v1312 = vsel %vm334, %v1310, %v1297
  %v1313 = vsel %vm334, %v1311, %v1299
  %v1314 = vsel %vm796, %v1312, %v1305
  %v1315 = vsel %vm796, %v1313, %v1307
  %v1316 = vpack.c.bf16 %v798, %v797
  %v1317 = vpack.c.bf16 %v1315, %v1314
  %v1318 = vld [vmem:[%s11] sm:$0xff]
  %v1319 = vld [vmem:[%s11 + $0x8] sm:$0xff]
  %v1320 = vld [vmem:[%s11 + $0x10] sm:$0xff]
  %v1321 = vld [vmem:[%s11 + $0x18] sm:$0xff]
  %v1322 = vpack.c.bf16 %v1319, %v1318
  %v1323 = vpack.c.bf16 %v1321, %v1320
  %v1324 = vld [vmem:[%s12] sm:$0x1]
  %v1326 = vlaneseq
  %v1327 = vshrl.u32 %v1326, 7
  %v1328 = vsub.s32 0, %v1327
  %v1329 = vrot.slane %v1324, %v1328
  %v1332 = vsel %vm70, %v1316, 0
  %v1335 = vsel %vm70, %v1317, 0
  %1337 = vmatprep.subr.bf16.mxu0 0
  %1338 = vmatpush1.bf16.msra.mxu0 0
  %1339 = vmatprep.subr.bf16.mxu0 0
  %1340 = vmatpush1.bf16.msra.mxu0 0
  %1341 = vmatprep.subr.bf16.mxu0 0
  %1342 = vmatpush1.bf16.msra.mxu0 0
  %1343 = vmatprep.subr.bf16.mxu0 0
  %1344 = vmatpush1.bf16.msra.mxu0 0
  %1345 = vmatprep.subr.bf16.mxu0 0
  %1346 = vmatpush1.bf16.msra.mxu0 0
  %1347 = vmatprep.subr.bf16.mxu0 0
  %1348 = vmatpush1.bf16.msra.mxu0 0
  %1349 = vmatprep.subr.bf16.mxu0 0
  %1350 = vmatpush1.bf16.msra.mxu0 %v1323
  %1351 = vmatprep.subr.bf16.mxu0 0
  %1352 = vmatpush1.bf16.msra.mxu0 %v1322
  %1353 = vmatprep.subr.bf16.mxu0 0
  %1354 = vmatpush2.bf16.msra.mxu0 0
  %1355 = vmatprep.subr.bf16.mxu0 0
  %1356 = vmatpush2.bf16.msra.mxu0 0
  %1357 = vmatprep.subr.bf16.mxu0 0
  %1358 = vmatpush2.bf16.msra.mxu0 0
  %1359 = vmatprep.subr.bf16.mxu0 0
  %1360 = vmatpush2.bf16.msra.mxu0 0
  %1361 = vmatprep.subr.bf16.mxu0 0
  %1362 = vmatpush2.bf16.msra.mxu0 0
  %1363 = vmatprep.subr.bf16.mxu0 0
  %1364 = vmatpush2.bf16.msra.mxu0 0
  %1365 = vmatprep.subr.bf16.mxu0 0
  %1366 = vmatpush2.bf16.msra.mxu0 0
  %1367 = vmatprep.subr.bf16.mxu0 0
  %1368 = vmatpush2.bf16.msra.mxu0 0
  %1369 = vmatprep.mubr.bf16.mxu0 0
  %1370 = vmatmul.mubr.bf16.gmra.mxu0 %v1332
  %v1371 = vpop.f32.mrf.mxu0
  %v1372 = vadd.f32 %v1329, %v1371
  %v1373 = vpop.f32.mrf.mxu0
  %v1374 = vpop.f32.mrf.mxu0
  %v1375 = vadd.f32 %v1329, %v1374
  %v1376 = vpop.f32.mrf.mxu0
  %1377 = vmatprep.mubr.bf16.mxu0 0
  %1378 = vmatmul.mubr.bf16.gmra.mxu0 %v1335
  %v1379 = vpop.f32.mrf.mxu0
  %v1380 = vadd.f32 %v1329, %v1379
  %v1381 = vpop.f32.mrf.mxu0
  %v1382 = vpop.f32.mrf.mxu0
  %v1383 = vadd.f32 %v1329, %v1382
  %v1384 = vpop.f32.mrf.mxu0
  %1385 = vdwg.mxu0
  %v1386 = vld [vmem:[%s3] sm:$0xff]
  %v1387 = vld [vmem:[%s3 + $0x8] sm:$0xff]
  %v1388 = vld [vmem:[%s3 + $0x10] sm:$0xff]
  %v1389 = vld [vmem:[%s3 + $0x18] sm:$0xff]
  %v1390 = vadd.f32 %v1386, %v1372
  %v1391 = vadd.f32 %v1387, %v1375
  %v1392 = vadd.f32 %v1388, %v1380
  %v1393 = vadd.f32 %v1389, %v1383
  %v1394 = vld [vmem:[%s13] sm:$0x1]
  %v1395 = vld [vmem:[%s14] sm:$0x1]
  %v1396 = vsel %vm70, %v1390, 0.0
  %1397 = vadd.xlane.f32.xlu0 %v1396
  %v1398 = vpop.xlane.xlu0 %1397
  %v1399 = vsel %vm70, %v1391, 0.0
  %1400 = vadd.xlane.f32.xlu0 %v1399
  %v1401 = vpop.xlane.xlu0 %1400
  %v1402 = vsel %vm70, %v1392, 0.0
  %1403 = vadd.xlane.f32.xlu0 %v1402
  %v1404 = vpop.xlane.xlu0 %1403
  %v1405 = vsel %vm70, %v1393, 0.0
  %1406 = vadd.xlane.f32.xlu0 %v1405
  %v1407 = vpop.xlane.xlu0 %1406
  %v1408 = vrcp.pop 32.0
  %v1409 = vmul.f32 %v1398, %v1408
  %v1410 = vmul.f32 %v1401, %v1408
  %v1411 = vmul.f32 %v1404, %v1408
  %v1412 = vmul.f32 %v1407, %v1408
  %v1413 = vsub.f32 %v1390, %v1409
  %v1414 = vsub.f32 %v1391, %v1410
  %v1415 = vsub.f32 %v1392, %v1411
  %v1416 = vsub.f32 %v1393, %v1412
  %v1417 = vmul.f32 %v1413, %v1413
  %v1418 = vmul.f32 %v1414, %v1414
  %v1419 = vmul.f32 %v1415, %v1415
  %v1420 = vmul.f32 %v1416, %v1416
  %v1421 = vsel %vm70, %v1417, 0.0
  %1422 = vadd.xlane.f32.xlu0 %v1421
  %v1423 = vpop.xlane.xlu0 %1422
  %v1424 = vsel %vm70, %v1418, 0.0
  %1425 = vadd.xlane.f32.xlu0 %v1424
  %v1426 = vpop.xlane.xlu0 %1425
  %v1427 = vsel %vm70, %v1419, 0.0
  %1428 = vadd.xlane.f32.xlu0 %v1427
  %v1429 = vpop.xlane.xlu0 %1428
  %v1430 = vsel %vm70, %v1420, 0.0
  %1431 = vadd.xlane.f32.xlu0 %v1430
  %v1432 = vpop.xlane.xlu0 %1431
  %v1433 = vmul.f32 %v1423, %v1408
  %v1434 = vmul.f32 %v1426, %v1408
  %v1435 = vmul.f32 %v1429, %v1408
  %v1436 = vmul.f32 %v1432, %v1408
  %v1437 = vadd.f32 %v1433, 1e-05
  %v1438 = vadd.f32 %v1434, 1e-05
  %v1439 = vadd.f32 %v1435, 1e-05
  %v1440 = vadd.f32 %v1436, 1e-05
  %v1441 = vrsqrt.pop %v1437
  %v1442 = vrsqrt.pop %v1438
  %v1443 = vrsqrt.pop %v1439
  %v1444 = vrsqrt.pop %v1440
  %v1445 = vmul.f32 %v1413, %v1441
  %v1446 = vmul.f32 %v1414, %v1442
  %v1447 = vmul.f32 %v1415, %v1443
  %v1448 = vmul.f32 %v1416, %v1444
  %v1450 = vlaneseq
  %v1451 = vshrl.u32 %v1450, 7
  %v1452 = vsub.s32 0, %v1451
  %v1453 = vrot.slane %v1394, %v1452
  %v1455 = vmul.f32 %v1445, %v1453
  %v1456 = vmul.f32 %v1446, %v1453
  %v1457 = vmul.f32 %v1447, %v1453
  %v1458 = vmul.f32 %v1448, %v1453
  %v1460 = vlaneseq
  %v1461 = vshrl.u32 %v1460, 7
  %v1462 = vsub.s32 0, %v1461
  %v1463 = vrot.slane %v1395, %v1462
  %v1465 = vadd.f32 %v1455, %v1463
  %v1466 = vadd.f32 %v1456, %v1463
  %v1467 = vadd.f32 %v1457, %v1463
  %v1468 = vadd.f32 %v1458, %v1463
  %1469 = vst.msk [vmem:[%s15] sm:$0xff] %vm70, %v1465
  %1470 = vst.msk [vmem:[%s15 + $0x8] sm:$0xff] %vm70, %v1466
  %1471 = vst.msk [vmem:[%s15 + $0x10] sm:$0xff] %vm70, %v1467
  %1472 = vst.msk [vmem:[%s15 + $0x18] sm:$0xff] %vm70, %v1468
  // Predicated region
  $region62: #{transformer_forward.24} parent=0 // pred_check
    _
  $region63: #{transformer_forward.24} parent=0 // pred_check_branch
    %1474 = sbr.rel (0) target = $region65
  $region64: #{transformer_forward.24} parent=0 // pred_region
    _
  $region65: #{transformer_forward.24} parent=0 // pred_fallthru
    _
  // Predicated region
  $region66: #{transformer_forward.24} parent=0 // pred_check
    _
  $region67: #{transformer_forward.24} parent=0 // pred_check_branch
    %1476 = sbr.rel (0) target = $region69
  $region68: #{transformer_forward.24} parent=0 // pred_region
    _
  $region69: #{transformer_forward.24} parent=0 // pred_fallthru
    _

// kernel: transformer_forward.29
$region0: #{transformer_forward.29}
  #allocation0 [shape = 'u32[]', space=smem, size = 0x4, offset = 0x4, fixed_abs, tag = 'smem constant byte address 0x4 - core index']
  #allocation1 [shape = 'u32[144,128]{1,0:T(1,128)}', space=vmem, size = 0x12000, scoped, tag = 'internal scratch']
  %s0 = inlined_call_operand.vmem [shape: f32[16,32], index: 0, kind: input, shape index: {}]
  %s1 = inlined_call_operand.vmem [shape: f32[32,32], index: 1, kind: input, shape index: {}]
  %s2 = inlined_call_operand.vmem [shape: f32[32,32], index: 2, kind: input, shape index: {}]
  %s3 = inlined_call_operand.vmem [shape: f32[16,32], index: 3, kind: input, shape index: {}]
  %s4 = inlined_call_operand.vmem [shape: f32[2,16], index: 4, kind: input, shape index: {}]
  %s5 = inlined_call_operand.vmem [shape: f32[32,32], index: 5, kind: input, shape index: {}]
  %s6 = inlined_call_operand.vmem [shape: f32[1,32], index: 6, kind: input, shape index: {}]
  %s7 = inlined_call_operand.vmem [shape: f32[32,32], index: 7, kind: input, shape index: {}]
  %s8 = inlined_call_operand.vmem [shape: f32[1,32], index: 8, kind: input, shape index: {}]
  %s9 = inlined_call_operand.vmem [shape: f32[32,32], index: 9, kind: input, shape index: {}]
  %s10 = inlined_call_operand.vmem [shape: f32[1,32], index: 10, kind: input, shape index: {}]
  %s11 = inlined_call_operand.vmem [shape: f32[32,32], index: 11, kind: input, shape index: {}]
  %s12 = inlined_call_operand.vmem [shape: f32[1,32], index: 12, kind: input, shape index: {}]
  %s13 = inlined_call_operand.vmem [shape: f32[1,32], index: 13, kind: input, shape index: {}]
  %s14 = inlined_call_operand.vmem [shape: f32[1,32], index: 14, kind: input, shape index: {}]
  %s15 = inlined_call_operand.vmem [shape: f32[16,32], index: 15, kind: output, shape index: {}]
  %s16 = sld [smem:[#allocation0]]
  $region70: #{transformer_forward.29} parent=0
    _
  %s18 = ssub.s32 1, %s16
  %s19 = scalar_select 0, %s18, %s16
  // Predicated region
  $region2: #{transformer_forward.29} parent=0 // pred_check
    _
  $region3: #{transformer_forward.29} parent=0 // pred_check_branch
    %21 = sbr.rel (0) target = $region5
  $region4: #{transformer_forward.29} parent=0 // pred_region
    _
  $region5: #{transformer_forward.29} parent=0 // pred_fallthru
    _
  // Predicated region
  $region6: #{transformer_forward.29} parent=0 // pred_check
    _
  $region7: #{transformer_forward.29} parent=0 // pred_check_branch
    %23 = sbr.rel (0) target = $region9
  $region8: #{transformer_forward.29} parent=0 // pred_region
    _
  $region9: #{transformer_forward.29} parent=0 // pred_fallthru
    _
  // Predicated region
  $region10: #{transformer_forward.29} parent=0 // pred_check
    _
  $region11: #{transformer_forward.29} parent=0 // pred_check_branch
    %25 = sbr.rel (0) target = $region13
  $region12: #{transformer_forward.29} parent=0 // pred_region
    _
  $region13: #{transformer_forward.29} parent=0 // pred_fallthru
    _
  // Predicated region
  $region14: #{transformer_forward.29} parent=0 // pred_check
    _
  $region15: #{transformer_forward.29} parent=0 // pred_check_branch
    %27 = sbr.rel (0) target = $region17
  $region16: #{transformer_forward.29} parent=0 // pred_region
    _
  $region17: #{transformer_forward.29} parent=0 // pred_fallthru
    _
  // Predicated region
  $region18: #{transformer_forward.29} parent=0 // pred_check
    _
  $region19: #{transformer_forward.29} parent=0 // pred_check_branch
    %29 = sbr.rel (0) target = $region21
  $region20: #{transformer_forward.29} parent=0 // pred_region
    _
  $region21: #{transformer_forward.29} parent=0 // pred_fallthru
    _
  // Predicated region
  $region22: #{transformer_forward.29} parent=0 // pred_check
    _
  $region23: #{transformer_forward.29} parent=0 // pred_check_branch
    %31 = sbr.rel (0) target = $region25
  $region24: #{transformer_forward.29} parent=0 // pred_region
    _
  $region25: #{transformer_forward.29} parent=0 // pred_fallthru
    _
  // Predicated region
  $region26: #{transformer_forward.29} parent=0 // pred_check
    _
  $region27: #{transformer_forward.29} parent=0 // pred_check_branch
    %33 = sbr.rel (0) target = $region29
  $region28: #{transformer_forward.29} parent=0 // pred_region
    _
  $region29: #{transformer_forward.29} parent=0 // pred_fallthru
    _
  // Predicated region
  $region30: #{transformer_forward.29} parent=0 // pred_check
    _
  $region31: #{transformer_forward.29} parent=0 // pred_check_branch
    %35 = sbr.rel (0) target = $region33
  $region32: #{transformer_forward.29} parent=0 // pred_region
    _
  $region33: #{transformer_forward.29} parent=0 // pred_fallthru
    _
  // Predicated region
  $region34: #{transformer_forward.29} parent=0 // pred_check
    _
  $region35: #{transformer_forward.29} parent=0 // pred_check_branch
    %37 = sbr.rel (0) target = $region37
  $region36: #{transformer_forward.29} parent=0 // pred_region
    _
  $region37: #{transformer_forward.29} parent=0 // pred_fallthru
    _
  // Predicated region
  $region38: #{transformer_forward.29} parent=0 // pred_check
    _
  $region39: #{transformer_forward.29} parent=0 // pred_check_branch
    %39 = sbr.rel (0) target = $region41
  $region40: #{transformer_forward.29} parent=0 // pred_region
    _
  $region41: #{transformer_forward.29} parent=0 // pred_fallthru
    _
  // Predicated region
  $region42: #{transformer_forward.29} parent=0 // pred_check
    _
  $region43: #{transformer_forward.29} parent=0 // pred_check_branch
    %41 = sbr.rel (0) target = $region45
  $region44: #{transformer_forward.29} parent=0 // pred_region
    _
  $region45: #{transformer_forward.29} parent=0 // pred_fallthru
    _
  // Predicated region
  $region46: #{transformer_forward.29} parent=0 // pred_check
    _
  $region47: #{transformer_forward.29} parent=0 // pred_check_branch
    %43 = sbr.rel (0) target = $region49
  $region48: #{transformer_forward.29} parent=0 // pred_region
    _
  $region49: #{transformer_forward.29} parent=0 // pred_fallthru
    _
  // Predicated region
  $region50: #{transformer_forward.29} parent=0 // pred_check
    _
  $region51: #{transformer_forward.29} parent=0 // pred_check_branch
    %45 = sbr.rel (0) target = $region53
  $region52: #{transformer_forward.29} parent=0 // pred_region
    _
  $region53: #{transformer_forward.29} parent=0 // pred_fallthru
    _
  // Predicated region
  $region54: #{transformer_forward.29} parent=0 // pred_check
    _
  $region55: #{transformer_forward.29} parent=0 // pred_check_branch
    %47 = sbr.rel (0) target = $region57
  $region56: #{transformer_forward.29} parent=0 // pred_region
    _
  $region57: #{transformer_forward.29} parent=0 // pred_fallthru
    _
  // Predicated region
  $region58: #{transformer_forward.29} parent=0 // pred_check
    _
  $region59: #{transformer_forward.29} parent=0 // pred_check_branch
    %49 = sbr.rel (0) target = $region61
  $region60: #{transformer_forward.29} parent=0 // pred_region
    _
  $region61: #{transformer_forward.29} parent=0 // pred_fallthru
    _
  %v51 = vld [vmem:[%s0] sm:$0xff]
  %v52 = vld [vmem:[%s0 + $0x8] sm:$0xff]
  %v53 = vpack.c.bf16 %v52, %v51
  %v54 = vld [vmem:[%s5] sm:$0xff]
  %v55 = vld [vmem:[%s5 + $0x8] sm:$0xff]
  %v56 = vld [vmem:[%s5 + $0x10] sm:$0xff]
  %v57 = vld [vmem:[%s5 + $0x18] sm:$0xff]
  %v58 = vpack.c.bf16 %v55, %v54
  %v59 = vpack.c.bf16 %v57, %v56
  %v60 = vld [vmem:[%s6] sm:$0x1]
  %v62 = vlaneseq
  %v63 = vshrl.u32 %v62, 7
  %v64 = vsub.s32 0, %v63
  %v65 = vrot.slane %v60, %v64
  %vm67 = vcmask 261120
  %v69 = vsel %vm67, %v53, 0
  %71 = vmatprep.subr.bf16.mxu0 0
  %72 = vmatpush1.bf16.msra.mxu0 0
  %73 = vmatprep.subr.bf16.mxu0 0
  %74 = vmatpush1.bf16.msra.mxu0 0
  %75 = vmatprep.subr.bf16.mxu0 0
  %76 = vmatpush1.bf16.msra.mxu0 0
  %77 = vmatprep.subr.bf16.mxu0 0
  %78 = vmatpush1.bf16.msra.mxu0 0
  %79 = vmatprep.subr.bf16.mxu0 0
  %80 = vmatpush1.bf16.msra.mxu0 0
  %81 = vmatprep.subr.bf16.mxu0 0
  %82 = vmatpush1.bf16.msra.mxu0 0
  %83 = vmatprep.subr.bf16.mxu0 0
  %84 = vmatpush1.bf16.msra.mxu0 %v59
  %85 = vmatprep.subr.bf16.mxu0 0
  %86 = vmatpush1.bf16.msra.mxu0 %v58
  %87 = vmatprep.subr.bf16.mxu0 0
  %88 = vmatpush2.bf16.msra.mxu0 0
  %89 = vmatprep.subr.bf16.mxu0 0
  %90 = vmatpush2.bf16.msra.mxu0 0
  %91 = vmatprep.subr.bf16.mxu0 0
  %92 = vmatpush2.bf16.msra.mxu0 0
  %93 = vmatprep.subr.bf16.mxu0 0
  %94 = vmatpush2.bf16.msra.mxu0 0
  %95 = vmatprep.subr.bf16.mxu0 0
  %96 = vmatpush2.bf16.msra.mxu0 0
  %97 = vmatprep.subr.bf16.mxu0 0
  %98 = vmatpush2.bf16.msra.mxu0 0
  %99 = vmatprep.subr.bf16.mxu0 0
  %100 = vmatpush2.bf16.msra.mxu0 0
  %101 = vmatprep.subr.bf16.mxu0 0
  %102 = vmatpush2.bf16.msra.mxu0 0
  %103 = vmatprep.mubr.bf16.mxu0 0
  %104 = vmatmul.mubr.bf16.gmra.mxu0 %v69
  %v105 = vpop.f32.mrf.mxu0
  %v106 = vadd.f32 %v65, %v105
  %v107 = vpop.f32.mrf.mxu0
  %v108 = vpop.f32.mrf.mxu0
  %v109 = vadd.f32 %v65, %v108
  %v110 = vpop.f32.mrf.mxu0
  %111 = vdwg.mxu0
  %v112 = vmul.f32 %v106, 0.35355338
  %v113 = vmul.f32 %v109, 0.35355338
  %v114 = vld [vmem:[%s1] sm:$0xff]
  %v115 = vld [vmem:[%s1 + $0x8] sm:$0xff]
  %v116 = vld [vmem:[%s1 + $0x10] sm:$0xff]
  %v117 = vld [vmem:[%s1 + $0x18] sm:$0xff]
  %v118 = vpack.c.bf16 %v115, %v114
  %v119 = vpack.c.bf16 %v117, %v116
  %v120 = vld [vmem:[%s7] sm:$0xff]
  %v121 = vld [vmem:[%s7 + $0x8] sm:$0xff]
  %v122 = vld [vmem:[%s7 + $0x10] sm:$0xff]
  %v123 = vld [vmem:[%s7 + $0x18] sm:$0xff]
  %v124 = vpack.c.bf16 %v121, %v120
  %v125 = vpack.c.bf16 %v123, %v122
  %v126 = vld [vmem:[%s8] sm:$0x1]
  %v128 = vlaneseq
  %v129 = vshrl.u32 %v128, 7
  %v130 = vsub.s32 0, %v129
  %v131 = vrot.slane %v126, %v130
  %v134 = vsel %vm67, %v118, 0
  %v137 = vsel %vm67, %v119, 0
  %139 = vmatprep.subr.bf16.mxu0 0
  %140 = vmatpush1.bf16.msra.mxu0 0
  %141 = vmatprep.subr.bf16.mxu0 0
  %142 = vmatpush1.bf16.msra.mxu0 0
  %143 = vmatprep.subr.bf16.mxu0 0
  %144 = vmatpush1.bf16.msra.mxu0 0
  %145 = vmatprep.subr.bf16.mxu0 0
  %146 = vmatpush1.bf16.msra.mxu0 0
  %147 = vmatprep.subr.bf16.mxu0 0
  %148 = vmatpush1.bf16.msra.mxu0 0
  %149 = vmatprep.subr.bf16.mxu0 0
  %150 = vmatpush1.bf16.msra.mxu0 0
  %151 = vmatprep.subr.bf16.mxu0 0
  %152 = vmatpush1.bf16.msra.mxu0 %v125
  %153 = vmatprep.subr.bf16.mxu0 0
  %154 = vmatpush1.bf16.msra.mxu0 %v124
  %155 = vmatprep.subr.bf16.mxu0 0
  %156 = vmatpush2.bf16.msra.mxu0 0
  %157 = vmatprep.subr.bf16.mxu0 0
  %158 = vmatpush2.bf16.msra.mxu0 0
  %159 = vmatprep.subr.bf16.mxu0 0
  %160 = vmatpush2.bf16.msra.mxu0 0
  %161 = vmatprep.subr.bf16.mxu0 0
  %162 = vmatpush2.bf16.msra.mxu0 0
  %163 = vmatprep.subr.bf16.mxu0 0
  %164 = vmatpush2.bf16.msra.mxu0 0
  %165 = vmatprep.subr.bf16.mxu0 0
  %166 = vmatpush2.bf16.msra.mxu0 0
  %167 = vmatprep.subr.bf16.mxu0 0
  %168 = vmatpush2.bf16.msra.mxu0 0
  %169 = vmatprep.subr.bf16.mxu0 0
  %170 = vmatpush2.bf16.msra.mxu0 0
  %171 = vmatprep.mubr.bf16.mxu0 0
  %172 = vmatmul.mubr.bf16.gmra.mxu0 %v134
  %v173 = vpop.f32.mrf.mxu0
  %v174 = vadd.f32 %v131, %v173
  %v175 = vpop.f32.mrf.mxu0
  %v176 = vpop.f32.mrf.mxu0
  %v177 = vadd.f32 %v131, %v176
  %v178 = vpop.f32.mrf.mxu0
  %179 = vmatprep.mubr.bf16.mxu0 0
  %180 = vmatmul.mubr.bf16.gmra.mxu0 %v137
  %v181 = vpop.f32.mrf.mxu0
  %v182 = vadd.f32 %v131, %v181
  %v183 = vpop.f32.mrf.mxu0
  %v184 = vpop.f32.mrf.mxu0
  %v185 = vadd.f32 %v131, %v184
  %v186 = vpop.f32.mrf.mxu0
  %187 = vdwg.mxu0
  %v188 = vld [vmem:[%s2] sm:$0xff]
  %v189 = vld [vmem:[%s2 + $0x8] sm:$0xff]
  %v190 = vld [vmem:[%s2 + $0x10] sm:$0xff]
  %v191 = vld [vmem:[%s2 + $0x18] sm:$0xff]
  %v192 = vpack.c.bf16 %v189, %v188
  %v193 = vpack.c.bf16 %v191, %v190
  %v194 = vld [vmem:[%s9] sm:$0xff]
  %v195 = vld [vmem:[%s9 + $0x8] sm:$0xff]
  %v196 = vld [vmem:[%s9 + $0x10] sm:$0xff]
  %v197 = vld [vmem:[%s9 + $0x18] sm:$0xff]
  %v198 = vpack.c.bf16 %v195, %v194
  %v199 = vpack.c.bf16 %v197, %v196
  %v200 = vld [vmem:[%s10] sm:$0x1]
  %v202 = vlaneseq
  %v203 = vshrl.u32 %v202, 7
  %v204 = vsub.s32 0, %v203
  %v205 = vrot.slane %v200, %v204
  %v208 = vsel %vm67, %v192, 0
  %v211 = vsel %vm67, %v193, 0
  %213 = vmatprep.subr.bf16.mxu0 0
  %214 = vmatpush1.bf16.msra.mxu0 0
  %215 = vmatprep.subr.bf16.mxu0 0
  %216 = vmatpush1.bf16.msra.mxu0 0
  %217 = vmatprep.subr.bf16.mxu0 0
  %218 = vmatpush1.bf16.msra.mxu0 0
  %219 = vmatprep.subr.bf16.mxu0 0
  %220 = vmatpush1.bf16.msra.mxu0 0
  %221 = vmatprep.subr.bf16.mxu0 0
  %222 = vmatpush1.bf16.msra.mxu0 0
  %223 = vmatprep.subr.bf16.mxu0 0
  %224 = vmatpush1.bf16.msra.mxu0 0
  %225 = vmatprep.subr.bf16.mxu0 0
  %226 = vmatpush1.bf16.msra.mxu0 %v199
  %227 = vmatprep.subr.bf16.mxu0 0
  %228 = vmatpush1.bf16.msra.mxu0 %v198
  %229 = vmatprep.subr.bf16.mxu0 0
  %230 = vmatpush2.bf16.msra.mxu0 0
  %231 = vmatprep.subr.bf16.mxu0 0
  %232 = vmatpush2.bf16.msra.mxu0 0
  %233 = vmatprep.subr.bf16.mxu0 0
  %234 = vmatpush2.bf16.msra.mxu0 0
  %235 = vmatprep.subr.bf16.mxu0 0
  %236 = vmatpush2.bf16.msra.mxu0 0
  %237 = vmatprep.subr.bf16.mxu0 0
  %238 = vmatpush2.bf16.msra.mxu0 0
  %239 = vmatprep.subr.bf16.mxu0 0
  %240 = vmatpush2.bf16.msra.mxu0 0
  %241 = vmatprep.subr.bf16.mxu0 0
  %242 = vmatpush2.bf16.msra.mxu0 0
  %243 = vmatprep.subr.bf16.mxu0 0
  %244 = vmatpush2.bf16.msra.mxu0 0
  %245 = vmatprep.mubr.bf16.mxu0 0
  %246 = vmatmul.mubr.bf16.gmra.mxu0 %v208
  %v247 = vpop.f32.mrf.mxu0
  %v248 = vadd.f32 %v205, %v247
  %v249 = vpop.f32.mrf.mxu0
  %v250 = vpop.f32.mrf.mxu0
  %v251 = vadd.f32 %v205, %v250
  %v252 = vpop.f32.mrf.mxu0
  %253 = vmatprep.mubr.bf16.mxu0 0
  %254 = vmatmul.mubr.bf16.gmra.mxu0 %v211
  %v255 = vpop.f32.mrf.mxu0
  %v256 = vadd.f32 %v205, %v255
  %v257 = vpop.f32.mrf.mxu0
  %v258 = vpop.f32.mrf.mxu0
  %v259 = vadd.f32 %v205, %v258
  %v260 = vpop.f32.mrf.mxu0
  %261 = vdwg.mxu0
  %v262 = vld [vmem:[%s4] sm:$0x3]
  %v263 = vpack.c.bf16 %v112, %v112
  %v264 = vpack.c.bf16 %v177, %v174
  %v265 = vpack.c.bf16 %v251, %v248
  %v266 = vlaneseq
  %v267 = vshrl.u32 %v266, 7
  %v268 = vsub.s32 0, %v267
  %v269 = vrot.slane %v262, %v268
  %vm270 = vcmask 64512
  %v272 = vsel %vm270, %v263, 0
  %v275 = vsel %vm270, %v264, 0
  %277 = vmatprep.subr.bf16.mxu0 0
  %278 = vmatpush1.bf16.xpose.msra.mxu0 0
  %279 = vmatprep.subr.bf16.mxu0 0
  %280 = vmatpush1.bf16.xpose.msra.mxu0 0
  %281 = vmatprep.subr.bf16.mxu0 0
  %282 = vmatpush1.bf16.xpose.msra.mxu0 0
  %283 = vmatprep.subr.bf16.mxu0 0
  %284 = vmatpush1.bf16.xpose.msra.mxu0 0
  %285 = vmatprep.subr.bf16.mxu0 0
  %286 = vmatpush1.bf16.xpose.msra.mxu0 0
  %287 = vmatprep.subr.bf16.mxu0 0
  %288 = vmatpush1.bf16.xpose.msra.mxu0 0
  %289 = vmatprep.subr.bf16.mxu0 0
  %290 = vmatpush1.bf16.xpose.msra.mxu0 0
  %291 = vmatprep.subr.bf16.mxu0 0
  %292 = vmatpush1.bf16.xpose.msra.mxu0 %v275
  %293 = vmatprep.subr.bf16.mxu0 0
  %294 = vmatpush2.bf16.xpose.msra.mxu0 0
  %295 = vmatprep.subr.bf16.mxu0 0
  %296 = vmatpush2.bf16.xpose.msra.mxu0 0
  %297 = vmatprep.subr.bf16.mxu0 0
  %298 = vmatpush2.bf16.xpose.msra.mxu0 0
  %299 = vmatprep.subr.bf16.mxu0 0
  %300 = vmatpush2.bf16.xpose.msra.mxu0 0
  %301 = vmatprep.subr.bf16.mxu0 0
  %302 = vmatpush2.bf16.xpose.msra.mxu0 0
  %303 = vmatprep.subr.bf16.mxu0 0
  %304 = vmatpush2.bf16.xpose.msra.mxu0 0
  %305 = vmatprep.subr.bf16.mxu0 0
  %306 = vmatpush2.bf16.xpose.msra.mxu0 0
  %307 = vmatprep.subr.bf16.mxu0 0
  %308 = vmatpush2.bf16.xpose.msra.mxu0 0
  %309 = vmatprep.mubr.bf16.mxu0 0
  %310 = vmatmul.mubr.bf16.gmra.mxu0 %v272
  %v311 = vpop.f32.mrf.mxu0
  %v312 = vadd.f32 %v269, %v311
  %v313 = vpop.f32.mrf.mxu0
  %v314 = vpop.f32.mrf.mxu0
  %v315 = vpop.f32.mrf.mxu0
  %316 = vdwg.mxu0
  %vm317 = vcmask 130048
  %v318 = vsel %vm317, %v312, -inf
  %319 = vmax.xlane.f32.xlu0 %v318
  %v320 = vpop.xlane.xlu0 %319
  %v321 = vsub.f32 %v312, %v320
  %v322 = vmul.f32 %v321, 1.442695
  %v323 = vpow.pop %v322
  %v324 = vsel %vm317, %v323, 0.0
  %325 = vadd.xlane.f32.xlu0 %v324
  %v326 = vpop.xlane.xlu0 %325
  %v327 = vrcp.pop %v326
  %v328 = vmul.f32 %v323, %v327
  %v329 = vpack.c.bf16 %v328, %v328
  %v331 = vsel %vm317, %v329, 0
  %333 = vmatprep.subr.bf16.mxu0 0
  %334 = vmatpush1.bf16.msra.mxu0 0
  %335 = vmatprep.subr.bf16.mxu0 0
  %336 = vmatpush1.bf16.msra.mxu0 0
  %337 = vmatprep.subr.bf16.mxu0 0
  %338 = vmatpush1.bf16.msra.mxu0 0
  %339 = vmatprep.subr.bf16.mxu0 0
  %340 = vmatpush1.bf16.msra.mxu0 0
  %341 = vmatprep.subr.bf16.mxu0 0
  %342 = vmatpush1.bf16.msra.mxu0 0
  %343 = vmatprep.subr.bf16.mxu0 0
  %344 = vmatpush1.bf16.msra.mxu0 0
  %345 = vmatprep.subr.bf16.mxu0 0
  %346 = vmatpush1.bf16.msra.mxu0 0
  %347 = vmatprep.subr.bf16.mxu0 0
  %348 = vmatpush1.bf16.msra.mxu0 %v265
  %349 = vmatprep.subr.bf16.mxu0 0
  %350 = vmatpush2.bf16.msra.mxu0 0
  %351 = vmatprep.subr.bf16.mxu0 0
  %352 = vmatpush2.bf16.msra.mxu0 0
  %353 = vmatprep.subr.bf16.mxu0 0
  %354 = vmatpush2.bf16.msra.mxu0 0
  %355 = vmatprep.subr.bf16.mxu0 0
  %356 = vmatpush2.bf16.msra.mxu0 0
  %357 = vmatprep.subr.bf16.mxu0 0
  %358 = vmatpush2.bf16.msra.mxu0 0
  %359 = vmatprep.subr.bf16.mxu0 0
  %360 = vmatpush2.bf16.msra.mxu0 0
  %361 = vmatprep.subr.bf16.mxu0 0
  %362 = vmatpush2.bf16.msra.mxu0 0
  %363 = vmatprep.subr.bf16.mxu0 0
  %364 = vmatpush2.bf16.msra.mxu0 0
  %365 = vmatprep.mubr.bf16.mxu0 0
  %366 = vmatmul.mubr.bf16.gmra.mxu0 %v331
  %v367 = vpop.f32.mrf.mxu0
  %v368 = vadd.f32 0.0, %v367
  %v369 = vpop.f32.mrf.mxu0
  %v370 = vpop.f32.mrf.mxu0
  %v371 = vpop.f32.mrf.mxu0
  %372 = vdwg.mxu0
  %374 = vrot.lane.b32.xlu0 %v263, 120
  %v375 = vpop.permute.xlu0 %374
  %377 = vrot.lane.b32.xlu0 %v264, 120
  %v378 = vpop.permute.xlu0 %377
  %v380 = vsel %vm270, %v375, 0
  %v383 = vsel %vm270, %v378, 0
  %385 = vmatprep.subr.bf16.mxu0 0
  %386 = vmatpush1.bf16.xpose.msra.mxu0 0
  %387 = vmatprep.subr.bf16.mxu0 0
  %388 = vmatpush1.bf16.xpose.msra.mxu0 0
  %389 = vmatprep.subr.bf16.mxu0 0
  %390 = vmatpush1.bf16.xpose.msra.mxu0 0
  %391 = vmatprep.subr.bf16.mxu0 0
  %392 = vmatpush1.bf16.xpose.msra.mxu0 0
  %393 = vmatprep.subr.bf16.mxu0 0
  %394 = vmatpush1.bf16.xpose.msra.mxu0 0
  %395 = vmatprep.subr.bf16.mxu0 0
  %396 = vmatpush1.bf16.xpose.msra.mxu0 0
  %397 = vmatprep.subr.bf16.mxu0 0
  %398 = vmatpush1.bf16.xpose.msra.mxu0 0
  %399 = vmatprep.subr.bf16.mxu0 0
  %400 = vmatpush1.bf16.xpose.msra.mxu0 %v383
  %401 = vmatprep.subr.bf16.mxu0 0
  %402 = vmatpush2.bf16.xpose.msra.mxu0 0
  %403 = vmatprep.subr.bf16.mxu0 0
  %404 = vmatpush2.bf16.xpose.msra.mxu0 0
  %405 = vmatprep.subr.bf16.mxu0 0
  %406 = vmatpush2.bf16.xpose.msra.mxu0 0
  %407 = vmatprep.subr.bf16.mxu0 0
  %408 = vmatpush2.bf16.xpose.msra.mxu0 0
  %409 = vmatprep.subr.bf16.mxu0 0
  %410 = vmatpush2.bf16.xpose.msra.mxu0 0
  %411 = vmatprep.subr.bf16.mxu0 0
  %412 = vmatpush2.bf16.xpose.msra.mxu0 0
  %413 = vmatprep.subr.bf16.mxu0 0
  %414 = vmatpush2.bf16.xpose.msra.mxu0 0
  %415 = vmatprep.subr.bf16.mxu0 0
  %416 = vmatpush2.bf16.xpose.msra.mxu0 0
  %417 = vmatprep.mubr.bf16.mxu0 0
  %418 = vmatmul.mubr.bf16.gmra.mxu0 %v380
  %v419 = vpop.f32.mrf.mxu0
  %v420 = vadd.f32 %v269, %v419
  %v421 = vpop.f32.mrf.mxu0
  %v422 = vpop.f32.mrf.mxu0
  %v423 = vpop.f32.mrf.mxu0
  %424 = vdwg.mxu0
  %v425 = vsel %vm317, %v420, -inf
  %426 = vmax.xlane.f32.xlu0 %v425
  %v427 = vpop.xlane.xlu0 %426
  %v428 = vsub.f32 %v420, %v427
  %v429 = vmul.f32 %v428, 1.442695
  %v430 = vpow.pop %v429
  %v431 = vsel %vm317, %v430, 0.0
  %432 = vadd.xlane.f32.xlu0 %v431
  %v433 = vpop.xlane.xlu0 %432
  %v434 = vrcp.pop %v433
  %v435 = vmul.f32 %v430, %v434
  %v436 = vpack.c.bf16 %v435, %v435
  %438 = vrot.lane.b32.xlu0 %v265, 120
  %v439 = vpop.permute.xlu0 %438
  %v442 = vsel %vm317, %v436, 0
  %444 = vmatprep.subr.bf16.mxu0 0
  %445 = vmatpush1.bf16.msra.mxu0 0
  %446 = vmatprep.subr.bf16.mxu0 0
  %447 = vmatpush1.bf16.msra.mxu0 0
  %448 = vmatprep.subr.bf16.mxu0 0
  %449 = vmatpush1.bf16.msra.mxu0 0
  %450 = vmatprep.subr.bf16.mxu0 0
  %451 = vmatpush1.bf16.msra.mxu0 0
  %452 = vmatprep.subr.bf16.mxu0 0
  %453 = vmatpush1.bf16.msra.mxu0 0
  %454 = vmatprep.subr.bf16.mxu0 0
  %455 = vmatpush1.bf16.msra.mxu0 0
  %456 = vmatprep.subr.bf16.mxu0 0
  %457 = vmatpush1.bf16.msra.mxu0 0
  %458 = vmatprep.subr.bf16.mxu0 0
  %459 = vmatpush1.bf16.msra.mxu0 %v439
  %460 = vmatprep.subr.bf16.mxu0 0
  %461 = vmatpush2.bf16.msra.mxu0 0
  %462 = vmatprep.subr.bf16.mxu0 0
  %463 = vmatpush2.bf16.msra.mxu0 0
  %464 = vmatprep.subr.bf16.mxu0 0
  %465 = vmatpush2.bf16.msra.mxu0 0
  %466 = vmatprep.subr.bf16.mxu0 0
  %467 = vmatpush2.bf16.msra.mxu0 0
  %468 = vmatprep.subr.bf16.mxu0 0
  %469 = vmatpush2.bf16.msra.mxu0 0
  %470 = vmatprep.subr.bf16.mxu0 0
  %471 = vmatpush2.bf16.msra.mxu0 0
  %472 = vmatprep.subr.bf16.mxu0 0
  %473 = vmatpush2.bf16.msra.mxu0 0
  %474 = vmatprep.subr.bf16.mxu0 0
  %475 = vmatpush2.bf16.msra.mxu0 0
  %476 = vmatprep.mubr.bf16.mxu0 0
  %477 = vmatmul.mubr.bf16.gmra.mxu0 %v442
  %v478 = vpop.f32.mrf.mxu0
  %v479 = vadd.f32 0.0, %v478
  %v480 = vpop.f32.mrf.mxu0
  %v481 = vpop.f32.mrf.mxu0
  %v482 = vpop.f32.mrf.mxu0
  %483 = vdwg.mxu0
  %484 = vrot.lane.b32.xlu0 %v263, 112
  %v485 = vpop.permute.xlu0 %484
  %486 = vrot.lane.b32.xlu0 %v264, 112
  %v487 = vpop.permute.xlu0 %486
  %v489 = vsel %vm270, %v485, 0
  %v492 = vsel %vm270, %v487, 0
  %494 = vmatprep.subr.bf16.mxu0 0
  %495 = vmatpush1.bf16.xpose.msra.mxu0 0
  %496 = vmatprep.subr.bf16.mxu0 0
  %497 = vmatpush1.bf16.xpose.msra.mxu0 0
  %498 = vmatprep.subr.bf16.mxu0 0
  %499 = vmatpush1.bf16.xpose.msra.mxu0 0
  %500 = vmatprep.subr.bf16.mxu0 0
  %501 = vmatpush1.bf16.xpose.msra.mxu0 0
  %502 = vmatprep.subr.bf16.mxu0 0
  %503 = vmatpush1.bf16.xpose.msra.mxu0 0
  %504 = vmatprep.subr.bf16.mxu0 0
  %505 = vmatpush1.bf16.xpose.msra.mxu0 0
  %506 = vmatprep.subr.bf16.mxu0 0
  %507 = vmatpush1.bf16.xpose.msra.mxu0 0
  %508 = vmatprep.subr.bf16.mxu0 0
  %509 = vmatpush1.bf16.xpose.msra.mxu0 %v492
  %510 = vmatprep.subr.bf16.mxu0 0
  %511 = vmatpush2.bf16.xpose.msra.mxu0 0
  %512 = vmatprep.subr.bf16.mxu0 0
  %513 = vmatpush2.bf16.xpose.msra.mxu0 0
  %514 = vmatprep.subr.bf16.mxu0 0
  %515 = vmatpush2.bf16.xpose.msra.mxu0 0
  %516 = vmatprep.subr.bf16.mxu0 0
  %517 = vmatpush2.bf16.xpose.msra.mxu0 0
  %518 = vmatprep.subr.bf16.mxu0 0
  %519 = vmatpush2.bf16.xpose.msra.mxu0 0
  %520 = vmatprep.subr.bf16.mxu0 0
  %521 = vmatpush2.bf16.xpose.msra.mxu0 0
  %522 = vmatprep.subr.bf16.mxu0 0
  %523 = vmatpush2.bf16.xpose.msra.mxu0 0
  %524 = vmatprep.subr.bf16.mxu0 0
  %525 = vmatpush2.bf16.xpose.msra.mxu0 0
  %526 = vmatprep.mubr.bf16.mxu0 0
  %527 = vmatmul.mubr.bf16.gmra.mxu0 %v489
  %v528 = vpop.f32.mrf.mxu0
  %v529 = vadd.f32 %v269, %v528
  %v530 = vpop.f32.mrf.mxu0
  %v531 = vpop.f32.mrf.mxu0
  %v532 = vpop.f32.mrf.mxu0
  %533 = vdwg.mxu0
  %v534 = vsel %vm317, %v529, -inf
  %535 = vmax.xlane.f32.xlu0 %v534
  %v536 = vpop.xlane.xlu0 %535
  %v537 = vsub.f32 %v529, %v536
  %v538 = vmul.f32 %v537, 1.442695
  %v539 = vpow.pop %v538
  %v540 = vsel %vm317, %v539, 0.0
  %541 = vadd.xlane.f32.xlu0 %v540
  %v542 = vpop.xlane.xlu0 %541
  %v543 = vrcp.pop %v542
  %v544 = vmul.f32 %v539, %v543
  %v545 = vpack.c.bf16 %v544, %v544
  %546 = vrot.lane.b32.xlu0 %v265, 112
  %v547 = vpop.permute.xlu0 %546
  %v550 = vsel %vm317, %v545, 0
  %552 = vmatprep.subr.bf16.mxu0 0
  %553 = vmatpush1.bf16.msra.mxu0 0
  %554 = vmatprep.subr.bf16.mxu0 0
  %555 = vmatpush1.bf16.msra.mxu0 0
  %556 = vmatprep.subr.bf16.mxu0 0
  %557 = vmatpush1.bf16.msra.mxu0 0
  %558 = vmatprep.subr.bf16.mxu0 0
  %559 = vmatpush1.bf16.msra.mxu0 0
  %560 = vmatprep.subr.bf16.mxu0 0
  %561 = vmatpush1.bf16.msra.mxu0 0
  %562 = vmatprep.subr.bf16.mxu0 0
  %563 = vmatpush1.bf16.msra.mxu0 0
  %564 = vmatprep.subr.bf16.mxu0 0
  %565 = vmatpush1.bf16.msra.mxu0 0
  %566 = vmatprep.subr.bf16.mxu0 0
  %567 = vmatpush1.bf16.msra.mxu0 %v547
  %568 = vmatprep.subr.bf16.mxu0 0
  %569 = vmatpush2.bf16.msra.mxu0 0
  %570 = vmatprep.subr.bf16.mxu0 0
  %571 = vmatpush2.bf16.msra.mxu0 0
  %572 = vmatprep.subr.bf16.mxu0 0
  %573 = vmatpush2.bf16.msra.mxu0 0
  %574 = vmatprep.subr.bf16.mxu0 0
  %575 = vmatpush2.bf16.msra.mxu0 0
  %576 = vmatprep.subr.bf16.mxu0 0
  %577 = vmatpush2.bf16.msra.mxu0 0
  %578 = vmatprep.subr.bf16.mxu0 0
  %579 = vmatpush2.bf16.msra.mxu0 0
  %580 = vmatprep.subr.bf16.mxu0 0
  %581 = vmatpush2.bf16.msra.mxu0 0
  %582 = vmatprep.subr.bf16.mxu0 0
  %583 = vmatpush2.bf16.msra.mxu0 0
  %584 = vmatprep.mubr.bf16.mxu0 0
  %585 = vmatmul.mubr.bf16.gmra.mxu0 %v550
  %v586 = vpop.f32.mrf.mxu0
  %v587 = vadd.f32 0.0, %v586
  %v588 = vpop.f32.mrf.mxu0
  %v589 = vpop.f32.mrf.mxu0
  %v590 = vpop.f32.mrf.mxu0
  %591 = vdwg.mxu0
  %592 = vrot.lane.b32.xlu0 %v263, 104
  %v593 = vpop.permute.xlu0 %592
  %594 = vrot.lane.b32.xlu0 %v264, 104
  %v595 = vpop.permute.xlu0 %594
  %v597 = vsel %vm270, %v593, 0
  %v600 = vsel %vm270, %v595, 0
  %602 = vmatprep.subr.bf16.mxu0 0
  %603 = vmatpush1.bf16.xpose.msra.mxu0 0
  %604 = vmatprep.subr.bf16.mxu0 0
  %605 = vmatpush1.bf16.xpose.msra.mxu0 0
  %606 = vmatprep.subr.bf16.mxu0 0
  %607 = vmatpush1.bf16.xpose.msra.mxu0 0
  %608 = vmatprep.subr.bf16.mxu0 0
  %609 = vmatpush1.bf16.xpose.msra.mxu0 0
  %610 = vmatprep.subr.bf16.mxu0 0
  %611 = vmatpush1.bf16.xpose.msra.mxu0 0
  %612 = vmatprep.subr.bf16.mxu0 0
  %613 = vmatpush1.bf16.xpose.msra.mxu0 0
  %614 = vmatprep.subr.bf16.mxu0 0
  %615 = vmatpush1.bf16.xpose.msra.mxu0 0
  %616 = vmatprep.subr.bf16.mxu0 0
  %617 = vmatpush1.bf16.xpose.msra.mxu0 %v600
  %618 = vmatprep.subr.bf16.mxu0 0
  %619 = vmatpush2.bf16.xpose.msra.mxu0 0
  %620 = vmatprep.subr.bf16.mxu0 0
  %621 = vmatpush2.bf16.xpose.msra.mxu0 0
  %622 = vmatprep.subr.bf16.mxu0 0
  %623 = vmatpush2.bf16.xpose.msra.mxu0 0
  %624 = vmatprep.subr.bf16.mxu0 0
  %625 = vmatpush2.bf16.xpose.msra.mxu0 0
  %626 = vmatprep.subr.bf16.mxu0 0
  %627 = vmatpush2.bf16.xpose.msra.mxu0 0
  %628 = vmatprep.subr.bf16.mxu0 0
  %629 = vmatpush2.bf16.xpose.msra.mxu0 0
  %630 = vmatprep.subr.bf16.mxu0 0
  %631 = vmatpush2.bf16.xpose.msra.mxu0 0
  %632 = vmatprep.subr.bf16.mxu0 0
  %633 = vmatpush2.bf16.xpose.msra.mxu0 0
  %634 = vmatprep.mubr.bf16.mxu0 0
  %635 = vmatmul.mubr.bf16.gmra.mxu0 %v597
  %v636 = vpop.f32.mrf.mxu0
  %v637 = vadd.f32 %v269, %v636
  %v638 = vpop.f32.mrf.mxu0
  %v639 = vpop.f32.mrf.mxu0
  %v640 = vpop.f32.mrf.mxu0
  %641 = vdwg.mxu0
  %v642 = vsel %vm317, %v637, -inf
  %643 = vmax.xlane.f32.xlu0 %v642
  %v644 = vpop.xlane.xlu0 %643
  %v645 = vsub.f32 %v637, %v644
  %v646 = vmul.f32 %v645, 1.442695
  %v647 = vpow.pop %v646
  %v648 = vsel %vm317, %v647, 0.0
  %649 = vadd.xlane.f32.xlu0 %v648
  %v650 = vpop.xlane.xlu0 %649
  %v651 = vrcp.pop %v650
  %v652 = vmul.f32 %v647, %v651
  %v653 = vpack.c.bf16 %v652, %v652
  %654 = vrot.lane.b32.xlu0 %v265, 104
  %v655 = vpop.permute.xlu0 %654
  %v658 = vsel %vm317, %v653, 0
  %660 = vmatprep.subr.bf16.mxu0 0
  %661 = vmatpush1.bf16.msra.mxu0 0
  %662 = vmatprep.subr.bf16.mxu0 0
  %663 = vmatpush1.bf16.msra.mxu0 0
  %664 = vmatprep.subr.bf16.mxu0 0
  %665 = vmatpush1.bf16.msra.mxu0 0
  %666 = vmatprep.subr.bf16.mxu0 0
  %667 = vmatpush1.bf16.msra.mxu0 0
  %668 = vmatprep.subr.bf16.mxu0 0
  %669 = vmatpush1.bf16.msra.mxu0 0
  %670 = vmatprep.subr.bf16.mxu0 0
  %671 = vmatpush1.bf16.msra.mxu0 0
  %672 = vmatprep.subr.bf16.mxu0 0
  %673 = vmatpush1.bf16.msra.mxu0 0
  %674 = vmatprep.subr.bf16.mxu0 0
  %675 = vmatpush1.bf16.msra.mxu0 %v655
  %676 = vmatprep.subr.bf16.mxu0 0
  %677 = vmatpush2.bf16.msra.mxu0 0
  %678 = vmatprep.subr.bf16.mxu0 0
  %679 = vmatpush2.bf16.msra.mxu0 0
  %680 = vmatprep.subr.bf16.mxu0 0
  %681 = vmatpush2.bf16.msra.mxu0 0
  %682 = vmatprep.subr.bf16.mxu0 0
  %683 = vmatpush2.bf16.msra.mxu0 0
  %684 = vmatprep.subr.bf16.mxu0 0
  %685 = vmatpush2.bf16.msra.mxu0 0
  %686 = vmatprep.subr.bf16.mxu0 0
  %687 = vmatpush2.bf16.msra.mxu0 0
  %688 = vmatprep.subr.bf16.mxu0 0
  %689 = vmatpush2.bf16.msra.mxu0 0
  %690 = vmatprep.subr.bf16.mxu0 0
  %691 = vmatpush2.bf16.msra.mxu0 0
  %692 = vmatprep.mubr.bf16.mxu0 0
  %693 = vmatmul.mubr.bf16.gmra.mxu0 %v658
  %v694 = vpop.f32.mrf.mxu0
  %v695 = vadd.f32 0.0, %v694
  %v696 = vpop.f32.mrf.mxu0
  %v697 = vpop.f32.mrf.mxu0
  %v698 = vpop.f32.mrf.mxu0
  %699 = vdwg.mxu0
  %701 = vrot.lane.b32.xlu0 %v479, 8
  %v702 = vpop.permute.xlu0 %701
  %705 = vrot.lane.b32.xlu0 %v587, 16
  %v706 = vpop.permute.xlu0 %705
  %709 = vrot.lane.b32.xlu0 %v695, 24
  %v710 = vpop.permute.xlu0 %709
  %v712 = vsel %vm270, %v368, %v702
  %v713 = vsel %vm317, %v712, %v706
  %vm714 = vcmask 195584
  %v715 = vsel %vm714, %v713, %v710
  %v716 = vpack.c.bf16 %v113, %v113
  %v717 = vpack.c.bf16 %v185, %v182
  %v718 = vpack.c.bf16 %v259, %v256
  %v719 = vlaneseq
  %v720 = vshrl.u32 %v719, 7
  %v721 = vsub.s32 1, %v720
  %v722 = vrot.slane %v262, %v721
  %v724 = vsel %vm270, %v716, 0
  %v727 = vsel %vm270, %v717, 0
  %729 = vmatprep.subr.bf16.mxu0 0
  %730 = vmatpush1.bf16.xpose.msra.mxu0 0
  %731 = vmatprep.subr.bf16.mxu0 0
  %732 = vmatpush1.bf16.xpose.msra.mxu0 0
  %733 = vmatprep.subr.bf16.mxu0 0
  %734 = vmatpush1.bf16.xpose.msra.mxu0 0
  %735 = vmatprep.subr.bf16.mxu0 0
  %736 = vmatpush1.bf16.xpose.msra.mxu0 0
  %737 = vmatprep.subr.bf16.mxu0 0
  %738 = vmatpush1.bf16.xpose.msra.mxu0 0
  %739 = vmatprep.subr.bf16.mxu0 0
  %740 = vmatpush1.bf16.xpose.msra.mxu0 0
  %741 = vmatprep.subr.bf16.mxu0 0
  %742 = vmatpush1.bf16.xpose.msra.mxu0 0
  %743 = vmatprep.subr.bf16.mxu0 0
  %744 = vmatpush1.bf16.xpose.msra.mxu0 %v727
  %745 = vmatprep.subr.bf16.mxu0 0
  %746 = vmatpush2.bf16.xpose.msra.mxu0 0
  %747 = vmatprep.subr.bf16.mxu0 0
  %748 = vmatpush2.bf16.xpose.msra.mxu0 0
  %749 = vmatprep.subr.bf16.mxu0 0
  %750 = vmatpush2.bf16.xpose.msra.mxu0 0
  %751 = vmatprep.subr.bf16.mxu0 0
  %752 = vmatpush2.bf16.xpose.msra.mxu0 0
  %753 = vmatprep.subr.bf16.mxu0 0
  %754 = vmatpush2.bf16.xpose.msra.mxu0 0
  %755 = vmatprep.subr.bf16.mxu0 0
  %756 = vmatpush2.bf16.xpose.msra.mxu0 0
  %757 = vmatprep.subr.bf16.mxu0 0
  %758 = vmatpush2.bf16.xpose.msra.mxu0 0
  %759 = vmatprep.subr.bf16.mxu0 0
  %760 = vmatpush2.bf16.xpose.msra.mxu0 0
  %761 = vmatprep.mubr.bf16.mxu0 0
  %762 = vmatmul.mubr.bf16.gmra.mxu0 %v724
  %v763 = vpop.f32.mrf.mxu0
  %v764 = vadd.f32 %v722, %v763
  %v765 = vpop.f32.mrf.mxu0
  %v766 = vpop.f32.mrf.mxu0
  %v767 = vpop.f32.mrf.mxu0
  %768 = vdwg.mxu0
  %v769 = vsel %vm317, %v764, -inf
  %770 = vmax.xlane.f32.xlu0 %v769
  %v771 = vpop.xlane.xlu0 %770
  %v772 = vsub.f32 %v764, %v771
  %v773 = vmul.f32 %v772, 1.442695
  %v774 = vpow.pop %v773
  %v775 = vsel %vm317, %v774, 0.0
  %776 = vadd.xlane.f32.xlu0 %v775
  %v777 = vpop.xlane.xlu0 %776
  %v778 = vrcp.pop %v777
  %v779 = vmul.f32 %v774, %v778
  %v780 = vpack.c.bf16 %v779, %v779
  %v782 = vsel %vm317, %v780, 0
  %784 = vmatprep.subr.bf16.mxu0 0
  %785 = vmatpush1.bf16.msra.mxu0 0
  %786 = vmatprep.subr.bf16.mxu0 0
  %787 = vmatpush1.bf16.msra.mxu0 0
  %788 = vmatprep.subr.bf16.mxu0 0
  %789 = vmatpush1.bf16.msra.mxu0 0
  %790 = vmatprep.subr.bf16.mxu0 0
  %791 = vmatpush1.bf16.msra.mxu0 0
  %792 = vmatprep.subr.bf16.mxu0 0
  %793 = vmatpush1.bf16.msra.mxu0 0
  %794 = vmatprep.subr.bf16.mxu0 0
  %795 = vmatpush1.bf16.msra.mxu0 0
  %796 = vmatprep.subr.bf16.mxu0 0
  %797 = vmatpush1.bf16.msra.mxu0 0
  %798 = vmatprep.subr.bf16.mxu0 0
  %799 = vmatpush1.bf16.msra.mxu0 %v718
  %800 = vmatprep.subr.bf16.mxu0 0
  %801 = vmatpush2.bf16.msra.mxu0 0
  %802 = vmatprep.subr.bf16.mxu0 0
  %803 = vmatpush2.bf16.msra.mxu0 0
  %804 = vmatprep.subr.bf16.mxu0 0
  %805 = vmatpush2.bf16.msra.mxu0 0
  %806 = vmatprep.subr.bf16.mxu0 0
  %807 = vmatpush2.bf16.msra.mxu0 0
  %808 = vmatprep.subr.bf16.mxu0 0
  %809 = vmatpush2.bf16.msra.mxu0 0
  %810 = vmatprep.subr.bf16.mxu0 0
  %811 = vmatpush2.bf16.msra.mxu0 0
  %812 = vmatprep.subr.bf16.mxu0 0
  %813 = vmatpush2.bf16.msra.mxu0 0
  %814 = vmatprep.subr.bf16.mxu0 0
  %815 = vmatpush2.bf16.msra.mxu0 0
  %816 = vmatprep.mubr.bf16.mxu0 0
  %817 = vmatmul.mubr.bf16.gmra.mxu0 %v782
  %v818 = vpop.f32.mrf.mxu0
  %v819 = vadd.f32 0.0, %v818
  %v820 = vpop.f32.mrf.mxu0
  %v821 = vpop.f32.mrf.mxu0
  %v822 = vpop.f32.mrf.mxu0
  %823 = vdwg.mxu0
  %825 = vrot.lane.b32.xlu0 %v716, 120
  %v826 = vpop.permute.xlu0 %825
  %828 = vrot.lane.b32.xlu0 %v717, 120
  %v829 = vpop.permute.xlu0 %828
  %v831 = vsel %vm270, %v826, 0
  %v834 = vsel %vm270, %v829, 0
  %836 = vmatprep.subr.bf16.mxu0 0
  %837 = vmatpush1.bf16.xpose.msra.mxu0 0
  %838 = vmatprep.subr.bf16.mxu0 0
  %839 = vmatpush1.bf16.xpose.msra.mxu0 0
  %840 = vmatprep.subr.bf16.mxu0 0
  %841 = vmatpush1.bf16.xpose.msra.mxu0 0
  %842 = vmatprep.subr.bf16.mxu0 0
  %843 = vmatpush1.bf16.xpose.msra.mxu0 0
  %844 = vmatprep.subr.bf16.mxu0 0
  %845 = vmatpush1.bf16.xpose.msra.mxu0 0
  %846 = vmatprep.subr.bf16.mxu0 0
  %847 = vmatpush1.bf16.xpose.msra.mxu0 0
  %848 = vmatprep.subr.bf16.mxu0 0
  %849 = vmatpush1.bf16.xpose.msra.mxu0 0
  %850 = vmatprep.subr.bf16.mxu0 0
  %851 = vmatpush1.bf16.xpose.msra.mxu0 %v834
  %852 = vmatprep.subr.bf16.mxu0 0
  %853 = vmatpush2.bf16.xpose.msra.mxu0 0
  %854 = vmatprep.subr.bf16.mxu0 0
  %855 = vmatpush2.bf16.xpose.msra.mxu0 0
  %856 = vmatprep.subr.bf16.mxu0 0
  %857 = vmatpush2.bf16.xpose.msra.mxu0 0
  %858 = vmatprep.subr.bf16.mxu0 0
  %859 = vmatpush2.bf16.xpose.msra.mxu0 0
  %860 = vmatprep.subr.bf16.mxu0 0
  %861 = vmatpush2.bf16.xpose.msra.mxu0 0
  %862 = vmatprep.subr.bf16.mxu0 0
  %863 = vmatpush2.bf16.xpose.msra.mxu0 0
  %864 = vmatprep.subr.bf16.mxu0 0
  %865 = vmatpush2.bf16.xpose.msra.mxu0 0
  %866 = vmatprep.subr.bf16.mxu0 0
  %867 = vmatpush2.bf16.xpose.msra.mxu0 0
  %868 = vmatprep.mubr.bf16.mxu0 0
  %869 = vmatmul.mubr.bf16.gmra.mxu0 %v831
  %v870 = vpop.f32.mrf.mxu0
  %v871 = vadd.f32 %v722, %v870
  %v872 = vpop.f32.mrf.mxu0
  %v873 = vpop.f32.mrf.mxu0
  %v874 = vpop.f32.mrf.mxu0
  %875 = vdwg.mxu0
  %v876 = vsel %vm317, %v871, -inf
  %877 = vmax.xlane.f32.xlu0 %v876
  %v878 = vpop.xlane.xlu0 %877
  %v879 = vsub.f32 %v871, %v878
  %v880 = vmul.f32 %v879, 1.442695
  %v881 = vpow.pop %v880
  %v882 = vsel %vm317, %v881, 0.0
  %883 = vadd.xlane.f32.xlu0 %v882
  %v884 = vpop.xlane.xlu0 %883
  %v885 = vrcp.pop %v884
  %v886 = vmul.f32 %v881, %v885
  %v887 = vpack.c.bf16 %v886, %v886
  %889 = vrot.lane.b32.xlu0 %v718, 120
  %v890 = vpop.permute.xlu0 %889
  %v893 = vsel %vm317, %v887, 0
  %895 = vmatprep.subr.bf16.mxu0 0
  %896 = vmatpush1.bf16.msra.mxu0 0
  %897 = vmatprep.subr.bf16.mxu0 0
  %898 = vmatpush1.bf16.msra.mxu0 0
  %899 = vmatprep.subr.bf16.mxu0 0
  %900 = vmatpush1.bf16.msra.mxu0 0
  %901 = vmatprep.subr.bf16.mxu0 0
  %902 = vmatpush1.bf16.msra.mxu0 0
  %903 = vmatprep.subr.bf16.mxu0 0
  %904 = vmatpush1.bf16.msra.mxu0 0
  %905 = vmatprep.subr.bf16.mxu0 0
  %906 = vmatpush1.bf16.msra.mxu0 0
  %907 = vmatprep.subr.bf16.mxu0 0
  %908 = vmatpush1.bf16.msra.mxu0 0
  %909 = vmatprep.subr.bf16.mxu0 0
  %910 = vmatpush1.bf16.msra.mxu0 %v890
  %911 = vmatprep.subr.bf16.mxu0 0
  %912 = vmatpush2.bf16.msra.mxu0 0
  %913 = vmatprep.subr.bf16.mxu0 0
  %914 = vmatpush2.bf16.msra.mxu0 0
  %915 = vmatprep.subr.bf16.mxu0 0
  %916 = vmatpush2.bf16.msra.mxu0 0
  %917 = vmatprep.subr.bf16.mxu0 0
  %918 = vmatpush2.bf16.msra.mxu0 0
  %919 = vmatprep.subr.bf16.mxu0 0
  %920 = vmatpush2.bf16.msra.mxu0 0
  %921 = vmatprep.subr.bf16.mxu0 0
  %922 = vmatpush2.bf16.msra.mxu0 0
  %923 = vmatprep.subr.bf16.mxu0 0
  %924 = vmatpush2.bf16.msra.mxu0 0
  %925 = vmatprep.subr.bf16.mxu0 0
  %926 = vmatpush2.bf16.msra.mxu0 0
  %927 = vmatprep.mubr.bf16.mxu0 0
  %928 = vmatmul.mubr.bf16.gmra.mxu0 %v893
  %v929 = vpop.f32.mrf.mxu0
  %v930 = vadd.f32 0.0, %v929
  %v931 = vpop.f32.mrf.mxu0
  %v932 = vpop.f32.mrf.mxu0
  %v933 = vpop.f32.mrf.mxu0
  %934 = vdwg.mxu0
  %935 = vrot.lane.b32.xlu0 %v716, 112
  %v936 = vpop.permute.xlu0 %935
  %937 = vrot.lane.b32.xlu0 %v717, 112
  %v938 = vpop.permute.xlu0 %937
  %v940 = vsel %vm270, %v936, 0
  %v943 = vsel %vm270, %v938, 0
  %945 = vmatprep.subr.bf16.mxu0 0
  %946 = vmatpush1.bf16.xpose.msra.mxu0 0
  %947 = vmatprep.subr.bf16.mxu0 0
  %948 = vmatpush1.bf16.xpose.msra.mxu0 0
  %949 = vmatprep.subr.bf16.mxu0 0
  %950 = vmatpush1.bf16.xpose.msra.mxu0 0
  %951 = vmatprep.subr.bf16.mxu0 0
  %952 = vmatpush1.bf16.xpose.msra.mxu0 0
  %953 = vmatprep.subr.bf16.mxu0 0
  %954 = vmatpush1.bf16.xpose.msra.mxu0 0
  %955 = vmatprep.subr.bf16.mxu0 0
  %956 = vmatpush1.bf16.xpose.msra.mxu0 0
  %957 = vmatprep.subr.bf16.mxu0 0
  %958 = vmatpush1.bf16.xpose.msra.mxu0 0
  %959 = vmatprep.subr.bf16.mxu0 0
  %960 = vmatpush1.bf16.xpose.msra.mxu0 %v943
  %961 = vmatprep.subr.bf16.mxu0 0
  %962 = vmatpush2.bf16.xpose.msra.mxu0 0
  %963 = vmatprep.subr.bf16.mxu0 0
  %964 = vmatpush2.bf16.xpose.msra.mxu0 0
  %965 = vmatprep.subr.bf16.mxu0 0
  %966 = vmatpush2.bf16.xpose.msra.mxu0 0
  %967 = vmatprep.subr.bf16.mxu0 0
  %968 = vmatpush2.bf16.xpose.msra.mxu0 0
  %969 = vmatprep.subr.bf16.mxu0 0
  %970 = vmatpush2.bf16.xpose.msra.mxu0 0
  %971 = vmatprep.subr.bf16.mxu0 0
  %972 = vmatpush2.bf16.xpose.msra.mxu0 0
  %973 = vmatprep.subr.bf16.mxu0 0
  %974 = vmatpush2.bf16.xpose.msra.mxu0 0
  %975 = vmatprep.subr.bf16.mxu0 0
  %976 = vmatpush2.bf16.xpose.msra.mxu0 0
  %977 = vmatprep.mubr.bf16.mxu0 0
  %978 = vmatmul.mubr.bf16.gmra.mxu0 %v940
  %v979 = vpop.f32.mrf.mxu0
  %v980 = vadd.f32 %v722, %v979
  %v981 = vpop.f32.mrf.mxu0
  %v982 = vpop.f32.mrf.mxu0
  %v983 = vpop.f32.mrf.mxu0
  %984 = vdwg.mxu0
  %v985 = vsel %vm317, %v980, -inf
  %986 = vmax.xlane.f32.xlu0 %v985
  %v987 = vpop.xlane.xlu0 %986
  %v988 = vsub.f32 %v980, %v987
  %v989 = vmul.f32 %v988, 1.442695
  %v990 = vpow.pop %v989
  %v991 = vsel %vm317, %v990, 0.0
  %992 = vadd.xlane.f32.xlu0 %v991
  %v993 = vpop.xlane.xlu0 %992
  %v994 = vrcp.pop %v993
  %v995 = vmul.f32 %v990, %v994
  %v996 = vpack.c.bf16 %v995, %v995
  %997 = vrot.lane.b32.xlu0 %v718, 112
  %v998 = vpop.permute.xlu0 %997
  %v1001 = vsel %vm317, %v996, 0
  %1003 = vmatprep.subr.bf16.mxu0 0
  %1004 = vmatpush1.bf16.msra.mxu0 0
  %1005 = vmatprep.subr.bf16.mxu0 0
  %1006 = vmatpush1.bf16.msra.mxu0 0
  %1007 = vmatprep.subr.bf16.mxu0 0
  %1008 = vmatpush1.bf16.msra.mxu0 0
  %1009 = vmatprep.subr.bf16.mxu0 0
  %1010 = vmatpush1.bf16.msra.mxu0 0
  %1011 = vmatprep.subr.bf16.mxu0 0
  %1012 = vmatpush1.bf16.msra.mxu0 0
  %1013 = vmatprep.subr.bf16.mxu0 0
  %1014 = vmatpush1.bf16.msra.mxu0 0
  %1015 = vmatprep.subr.bf16.mxu0 0
  %1016 = vmatpush1.bf16.msra.mxu0 0
  %1017 = vmatprep.subr.bf16.mxu0 0
  %1018 = vmatpush1.bf16.msra.mxu0 %v998
  %1019 = vmatprep.subr.bf16.mxu0 0
  %1020 = vmatpush2.bf16.msra.mxu0 0
  %1021 = vmatprep.subr.bf16.mxu0 0
  %1022 = vmatpush2.bf16.msra.mxu0 0
  %1023 = vmatprep.subr.bf16.mxu0 0
  %1024 = vmatpush2.bf16.msra.mxu0 0
  %1025 = vmatprep.subr.bf16.mxu0 0
  %1026 = vmatpush2.bf16.msra.mxu0 0
  %1027 = vmatprep.subr.bf16.mxu0 0
  %1028 = vmatpush2.bf16.msra.mxu0 0
  %1029 = vmatprep.subr.bf16.mxu0 0
  %1030 = vmatpush2.bf16.msra.mxu0 0
  %1031 = vmatprep.subr.bf16.mxu0 0
  %1032 = vmatpush2.bf16.msra.mxu0 0
  %1033 = vmatprep.subr.bf16.mxu0 0
  %1034 = vmatpush2.bf16.msra.mxu0 0
  %1035 = vmatprep.mubr.bf16.mxu0 0
  %1036 = vmatmul.mubr.bf16.gmra.mxu0 %v1001
  %v1037 = vpop.f32.mrf.mxu0
  %v1038 = vadd.f32 0.0, %v1037
  %v1039 = vpop.f32.mrf.mxu0
  %v1040 = vpop.f32.mrf.mxu0
  %v1041 = vpop.f32.mrf.mxu0
  %1042 = vdwg.mxu0
  %1043 = vrot.lane.b32.xlu0 %v716, 104
  %v1044 = vpop.permute.xlu0 %1043
  %1045 = vrot.lane.b32.xlu0 %v717, 104
  %v1046 = vpop.permute.xlu0 %1045
  %v1048 = vsel %vm270, %v1044, 0
  %v1051 = vsel %vm270, %v1046, 0
  %1053 = vmatprep.subr.bf16.mxu0 0
  %1054 = vmatpush1.bf16.xpose.msra.mxu0 0
  %1055 = vmatprep.subr.bf16.mxu0 0
  %1056 = vmatpush1.bf16.xpose.msra.mxu0 0
  %1057 = vmatprep.subr.bf16.mxu0 0
  %1058 = vmatpush1.bf16.xpose.msra.mxu0 0
  %1059 = vmatprep.subr.bf16.mxu0 0
  %1060 = vmatpush1.bf16.xpose.msra.mxu0 0
  %1061 = vmatprep.subr.bf16.mxu0 0
  %1062 = vmatpush1.bf16.xpose.msra.mxu0 0
  %1063 = vmatprep.subr.bf16.mxu0 0
  %1064 = vmatpush1.bf16.xpose.msra.mxu0 0
  %1065 = vmatprep.subr.bf16.mxu0 0
  %1066 = vmatpush1.bf16.xpose.msra.mxu0 0
  %1067 = vmatprep.subr.bf16.mxu0 0
  %1068 = vmatpush1.bf16.xpose.msra.mxu0 %v1051
  %1069 = vmatprep.subr.bf16.mxu0 0
  %1070 = vmatpush2.bf16.xpose.msra.mxu0 0
  %1071 = vmatprep.subr.bf16.mxu0 0
  %1072 = vmatpush2.bf16.xpose.msra.mxu0 0
  %1073 = vmatprep.subr.bf16.mxu0 0
  %1074 = vmatpush2.bf16.xpose.msra.mxu0 0
  %1075 = vmatprep.subr.bf16.mxu0 0
  %1076 = vmatpush2.bf16.xpose.msra.mxu0 0
  %1077 = vmatprep.subr.bf16.mxu0 0
  %1078 = vmatpush2.bf16.xpose.msra.mxu0 0
  %1079 = vmatprep.subr.bf16.mxu0 0
  %1080 = vmatpush2.bf16.xpose.msra.mxu0 0
  %1081 = vmatprep.subr.bf16.mxu0 0
  %1082 = vmatpush2.bf16.xpose.msra.mxu0 0
  %1083 = vmatprep.subr.bf16.mxu0 0
  %1084 = vmatpush2.bf16.xpose.msra.mxu0 0
  %1085 = vmatprep.mubr.bf16.mxu0 0
  %1086 = vmatmul.mubr.bf16.gmra.mxu0 %v1048
  %v1087 = vpop.f32.mrf.mxu0
  %v1088 = vadd.f32 %v722, %v1087
  %v1089 = vpop.f32.mrf.mxu0
  %v1090 = vpop.f32.mrf.mxu0
  %v1091 = vpop.f32.mrf.mxu0
  %1092 = vdwg.mxu0
  %v1093 = vsel %vm317, %v1088, -inf
  %1094 = vmax.xlane.f32.xlu0 %v1093
  %v1095 = vpop.xlane.xlu0 %1094
  %v1096 = vsub.f32 %v1088, %v1095
  %v1097 = vmul.f32 %v1096, 1.442695
  %v1098 = vpow.pop %v1097
  %v1099 = vsel %vm317, %v1098, 0.0
  %1100 = vadd.xlane.f32.xlu0 %v1099
  %v1101 = vpop.xlane.xlu0 %1100
  %v1102 = vrcp.pop %v1101
  %v1103 = vmul.f32 %v1098, %v1102
  %v1104 = vpack.c.bf16 %v1103, %v1103
  %1105 = vrot.lane.b32.xlu0 %v718, 104
  %v1106 = vpop.permute.xlu0 %1105
  %v1109 = vsel %vm317, %v1104, 0
  %1111 = vmatprep.subr.bf16.mxu0 0
  %1112 = vmatpush1.bf16.msra.mxu0 0
  %1113 = vmatprep.subr.bf16.mxu0 0
  %1114 = vmatpush1.bf16.msra.mxu0 0
  %1115 = vmatprep.subr.bf16.mxu0 0
  %1116 = vmatpush1.bf16.msra.mxu0 0
  %1117 = vmatprep.subr.bf16.mxu0 0
  %1118 = vmatpush1.bf16.msra.mxu0 0
  %1119 = vmatprep.subr.bf16.mxu0 0
  %1120 = vmatpush1.bf16.msra.mxu0 0
  %1121 = vmatprep.subr.bf16.mxu0 0
  %1122 = vmatpush1.bf16.msra.mxu0 0
  %1123 = vmatprep.subr.bf16.mxu0 0
  %1124 = vmatpush1.bf16.msra.mxu0 0
  %1125 = vmatprep.subr.bf16.mxu0 0
  %1126 = vmatpush1.bf16.msra.mxu0 %v1106
  %1127 = vmatprep.subr.bf16.mxu0 0
  %1128 = vmatpush2.bf16.msra.mxu0 0
  %1129 = vmatprep.subr.bf16.mxu0 0
  %1130 = vmatpush2.bf16.msra.mxu0 0
  %1131 = vmatprep.subr.bf16.mxu0 0
  %1132 = vmatpush2.bf16.msra.mxu0 0
  %1133 = vmatprep.subr.bf16.mxu0 0
  %1134 = vmatpush2.bf16.msra.mxu0 0
  %1135 = vmatprep.subr.bf16.mxu0 0
  %1136 = vmatpush2.bf16.msra.mxu0 0
  %1137 = vmatprep.subr.bf16.mxu0 0
  %1138 = vmatpush2.bf16.msra.mxu0 0
  %1139 = vmatprep.subr.bf16.mxu0 0
  %1140 = vmatpush2.bf16.msra.mxu0 0
  %1141 = vmatprep.subr.bf16.mxu0 0
  %1142 = vmatpush2.bf16.msra.mxu0 0
  %1143 = vmatprep.mubr.bf16.mxu0 0
  %1144 = vmatmul.mubr.bf16.gmra.mxu0 %v1109
  %v1145 = vpop.f32.mrf.mxu0
  %v1146 = vadd.f32 0.0, %v1145
  %v1147 = vpop.f32.mrf.mxu0
  %v1148 = vpop.f32.mrf.mxu0
  %v1149 = vpop.f32.mrf.mxu0
  %1150 = vdwg.mxu0
  %1152 = vrot.lane.b32.xlu0 %v930, 8
  %v1153 = vpop.permute.xlu0 %1152
  %1156 = vrot.lane.b32.xlu0 %v1038, 16
  %v1157 = vpop.permute.xlu0 %1156
  %1160 = vrot.lane.b32.xlu0 %v1146, 24
  %v1161 = vpop.permute.xlu0 %1160
  %v1163 = vsel %vm270, %v819, %v1153
  %v1164 = vsel %vm317, %v1163, %v1157
  %v1165 = vsel %vm714, %v1164, %v1161
  %v1166 = vpack.c.bf16 %v1165, %v715
  %v1167 = vld [vmem:[%s11] sm:$0xff]
  %v1168 = vld [vmem:[%s11 + $0x8] sm:$0xff]
  %v1169 = vld [vmem:[%s11 + $0x10] sm:$0xff]
  %v1170 = vld [vmem:[%s11 + $0x18] sm:$0xff]
  %v1171 = vpack.c.bf16 %v1168, %v1167
  %v1172 = vpack.c.bf16 %v1170, %v1169
  %v1173 = vld [vmem:[%s12] sm:$0x1]
  %v1175 = vlaneseq
  %v1176 = vshrl.u32 %v1175, 7
  %v1177 = vsub.s32 0, %v1176
  %v1178 = vrot.slane %v1173, %v1177
  %v1181 = vsel %vm67, %v1166, 0
  %1183 = vmatprep.subr.bf16.mxu0 0
  %1184 = vmatpush1.bf16.msra.mxu0 0
  %1185 = vmatprep.subr.bf16.mxu0 0
  %1186 = vmatpush1.bf16.msra.mxu0 0
  %1187 = vmatprep.subr.bf16.mxu0 0
  %1188 = vmatpush1.bf16.msra.mxu0 0
  %1189 = vmatprep.subr.bf16.mxu0 0
  %1190 = vmatpush1.bf16.msra.mxu0 0
  %1191 = vmatprep.subr.bf16.mxu0 0
  %1192 = vmatpush1.bf16.msra.mxu0 0
  %1193 = vmatprep.subr.bf16.mxu0 0
  %1194 = vmatpush1.bf16.msra.mxu0 0
  %1195 = vmatprep.subr.bf16.mxu0 0
  %1196 = vmatpush1.bf16.msra.mxu0 %v1172
  %1197 = vmatprep.subr.bf16.mxu0 0
  %1198 = vmatpush1.bf16.msra.mxu0 %v1171
  %1199 = vmatprep.subr.bf16.mxu0 0
  %1200 = vmatpush2.bf16.msra.mxu0 0
  %1201 = vmatprep.subr.bf16.mxu0 0
  %1202 = vmatpush2.bf16.msra.mxu0 0
  %1203 = vmatprep.subr.bf16.mxu0 0
  %1204 = vmatpush2.bf16.msra.mxu0 0
  %1205 = vmatprep.subr.bf16.mxu0 0
  %1206 = vmatpush2.bf16.msra.mxu0 0
  %1207 = vmatprep.subr.bf16.mxu0 0
  %1208 = vmatpush2.bf16.msra.mxu0 0
  %1209 = vmatprep.subr.bf16.mxu0 0
  %1210 = vmatpush2.bf16.msra.mxu0 0
  %1211 = vmatprep.subr.bf16.mxu0 0
  %1212 = vmatpush2.bf16.msra.mxu0 0
  %1213 = vmatprep.subr.bf16.mxu0 0
  %1214 = vmatpush2.bf16.msra.mxu0 0
  %1215 = vmatprep.mubr.bf16.mxu0 0
  %1216 = vmatmul.mubr.bf16.gmra.mxu0 %v1181
  %v1217 = vpop.f32.mrf.mxu0
  %v1218 = vadd.f32 %v1178, %v1217
  %v1219 = vpop.f32.mrf.mxu0
  %v1220 = vpop.f32.mrf.mxu0
  %v1221 = vadd.f32 %v1178, %v1220
  %v1222 = vpop.f32.mrf.mxu0
  %1223 = vdwg.mxu0
  %v1224 = vld [vmem:[%s3] sm:$0xff]
  %v1225 = vld [vmem:[%s3 + $0x8] sm:$0xff]
  %v1226 = vadd.f32 %v1224, %v1218
  %v1227 = vadd.f32 %v1225, %v1221
  %v1228 = vld [vmem:[%s13] sm:$0x1]
  %v1229 = vld [vmem:[%s14] sm:$0x1]
  %v1230 = vsel %vm67, %v1226, 0.0
  %1231 = vadd.xlane.f32.xlu0 %v1230
  %v1232 = vpop.xlane.xlu0 %1231
  %v1233 = vsel %vm67, %v1227, 0.0
  %1234 = vadd.xlane.f32.xlu0 %v1233
  %v1235 = vpop.xlane.xlu0 %1234
  %v1236 = vrcp.pop 32.0
  %v1237 = vmul.f32 %v1232, %v1236
  %v1238 = vmul.f32 %v1235, %v1236
  %v1239 = vsub.f32 %v1226, %v1237
  %v1240 = vsub.f32 %v1227, %v1238
  %v1241 = vmul.f32 %v1239, %v1239
  %v1242 = vmul.f32 %v1240, %v1240
  %v1243 = vsel %vm67, %v1241, 0.0
  %1244 = vadd.xlane.f32.xlu0 %v1243
  %v1245 = vpop.xlane.xlu0 %1244
  %v1246 = vsel %vm67, %v1242, 0.0
  %1247 = vadd.xlane.f32.xlu0 %v1246
  %v1248 = vpop.xlane.xlu0 %1247
  %v1249 = vmul.f32 %v1245, %v1236
  %v1250 = vmul.f32 %v1248, %v1236
  %v1251 = vadd.f32 %v1249, 1e-05
  %v1252 = vadd.f32 %v1250, 1e-05
  %v1253 = vrsqrt.pop %v1251
  %v1254 = vrsqrt.pop %v1252
  %v1255 = vmul.f32 %v1239, %v1253
  %v1256 = vmul.f32 %v1240, %v1254
  %v1258 = vlaneseq
  %v1259 = vshrl.u32 %v1258, 7
  %v1260 = vsub.s32 0, %v1259
  %v1261 = vrot.slane %v1228, %v1260
  %v1263 = vmul.f32 %v1255, %v1261
  %v1264 = vmul.f32 %v1256, %v1261
  %v1266 = vlaneseq
  %v1267 = vshrl.u32 %v1266, 7
  %v1268 = vsub.s32 0, %v1267
  %v1269 = vrot.slane %v1229, %v1268
  %v1271 = vadd.f32 %v1263, %v1269
  %v1272 = vadd.f32 %v1264, %v1269
  %1273 = vst.msk [vmem:[%s15] sm:$0xff] %vm67, %v1271
  %1274 = vst.msk [vmem:[%s15 + $0x8] sm:$0xff] %vm67, %v1272
  // Predicated region
  $region62: #{transformer_forward.29} parent=0 // pred_check
    _
  $region63: #{transformer_forward.29} parent=0 // pred_check_branch
    %1276 = sbr.rel (0) target = $region65
  $region64: #{transformer_forward.29} parent=0 // pred_region
    _
  $region65: #{transformer_forward.29} parent=0 // pred_fallthru
    _
  // Predicated region
  $region66: #{transformer_forward.29} parent=0 // pred_check
    _
  $region67: #{transformer_forward.29} parent=0 // pred_check_branch
    %1278 = sbr.rel (0) target = $region69
  $region68: #{transformer_forward.29} parent=0 // pred_region
    _
  $region69: #{transformer_forward.29} parent=0 // pred_fallthru
    _

// kernel: transformer_forward.30
$region0: #{transformer_forward.30}
  #allocation0 [shape = 'u32[]', space=smem, size = 0x4, offset = 0x4, fixed_abs, tag = 'smem constant byte address 0x4 - core index']
  #allocation1 [shape = 'u32[144,128]{1,0:T(1,128)}', space=vmem, size = 0x12000, scoped, tag = 'internal scratch']
  %s0 = inlined_call_operand.vmem [shape: f32[16,32], index: 0, kind: input, shape index: {}]
  %s1 = inlined_call_operand.vmem [shape: f32[32,64], index: 1, kind: input, shape index: {}]
  %s2 = inlined_call_operand.vmem [shape: f32[1,64], index: 2, kind: input, shape index: {}]
  %s3 = inlined_call_operand.vmem [shape: f32[64,32], index: 3, kind: input, shape index: {}]
  %s4 = inlined_call_operand.vmem [shape: f32[1,32], index: 4, kind: input, shape index: {}]
  %s5 = inlined_call_operand.vmem [shape: f32[1,32], index: 5, kind: input, shape index: {}]
  %s6 = inlined_call_operand.vmem [shape: f32[1,32], index: 6, kind: input, shape index: {}]
  %s7 = inlined_call_operand.vmem [shape: f32[16,32], index: 7, kind: output, shape index: {}]
  %s8 = sld [smem:[#allocation0]]
  $region38: #{transformer_forward.30} parent=0
    _
  %s10 = ssub.s32 1, %s8
  %s11 = scalar_select 0, %s10, %s8
  // Predicated region
  $region2: #{transformer_forward.30} parent=0 // pred_check
    _
  $region3: #{transformer_forward.30} parent=0 // pred_check_branch
    %13 = sbr.rel (0) target = $region5
  $region4: #{transformer_forward.30} parent=0 // pred_region
    _
  $region5: #{transformer_forward.30} parent=0 // pred_fallthru
    _
  // Predicated region
  $region6: #{transformer_forward.30} parent=0 // pred_check
    _
  $region7: #{transformer_forward.30} parent=0 // pred_check_branch
    %15 = sbr.rel (0) target = $region9
  $region8: #{transformer_forward.30} parent=0 // pred_region
    _
  $region9: #{transformer_forward.30} parent=0 // pred_fallthru
    _
  // Predicated region
  $region10: #{transformer_forward.30} parent=0 // pred_check
    _
  $region11: #{transformer_forward.30} parent=0 // pred_check_branch
    %17 = sbr.rel (0) target = $region13
  $region12: #{transformer_forward.30} parent=0 // pred_region
    _
  $region13: #{transformer_forward.30} parent=0 // pred_fallthru
    _
  // Predicated region
  $region14: #{transformer_forward.30} parent=0 // pred_check
    _
  $region15: #{transformer_forward.30} parent=0 // pred_check_branch
    %19 = sbr.rel (0) target = $region17
  $region16: #{transformer_forward.30} parent=0 // pred_region
    _
  $region17: #{transformer_forward.30} parent=0 // pred_fallthru
    _
  // Predicated region
  $region18: #{transformer_forward.30} parent=0 // pred_check
    _
  $region19: #{transformer_forward.30} parent=0 // pred_check_branch
    %21 = sbr.rel (0) target = $region21
  $region20: #{transformer_forward.30} parent=0 // pred_region
    _
  $region21: #{transformer_forward.30} parent=0 // pred_fallthru
    _
  // Predicated region
  $region22: #{transformer_forward.30} parent=0 // pred_check
    _
  $region23: #{transformer_forward.30} parent=0 // pred_check_branch
    %23 = sbr.rel (0) target = $region25
  $region24: #{transformer_forward.30} parent=0 // pred_region
    _
  $region25: #{transformer_forward.30} parent=0 // pred_fallthru
    _
  // Predicated region
  $region26: #{transformer_forward.30} parent=0 // pred_check
    _
  $region27: #{transformer_forward.30} parent=0 // pred_check_branch
    %25 = sbr.rel (0) target = $region29
  $region28: #{transformer_forward.30} parent=0 // pred_region
    _
  $region29: #{transformer_forward.30} parent=0 // pred_fallthru
    _
  %v27 = vld [vmem:[%s0] sm:$0xff]
  %v28 = vld [vmem:[%s0 + $0x8] sm:$0xff]
  %v29 = vpack.c.bf16 %v28, %v27
  %v30 = vld [vmem:[%s1] sm:$0xff]
  %v31 = vld [vmem:[%s1 + $0x8] sm:$0xff]
  %v32 = vld [vmem:[%s1 + $0x10] sm:$0xff]
  %v33 = vld [vmem:[%s1 + $0x18] sm:$0xff]
  %v34 = vpack.c.bf16 %v31, %v30
  %v35 = vpack.c.bf16 %v33, %v32
  %v36 = vld [vmem:[%s2] sm:$0x1]
  %v38 = vlaneseq
  %v39 = vshrl.u32 %v38, 7
  %v40 = vsub.s32 0, %v39
  %v41 = vrot.slane %v36, %v40
  %vm43 = vcmask 261120
  %v45 = vsel %vm43, %v29, 0
  %47 = vmatprep.subr.bf16.mxu0 0
  %48 = vmatpush1.bf16.msra.mxu0 0
  %49 = vmatprep.subr.bf16.mxu0 0
  %50 = vmatpush1.bf16.msra.mxu0 0
  %51 = vmatprep.subr.bf16.mxu0 0
  %52 = vmatpush1.bf16.msra.mxu0 0
  %53 = vmatprep.subr.bf16.mxu0 0
  %54 = vmatpush1.bf16.msra.mxu0 0
  %55 = vmatprep.subr.bf16.mxu0 0
  %56 = vmatpush1.bf16.msra.mxu0 0
  %57 = vmatprep.subr.bf16.mxu0 0
  %58 = vmatpush1.bf16.msra.mxu0 0
  %59 = vmatprep.subr.bf16.mxu0 0
  %60 = vmatpush1.bf16.msra.mxu0 %v35
  %61 = vmatprep.subr.bf16.mxu0 0
  %62 = vmatpush1.bf16.msra.mxu0 %v34
  %63 = vmatprep.subr.bf16.mxu0 0
  %64 = vmatpush2.bf16.msra.mxu0 0
  %65 = vmatprep.subr.bf16.mxu0 0
  %66 = vmatpush2.bf16.msra.mxu0 0
  %67 = vmatprep.subr.bf16.mxu0 0
  %68 = vmatpush2.bf16.msra.mxu0 0
  %69 = vmatprep.subr.bf16.mxu0 0
  %70 = vmatpush2.bf16.msra.mxu0 0
  %71 = vmatprep.subr.bf16.mxu0 0
  %72 = vmatpush2.bf16.msra.mxu0 0
  %73 = vmatprep.subr.bf16.mxu0 0
  %74 = vmatpush2.bf16.msra.mxu0 0
  %75 = vmatprep.subr.bf16.mxu0 0
  %76 = vmatpush2.bf16.msra.mxu0 0
  %77 = vmatprep.subr.bf16.mxu0 0
  %78 = vmatpush2.bf16.msra.mxu0 0
  %79 = vmatprep.mubr.bf16.mxu0 0
  %80 = vmatmul.mubr.bf16.gmra.mxu0 %v45
  %v81 = vpop.f32.mrf.mxu0
  %v82 = vadd.f32 %v41, %v81
  %v83 = vpop.f32.mrf.mxu0
  %v84 = vpop.f32.mrf.mxu0
  %v85 = vadd.f32 %v41, %v84
  %v86 = vpop.f32.mrf.mxu0
  %87 = vdwg.mxu0
  %v88 = vmax.f32 %v82, 0.0
  %v89 = vmax.f32 %v85, 0.0
  %v90 = vpack.c.bf16 %v89, %v88
  %v91 = vld [vmem:[%s3] sm:$0xff]
  %v92 = vld [vmem:[%s3 + $0x8] sm:$0xff]
  %v93 = vld [vmem:[%s3 + $0x10] sm:$0xff]
  %v94 = vld [vmem:[%s3 + $0x18] sm:$0xff]
  %v95 = vld [vmem:[%s3 + $0x20] sm:$0xff]
  %v96 = vld [vmem:[%s3 + $0x28] sm:$0xff]
  %v97 = vld [vmem:[%s3 + $0x30] sm:$0xff]
  %v98 = vld [vmem:[%s3 + $0x38] sm:$0xff]
  %v99 = vpack.c.bf16 %v92, %v91
  %v100 = vpack.c.bf16 %v94, %v93
  %v101 = vpack.c.bf16 %v96, %v95
  %v102 = vpack.c.bf16 %v98, %v97
  %v103 = vld [vmem:[%s4] sm:$0x1]
  %v105 = vlaneseq
  %v106 = vshrl.u32 %v105, 7
  %v107 = vsub.s32 0, %v106
  %v108 = vrot.slane %v103, %v107
  %vm110 = vcmask 523264
  %v112 = vsel %vm110, %v90, 0
  %114 = vmatprep.subr.bf16.mxu0 0
  %115 = vmatpush1.bf16.msra.mxu0 0
  %116 = vmatprep.subr.bf16.mxu0 0
  %117 = vmatpush1.bf16.msra.mxu0 0
  %118 = vmatprep.subr.bf16.mxu0 0
  %119 = vmatpush1.bf16.msra.mxu0 0
  %120 = vmatprep.subr.bf16.mxu0 0
  %121 = vmatpush1.bf16.msra.mxu0 0
  %122 = vmatprep.subr.bf16.mxu0 0
  %123 = vmatpush1.bf16.msra.mxu0 %v102
  %124 = vmatprep.subr.bf16.mxu0 0
  %125 = vmatpush1.bf16.msra.mxu0 %v101
  %126 = vmatprep.subr.bf16.mxu0 0
  %127 = vmatpush1.bf16.msra.mxu0 %v100
  %128 = vmatprep.subr.bf16.mxu0 0
  %129 = vmatpush1.bf16.msra.mxu0 %v99
  %130 = vmatprep.subr.bf16.mxu0 0
  %131 = vmatpush2.bf16.msra.mxu0 0
  %132 = vmatprep.subr.bf16.mxu0 0
  %133 = vmatpush2.bf16.msra.mxu0 0
  %134 = vmatprep.subr.bf16.mxu0 0
  %135 = vmatpush2.bf16.msra.mxu0 0
  %136 = vmatprep.subr.bf16.mxu0 0
  %137 = vmatpush2.bf16.msra.mxu0 0
  %138 = vmatprep.subr.bf16.mxu0 0
  %139 = vmatpush2.bf16.msra.mxu0 0
  %140 = vmatprep.subr.bf16.mxu0 0
  %141 = vmatpush2.bf16.msra.mxu0 0
  %142 = vmatprep.subr.bf16.mxu0 0
  %143 = vmatpush2.bf16.msra.mxu0 0
  %144 = vmatprep.subr.bf16.mxu0 0
  %145 = vmatpush2.bf16.msra.mxu0 0
  %146 = vmatprep.mubr.bf16.mxu0 0
  %147 = vmatmul.mubr.bf16.gmra.mxu0 %v112
  %v148 = vpop.f32.mrf.mxu0
  %v149 = vadd.f32 %v108, %v148
  %v150 = vpop.f32.mrf.mxu0
  %v151 = vpop.f32.mrf.mxu0
  %v152 = vadd.f32 %v108, %v151
  %v153 = vpop.f32.mrf.mxu0
  %154 = vdwg.mxu0
  %v155 = vadd.f32 %v27, %v149
  %v156 = vadd.f32 %v28, %v152
  %v157 = vld [vmem:[%s5] sm:$0x1]
  %v158 = vld [vmem:[%s6] sm:$0x1]
  %v159 = vsel %vm43, %v155, 0.0
  %160 = vadd.xlane.f32.xlu0 %v159
  %v161 = vpop.xlane.xlu0 %160
  %v162 = vsel %vm43, %v156, 0.0
  %163 = vadd.xlane.f32.xlu0 %v162
  %v164 = vpop.xlane.xlu0 %163
  %v165 = vrcp.pop 32.0
  %v166 = vmul.f32 %v161, %v165
  %v167 = vmul.f32 %v164, %v165
  %v168 = vsub.f32 %v155, %v166
  %v169 = vsub.f32 %v156, %v167
  %v170 = vmul.f32 %v168, %v168
  %v171 = vmul.f32 %v169, %v169
  %v172 = vsel %vm43, %v170, 0.0
  %173 = vadd.xlane.f32.xlu0 %v172
  %v174 = vpop.xlane.xlu0 %173
  %v175 = vsel %vm43, %v171, 0.0
  %176 = vadd.xlane.f32.xlu0 %v175
  %v177 = vpop.xlane.xlu0 %176
  %v178 = vmul.f32 %v174, %v165
  %v179 = vmul.f32 %v177, %v165
  %v180 = vadd.f32 %v178, 1e-05
  %v181 = vadd.f32 %v179, 1e-05
  %v182 = vrsqrt.pop %v180
  %v183 = vrsqrt.pop %v181
  %v184 = vmul.f32 %v168, %v182
  %v185 = vmul.f32 %v169, %v183
  %v187 = vlaneseq
  %v188 = vshrl.u32 %v187, 7
  %v189 = vsub.s32 0, %v188
  %v190 = vrot.slane %v157, %v189
  %v192 = vmul.f32 %v184, %v190
  %v193 = vmul.f32 %v185, %v190
  %v195 = vlaneseq
  %v196 = vshrl.u32 %v195, 7
  %v197 = vsub.s32 0, %v196
  %v198 = vrot.slane %v158, %v197
  %v200 = vadd.f32 %v192, %v198
  %v201 = vadd.f32 %v193, %v198
  %202 = vst.msk [vmem:[%s7] sm:$0xff] %vm43, %v200
  %203 = vst.msk [vmem:[%s7 + $0x8] sm:$0xff] %vm43, %v201
  // Predicated region
  $region30: #{transformer_forward.30} parent=0 // pred_check
    _
  $region31: #{transformer_forward.30} parent=0 // pred_check_branch
    %205 = sbr.rel (0) target = $region33
  $region32: #{transformer_forward.30} parent=0 // pred_region
    _
  $region33: #{transformer_forward.30} parent=0 // pred_fallthru
    _
  // Predicated region
  $region34: #{transformer_forward.30} parent=0 // pred_check
    _
  $region35: #{transformer_forward.30} parent=0 // pred_check_branch
    %207 = sbr.rel (0) target = $region37
  $region36: #{transformer_forward.30} parent=0 // pred_region
    _
  $region37: #{transformer_forward.30} parent=0 // pred_fallthru
    _

// kernel: transformer_forward.32
$region0: #{transformer_forward.32}
  #allocation0 [shape = 'u32[]', space=smem, size = 0x4, offset = 0x4, fixed_abs, tag = 'smem constant byte address 0x4 - core index']
  #allocation1 [shape = 'u32[144,128]{1,0:T(1,128)}', space=vmem, size = 0x12000, scoped, tag = 'internal scratch']
  %s0 = inlined_call_operand.vmem [shape: f32[16,32], index: 0, kind: input, shape index: {}]
  %s1 = inlined_call_operand.vmem [shape: f32[32,32], index: 1, kind: input, shape index: {}]
  %s2 = inlined_call_operand.vmem [shape: f32[32,32], index: 2, kind: input, shape index: {}]
  %s3 = inlined_call_operand.vmem [shape: f32[16,32], index: 3, kind: input, shape index: {}]
  %s4 = inlined_call_operand.vmem [shape: f32[2,16], index: 4, kind: input, shape index: {}]
  %s5 = inlined_call_operand.vmem [shape: f32[32,32], index: 5, kind: input, shape index: {}]
  %s6 = inlined_call_operand.vmem [shape: f32[1,32], index: 6, kind: input, shape index: {}]
  %s7 = inlined_call_operand.vmem [shape: f32[32,32], index: 7, kind: input, shape index: {}]
  %s8 = inlined_call_operand.vmem [shape: f32[1,32], index: 8, kind: input, shape index: {}]
  %s9 = inlined_call_operand.vmem [shape: f32[32,32], index: 9, kind: input, shape index: {}]
  %s10 = inlined_call_operand.vmem [shape: f32[1,32], index: 10, kind: input, shape index: {}]
  %s11 = inlined_call_operand.vmem [shape: f32[32,32], index: 11, kind: input, shape index: {}]
  %s12 = inlined_call_operand.vmem [shape: f32[1,32], index: 12, kind: input, shape index: {}]
  %s13 = inlined_call_operand.vmem [shape: f32[1,32], index: 13, kind: input, shape index: {}]
  %s14 = inlined_call_operand.vmem [shape: f32[1,32], index: 14, kind: input, shape index: {}]
  %s15 = inlined_call_operand.vmem [shape: f32[16,32], index: 15, kind: output, shape index: {0}]
  %s16 = inlined_call_operand.vmem [shape: f32[2,8,16], index: 16, kind: output, shape index: {1}]
  %17 = xla_tuple %s15, %s16
  %s18 = sld [smem:[#allocation0]]
  $region78: #{transformer_forward.32} parent=0
    _
  %s20 = ssub.s32 1, %s18
  %s21 = scalar_select 0, %s20, %s18
  // Predicated region
  $region2: #{transformer_forward.32} parent=0 // pred_check
    _
  $region3: #{transformer_forward.32} parent=0 // pred_check_branch
    %23 = sbr.rel (0) target = $region5
  $region4: #{transformer_forward.32} parent=0 // pred_region
    _
  $region5: #{transformer_forward.32} parent=0 // pred_fallthru
    _
  // Predicated region
  $region6: #{transformer_forward.32} parent=0 // pred_check
    _
  $region7: #{transformer_forward.32} parent=0 // pred_check_branch
    %25 = sbr.rel (0) target = $region9
  $region8: #{transformer_forward.32} parent=0 // pred_region
    _
  $region9: #{transformer_forward.32} parent=0 // pred_fallthru
    _
  // Predicated region
  $region10: #{transformer_forward.32} parent=0 // pred_check
    _
  $region11: #{transformer_forward.32} parent=0 // pred_check_branch
    %27 = sbr.rel (0) target = $region13
  $region12: #{transformer_forward.32} parent=0 // pred_region
    _
  $region13: #{transformer_forward.32} parent=0 // pred_fallthru
    _
  // Predicated region
  $region14: #{transformer_forward.32} parent=0 // pred_check
    _
  $region15: #{transformer_forward.32} parent=0 // pred_check_branch
    %29 = sbr.rel (0) target = $region17
  $region16: #{transformer_forward.32} parent=0 // pred_region
    _
  $region17: #{transformer_forward.32} parent=0 // pred_fallthru
    _
  // Predicated region
  $region18: #{transformer_forward.32} parent=0 // pred_check
    _
  $region19: #{transformer_forward.32} parent=0 // pred_check_branch
    %31 = sbr.rel (0) target = $region21
  $region20: #{transformer_forward.32} parent=0 // pred_region
    _
  $region21: #{transformer_forward.32} parent=0 // pred_fallthru
    _
  // Predicated region
  $region22: #{transformer_forward.32} parent=0 // pred_check
    _
  $region23: #{transformer_forward.32} parent=0 // pred_check_branch
    %33 = sbr.rel (0) target = $region25
  $region24: #{transformer_forward.32} parent=0 // pred_region
    _
  $region25: #{transformer_forward.32} parent=0 // pred_fallthru
    _
  // Predicated region
  $region26: #{transformer_forward.32} parent=0 // pred_check
    _
  $region27: #{transformer_forward.32} parent=0 // pred_check_branch
    %35 = sbr.rel (0) target = $region29
  $region28: #{transformer_forward.32} parent=0 // pred_region
    _
  $region29: #{transformer_forward.32} parent=0 // pred_fallthru
    _
  // Predicated region
  $region30: #{transformer_forward.32} parent=0 // pred_check
    _
  $region31: #{transformer_forward.32} parent=0 // pred_check_branch
    %37 = sbr.rel (0) target = $region33
  $region32: #{transformer_forward.32} parent=0 // pred_region
    _
  $region33: #{transformer_forward.32} parent=0 // pred_fallthru
    _
  // Predicated region
  $region34: #{transformer_forward.32} parent=0 // pred_check
    _
  $region35: #{transformer_forward.32} parent=0 // pred_check_branch
    %39 = sbr.rel (0) target = $region37
  $region36: #{transformer_forward.32} parent=0 // pred_region
    _
  $region37: #{transformer_forward.32} parent=0 // pred_fallthru
    _
  // Predicated region
  $region38: #{transformer_forward.32} parent=0 // pred_check
    _
  $region39: #{transformer_forward.32} parent=0 // pred_check_branch
    %41 = sbr.rel (0) target = $region41
  $region40: #{transformer_forward.32} parent=0 // pred_region
    _
  $region41: #{transformer_forward.32} parent=0 // pred_fallthru
    _
  // Predicated region
  $region42: #{transformer_forward.32} parent=0 // pred_check
    _
  $region43: #{transformer_forward.32} parent=0 // pred_check_branch
    %43 = sbr.rel (0) target = $region45
  $region44: #{transformer_forward.32} parent=0 // pred_region
    _
  $region45: #{transformer_forward.32} parent=0 // pred_fallthru
    _
  // Predicated region
  $region46: #{transformer_forward.32} parent=0 // pred_check
    _
  $region47: #{transformer_forward.32} parent=0 // pred_check_branch
    %45 = sbr.rel (0) target = $region49
  $region48: #{transformer_forward.32} parent=0 // pred_region
    _
  $region49: #{transformer_forward.32} parent=0 // pred_fallthru
    _
  // Predicated region
  $region50: #{transformer_forward.32} parent=0 // pred_check
    _
  $region51: #{transformer_forward.32} parent=0 // pred_check_branch
    %47 = sbr.rel (0) target = $region53
  $region52: #{transformer_forward.32} parent=0 // pred_region
    _
  $region53: #{transformer_forward.32} parent=0 // pred_fallthru
    _
  // Predicated region
  $region54: #{transformer_forward.32} parent=0 // pred_check
    _
  $region55: #{transformer_forward.32} parent=0 // pred_check_branch
    %49 = sbr.rel (0) target = $region57
  $region56: #{transformer_forward.32} parent=0 // pred_region
    _
  $region57: #{transformer_forward.32} parent=0 // pred_fallthru
    _
  // Predicated region
  $region58: #{transformer_forward.32} parent=0 // pred_check
    _
  $region59: #{transformer_forward.32} parent=0 // pred_check_branch
    %51 = sbr.rel (0) target = $region61
  $region60: #{transformer_forward.32} parent=0 // pred_region
    _
  $region61: #{transformer_forward.32} parent=0 // pred_fallthru
    _
  %v53 = vld [vmem:[%s0] sm:$0xff]
  %v54 = vld [vmem:[%s0 + $0x8] sm:$0xff]
  %v55 = vpack.c.bf16 %v54, %v53
  %v56 = vld [vmem:[%s5] sm:$0xff]
  %v57 = vld [vmem:[%s5 + $0x8] sm:$0xff]
  %v58 = vld [vmem:[%s5 + $0x10] sm:$0xff]
  %v59 = vld [vmem:[%s5 + $0x18] sm:$0xff]
  %v60 = vpack.c.bf16 %v57, %v56
  %v61 = vpack.c.bf16 %v59, %v58
  %v62 = vld [vmem:[%s6] sm:$0x1]
  %v64 = vlaneseq
  %v65 = vshrl.u32 %v64, 7
  %v66 = vsub.s32 0, %v65
  %v67 = vrot.slane %v62, %v66
  %vm69 = vcmask 261120
  %v71 = vsel %vm69, %v55, 0
  %73 = vmatprep.subr.bf16.mxu0 0
  %74 = vmatpush1.bf16.msra.mxu0 0
  %75 = vmatprep.subr.bf16.mxu0 0
  %76 = vmatpush1.bf16.msra.mxu0 0
  %77 = vmatprep.subr.bf16.mxu0 0
  %78 = vmatpush1.bf16.msra.mxu0 0
  %79 = vmatprep.subr.bf16.mxu0 0
  %80 = vmatpush1.bf16.msra.mxu0 0
  %81 = vmatprep.subr.bf16.mxu0 0
  %82 = vmatpush1.bf16.msra.mxu0 0
  %83 = vmatprep.subr.bf16.mxu0 0
  %84 = vmatpush1.bf16.msra.mxu0 0
  %85 = vmatprep.subr.bf16.mxu0 0
  %86 = vmatpush1.bf16.msra.mxu0 %v61
  %87 = vmatprep.subr.bf16.mxu0 0
  %88 = vmatpush1.bf16.msra.mxu0 %v60
  %89 = vmatprep.subr.bf16.mxu0 0
  %90 = vmatpush2.bf16.msra.mxu0 0
  %91 = vmatprep.subr.bf16.mxu0 0
  %92 = vmatpush2.bf16.msra.mxu0 0
  %93 = vmatprep.subr.bf16.mxu0 0
  %94 = vmatpush2.bf16.msra.mxu0 0
  %95 = vmatprep.subr.bf16.mxu0 0
  %96 = vmatpush2.bf16.msra.mxu0 0
  %97 = vmatprep.subr.bf16.mxu0 0
  %98 = vmatpush2.bf16.msra.mxu0 0
  %99 = vmatprep.subr.bf16.mxu0 0
  %100 = vmatpush2.bf16.msra.mxu0 0
  %101 = vmatprep.subr.bf16.mxu0 0
  %102 = vmatpush2.bf16.msra.mxu0 0
  %103 = vmatprep.subr.bf16.mxu0 0
  %104 = vmatpush2.bf16.msra.mxu0 0
  %105 = vmatprep.mubr.bf16.mxu0 0
  %106 = vmatmul.mubr.bf16.gmra.mxu0 %v71
  %v107 = vpop.f32.mrf.mxu0
  %v108 = vadd.f32 %v67, %v107
  %v109 = vpop.f32.mrf.mxu0
  %v110 = vpop.f32.mrf.mxu0
  %v111 = vadd.f32 %v67, %v110
  %v112 = vpop.f32.mrf.mxu0
  %113 = vdwg.mxu0
  %v114 = vmul.f32 %v108, 0.35355338
  %v115 = vmul.f32 %v111, 0.35355338
  %v116 = vld [vmem:[%s1] sm:$0xff]
  %v117 = vld [vmem:[%s1 + $0x8] sm:$0xff]
  %v118 = vld [vmem:[%s1 + $0x10] sm:$0xff]
  %v119 = vld [vmem:[%s1 + $0x18] sm:$0xff]
  %v120 = vpack.c.bf16 %v117, %v116
  %v121 = vpack.c.bf16 %v119, %v118
  %v122 = vld [vmem:[%s7] sm:$0xff]
  %v123 = vld [vmem:[%s7 + $0x8] sm:$0xff]
  %v124 = vld [vmem:[%s7 + $0x10] sm:$0xff]
  %v125 = vld [vmem:[%s7 + $0x18] sm:$0xff]
  %v126 = vpack.c.bf16 %v123, %v122
  %v127 = vpack.c.bf16 %v125, %v124
  %v128 = vld [vmem:[%s8] sm:$0x1]
  %v130 = vlaneseq
  %v131 = vshrl.u32 %v130, 7
  %v132 = vsub.s32 0, %v131
  %v133 = vrot.slane %v128, %v132
  %v136 = vsel %vm69, %v120, 0
  %v139 = vsel %vm69, %v121, 0
  %141 = vmatprep.subr.bf16.mxu0 0
  %142 = vmatpush1.bf16.msra.mxu0 0
  %143 = vmatprep.subr.bf16.mxu0 0
  %144 = vmatpush1.bf16.msra.mxu0 0
  %145 = vmatprep.subr.bf16.mxu0 0
  %146 = vmatpush1.bf16.msra.mxu0 0
  %147 = vmatprep.subr.bf16.mxu0 0
  %148 = vmatpush1.bf16.msra.mxu0 0
  %149 = vmatprep.subr.bf16.mxu0 0
  %150 = vmatpush1.bf16.msra.mxu0 0
  %151 = vmatprep.subr.bf16.mxu0 0
  %152 = vmatpush1.bf16.msra.mxu0 0
  %153 = vmatprep.subr.bf16.mxu0 0
  %154 = vmatpush1.bf16.msra.mxu0 %v127
  %155 = vmatprep.subr.bf16.mxu0 0
  %156 = vmatpush1.bf16.msra.mxu0 %v126
  %157 = vmatprep.subr.bf16.mxu0 0
  %158 = vmatpush2.bf16.msra.mxu0 0
  %159 = vmatprep.subr.bf16.mxu0 0
  %160 = vmatpush2.bf16.msra.mxu0 0
  %161 = vmatprep.subr.bf16.mxu0 0
  %162 = vmatpush2.bf16.msra.mxu0 0
  %163 = vmatprep.subr.bf16.mxu0 0
  %164 = vmatpush2.bf16.msra.mxu0 0
  %165 = vmatprep.subr.bf16.mxu0 0
  %166 = vmatpush2.bf16.msra.mxu0 0
  %167 = vmatprep.subr.bf16.mxu0 0
  %168 = vmatpush2.bf16.msra.mxu0 0
  %169 = vmatprep.subr.bf16.mxu0 0
  %170 = vmatpush2.bf16.msra.mxu0 0
  %171 = vmatprep.subr.bf16.mxu0 0
  %172 = vmatpush2.bf16.msra.mxu0 0
  %173 = vmatprep.mubr.bf16.mxu0 0
  %174 = vmatmul.mubr.bf16.gmra.mxu0 %v136
  %v175 = vpop.f32.mrf.mxu0
  %v176 = vadd.f32 %v133, %v175
  %v177 = vpop.f32.mrf.mxu0
  %v178 = vpop.f32.mrf.mxu0
  %v179 = vadd.f32 %v133, %v178
  %v180 = vpop.f32.mrf.mxu0
  %181 = vmatprep.mubr.bf16.mxu0 0
  %182 = vmatmul.mubr.bf16.gmra.mxu0 %v139
  %v183 = vpop.f32.mrf.mxu0
  %v184 = vadd.f32 %v133, %v183
  %v185 = vpop.f32.mrf.mxu0
  %v186 = vpop.f32.mrf.mxu0
  %v187 = vadd.f32 %v133, %v186
  %v188 = vpop.f32.mrf.mxu0
  %189 = vdwg.mxu0
  %v190 = vld [vmem:[%s2] sm:$0xff]
  %v191 = vld [vmem:[%s2 + $0x8] sm:$0xff]
  %v192 = vld [vmem:[%s2 + $0x10] sm:$0xff]
  %v193 = vld [vmem:[%s2 + $0x18] sm:$0xff]
  %v194 = vpack.c.bf16 %v191, %v190
  %v195 = vpack.c.bf16 %v193, %v192
  %v196 = vld [vmem:[%s9] sm:$0xff]
  %v197 = vld [vmem:[%s9 + $0x8] sm:$0xff]
  %v198 = vld [vmem:[%s9 + $0x10] sm:$0xff]
  %v199 = vld [vmem:[%s9 + $0x18] sm:$0xff]
  %v200 = vpack.c.bf16 %v197, %v196
  %v201 = vpack.c.bf16 %v199, %v198
  %v202 = vld [vmem:[%s10] sm:$0x1]
  %v204 = vlaneseq
  %v205 = vshrl.u32 %v204, 7
  %v206 = vsub.s32 0, %v205
  %v207 = vrot.slane %v202, %v206
  %v210 = vsel %vm69, %v194, 0
  %v213 = vsel %vm69, %v195, 0
  %215 = vmatprep.subr.bf16.mxu0 0
  %216 = vmatpush1.bf16.msra.mxu0 0
  %217 = vmatprep.subr.bf16.mxu0 0
  %218 = vmatpush1.bf16.msra.mxu0 0
  %219 = vmatprep.subr.bf16.mxu0 0
  %220 = vmatpush1.bf16.msra.mxu0 0
  %221 = vmatprep.subr.bf16.mxu0 0
  %222 = vmatpush1.bf16.msra.mxu0 0
  %223 = vmatprep.subr.bf16.mxu0 0
  %224 = vmatpush1.bf16.msra.mxu0 0
  %225 = vmatprep.subr.bf16.mxu0 0
  %226 = vmatpush1.bf16.msra.mxu0 0
  %227 = vmatprep.subr.bf16.mxu0 0
  %228 = vmatpush1.bf16.msra.mxu0 %v201
  %229 = vmatprep.subr.bf16.mxu0 0
  %230 = vmatpush1.bf16.msra.mxu0 %v200
  %231 = vmatprep.subr.bf16.mxu0 0
  %232 = vmatpush2.bf16.msra.mxu0 0
  %233 = vmatprep.subr.bf16.mxu0 0
  %234 = vmatpush2.bf16.msra.mxu0 0
  %235 = vmatprep.subr.bf16.mxu0 0
  %236 = vmatpush2.bf16.msra.mxu0 0
  %237 = vmatprep.subr.bf16.mxu0 0
  %238 = vmatpush2.bf16.msra.mxu0 0
  %239 = vmatprep.subr.bf16.mxu0 0
  %240 = vmatpush2.bf16.msra.mxu0 0
  %241 = vmatprep.subr.bf16.mxu0 0
  %242 = vmatpush2.bf16.msra.mxu0 0
  %243 = vmatprep.subr.bf16.mxu0 0
  %244 = vmatpush2.bf16.msra.mxu0 0
  %245 = vmatprep.subr.bf16.mxu0 0
  %246 = vmatpush2.bf16.msra.mxu0 0
  %247 = vmatprep.mubr.bf16.mxu0 0
  %248 = vmatmul.mubr.bf16.gmra.mxu0 %v210
  %v249 = vpop.f32.mrf.mxu0
  %v250 = vadd.f32 %v207, %v249
  %v251 = vpop.f32.mrf.mxu0
  %v252 = vpop.f32.mrf.mxu0
  %v253 = vadd.f32 %v207, %v252
  %v254 = vpop.f32.mrf.mxu0
  %255 = vmatprep.mubr.bf16.mxu0 0
  %256 = vmatmul.mubr.bf16.gmra.mxu0 %v213
  %v257 = vpop.f32.mrf.mxu0
  %v258 = vadd.f32 %v207, %v257
  %v259 = vpop.f32.mrf.mxu0
  %v260 = vpop.f32.mrf.mxu0
  %v261 = vadd.f32 %v207, %v260
  %v262 = vpop.f32.mrf.mxu0
  %263 = vdwg.mxu0
  %v264 = vld [vmem:[%s4] sm:$0x3]
  %v265 = vpack.c.bf16 %v114, %v114
  %v266 = vpack.c.bf16 %v179, %v176
  %v267 = vpack.c.bf16 %v253, %v250
  %v268 = vlaneseq
  %v269 = vshrl.u32 %v268, 7
  %v270 = vsub.s32 0, %v269
  %v271 = vrot.slane %v264, %v270
  %vm272 = vcmask 64512
  %v274 = vsel %vm272, %v265, 0
  %v277 = vsel %vm272, %v266, 0
  %279 = vmatprep.subr.bf16.mxu0 0
  %280 = vmatpush1.bf16.xpose.msra.mxu0 0
  %281 = vmatprep.subr.bf16.mxu0 0
  %282 = vmatpush1.bf16.xpose.msra.mxu0 0
  %283 = vmatprep.subr.bf16.mxu0 0
  %284 = vmatpush1.bf16.xpose.msra.mxu0 0
  %285 = vmatprep.subr.bf16.mxu0 0
  %286 = vmatpush1.bf16.xpose.msra.mxu0 0
  %287 = vmatprep.subr.bf16.mxu0 0
  %288 = vmatpush1.bf16.xpose.msra.mxu0 0
  %289 = vmatprep.subr.bf16.mxu0 0
  %290 = vmatpush1.bf16.xpose.msra.mxu0 0
  %291 = vmatprep.subr.bf16.mxu0 0
  %292 = vmatpush1.bf16.xpose.msra.mxu0 0
  %293 = vmatprep.subr.bf16.mxu0 0
  %294 = vmatpush1.bf16.xpose.msra.mxu0 %v277
  %295 = vmatprep.subr.bf16.mxu0 0
  %296 = vmatpush2.bf16.xpose.msra.mxu0 0
  %297 = vmatprep.subr.bf16.mxu0 0
  %298 = vmatpush2.bf16.xpose.msra.mxu0 0
  %299 = vmatprep.subr.bf16.mxu0 0
  %300 = vmatpush2.bf16.xpose.msra.mxu0 0
  %301 = vmatprep.subr.bf16.mxu0 0
  %302 = vmatpush2.bf16.xpose.msra.mxu0 0
  %303 = vmatprep.subr.bf16.mxu0 0
  %304 = vmatpush2.bf16.xpose.msra.mxu0 0
  %305 = vmatprep.subr.bf16.mxu0 0
  %306 = vmatpush2.bf16.xpose.msra.mxu0 0
  %307 = vmatprep.subr.bf16.mxu0 0
  %308 = vmatpush2.bf16.xpose.msra.mxu0 0
  %309 = vmatprep.subr.bf16.mxu0 0
  %310 = vmatpush2.bf16.xpose.msra.mxu0 0
  %311 = vmatprep.mubr.bf16.mxu0 0
  %312 = vmatmul.mubr.bf16.gmra.mxu0 %v274
  %v313 = vpop.f32.mrf.mxu0
  %v314 = vadd.f32 %v271, %v313
  %v315 = vpop.f32.mrf.mxu0
  %v316 = vpop.f32.mrf.mxu0
  %v317 = vpop.f32.mrf.mxu0
  %318 = vdwg.mxu0
  %vm319 = vcmask 130048
  %v320 = vsel %vm319, %v314, -inf
  %321 = vmax.xlane.f32.xlu0 %v320
  %v322 = vpop.xlane.xlu0 %321
  %v323 = vsub.f32 %v314, %v322
  %v324 = vmul.f32 %v323, 1.442695
  %v325 = vpow.pop %v324
  %v326 = vsel %vm319, %v325, 0.0
  %327 = vadd.xlane.f32.xlu0 %v326
  %v328 = vpop.xlane.xlu0 %327
  %v329 = vrcp.pop %v328
  %v330 = vmul.f32 %v325, %v329
  %v331 = vpack.c.bf16 %v330, %v330
  %v333 = vsel %vm319, %v331, 0
  %335 = vmatprep.subr.bf16.mxu0 0
  %336 = vmatpush1.bf16.msra.mxu0 0
  %337 = vmatprep.subr.bf16.mxu0 0
  %338 = vmatpush1.bf16.msra.mxu0 0
  %339 = vmatprep.subr.bf16.mxu0 0
  %340 = vmatpush1.bf16.msra.mxu0 0
  %341 = vmatprep.subr.bf16.mxu0 0
  %342 = vmatpush1.bf16.msra.mxu0 0
  %343 = vmatprep.subr.bf16.mxu0 0
  %344 = vmatpush1.bf16.msra.mxu0 0
  %345 = vmatprep.subr.bf16.mxu0 0
  %346 = vmatpush1.bf16.msra.mxu0 0
  %347 = vmatprep.subr.bf16.mxu0 0
  %348 = vmatpush1.bf16.msra.mxu0 0
  %349 = vmatprep.subr.bf16.mxu0 0
  %350 = vmatpush1.bf16.msra.mxu0 %v267
  %351 = vmatprep.subr.bf16.mxu0 0
  %352 = vmatpush2.bf16.msra.mxu0 0
  %353 = vmatprep.subr.bf16.mxu0 0
  %354 = vmatpush2.bf16.msra.mxu0 0
  %355 = vmatprep.subr.bf16.mxu0 0
  %356 = vmatpush2.bf16.msra.mxu0 0
  %357 = vmatprep.subr.bf16.mxu0 0
  %358 = vmatpush2.bf16.msra.mxu0 0
  %359 = vmatprep.subr.bf16.mxu0 0
  %360 = vmatpush2.bf16.msra.mxu0 0
  %361 = vmatprep.subr.bf16.mxu0 0
  %362 = vmatpush2.bf16.msra.mxu0 0
  %363 = vmatprep.subr.bf16.mxu0 0
  %364 = vmatpush2.bf16.msra.mxu0 0
  %365 = vmatprep.subr.bf16.mxu0 0
  %366 = vmatpush2.bf16.msra.mxu0 0
  %367 = vmatprep.mubr.bf16.mxu0 0
  %368 = vmatmul.mubr.bf16.gmra.mxu0 %v333
  %v369 = vpop.f32.mrf.mxu0
  %v370 = vadd.f32 0.0, %v369
  %v371 = vpop.f32.mrf.mxu0
  %v372 = vpop.f32.mrf.mxu0
  %v373 = vpop.f32.mrf.mxu0
  %374 = vdwg.mxu0
  %376 = vrot.lane.b32.xlu0 %v265, 120
  %v377 = vpop.permute.xlu0 %376
  %379 = vrot.lane.b32.xlu0 %v266, 120
  %v380 = vpop.permute.xlu0 %379
  %v382 = vsel %vm272, %v377, 0
  %v385 = vsel %vm272, %v380, 0
  %387 = vmatprep.subr.bf16.mxu0 0
  %388 = vmatpush1.bf16.xpose.msra.mxu0 0
  %389 = vmatprep.subr.bf16.mxu0 0
  %390 = vmatpush1.bf16.xpose.msra.mxu0 0
  %391 = vmatprep.subr.bf16.mxu0 0
  %392 = vmatpush1.bf16.xpose.msra.mxu0 0
  %393 = vmatprep.subr.bf16.mxu0 0
  %394 = vmatpush1.bf16.xpose.msra.mxu0 0
  %395 = vmatprep.subr.bf16.mxu0 0
  %396 = vmatpush1.bf16.xpose.msra.mxu0 0
  %397 = vmatprep.subr.bf16.mxu0 0
  %398 = vmatpush1.bf16.xpose.msra.mxu0 0
  %399 = vmatprep.subr.bf16.mxu0 0
  %400 = vmatpush1.bf16.xpose.msra.mxu0 0
  %401 = vmatprep.subr.bf16.mxu0 0
  %402 = vmatpush1.bf16.xpose.msra.mxu0 %v385
  %403 = vmatprep.subr.bf16.mxu0 0
  %404 = vmatpush2.bf16.xpose.msra.mxu0 0
  %405 = vmatprep.subr.bf16.mxu0 0
  %406 = vmatpush2.bf16.xpose.msra.mxu0 0
  %407 = vmatprep.subr.bf16.mxu0 0
  %408 = vmatpush2.bf16.xpose.msra.mxu0 0
  %409 = vmatprep.subr.bf16.mxu0 0
  %410 = vmatpush2.bf16.xpose.msra.mxu0 0
  %411 = vmatprep.subr.bf16.mxu0 0
  %412 = vmatpush2.bf16.xpose.msra.mxu0 0
  %413 = vmatprep.subr.bf16.mxu0 0
  %414 = vmatpush2.bf16.xpose.msra.mxu0 0
  %415 = vmatprep.subr.bf16.mxu0 0
  %416 = vmatpush2.bf16.xpose.msra.mxu0 0
  %417 = vmatprep.subr.bf16.mxu0 0
  %418 = vmatpush2.bf16.xpose.msra.mxu0 0
  %419 = vmatprep.mubr.bf16.mxu0 0
  %420 = vmatmul.mubr.bf16.gmra.mxu0 %v382
  %v421 = vpop.f32.mrf.mxu0
  %v422 = vadd.f32 %v271, %v421
  %v423 = vpop.f32.mrf.mxu0
  %v424 = vpop.f32.mrf.mxu0
  %v425 = vpop.f32.mrf.mxu0
  %426 = vdwg.mxu0
  %v427 = vsel %vm319, %v422, -inf
  %428 = vmax.xlane.f32.xlu0 %v427
  %v429 = vpop.xlane.xlu0 %428
  %v430 = vsub.f32 %v422, %v429
  %v431 = vmul.f32 %v430, 1.442695
  %v432 = vpow.pop %v431
  %v433 = vsel %vm319, %v432, 0.0
  %434 = vadd.xlane.f32.xlu0 %v433
  %v435 = vpop.xlane.xlu0 %434
  %v436 = vrcp.pop %v435
  %v437 = vmul.f32 %v432, %v436
  %v438 = vpack.c.bf16 %v437, %v437
  %440 = vrot.lane.b32.xlu0 %v267, 120
  %v441 = vpop.permute.xlu0 %440
  %v444 = vsel %vm319, %v438, 0
  %446 = vmatprep.subr.bf16.mxu0 0
  %447 = vmatpush1.bf16.msra.mxu0 0
  %448 = vmatprep.subr.bf16.mxu0 0
  %449 = vmatpush1.bf16.msra.mxu0 0
  %450 = vmatprep.subr.bf16.mxu0 0
  %451 = vmatpush1.bf16.msra.mxu0 0
  %452 = vmatprep.subr.bf16.mxu0 0
  %453 = vmatpush1.bf16.msra.mxu0 0
  %454 = vmatprep.subr.bf16.mxu0 0
  %455 = vmatpush1.bf16.msra.mxu0 0
  %456 = vmatprep.subr.bf16.mxu0 0
  %457 = vmatpush1.bf16.msra.mxu0 0
  %458 = vmatprep.subr.bf16.mxu0 0
  %459 = vmatpush1.bf16.msra.mxu0 0
  %460 = vmatprep.subr.bf16.mxu0 0
  %461 = vmatpush1.bf16.msra.mxu0 %v441
  %462 = vmatprep.subr.bf16.mxu0 0
  %463 = vmatpush2.bf16.msra.mxu0 0
  %464 = vmatprep.subr.bf16.mxu0 0
  %465 = vmatpush2.bf16.msra.mxu0 0
  %466 = vmatprep.subr.bf16.mxu0 0
  %467 = vmatpush2.bf16.msra.mxu0 0
  %468 = vmatprep.subr.bf16.mxu0 0
  %469 = vmatpush2.bf16.msra.mxu0 0
  %470 = vmatprep.subr.bf16.mxu0 0
  %471 = vmatpush2.bf16.msra.mxu0 0
  %472 = vmatprep.subr.bf16.mxu0 0
  %473 = vmatpush2.bf16.msra.mxu0 0
  %474 = vmatprep.subr.bf16.mxu0 0
  %475 = vmatpush2.bf16.msra.mxu0 0
  %476 = vmatprep.subr.bf16.mxu0 0
  %477 = vmatpush2.bf16.msra.mxu0 0
  %478 = vmatprep.mubr.bf16.mxu0 0
  %479 = vmatmul.mubr.bf16.gmra.mxu0 %v444
  %v480 = vpop.f32.mrf.mxu0
  %v481 = vadd.f32 0.0, %v480
  %v482 = vpop.f32.mrf.mxu0
  %v483 = vpop.f32.mrf.mxu0
  %v484 = vpop.f32.mrf.mxu0
  %485 = vdwg.mxu0
  %v486 = vadd.f32 %v330, %v437
  %487 = vrot.lane.b32.xlu0 %v265, 112
  %v488 = vpop.permute.xlu0 %487
  %489 = vrot.lane.b32.xlu0 %v266, 112
  %v490 = vpop.permute.xlu0 %489
  %v492 = vsel %vm272, %v488, 0
  %v495 = vsel %vm272, %v490, 0
  %497 = vmatprep.subr.bf16.mxu0 0
  %498 = vmatpush1.bf16.xpose.msra.mxu0 0
  %499 = vmatprep.subr.bf16.mxu0 0
  %500 = vmatpush1.bf16.xpose.msra.mxu0 0
  %501 = vmatprep.subr.bf16.mxu0 0
  %502 = vmatpush1.bf16.xpose.msra.mxu0 0
  %503 = vmatprep.subr.bf16.mxu0 0
  %504 = vmatpush1.bf16.xpose.msra.mxu0 0
  %505 = vmatprep.subr.bf16.mxu0 0
  %506 = vmatpush1.bf16.xpose.msra.mxu0 0
  %507 = vmatprep.subr.bf16.mxu0 0
  %508 = vmatpush1.bf16.xpose.msra.mxu0 0
  %509 = vmatprep.subr.bf16.mxu0 0
  %510 = vmatpush1.bf16.xpose.msra.mxu0 0
  %511 = vmatprep.subr.bf16.mxu0 0
  %512 = vmatpush1.bf16.xpose.msra.mxu0 %v495
  %513 = vmatprep.subr.bf16.mxu0 0
  %514 = vmatpush2.bf16.xpose.msra.mxu0 0
  %515 = vmatprep.subr.bf16.mxu0 0
  %516 = vmatpush2.bf16.xpose.msra.mxu0 0
  %517 = vmatprep.subr.bf16.mxu0 0
  %518 = vmatpush2.bf16.xpose.msra.mxu0 0
  %519 = vmatprep.subr.bf16.mxu0 0
  %520 = vmatpush2.bf16.xpose.msra.mxu0 0
  %521 = vmatprep.subr.bf16.mxu0 0
  %522 = vmatpush2.bf16.xpose.msra.mxu0 0
  %523 = vmatprep.subr.bf16.mxu0 0
  %524 = vmatpush2.bf16.xpose.msra.mxu0 0
  %525 = vmatprep.subr.bf16.mxu0 0
  %526 = vmatpush2.bf16.xpose.msra.mxu0 0
  %527 = vmatprep.subr.bf16.mxu0 0
  %528 = vmatpush2.bf16.xpose.msra.mxu0 0
  %529 = vmatprep.mubr.bf16.mxu0 0
  %530 = vmatmul.mubr.bf16.gmra.mxu0 %v492
  %v531 = vpop.f32.mrf.mxu0
  %v532 = vadd.f32 %v271, %v531
  %v533 = vpop.f32.mrf.mxu0
  %v534 = vpop.f32.mrf.mxu0
  %v535 = vpop.f32.mrf.mxu0
  %536 = vdwg.mxu0
  %v537 = vsel %vm319, %v532, -inf
  %538 = vmax.xlane.f32.xlu0 %v537
  %v539 = vpop.xlane.xlu0 %538
  %v540 = vsub.f32 %v532, %v539
  %v541 = vmul.f32 %v540, 1.442695
  %v542 = vpow.pop %v541
  %v543 = vsel %vm319, %v542, 0.0
  %544 = vadd.xlane.f32.xlu0 %v543
  %v545 = vpop.xlane.xlu0 %544
  %v546 = vrcp.pop %v545
  %v547 = vmul.f32 %v542, %v546
  %v548 = vpack.c.bf16 %v547, %v547
  %549 = vrot.lane.b32.xlu0 %v267, 112
  %v550 = vpop.permute.xlu0 %549
  %v553 = vsel %vm319, %v548, 0
  %555 = vmatprep.subr.bf16.mxu0 0
  %556 = vmatpush1.bf16.msra.mxu0 0
  %557 = vmatprep.subr.bf16.mxu0 0
  %558 = vmatpush1.bf16.msra.mxu0 0
  %559 = vmatprep.subr.bf16.mxu0 0
  %560 = vmatpush1.bf16.msra.mxu0 0
  %561 = vmatprep.subr.bf16.mxu0 0
  %562 = vmatpush1.bf16.msra.mxu0 0
  %563 = vmatprep.subr.bf16.mxu0 0
  %564 = vmatpush1.bf16.msra.mxu0 0
  %565 = vmatprep.subr.bf16.mxu0 0
  %566 = vmatpush1.bf16.msra.mxu0 0
  %567 = vmatprep.subr.bf16.mxu0 0
  %568 = vmatpush1.bf16.msra.mxu0 0
  %569 = vmatprep.subr.bf16.mxu0 0
  %570 = vmatpush1.bf16.msra.mxu0 %v550
  %571 = vmatprep.subr.bf16.mxu0 0
  %572 = vmatpush2.bf16.msra.mxu0 0
  %573 = vmatprep.subr.bf16.mxu0 0
  %574 = vmatpush2.bf16.msra.mxu0 0
  %575 = vmatprep.subr.bf16.mxu0 0
  %576 = vmatpush2.bf16.msra.mxu0 0
  %577 = vmatprep.subr.bf16.mxu0 0
  %578 = vmatpush2.bf16.msra.mxu0 0
  %579 = vmatprep.subr.bf16.mxu0 0
  %580 = vmatpush2.bf16.msra.mxu0 0
  %581 = vmatprep.subr.bf16.mxu0 0
  %582 = vmatpush2.bf16.msra.mxu0 0
  %583 = vmatprep.subr.bf16.mxu0 0
  %584 = vmatpush2.bf16.msra.mxu0 0
  %585 = vmatprep.subr.bf16.mxu0 0
  %586 = vmatpush2.bf16.msra.mxu0 0
  %587 = vmatprep.mubr.bf16.mxu0 0
  %588 = vmatmul.mubr.bf16.gmra.mxu0 %v553
  %v589 = vpop.f32.mrf.mxu0
  %v590 = vadd.f32 0.0, %v589
  %v591 = vpop.f32.mrf.mxu0
  %v592 = vpop.f32.mrf.mxu0
  %v593 = vpop.f32.mrf.mxu0
  %594 = vdwg.mxu0
  %v595 = vadd.f32 %v486, %v547
  %596 = vrot.lane.b32.xlu0 %v265, 104
  %v597 = vpop.permute.xlu0 %596
  %598 = vrot.lane.b32.xlu0 %v266, 104
  %v599 = vpop.permute.xlu0 %598
  %v601 = vsel %vm272, %v597, 0
  %v604 = vsel %vm272, %v599, 0
  %606 = vmatprep.subr.bf16.mxu0 0
  %607 = vmatpush1.bf16.xpose.msra.mxu0 0
  %608 = vmatprep.subr.bf16.mxu0 0
  %609 = vmatpush1.bf16.xpose.msra.mxu0 0
  %610 = vmatprep.subr.bf16.mxu0 0
  %611 = vmatpush1.bf16.xpose.msra.mxu0 0
  %612 = vmatprep.subr.bf16.mxu0 0
  %613 = vmatpush1.bf16.xpose.msra.mxu0 0
  %614 = vmatprep.subr.bf16.mxu0 0
  %615 = vmatpush1.bf16.xpose.msra.mxu0 0
  %616 = vmatprep.subr.bf16.mxu0 0
  %617 = vmatpush1.bf16.xpose.msra.mxu0 0
  %618 = vmatprep.subr.bf16.mxu0 0
  %619 = vmatpush1.bf16.xpose.msra.mxu0 0
  %620 = vmatprep.subr.bf16.mxu0 0
  %621 = vmatpush1.bf16.xpose.msra.mxu0 %v604
  %622 = vmatprep.subr.bf16.mxu0 0
  %623 = vmatpush2.bf16.xpose.msra.mxu0 0
  %624 = vmatprep.subr.bf16.mxu0 0
  %625 = vmatpush2.bf16.xpose.msra.mxu0 0
  %626 = vmatprep.subr.bf16.mxu0 0
  %627 = vmatpush2.bf16.xpose.msra.mxu0 0
  %628 = vmatprep.subr.bf16.mxu0 0
  %629 = vmatpush2.bf16.xpose.msra.mxu0 0
  %630 = vmatprep.subr.bf16.mxu0 0
  %631 = vmatpush2.bf16.xpose.msra.mxu0 0
  %632 = vmatprep.subr.bf16.mxu0 0
  %633 = vmatpush2.bf16.xpose.msra.mxu0 0
  %634 = vmatprep.subr.bf16.mxu0 0
  %635 = vmatpush2.bf16.xpose.msra.mxu0 0
  %636 = vmatprep.subr.bf16.mxu0 0
  %637 = vmatpush2.bf16.xpose.msra.mxu0 0
  %638 = vmatprep.mubr.bf16.mxu0 0
  %639 = vmatmul.mubr.bf16.gmra.mxu0 %v601
  %v640 = vpop.f32.mrf.mxu0
  %v641 = vadd.f32 %v271, %v640
  %v642 = vpop.f32.mrf.mxu0
  %v643 = vpop.f32.mrf.mxu0
  %v644 = vpop.f32.mrf.mxu0
  %645 = vdwg.mxu0
  %v646 = vsel %vm319, %v641, -inf
  %647 = vmax.xlane.f32.xlu0 %v646
  %v648 = vpop.xlane.xlu0 %647
  %v649 = vsub.f32 %v641, %v648
  %v650 = vmul.f32 %v649, 1.442695
  %v651 = vpow.pop %v650
  %v652 = vsel %vm319, %v651, 0.0
  %653 = vadd.xlane.f32.xlu0 %v652
  %v654 = vpop.xlane.xlu0 %653
  %v655 = vrcp.pop %v654
  %v656 = vmul.f32 %v651, %v655
  %v657 = vpack.c.bf16 %v656, %v656
  %658 = vrot.lane.b32.xlu0 %v267, 104
  %v659 = vpop.permute.xlu0 %658
  %v662 = vsel %vm319, %v657, 0
  %664 = vmatprep.subr.bf16.mxu0 0
  %665 = vmatpush1.bf16.msra.mxu0 0
  %666 = vmatprep.subr.bf16.mxu0 0
  %667 = vmatpush1.bf16.msra.mxu0 0
  %668 = vmatprep.subr.bf16.mxu0 0
  %669 = vmatpush1.bf16.msra.mxu0 0
  %670 = vmatprep.subr.bf16.mxu0 0
  %671 = vmatpush1.bf16.msra.mxu0 0
  %672 = vmatprep.subr.bf16.mxu0 0
  %673 = vmatpush1.bf16.msra.mxu0 0
  %674 = vmatprep.subr.bf16.mxu0 0
  %675 = vmatpush1.bf16.msra.mxu0 0
  %676 = vmatprep.subr.bf16.mxu0 0
  %677 = vmatpush1.bf16.msra.mxu0 0
  %678 = vmatprep.subr.bf16.mxu0 0
  %679 = vmatpush1.bf16.msra.mxu0 %v659
  %680 = vmatprep.subr.bf16.mxu0 0
  %681 = vmatpush2.bf16.msra.mxu0 0
  %682 = vmatprep.subr.bf16.mxu0 0
  %683 = vmatpush2.bf16.msra.mxu0 0
  %684 = vmatprep.subr.bf16.mxu0 0
  %685 = vmatpush2.bf16.msra.mxu0 0
  %686 = vmatprep.subr.bf16.mxu0 0
  %687 = vmatpush2.bf16.msra.mxu0 0
  %688 = vmatprep.subr.bf16.mxu0 0
  %689 = vmatpush2.bf16.msra.mxu0 0
  %690 = vmatprep.subr.bf16.mxu0 0
  %691 = vmatpush2.bf16.msra.mxu0 0
  %692 = vmatprep.subr.bf16.mxu0 0
  %693 = vmatpush2.bf16.msra.mxu0 0
  %694 = vmatprep.subr.bf16.mxu0 0
  %695 = vmatpush2.bf16.msra.mxu0 0
  %696 = vmatprep.mubr.bf16.mxu0 0
  %697 = vmatmul.mubr.bf16.gmra.mxu0 %v662
  %v698 = vpop.f32.mrf.mxu0
  %v699 = vadd.f32 0.0, %v698
  %v700 = vpop.f32.mrf.mxu0
  %v701 = vpop.f32.mrf.mxu0
  %v702 = vpop.f32.mrf.mxu0
  %703 = vdwg.mxu0
  %v704 = vadd.f32 %v595, %v656
  %706 = vrot.lane.b32.xlu0 %v481, 8
  %v707 = vpop.permute.xlu0 %706
  %710 = vrot.lane.b32.xlu0 %v590, 16
  %v711 = vpop.permute.xlu0 %710
  %714 = vrot.lane.b32.xlu0 %v699, 24
  %v715 = vpop.permute.xlu0 %714
  %v717 = vsel %vm272, %v370, %v707
  %v718 = vsel %vm319, %v717, %v711
  %vm719 = vcmask 195584
  %v720 = vsel %vm719, %v718, %v715
  %v721 = vmul.f32 %v704, 0.25
  %722 = vst.msk [vmem:[%s16] sm:$0xff] %vm319, %v721
  %v723 = vpack.c.bf16 %v115, %v115
  %v724 = vpack.c.bf16 %v187, %v184
  %v725 = vpack.c.bf16 %v261, %v258
  %v726 = vlaneseq
  %v727 = vshrl.u32 %v726, 7
  %v728 = vsub.s32 1, %v727
  %v729 = vrot.slane %v264, %v728
  %v731 = vsel %vm272, %v723, 0
  %v734 = vsel %vm272, %v724, 0
  %736 = vmatprep.subr.bf16.mxu0 0
  %737 = vmatpush1.bf16.xpose.msra.mxu0 0
  %738 = vmatprep.subr.bf16.mxu0 0
  %739 = vmatpush1.bf16.xpose.msra.mxu0 0
  %740 = vmatprep.subr.bf16.mxu0 0
  %741 = vmatpush1.bf16.xpose.msra.mxu0 0
  %742 = vmatprep.subr.bf16.mxu0 0
  %743 = vmatpush1.bf16.xpose.msra.mxu0 0
  %744 = vmatprep.subr.bf16.mxu0 0
  %745 = vmatpush1.bf16.xpose.msra.mxu0 0
  %746 = vmatprep.subr.bf16.mxu0 0
  %747 = vmatpush1.bf16.xpose.msra.mxu0 0
  %748 = vmatprep.subr.bf16.mxu0 0
  %749 = vmatpush1.bf16.xpose.msra.mxu0 0
  %750 = vmatprep.subr.bf16.mxu0 0
  %751 = vmatpush1.bf16.xpose.msra.mxu0 %v734
  %752 = vmatprep.subr.bf16.mxu0 0
  %753 = vmatpush2.bf16.xpose.msra.mxu0 0
  %754 = vmatprep.subr.bf16.mxu0 0
  %755 = vmatpush2.bf16.xpose.msra.mxu0 0
  %756 = vmatprep.subr.bf16.mxu0 0
  %757 = vmatpush2.bf16.xpose.msra.mxu0 0
  %758 = vmatprep.subr.bf16.mxu0 0
  %759 = vmatpush2.bf16.xpose.msra.mxu0 0
  %760 = vmatprep.subr.bf16.mxu0 0
  %761 = vmatpush2.bf16.xpose.msra.mxu0 0
  %762 = vmatprep.subr.bf16.mxu0 0
  %763 = vmatpush2.bf16.xpose.msra.mxu0 0
  %764 = vmatprep.subr.bf16.mxu0 0
  %765 = vmatpush2.bf16.xpose.msra.mxu0 0
  %766 = vmatprep.subr.bf16.mxu0 0
  %767 = vmatpush2.bf16.xpose.msra.mxu0 0
  %768 = vmatprep.mubr.bf16.mxu0 0
  %769 = vmatmul.mubr.bf16.gmra.mxu0 %v731
  %v770 = vpop.f32.mrf.mxu0
  %v771 = vadd.f32 %v729, %v770
  %v772 = vpop.f32.mrf.mxu0
  %v773 = vpop.f32.mrf.mxu0
  %v774 = vpop.f32.mrf.mxu0
  %775 = vdwg.mxu0
  %v776 = vsel %vm319, %v771, -inf
  %777 = vmax.xlane.f32.xlu0 %v776
  %v778 = vpop.xlane.xlu0 %777
  %v779 = vsub.f32 %v771, %v778
  %v780 = vmul.f32 %v779, 1.442695
  %v781 = vpow.pop %v780
  %v782 = vsel %vm319, %v781, 0.0
  %783 = vadd.xlane.f32.xlu0 %v782
  %v784 = vpop.xlane.xlu0 %783
  %v785 = vrcp.pop %v784
  %v786 = vmul.f32 %v781, %v785
  %v787 = vpack.c.bf16 %v786, %v786
  %v789 = vsel %vm319, %v787, 0
  %791 = vmatprep.subr.bf16.mxu0 0
  %792 = vmatpush1.bf16.msra.mxu0 0
  %793 = vmatprep.subr.bf16.mxu0 0
  %794 = vmatpush1.bf16.msra.mxu0 0
  %795 = vmatprep.subr.bf16.mxu0 0
  %796 = vmatpush1.bf16.msra.mxu0 0
  %797 = vmatprep.subr.bf16.mxu0 0
  %798 = vmatpush1.bf16.msra.mxu0 0
  %799 = vmatprep.subr.bf16.mxu0 0
  %800 = vmatpush1.bf16.msra.mxu0 0
  %801 = vmatprep.subr.bf16.mxu0 0
  %802 = vmatpush1.bf16.msra.mxu0 0
  %803 = vmatprep.subr.bf16.mxu0 0
  %804 = vmatpush1.bf16.msra.mxu0 0
  %805 = vmatprep.subr.bf16.mxu0 0
  %806 = vmatpush1.bf16.msra.mxu0 %v725
  %807 = vmatprep.subr.bf16.mxu0 0
  %808 = vmatpush2.bf16.msra.mxu0 0
  %809 = vmatprep.subr.bf16.mxu0 0
  %810 = vmatpush2.bf16.msra.mxu0 0
  %811 = vmatprep.subr.bf16.mxu0 0
  %812 = vmatpush2.bf16.msra.mxu0 0
  %813 = vmatprep.subr.bf16.mxu0 0
  %814 = vmatpush2.bf16.msra.mxu0 0
  %815 = vmatprep.subr.bf16.mxu0 0
  %816 = vmatpush2.bf16.msra.mxu0 0
  %817 = vmatprep.subr.bf16.mxu0 0
  %818 = vmatpush2.bf16.msra.mxu0 0
  %819 = vmatprep.subr.bf16.mxu0 0
  %820 = vmatpush2.bf16.msra.mxu0 0
  %821 = vmatprep.subr.bf16.mxu0 0
  %822 = vmatpush2.bf16.msra.mxu0 0
  %823 = vmatprep.mubr.bf16.mxu0 0
  %824 = vmatmul.mubr.bf16.gmra.mxu0 %v789
  %v825 = vpop.f32.mrf.mxu0
  %v826 = vadd.f32 0.0, %v825
  %v827 = vpop.f32.mrf.mxu0
  %v828 = vpop.f32.mrf.mxu0
  %v829 = vpop.f32.mrf.mxu0
  %830 = vdwg.mxu0
  %832 = vrot.lane.b32.xlu0 %v723, 120
  %v833 = vpop.permute.xlu0 %832
  %835 = vrot.lane.b32.xlu0 %v724, 120
  %v836 = vpop.permute.xlu0 %835
  %v838 = vsel %vm272, %v833, 0
  %v841 = vsel %vm272, %v836, 0
  %843 = vmatprep.subr.bf16.mxu0 0
  %844 = vmatpush1.bf16.xpose.msra.mxu0 0
  %845 = vmatprep.subr.bf16.mxu0 0
  %846 = vmatpush1.bf16.xpose.msra.mxu0 0
  %847 = vmatprep.subr.bf16.mxu0 0
  %848 = vmatpush1.bf16.xpose.msra.mxu0 0
  %849 = vmatprep.subr.bf16.mxu0 0
  %850 = vmatpush1.bf16.xpose.msra.mxu0 0
  %851 = vmatprep.subr.bf16.mxu0 0
  %852 = vmatpush1.bf16.xpose.msra.mxu0 0
  %853 = vmatprep.subr.bf16.mxu0 0
  %854 = vmatpush1.bf16.xpose.msra.mxu0 0
  %855 = vmatprep.subr.bf16.mxu0 0
  %856 = vmatpush1.bf16.xpose.msra.mxu0 0
  %857 = vmatprep.subr.bf16.mxu0 0
  %858 = vmatpush1.bf16.xpose.msra.mxu0 %v841
  %859 = vmatprep.subr.bf16.mxu0 0
  %860 = vmatpush2.bf16.xpose.msra.mxu0 0
  %861 = vmatprep.subr.bf16.mxu0 0
  %862 = vmatpush2.bf16.xpose.msra.mxu0 0
  %863 = vmatprep.subr.bf16.mxu0 0
  %864 = vmatpush2.bf16.xpose.msra.mxu0 0
  %865 = vmatprep.subr.bf16.mxu0 0
  %866 = vmatpush2.bf16.xpose.msra.mxu0 0
  %867 = vmatprep.subr.bf16.mxu0 0
  %868 = vmatpush2.bf16.xpose.msra.mxu0 0
  %869 = vmatprep.subr.bf16.mxu0 0
  %870 = vmatpush2.bf16.xpose.msra.mxu0 0
  %871 = vmatprep.subr.bf16.mxu0 0
  %872 = vmatpush2.bf16.xpose.msra.mxu0 0
  %873 = vmatprep.subr.bf16.mxu0 0
  %874 = vmatpush2.bf16.xpose.msra.mxu0 0
  %875 = vmatprep.mubr.bf16.mxu0 0
  %876 = vmatmul.mubr.bf16.gmra.mxu0 %v838
  %v877 = vpop.f32.mrf.mxu0
  %v878 = vadd.f32 %v729, %v877
  %v879 = vpop.f32.mrf.mxu0
  %v880 = vpop.f32.mrf.mxu0
  %v881 = vpop.f32.mrf.mxu0
  %882 = vdwg.mxu0
  %v883 = vsel %vm319, %v878, -inf
  %884 = vmax.xlane.f32.xlu0 %v883
  %v885 = vpop.xlane.xlu0 %884
  %v886 = vsub.f32 %v878, %v885
  %v887 = vmul.f32 %v886, 1.442695
  %v888 = vpow.pop %v887
  %v889 = vsel %vm319, %v888, 0.0
  %890 = vadd.xlane.f32.xlu0 %v889
  %v891 = vpop.xlane.xlu0 %890
  %v892 = vrcp.pop %v891
  %v893 = vmul.f32 %v888, %v892
  %v894 = vpack.c.bf16 %v893, %v893
  %896 = vrot.lane.b32.xlu0 %v725, 120
  %v897 = vpop.permute.xlu0 %896
  %v900 = vsel %vm319, %v894, 0
  %902 = vmatprep.subr.bf16.mxu0 0
  %903 = vmatpush1.bf16.msra.mxu0 0
  %904 = vmatprep.subr.bf16.mxu0 0
  %905 = vmatpush1.bf16.msra.mxu0 0
  %906 = vmatprep.subr.bf16.mxu0 0
  %907 = vmatpush1.bf16.msra.mxu0 0
  %908 = vmatprep.subr.bf16.mxu0 0
  %909 = vmatpush1.bf16.msra.mxu0 0
  %910 = vmatprep.subr.bf16.mxu0 0
  %911 = vmatpush1.bf16.msra.mxu0 0
  %912 = vmatprep.subr.bf16.mxu0 0
  %913 = vmatpush1.bf16.msra.mxu0 0
  %914 = vmatprep.subr.bf16.mxu0 0
  %915 = vmatpush1.bf16.msra.mxu0 0
  %916 = vmatprep.subr.bf16.mxu0 0
  %917 = vmatpush1.bf16.msra.mxu0 %v897
  %918 = vmatprep.subr.bf16.mxu0 0
  %919 = vmatpush2.bf16.msra.mxu0 0
  %920 = vmatprep.subr.bf16.mxu0 0
  %921 = vmatpush2.bf16.msra.mxu0 0
  %922 = vmatprep.subr.bf16.mxu0 0
  %923 = vmatpush2.bf16.msra.mxu0 0
  %924 = vmatprep.subr.bf16.mxu0 0
  %925 = vmatpush2.bf16.msra.mxu0 0
  %926 = vmatprep.subr.bf16.mxu0 0
  %927 = vmatpush2.bf16.msra.mxu0 0
  %928 = vmatprep.subr.bf16.mxu0 0
  %929 = vmatpush2.bf16.msra.mxu0 0
  %930 = vmatprep.subr.bf16.mxu0 0
  %931 = vmatpush2.bf16.msra.mxu0 0
  %932 = vmatprep.subr.bf16.mxu0 0
  %933 = vmatpush2.bf16.msra.mxu0 0
  %934 = vmatprep.mubr.bf16.mxu0 0
  %935 = vmatmul.mubr.bf16.gmra.mxu0 %v900
  %v936 = vpop.f32.mrf.mxu0
  %v937 = vadd.f32 0.0, %v936
  %v938 = vpop.f32.mrf.mxu0
  %v939 = vpop.f32.mrf.mxu0
  %v940 = vpop.f32.mrf.mxu0
  %941 = vdwg.mxu0
  %v942 = vadd.f32 %v786, %v893
  %943 = vrot.lane.b32.xlu0 %v723, 112
  %v944 = vpop.permute.xlu0 %943
  %945 = vrot.lane.b32.xlu0 %v724, 112
  %v946 = vpop.permute.xlu0 %945
  %v948 = vsel %vm272, %v944, 0
  %v951 = vsel %vm272, %v946, 0
  %953 = vmatprep.subr.bf16.mxu0 0
  %954 = vmatpush1.bf16.xpose.msra.mxu0 0
  %955 = vmatprep.subr.bf16.mxu0 0
  %956 = vmatpush1.bf16.xpose.msra.mxu0 0
  %957 = vmatprep.subr.bf16.mxu0 0
  %958 = vmatpush1.bf16.xpose.msra.mxu0 0
  %959 = vmatprep.subr.bf16.mxu0 0
  %960 = vmatpush1.bf16.xpose.msra.mxu0 0
  %961 = vmatprep.subr.bf16.mxu0 0
  %962 = vmatpush1.bf16.xpose.msra.mxu0 0
  %963 = vmatprep.subr.bf16.mxu0 0
  %964 = vmatpush1.bf16.xpose.msra.mxu0 0
  %965 = vmatprep.subr.bf16.mxu0 0
  %966 = vmatpush1.bf16.xpose.msra.mxu0 0
  %967 = vmatprep.subr.bf16.mxu0 0
  %968 = vmatpush1.bf16.xpose.msra.mxu0 %v951
  %969 = vmatprep.subr.bf16.mxu0 0
  %970 = vmatpush2.bf16.xpose.msra.mxu0 0
  %971 = vmatprep.subr.bf16.mxu0 0
  %972 = vmatpush2.bf16.xpose.msra.mxu0 0
  %973 = vmatprep.subr.bf16.mxu0 0
  %974 = vmatpush2.bf16.xpose.msra.mxu0 0
  %975 = vmatprep.subr.bf16.mxu0 0
  %976 = vmatpush2.bf16.xpose.msra.mxu0 0
  %977 = vmatprep.subr.bf16.mxu0 0
  %978 = vmatpush2.bf16.xpose.msra.mxu0 0
  %979 = vmatprep.subr.bf16.mxu0 0
  %980 = vmatpush2.bf16.xpose.msra.mxu0 0
  %981 = vmatprep.subr.bf16.mxu0 0
  %982 = vmatpush2.bf16.xpose.msra.mxu0 0
  %983 = vmatprep.subr.bf16.mxu0 0
  %984 = vmatpush2.bf16.xpose.msra.mxu0 0
  %985 = vmatprep.mubr.bf16.mxu0 0
  %986 = vmatmul.mubr.bf16.gmra.mxu0 %v948
  %v987 = vpop.f32.mrf.mxu0
  %v988 = vadd.f32 %v729, %v987
  %v989 = vpop.f32.mrf.mxu0
  %v990 = vpop.f32.mrf.mxu0
  %v991 = vpop.f32.mrf.mxu0
  %992 = vdwg.mxu0
  %v993 = vsel %vm319, %v988, -inf
  %994 = vmax.xlane.f32.xlu0 %v993
  %v995 = vpop.xlane.xlu0 %994
  %v996 = vsub.f32 %v988, %v995
  %v997 = vmul.f32 %v996, 1.442695
  %v998 = vpow.pop %v997
  %v999 = vsel %vm319, %v998, 0.0
  %1000 = vadd.xlane.f32.xlu0 %v999
  %v1001 = vpop.xlane.xlu0 %1000
  %v1002 = vrcp.pop %v1001
  %v1003 = vmul.f32 %v998, %v1002
  %v1004 = vpack.c.bf16 %v1003, %v1003
  %1005 = vrot.lane.b32.xlu0 %v725, 112
  %v1006 = vpop.permute.xlu0 %1005
  %v1009 = vsel %vm319, %v1004, 0
  %1011 = vmatprep.subr.bf16.mxu0 0
  %1012 = vmatpush1.bf16.msra.mxu0 0
  %1013 = vmatprep.subr.bf16.mxu0 0
  %1014 = vmatpush1.bf16.msra.mxu0 0
  %1015 = vmatprep.subr.bf16.mxu0 0
  %1016 = vmatpush1.bf16.msra.mxu0 0
  %1017 = vmatprep.subr.bf16.mxu0 0
  %1018 = vmatpush1.bf16.msra.mxu0 0
  %1019 = vmatprep.subr.bf16.mxu0 0
  %1020 = vmatpush1.bf16.msra.mxu0 0
  %1021 = vmatprep.subr.bf16.mxu0 0
  %1022 = vmatpush1.bf16.msra.mxu0 0
  %1023 = vmatprep.subr.bf16.mxu0 0
  %1024 = vmatpush1.bf16.msra.mxu0 0
  %1025 = vmatprep.subr.bf16.mxu0 0
  %1026 = vmatpush1.bf16.msra.mxu0 %v1006
  %1027 = vmatprep.subr.bf16.mxu0 0
  %1028 = vmatpush2.bf16.msra.mxu0 0
  %1029 = vmatprep.subr.bf16.mxu0 0
  %1030 = vmatpush2.bf16.msra.mxu0 0
  %1031 = vmatprep.subr.bf16.mxu0 0
  %1032 = vmatpush2.bf16.msra.mxu0 0
  %1033 = vmatprep.subr.bf16.mxu0 0
  %1034 = vmatpush2.bf16.msra.mxu0 0
  %1035 = vmatprep.subr.bf16.mxu0 0
  %1036 = vmatpush2.bf16.msra.mxu0 0
  %1037 = vmatprep.subr.bf16.mxu0 0
  %1038 = vmatpush2.bf16.msra.mxu0 0
  %1039 = vmatprep.subr.bf16.mxu0 0
  %1040 = vmatpush2.bf16.msra.mxu0 0
  %1041 = vmatprep.subr.bf16.mxu0 0
  %1042 = vmatpush2.bf16.msra.mxu0 0
  %1043 = vmatprep.mubr.bf16.mxu0 0
  %1044 = vmatmul.mubr.bf16.gmra.mxu0 %v1009
  %v1045 = vpop.f32.mrf.mxu0
  %v1046 = vadd.f32 0.0, %v1045
  %v1047 = vpop.f32.mrf.mxu0
  %v1048 = vpop.f32.mrf.mxu0
  %v1049 = vpop.f32.mrf.mxu0
  %1050 = vdwg.mxu0
  %v1051 = vadd.f32 %v942, %v1003
  %1052 = vrot.lane.b32.xlu0 %v723, 104
  %v1053 = vpop.permute.xlu0 %1052
  %1054 = vrot.lane.b32.xlu0 %v724, 104
  %v1055 = vpop.permute.xlu0 %1054
  %v1057 = vsel %vm272, %v1053, 0
  %v1060 = vsel %vm272, %v1055, 0
  %1062 = vmatprep.subr.bf16.mxu0 0
  %1063 = vmatpush1.bf16.xpose.msra.mxu0 0
  %1064 = vmatprep.subr.bf16.mxu0 0
  %1065 = vmatpush1.bf16.xpose.msra.mxu0 0
  %1066 = vmatprep.subr.bf16.mxu0 0
  %1067 = vmatpush1.bf16.xpose.msra.mxu0 0
  %1068 = vmatprep.subr.bf16.mxu0 0
  %1069 = vmatpush1.bf16.xpose.msra.mxu0 0
  %1070 = vmatprep.subr.bf16.mxu0 0
  %1071 = vmatpush1.bf16.xpose.msra.mxu0 0
  %1072 = vmatprep.subr.bf16.mxu0 0
  %1073 = vmatpush1.bf16.xpose.msra.mxu0 0
  %1074 = vmatprep.subr.bf16.mxu0 0
  %1075 = vmatpush1.bf16.xpose.msra.mxu0 0
  %1076 = vmatprep.subr.bf16.mxu0 0
  %1077 = vmatpush1.bf16.xpose.msra.mxu0 %v1060
  %1078 = vmatprep.subr.bf16.mxu0 0
  %1079 = vmatpush2.bf16.xpose.msra.mxu0 0
  %1080 = vmatprep.subr.bf16.mxu0 0
  %1081 = vmatpush2.bf16.xpose.msra.mxu0 0
  %1082 = vmatprep.subr.bf16.mxu0 0
  %1083 = vmatpush2.bf16.xpose.msra.mxu0 0
  %1084 = vmatprep.subr.bf16.mxu0 0
  %1085 = vmatpush2.bf16.xpose.msra.mxu0 0
  %1086 = vmatprep.subr.bf16.mxu0 0
  %1087 = vmatpush2.bf16.xpose.msra.mxu0 0
  %1088 = vmatprep.subr.bf16.mxu0 0
  %1089 = vmatpush2.bf16.xpose.msra.mxu0 0
  %1090 = vmatprep.subr.bf16.mxu0 0
  %1091 = vmatpush2.bf16.xpose.msra.mxu0 0
  %1092 = vmatprep.subr.bf16.mxu0 0
  %1093 = vmatpush2.bf16.xpose.msra.mxu0 0
  %1094 = vmatprep.mubr.bf16.mxu0 0
  %1095 = vmatmul.mubr.bf16.gmra.mxu0 %v1057
  %v1096 = vpop.f32.mrf.mxu0
  %v1097 = vadd.f32 %v729, %v1096
  %v1098 = vpop.f32.mrf.mxu0
  %v1099 = vpop.f32.mrf.mxu0
  %v1100 = vpop.f32.mrf.mxu0
  %1101 = vdwg.mxu0
  %v1102 = vsel %vm319, %v1097, -inf
  %1103 = vmax.xlane.f32.xlu0 %v1102
  %v1104 = vpop.xlane.xlu0 %1103
  %v1105 = vsub.f32 %v1097, %v1104
  %v1106 = vmul.f32 %v1105, 1.442695
  %v1107 = vpow.pop %v1106
  %v1108 = vsel %vm319, %v1107, 0.0
  %1109 = vadd.xlane.f32.xlu0 %v1108
  %v1110 = vpop.xlane.xlu0 %1109
  %v1111 = vrcp.pop %v1110
  %v1112 = vmul.f32 %v1107, %v1111
  %v1113 = vpack.c.bf16 %v1112, %v1112
  %1114 = vrot.lane.b32.xlu0 %v725, 104
  %v1115 = vpop.permute.xlu0 %1114
  %v1118 = vsel %vm319, %v1113, 0
  %1120 = vmatprep.subr.bf16.mxu0 0
  %1121 = vmatpush1.bf16.msra.mxu0 0
  %1122 = vmatprep.subr.bf16.mxu0 0
  %1123 = vmatpush1.bf16.msra.mxu0 0
  %1124 = vmatprep.subr.bf16.mxu0 0
  %1125 = vmatpush1.bf16.msra.mxu0 0
  %1126 = vmatprep.subr.bf16.mxu0 0
  %1127 = vmatpush1.bf16.msra.mxu0 0
  %1128 = vmatprep.subr.bf16.mxu0 0
  %1129 = vmatpush1.bf16.msra.mxu0 0
  %1130 = vmatprep.subr.bf16.mxu0 0
  %1131 = vmatpush1.bf16.msra.mxu0 0
  %1132 = vmatprep.subr.bf16.mxu0 0
  %1133 = vmatpush1.bf16.msra.mxu0 0
  %1134 = vmatprep.subr.bf16.mxu0 0
  %1135 = vmatpush1.bf16.msra.mxu0 %v1115
  %1136 = vmatprep.subr.bf16.mxu0 0
  %1137 = vmatpush2.bf16.msra.mxu0 0
  %1138 = vmatprep.subr.bf16.mxu0 0
  %1139 = vmatpush2.bf16.msra.mxu0 0
  %1140 = vmatprep.subr.bf16.mxu0 0
  %1141 = vmatpush2.bf16.msra.mxu0 0
  %1142 = vmatprep.subr.bf16.mxu0 0
  %1143 = vmatpush2.bf16.msra.mxu0 0
  %1144 = vmatprep.subr.bf16.mxu0 0
  %1145 = vmatpush2.bf16.msra.mxu0 0
  %1146 = vmatprep.subr.bf16.mxu0 0
  %1147 = vmatpush2.bf16.msra.mxu0 0
  %1148 = vmatprep.subr.bf16.mxu0 0
  %1149 = vmatpush2.bf16.msra.mxu0 0
  %1150 = vmatprep.subr.bf16.mxu0 0
  %1151 = vmatpush2.bf16.msra.mxu0 0
  %1152 = vmatprep.mubr.bf16.mxu0 0
  %1153 = vmatmul.mubr.bf16.gmra.mxu0 %v1118
  %v1154 = vpop.f32.mrf.mxu0
  %v1155 = vadd.f32 0.0, %v1154
  %v1156 = vpop.f32.mrf.mxu0
  %v1157 = vpop.f32.mrf.mxu0
  %v1158 = vpop.f32.mrf.mxu0
  %1159 = vdwg.mxu0
  %v1160 = vadd.f32 %v1051, %v1112
  %1162 = vrot.lane.b32.xlu0 %v937, 8
  %v1163 = vpop.permute.xlu0 %1162
  %1166 = vrot.lane.b32.xlu0 %v1046, 16
  %v1167 = vpop.permute.xlu0 %1166
  %1170 = vrot.lane.b32.xlu0 %v1155, 24
  %v1171 = vpop.permute.xlu0 %1170
  %v1173 = vsel %vm272, %v826, %v1163
  %v1174 = vsel %vm319, %v1173, %v1167
  %v1175 = vsel %vm719, %v1174, %v1171
  %v1176 = vmul.f32 %v1160, 0.25
  %s1177 = scalar_lea.vmem %s16, 8
  %1178 = vst.msk [vmem:[%s1177] sm:$0xff] %vm319, %v1176
  %v1179 = vpack.c.bf16 %v1175, %v720
  %v1180 = vld [vmem:[%s11] sm:$0xff]
  %v1181 = vld [vmem:[%s11 + $0x8] sm:$0xff]
  %v1182 = vld [vmem:[%s11 + $0x10] sm:$0xff]
  %v1183 = vld [vmem:[%s11 + $0x18] sm:$0xff]
  %v1184 = vpack.c.bf16 %v1181, %v1180
  %v1185 = vpack.c.bf16 %v1183, %v1182
  %v1186 = vld [vmem:[%s12] sm:$0x1]
  %v1188 = vlaneseq
  %v1189 = vshrl.u32 %v1188, 7
  %v1190 = vsub.s32 0, %v1189
  %v1191 = vrot.slane %v1186, %v1190
  %v1194 = vsel %vm69, %v1179, 0
  %1196 = vmatprep.subr.bf16.mxu0 0
  %1197 = vmatpush1.bf16.msra.mxu0 0
  %1198 = vmatprep.subr.bf16.mxu0 0
  %1199 = vmatpush1.bf16.msra.mxu0 0
  %1200 = vmatprep.subr.bf16.mxu0 0
  %1201 = vmatpush1.bf16.msra.mxu0 0
  %1202 = vmatprep.subr.bf16.mxu0 0
  %1203 = vmatpush1.bf16.msra.mxu0 0
  %1204 = vmatprep.subr.bf16.mxu0 0
  %1205 = vmatpush1.bf16.msra.mxu0 0
  %1206 = vmatprep.subr.bf16.mxu0 0
  %1207 = vmatpush1.bf16.msra.mxu0 0
  %1208 = vmatprep.subr.bf16.mxu0 0
  %1209 = vmatpush1.bf16.msra.mxu0 %v1185
  %1210 = vmatprep.subr.bf16.mxu0 0
  %1211 = vmatpush1.bf16.msra.mxu0 %v1184
  %1212 = vmatprep.subr.bf16.mxu0 0
  %1213 = vmatpush2.bf16.msra.mxu0 0
  %1214 = vmatprep.subr.bf16.mxu0 0
  %1215 = vmatpush2.bf16.msra.mxu0 0
  %1216 = vmatprep.subr.bf16.mxu0 0
  %1217 = vmatpush2.bf16.msra.mxu0 0
  %1218 = vmatprep.subr.bf16.mxu0 0
  %1219 = vmatpush2.bf16.msra.mxu0 0
  %1220 = vmatprep.subr.bf16.mxu0 0
  %1221 = vmatpush2.bf16.msra.mxu0 0
  %1222 = vmatprep.subr.bf16.mxu0 0
  %1223 = vmatpush2.bf16.msra.mxu0 0
  %1224 = vmatprep.subr.bf16.mxu0 0
  %1225 = vmatpush2.bf16.msra.mxu0 0
  %1226 = vmatprep.subr.bf16.mxu0 0
  %1227 = vmatpush2.bf16.msra.mxu0 0
  %1228 = vmatprep.mubr.bf16.mxu0 0
  %1229 = vmatmul.mubr.bf16.gmra.mxu0 %v1194
  %v1230 = vpop.f32.mrf.mxu0
  %v1231 = vadd.f32 %v1191, %v1230
  %v1232 = vpop.f32.mrf.mxu0
  %v1233 = vpop.f32.mrf.mxu0
  %v1234 = vadd.f32 %v1191, %v1233
  %v1235 = vpop.f32.mrf.mxu0
  %1236 = vdwg.mxu0
  %v1237 = vld [vmem:[%s3] sm:$0xff]
  %v1238 = vld [vmem:[%s3 + $0x8] sm:$0xff]
  %v1239 = vadd.f32 %v1237, %v1231
  %v1240 = vadd.f32 %v1238, %v1234
  %v1241 = vld [vmem:[%s13] sm:$0x1]
  %v1242 = vld [vmem:[%s14] sm:$0x1]
  %v1243 = vsel %vm69, %v1239, 0.0
  %1244 = vadd.xlane.f32.xlu0 %v1243
  %v1245 = vpop.xlane.xlu0 %1244
  %v1246 = vsel %vm69, %v1240, 0.0
  %1247 = vadd.xlane.f32.xlu0 %v1246
  %v1248 = vpop.xlane.xlu0 %1247
  %v1249 = vrcp.pop 32.0
  %v1250 = vmul.f32 %v1245, %v1249
  %v1251 = vmul.f32 %v1248, %v1249
  %v1252 = vsub.f32 %v1239, %v1250
  %v1253 = vsub.f32 %v1240, %v1251
  %v1254 = vmul.f32 %v1252, %v1252
  %v1255 = vmul.f32 %v1253, %v1253
  %v1256 = vsel %vm69, %v1254, 0.0
  %1257 = vadd.xlane.f32.xlu0 %v1256
  %v1258 = vpop.xlane.xlu0 %1257
  %v1259 = vsel %vm69, %v1255, 0.0
  %1260 = vadd.xlane.f32.xlu0 %v1259
  %v1261 = vpop.xlane.xlu0 %1260
  %v1262 = vmul.f32 %v1258, %v1249
  %v1263 = vmul.f32 %v1261, %v1249
  %v1264 = vadd.f32 %v1262, 1e-05
  %v1265 = vadd.f32 %v1263, 1e-05
  %v1266 = vrsqrt.pop %v1264
  %v1267 = vrsqrt.pop %v1265
  %v1268 = vmul.f32 %v1252, %v1266
  %v1269 = vmul.f32 %v1253, %v1267
  %v1271 = vlaneseq
  %v1272 = vshrl.u32 %v1271, 7
  %v1273 = vsub.s32 0, %v1272
  %v1274 = vrot.slane %v1241, %v1273
  %v1276 = vmul.f32 %v1268, %v1274
  %v1277 = vmul.f32 %v1269, %v1274
  %v1279 = vlaneseq
  %v1280 = vshrl.u32 %v1279, 7
  %v1281 = vsub.s32 0, %v1280
  %v1282 = vrot.slane %v1242, %v1281
  %v1284 = vadd.f32 %v1276, %v1282
  %v1285 = vadd.f32 %v1277, %v1282
  %1286 = vst.msk [vmem:[%s15] sm:$0xff] %vm69, %v1284
  %1287 = vst.msk [vmem:[%s15 + $0x8] sm:$0xff] %vm69, %v1285
  // Predicated region
  $region62: #{transformer_forward.32} parent=0 // pred_check
    _
  $region63: #{transformer_forward.32} parent=0 // pred_check_branch
    %1289 = sbr.rel (0) target = $region65
  $region64: #{transformer_forward.32} parent=0 // pred_region
    _
  $region65: #{transformer_forward.32} parent=0 // pred_fallthru
    _
  // Predicated region
  $region66: #{transformer_forward.32} parent=0 // pred_check
    _
  $region67: #{transformer_forward.32} parent=0 // pred_check_branch
    %1291 = sbr.rel (0) target = $region69
  $region68: #{transformer_forward.32} parent=0 // pred_region
    _
  $region69: #{transformer_forward.32} parent=0 // pred_fallthru
    _
  // Predicated region
  $region70: #{transformer_forward.32} parent=0 // pred_check
    _
  $region71: #{transformer_forward.32} parent=0 // pred_check_branch
    %1293 = sbr.rel (0) target = $region73
  $region72: #{transformer_forward.32} parent=0 // pred_region
    _
  $region73: #{transformer_forward.32} parent=0 // pred_fallthru
    _
  // Predicated region
  $region74: #{transformer_forward.32} parent=0 // pred_check
    _
  $region75: #{transformer_forward.32} parent=0 // pred_check_branch
    %1295 = sbr.rel (0) target = $region77
  $region76: #{transformer_forward.32} parent=0 // pred_region
    _
  $region77: #{transformer_forward.32} parent=0 // pred_fallthru
    _

</llo_original>
